<compile_context>
chip_gen: v7x
topology: tpu7x:2x2x1
jax: 0.10.0
libtpu: 0.0.40
codegen_flags: <defaults>
</compile_context>

<pallas_src>
import numpy as np
import jax
import jax.numpy as jnp
from jax import lax
from jax.experimental import pallas as pl
from jax.experimental.pallas import tpu as pltpu


def _ru8(n):
    return ((n + 7) // 8) * 8


def _ru128(n):
    return ((n + 127) // 128) * 128


# --------------------------------------------------------------------------
# Fused Pallas kernel: conv stack + LSTM + both heads + softmax
# --------------------------------------------------------------------------
def _make_fused_kernel(*, B, W, Hs, Ws, R2, R3, Hn, A, L, RT):
    """All sizes are Python ints at trace time."""
    shifts = (0, B, W * B, (W + 1) * B)   # taps (kh,kw) = (0,0),(0,1),(1,0),(1,1)
    T = B                                  # LSTM seq_len == conv batch size

    def kernel(x_ref, w1_ref, b1_ref, w2_ref, b2_ref, w3_ref, b3_ref,
               wih_ref, whh_ref, bl_ref, h0_ref, c0_ref,
               wh1_ref, bh1_ref, wh2_ref, bh2_ref,
               out_ref, act1_ref, act2_ref, act3_ref):

        # --- conv1: taps pre-packed along lanes in the wrapper -> one K=4*Cin matmul
        act1_ref[...] = jnp.maximum(
            jnp.dot(x_ref[...], w1_ref[...],
                    preferred_element_type=jnp.float32) + b1_ref[...], 0.0)

        def conv2x2(in_ref, w_ref, b_ref, rout):
            # Shift-and-add 2x2/stride-1 conv on the (rows=(h*W+w)*B+b, lanes=cin)
            # activation matrix.  Rows whose (h, w) fall outside the valid output
            # region hold garbage that is never read by any valid downstream row.
            cin = in_ref.shape[1]
            acc = None
            for k, s in enumerate(shifts):
                lhs = in_ref[s:s + rout, :].astype(w_ref.dtype)
                rhs = w_ref[k * cin:(k + 1) * cin, :]
                term = jnp.dot(lhs, rhs, preferred_element_type=jnp.float32)
                acc = term if acc is None else acc + term
            return jnp.maximum(acc + b_ref[...], 0.0)

        act2_ref[...] = conv2x2(act1_ref, w2_ref, b2_ref, R2)
        act3_ref[...] = conv2x2(act2_ref, w3_ref, b3_ref, R3)

        # --- LSTM input projection: lane-pack all valid (hs, ws) act3 tiles into
        # one (T, Hs*Ws*C3) LHS and do a single deep-K matmul against W_ih.
        lhs = jnp.concatenate(
            [act3_ref[(hs * W + ws) * B:(hs * W + ws) * B + B, :]
             for hs in range(Hs) for ws in range(Ws)], axis=1)
        gx = jnp.dot(lhs.astype(wih_ref.dtype), wih_ref[...],
                     preferred_element_type=jnp.float32) + bl_ref[...]   # (T, 4*Hn)

        # --- LSTM recurrence (PyTorch gate order [i, f, g, o]); f32 elementwise.
        # W_hh is read from VMEM inside the short unrolled loop (no long-lived
        # hoisted register value -> no vreg-file pressure).
        row = lax.broadcasted_iota(jnp.int32, (T, Hn), 0)
        out = jnp.zeros((T, Hn), jnp.float32)
        h = h0_ref[...]
        c = c0_ref[...]
        for t in range(T):                     # static unroll (T known at trace)
            g = gx[t:t + 1, :] + jnp.dot(h, whh_ref[...],
                                         preferred_element_type=jnp.float32)
            i_g = jax.nn.sigmoid(g[:, 0 * Hn:1 * Hn])
            f_g = jax.nn.sigmoid(g[:, 1 * Hn:2 * Hn])
            g_g = jnp.tanh(g[:, 2 * Hn:3 * Hn])
            o_g = jax.nn.sigmoid(g[:, 3 * Hn:4 * Hn])
            c = f_g * c + i_g * g_g
            h = o_g * jnp.tanh(c)
            out = jnp.where(row == t, h, out)  # keep hidden states in vregs

        # --- both heads fused: (Hn, 128) matmul + lane-padded block-diag matmul.
        # wh2/bh2 were lane-padded to L columns in the wrapper, so o2 is already
        # a lane-dense (T, L) slab: lanes [0, A) = pi logits, lane A = v, rest 0.
        hid = jnp.maximum(
            jnp.dot(out.astype(wh1_ref.dtype), wh1_ref[...],
                    preferred_element_type=jnp.float32) + bh1_ref[...], 0.0)
        o2 = jnp.dot(hid.astype(wh2_ref.dtype), wh2_ref[...],
                     preferred_element_type=jnp.float32) + bh2_ref[...]   # (T, L)

        lane = lax.broadcasted_iota(jnp.int32, (T, L), 1)
        is_logit = lane < A
        logit_m = jnp.where(is_logit, o2, jnp.float32(-1e30))
        m = jnp.max(logit_m, axis=-1, keepdims=True)
        e = jnp.where(is_logit, jnp.exp(o2 - m), 0.0)
        denom = jnp.sum(e, axis=-1, keepdims=True)
        pi_full = e / denom                    # exact normalization (sum == 1)
        top = jnp.where(lane == A, o2, pi_full)   # [pi | v | zeros]  (T, L)

        if Hn == L:
            h_row, c_row = h, c
        else:
            h_row = jnp.pad(h, ((0, 0), (0, L - Hn)))
            c_row = jnp.pad(c, ((0, 0), (0, L - Hn)))

        # lane-dense merged output slab: single output array / writeback DMA.
        out_ref[0:T, :] = top
        out_ref[T:T + 1, :] = h_row
        out_ref[T + 1:T + 2, :] = c_row
        if RT > T + 2:
            out_ref[T + 2:RT, :] = jnp.zeros((RT - T - 2, L), jnp.float32)

    return kernel


# --------------------------------------------------------------------------
# One-time parameter re-layout / dtype cast (pure weight plumbing)
# --------------------------------------------------------------------------
def prepare_params(params, input_dim):
    C, H, W = input_dim
    Hs, Ws = H - 3, W - 3
    Hn = params['w_hh'].shape[1]
    A = params['wp2'].shape[0]
    C3 = params['w3'].shape[0]
    Hd = params['wp1'].shape[0]
    f32, bf16 = jnp.float32, jnp.bfloat16

    def conv_w(w, dtype):
        co, ci = w.shape[0], w.shape[1]
        # (Cout, Cin, kh, kw) -> rows blocked by tap (kh, kw), each block (Cin, Cout)
        return jnp.transpose(w, (2, 3, 1, 0)).reshape(4 * ci, co).astype(dtype)

    # W_ih columns are PyTorch NCHW-flatten (c, h, w); regroup into per-(h, w)
    # (C3, 4*Hn) blocks matching the kernel's (h, w, b)-row / channel-lane layout.
    wih = params['w_ih'].reshape(4 * Hn, C3, Hs, Ws)
    wih = jnp.transpose(wih, (2, 3, 1, 0)).reshape(Hs * Ws * C3, 4 * Hn).astype(bf16)

    wh1 = jnp.concatenate([params['wp1'].T, params['wv1'].T], axis=1).astype(bf16)
    bh1 = jnp.concatenate([params['bp1'], params['bv1']]).reshape(1, -1).astype(f32)

    wh2 = jnp.zeros((2 * Hd, A + 1), f32)
    wh2 = wh2.at[:Hd, :A].set(params['wp2'].T)      # pi head second layer
    wh2 = wh2.at[Hd:, A:].set(params['wv2'].T)      # v head second layer
    wh2 = wh2.astype(bf16)
    bh2 = jnp.concatenate([params['bp2'], params['bv2']]).reshape(1, -1).astype(f32)

    return {
        'w1': conv_w(params['w1'], bf16), 'b1': params['b1'].reshape(1, -1).astype(f32),
        'w2': conv_w(params['w2'], bf16), 'b2': params['b2'].reshape(1, -1).astype(f32),
        'w3': conv_w(params['w3'], bf16), 'b3': params['b3'].reshape(1, -1).astype(f32),
        'wih': wih,
        'whh': params['w_hh'].T.astype(f32),          # f32: avoid recurrence drift
        'bl': (params['b_ih'] + params['b_hh']).reshape(1, -1).astype(f32),
        'wh1': wh1, 'bh1': bh1, 'wh2': wh2, 'bh2': bh2,
    }


# --------------------------------------------------------------------------
# Batched forward: grid over S independent sequences, weights VMEM-resident.
#   x: (S, B, C, H, W), h_in/c_in: (S, 1, 1, Hn)
#   -> pi (S, B, A), v (S, B, 1, 1), h_out (S, 1, 1, Hn), c_out (S, 1, 1, Hn)
# --------------------------------------------------------------------------
@jax.jit
def ac_model_forward_batched(kp, x, h_in, c_in):
    S, B, C, H, W = x.shape
    assert B % 8 == 0, "B (= LSTM seq len) must be a multiple of 8 (sublane alignment)"
    assert H >= 4 and W >= 4, "need >= 4x4 spatial for three 2x2 VALID convs"
    Hs, Ws = H - 3, W - 3
    Hn = kp['whh'].shape[0]
    A = kp['wh2'].shape[1] - 1
    C1 = kp['w1'].shape[1]
    C2 = kp['w2'].shape[1]
    C3 = kp['w3'].shape[1]
    assert kp['w1'].shape[0] == 4 * C, "params / input_dim channel mismatch"
    assert kp['wih'].shape[0] == Hs * Ws * C3, "params / input_dim spatial mismatch"
    T = B

    # Row layout r = (h*W + w)*B + b, lanes = channels; rows shrink per conv layer,
    # padded tail rows keep every statically shifted slice in bounds.
    SH = (W + 1) * B
    R3 = _ru8(((Hs - 1) * W + (Ws - 1)) * B + B)
    R2 = _ru8(R3 + SH)
    R1 = _ru8(R2 + SH)
    N = H * W * B
    L = _ru128(max(A + 1, Hn))            # lane-dense merged output width
    RT = _ru8(T + 2)                      # rows 0..T-1 = [pi|v], T = h, T+1 = c

    xr = jnp.transpose(x, (0, 3, 4, 1, 2)).reshape(S, N, C)   # (S, H*W*B, C)
    need = R1 + SH
    if need > N:
        xr = jnp.pad(xr, ((0, 0), (0, need - N), (0, 0)))
    shifts = (0, B, W * B, (W + 1) * B)
    # Lane-pack conv1's four taps in the wrapper -> single K=4*C matmul in-kernel.
    xp = jnp.concatenate([xr[:, s:s + R1, :] for s in shifts], axis=2)
    xp = xp.astype(jnp.bfloat16)                               # (S, R1, 4*C)

    # Lane-pad the second head layer so the kernel's last matmul is already the
    # lane-dense output slab (tiny XLA-side pad of a 32 KiB weight).
    wh2p = jnp.pad(kp['wh2'], ((0, 0), (0, L - (A + 1))))
    bh2p = jnp.pad(kp['bh2'], ((0, 0), (0, L - (A + 1))))

    kernel = _make_fused_kernel(B=B, W=W, Hs=Hs, Ws=Ws, R2=R2, R3=R3,
                                Hn=Hn, A=A, L=L, RT=RT)

    # Weights: whole-array blocks with a constant index map -> DMA'd once,
    # VMEM-resident across the whole grid.
    def const_spec(a):
        return pl.BlockSpec(a.shape, lambda s: (0, 0))

    slab = pl.pallas_call(
        kernel,
        out_shape=jax.ShapeDtypeStruct((S, RT, L), jnp.float32),
        grid=(S,),
        in_specs=[
            pl.BlockSpec((None, R1, 4 * C), lambda s: (s, 0, 0)),   # x (per seq)
            const_spec(kp['w1']), const_spec(kp['b1']),
            const_spec(kp['w2']), const_spec(kp['b2']),
            const_spec(kp['w3']), const_spec(kp['b3']),
            const_spec(kp['wih']), const_spec(kp['whh']), const_spec(kp['bl']),
            pl.BlockSpec((None, 1, Hn), lambda s: (s, 0, 0)),        # h0 (per seq)
            pl.BlockSpec((None, 1, Hn), lambda s: (s, 0, 0)),        # c0 (per seq)
            const_spec(kp['wh1']), const_spec(kp['bh1']),
            const_spec(wh2p), const_spec(bh2p),
        ],
        out_specs=pl.BlockSpec((None, RT, L), lambda s: (s, 0, 0)),
        scratch_shapes=[
            pltpu.VMEM((R1, C1), jnp.float32),
            pltpu.VMEM((R2, C2), jnp.float32),
            pltpu.VMEM((R3, C3), jnp.float32),
        ],
        compiler_params=pltpu.CompilerParams(
            dimension_semantics=("parallel",)),   # shard sequences across v7x's 2 TCs
    )(xp,
      kp['w1'], kp['b1'], kp['w2'], kp['b2'], kp['w3'], kp['b3'],
      kp['wih'], kp['whh'], kp['bl'],
      h_in.reshape(S, 1, Hn), c_in.reshape(S, 1, Hn),
      kp['wh1'], kp['bh1'], wh2p, bh2p)

    pi = slab[:, :T, :A]
    v = slab[:, :T, A:A + 1].reshape(S, T, 1, 1)
    h_out = slab[:, T, :Hn].reshape(S, 1, 1, Hn)
    c_out = slab[:, T + 1, :Hn].reshape(S, 1, 1, Hn)
    return pi, v, h_out, c_out


# --------------------------------------------------------------------------
# Single-sequence forward matching ACModel.forward(x, h_in, c_in)
# --------------------------------------------------------------------------
def ac_model_forward(kp, x, h_in, c_in):
    Hn = h_in.shape[-1]
    pi, v, h_out, c_out = ac_model_forward_batched(
        kp, x[None], h_in.reshape(1, 1, 1, Hn), c_in.reshape(1, 1, 1, Hn))
    return pi[0], v[0], h_out[0], c_out[0]


# --------------------------------------------------------------------------
# Deterministic synthetic parameters (PyTorch-like uniform(-1/sqrt(fan), .))
# --------------------------------------------------------------------------
def init_params(key, input_dim=(3, 7, 7), action_dim=7, mem_out_size=128):
    C, H, W = input_dim
    ks = jax.random.split(key, 20)

    def u(k, shape, fan_in):
        lim = 1.0 / np.sqrt(fan_in)
        return jax.random.uniform(k, shape, jnp.float32, -lim, lim)

    Hn = mem_out_size
    return {
        'w1': u(ks[0], (16, C, 2, 2), C * 4),   'b1': u(ks[1], (16,), C * 4),
        'w2': u(ks[2], (32, 16, 2, 2), 16 * 4), 'b2': u(ks[3], (32,), 16 * 4),
        'w3': u(ks[4], (64, 32, 2, 2), 32 * 4), 'b3': u(ks[5], (64,), 32 * 4),
        'w_ih': u(ks[6], (4 * Hn, 64 * (H - 3) * (W - 3)), Hn),
        'b_ih': u(ks[7], (4 * Hn,), Hn),
        'w_hh': u(ks[8], (4 * Hn, Hn), Hn),     'b_hh': u(ks[9], (4 * Hn,), Hn),
        'wp1': u(ks[10], (64, Hn), Hn),         'bp1': u(ks[11], (64,), Hn),
        'wp2': u(ks[12], (action_dim, 64), 64), 'bp2': u(ks[13], (action_dim,), 64),
        'wv1': u(ks[14], (64, Hn), Hn),         'bv1': u(ks[15], (64,), Hn),
        'wv2': u(ks[16], (1, 64), 64),          'bv2': u(ks[17], (1,), 64),
    }


# --------------------------------------------------------------------------
# Pure-JAX reference (numerical sanity check)
# --------------------------------------------------------------------------
def reference_forward(params, x, h_in, c_in):
    def conv(a, w, b):
        y = lax.conv_general_dilated(a, w, (1, 1), 'VALID',
                                     dimension_numbers=('NCHW', 'OIHW', 'NCHW'))
        return jax.nn.relu(y + b[None, :, None, None])

    a = conv(x, params['w1'], params['b1'])
    a = conv(a, params['w2'], params['b2'])
    a = conv(a, params['w3'], params['b3'])
    T = x.shape[0]
    seq = a.reshape(T, -1)
    Hn = params['w_hh'].shape[1]
    h = h_in.reshape(1, Hn)
    c = c_in.reshape(1, Hn)
    outs = []
    for t in range(T):
        xt = seq[t:t + 1]
        g = (xt @ params['w_ih'].T + h @ params['w_hh'].T
             + params['b_ih'] + params['b_hh'])
        i = jax.nn.sigmoid(g[:, :Hn]); f = jax.nn.sigmoid(g[:, Hn:2 * Hn])
        gg = jnp.tanh(g[:, 2 * Hn:3 * Hn]); o = jax.nn.sigmoid(g[:, 3 * Hn:])
        c = f * c + i * gg
        h = o * jnp.tanh(c)
        outs.append(h)
    out = jnp.concatenate(outs, axis=0)
    hid_pi = jax.nn.relu(out @ params['wp1'].T + params['bp1'])
    pi = jax.nn.softmax(hid_pi @ params['wp2'].T + params['bp2'], axis=-1)
    hid_v = jax.nn.relu(out @ params['wv1'].T + params['bv1'])
    v = hid_v @ params['wv2'].T + params['bv2']
    return pi, v.reshape(T, 1, 1), h.reshape(1, 1, Hn), c.reshape(1, 1, Hn)


# --------------------------------------------------------------------------
if __name__ == "__main__":
    key = jax.random.PRNGKey(0)
    kx, kh, kc, kw = jax.random.split(key, 4)

    input_dim = (3, 7, 7)    # MiniGrid-style (C, H, W)
    action_dim = 7
    mem = 128
    B = 8                    # conv batch == LSTM seq len (sublane aligned)
    S = 4                    # independent sequences batched over the Pallas grid

    params = init_params(kw, input_dim, action_dim, mem)
    kp = prepare_params(params, input_dim)          # one-time weight plumbing

    xs = jax.random.normal(kx, (S, B, *input_dim), jnp.float32)
    hs = 0.1 * jax.random.normal(kh, (S, 1, 1, mem), jnp.float32)
    cs = 0.1 * jax.random.normal(kc, (S, 1, 1, mem), jnp.float32)

    # batched call: grid over S, weights DMA'd once and VMEM-resident
    pi_b, v_b, h_b, c_b = ac_model_forward_batched(kp, xs, hs, cs)
    jax.block_until_ready((pi_b, v_b, h_b, c_b))

    assert pi_b.shape == (S, B, action_dim)
    assert v_b.shape == (S, B, 1, 1)
    assert h_b.shape == (S, 1, 1, mem)
    assert c_b.shape == (S, 1, 1, mem)
    assert np.allclose(np.asarray(pi_b).sum(-1), 1.0, atol=2e-3)

    # single-sequence call matching the PyTorch ACModel.forward signature
    pi1, v1, h1, c1 = ac_model_forward(kp, xs[0], hs[0], cs[0])
    jax.block_until_ready((pi1, v1, h1, c1))
    assert pi1.shape == (B, action_dim)
    assert v1.shape == (B, 1, 1)
    assert h1.shape == (1, 1, mem)
    assert c1.shape == (1, 1, mem)

    # numerical check vs pure-JAX f32 reference (bf16 MXU operands in kernel)
    for s in range(S):
        pr, vr, hr, cr = reference_forward(params, xs[s], hs[s], cs[s])
        np.testing.assert_allclose(np.asarray(pi_b[s]), np.asarray(pr), rtol=5e-2, atol=5e-2)
        np.testing.assert_allclose(np.asarray(v_b[s]), np.asarray(vr), rtol=5e-2, atol=5e-2)
        np.testing.assert_allclose(np.asarray(h_b[s]), np.asarray(hr), rtol=5e-2, atol=5e-2)
        np.testing.assert_allclose(np.asarray(c_b[s]), np.asarray(cr), rtol=5e-2, atol=5e-2)

    pr0, vr0, hr0, cr0 = reference_forward(params, xs[0], hs[0], cs[0])
    np.testing.assert_allclose(np.asarray(pi1), np.asarray(pr0), rtol=5e-2, atol=5e-2)
    np.testing.assert_allclose(np.asarray(v1), np.asarray(vr0), rtol=5e-2, atol=5e-2)
    np.testing.assert_allclose(np.asarray(h1), np.asarray(hr0), rtol=5e-2, atol=5e-2)
    np.testing.assert_allclose(np.asarray(c1), np.asarray(cr0), rtol=5e-2, atol=5e-2)

    print("KERNEL_OK")
</pallas_src>

<mosaic_0001>
module attributes {stable_mosaic.version = 11 : i64} {
  func.func @kernel(%arg0: i32, %arg1: memref<1x328x12xbf16, #tpu.memory_space<vmem>>, %arg2: memref<12x16xbf16, #tpu.memory_space<vmem>>, %arg3: memref<1x16xf32, #tpu.memory_space<vmem>>, %arg4: memref<64x32xbf16, #tpu.memory_space<vmem>>, %arg5: memref<1x32xf32, #tpu.memory_space<vmem>>, %arg6: memref<128x64xbf16, #tpu.memory_space<vmem>>, %arg7: memref<1x64xf32, #tpu.memory_space<vmem>>, %arg8: memref<1024x512xbf16, #tpu.memory_space<vmem>>, %arg9: memref<128x512xf32, #tpu.memory_space<vmem>>, %arg10: memref<1x512xf32, #tpu.memory_space<vmem>>, %arg11: memref<1x1x128xf32, #tpu.memory_space<vmem>>, %arg12: memref<1x1x128xf32, #tpu.memory_space<vmem>>, %arg13: memref<128x128xbf16, #tpu.memory_space<vmem>>, %arg14: memref<1x128xf32, #tpu.memory_space<vmem>>, %arg15: memref<128x128xbf16, #tpu.memory_space<vmem>>, %arg16: memref<1x128xf32, #tpu.memory_space<vmem>>, %arg17: memref<1x16x128xf32, #tpu.memory_space<vmem>>, %arg18: memref<328x16xf32, #tpu.memory_space<vmem>>, %arg19: memref<264x32xf32, #tpu.memory_space<vmem>>, %arg20: memref<200x64xf32, #tpu.memory_space<vmem>>) attributes {dimension_semantics = [#tpu.dimension_semantics<parallel>], iteration_bounds = array<i64: 4>, scalar_prefetch = 0 : i64, scratch_operands = 3 : i64, tpu.core_type = #tpu.core_type<tc>, window_params = [{transform_indices = @transform_0, window_bounds = array<i64: 1, 328, 12>}, {pipeline_mode = #tpu.pipeline_mode<synchronous>, transform_indices = @transform_1, window_bounds = array<i64: 12, 16>}, {pipeline_mode = #tpu.pipeline_mode<synchronous>, transform_indices = @transform_2, window_bounds = array<i64: 1, 16>}, {pipeline_mode = #tpu.pipeline_mode<synchronous>, transform_indices = @transform_3, window_bounds = array<i64: 64, 32>}, {pipeline_mode = #tpu.pipeline_mode<synchronous>, transform_indices = @transform_4, window_bounds = array<i64: 1, 32>}, {pipeline_mode = #tpu.pipeline_mode<synchronous>, transform_indices = @transform_5, window_bounds = array<i64: 128, 64>}, {pipeline_mode = #tpu.pipeline_mode<synchronous>, transform_indices = @transform_6, window_bounds = array<i64: 1, 64>}, {pipeline_mode = #tpu.pipeline_mode<synchronous>, transform_indices = @transform_7, window_bounds = array<i64: 1024, 512>}, {pipeline_mode = #tpu.pipeline_mode<synchronous>, transform_indices = @transform_8, window_bounds = array<i64: 128, 512>}, {pipeline_mode = #tpu.pipeline_mode<synchronous>, transform_indices = @transform_9, window_bounds = array<i64: 1, 512>}, {transform_indices = @transform_10, window_bounds = array<i64: 1, 1, 128>}, {transform_indices = @transform_11, window_bounds = array<i64: 1, 1, 128>}, {pipeline_mode = #tpu.pipeline_mode<synchronous>, transform_indices = @transform_12, window_bounds = array<i64: 128, 128>}, {pipeline_mode = #tpu.pipeline_mode<synchronous>, transform_indices = @transform_13, window_bounds = array<i64: 1, 128>}, {pipeline_mode = #tpu.pipeline_mode<synchronous>, transform_indices = @transform_14, window_bounds = array<i64: 128, 128>}, {pipeline_mode = #tpu.pipeline_mode<synchronous>, transform_indices = @transform_15, window_bounds = array<i64: 1, 128>}, {transform_indices = @transform_16, window_bounds = array<i64: 1, 16, 128>}]} {
    %c0 = arith.constant 0 : index
    %c0_0 = arith.constant 0 : index
    %c0_1 = arith.constant 0 : index
    %0 = vector.load %arg1[%c0, %c0_0, %c0_1] : memref<1x328x12xbf16, #tpu.memory_space<vmem>>, vector<1x328x12xbf16>
    %1 = vector.shape_cast %0 : vector<1x328x12xbf16> to vector<328x12xbf16>
    %c0_2 = arith.constant 0 : index
    %c0_3 = arith.constant 0 : index
    %2 = vector.load %arg2[%c0_2, %c0_3] : memref<12x16xbf16, #tpu.memory_space<vmem>>, vector<12x16xbf16>
    %cst = arith.constant dense<0.000000e+00> : vector<328x16xf32>
    %3 = tpu.matmul %1, %2, %cst {dimension_numbers = #tpu.dot_dimension_numbers<[1], [0], [0], [1], [0, 0, 1, 1], [], []>} : vector<328x12xbf16>, vector<12x16xbf16>, vector<328x16xf32> -> vector<328x16xf32>
    %c0_4 = arith.constant 0 : index
    %c0_5 = arith.constant 0 : index
    %4 = vector.load %arg3[%c0_4, %c0_5] : memref<1x16xf32, #tpu.memory_space<vmem>>, vector<1x16xf32>
    %5 = vector.broadcast %4 : vector<1x16xf32> to vector<328x16xf32>
    %6 = arith.addf %3, %5 : vector<328x16xf32>
    %cst_6 = arith.constant 0.000000e+00 : f32
    %7 = vector.broadcast %cst_6 : f32 to vector<328x16xf32>
    %8 = arith.maximumf %6, %7 : vector<328x16xf32>
    %c0_7 = arith.constant 0 : index
    %c0_8 = arith.constant 0 : index
    %9 = vector.load %arg18[%c0_7, %c0_8] : memref<328x16xf32, #tpu.memory_space<vmem>>, vector<328x16xf32>
    tpu.vector_store %arg18[%c0_7, %c0_8], %8 {strides = array<i32>} : memref<328x16xf32, #tpu.memory_space<vmem>>, vector<328x16xf32>,
    %c0_9 = arith.constant 0 : index
    %c0_10 = arith.constant 0 : index
    %10 = vector.load %arg18[%c0_9, %c0_10] : memref<328x16xf32, #tpu.memory_space<vmem>>, vector<264x16xf32>
    %11 = arith.truncf %10 : vector<264x16xf32> to vector<264x16xbf16>
    %c0_11 = arith.constant 0 : index
    %c0_12 = arith.constant 0 : index
    %12 = vector.load %arg4[%c0_11, %c0_12] : memref<64x32xbf16, #tpu.memory_space<vmem>>, vector<16x32xbf16>
    %cst_13 = arith.constant dense<0.000000e+00> : vector<264x32xf32>
    %13 = tpu.matmul %11, %12, %cst_13 {dimension_numbers = #tpu.dot_dimension_numbers<[1], [0], [0], [1], [0, 0, 1, 1], [], []>} : vector<264x16xbf16>, vector<16x32xbf16>, vector<264x32xf32> -> vector<264x32xf32>
    %c8 = arith.constant 8 : index
    %c0_14 = arith.constant 0 : index
    %14 = vector.load %arg18[%c8, %c0_14] : memref<328x16xf32, #tpu.memory_space<vmem>>, vector<264x16xf32>
    %15 = arith.truncf %14 : vector<264x16xf32> to vector<264x16xbf16>
    %c16 = arith.constant 16 : index
    %c0_15 = arith.constant 0 : index
    %16 = vector.load %arg4[%c16, %c0_15] : memref<64x32xbf16, #tpu.memory_space<vmem>>, vector<16x32xbf16>
    %cst_16 = arith.constant dense<0.000000e+00> : vector<264x32xf32>
    %17 = tpu.matmul %15, %16, %cst_16 {dimension_numbers = #tpu.dot_dimension_numbers<[1], [0], [0], [1], [0, 0, 1, 1], [], []>} : vector<264x16xbf16>, vector<16x32xbf16>, vector<264x32xf32> -> vector<264x32xf32>
    %18 = arith.addf %13, %17 : vector<264x32xf32>
    %c56 = arith.constant 56 : index
    %c0_17 = arith.constant 0 : index
    %19 = vector.load %arg18[%c56, %c0_17] : memref<328x16xf32, #tpu.memory_space<vmem>>, vector<264x16xf32>
    %20 = arith.truncf %19 : vector<264x16xf32> to vector<264x16xbf16>
    %c32 = arith.constant 32 : index
    %c0_18 = arith.constant 0 : index
    %21 = vector.load %arg4[%c32, %c0_18] : memref<64x32xbf16, #tpu.memory_space<vmem>>, vector<16x32xbf16>
    %cst_19 = arith.constant dense<0.000000e+00> : vector<264x32xf32>
    %22 = tpu.matmul %20, %21, %cst_19 {dimension_numbers = #tpu.dot_dimension_numbers<[1], [0], [0], [1], [0, 0, 1, 1], [], []>} : vector<264x16xbf16>, vector<16x32xbf16>, vector<264x32xf32> -> vector<264x32xf32>
    %23 = arith.addf %18, %22 : vector<264x32xf32>
    %c64 = arith.constant 64 : index
    %c0_20 = arith.constant 0 : index
    %24 = vector.load %arg18[%c64, %c0_20] : memref<328x16xf32, #tpu.memory_space<vmem>>, vector<264x16xf32>
    %25 = arith.truncf %24 : vector<264x16xf32> to vector<264x16xbf16>
    %c48 = arith.constant 48 : index
    %c0_21 = arith.constant 0 : index
    %26 = vector.load %arg4[%c48, %c0_21] : memref<64x32xbf16, #tpu.memory_space<vmem>>, vector<16x32xbf16>
    %cst_22 = arith.constant dense<0.000000e+00> : vector<264x32xf32>
    %27 = tpu.matmul %25, %26, %cst_22 {dimension_numbers = #tpu.dot_dimension_numbers<[1], [0], [0], [1], [0, 0, 1, 1], [], []>} : vector<264x16xbf16>, vector<16x32xbf16>, vector<264x32xf32> -> vector<264x32xf32>
    %28 = arith.addf %23, %27 : vector<264x32xf32>
    %c0_23 = arith.constant 0 : index
    %c0_24 = arith.constant 0 : index
    %29 = vector.load %arg5[%c0_23, %c0_24] : memref<1x32xf32, #tpu.memory_space<vmem>>, vector<1x32xf32>
    %30 = vector.broadcast %29 : vector<1x32xf32> to vector<264x32xf32>
    %31 = arith.addf %28, %30 : vector<264x32xf32>
    %cst_25 = arith.constant 0.000000e+00 : f32
    %32 = vector.broadcast %cst_25 : f32 to vector<264x32xf32>
    %33 = arith.maximumf %31, %32 : vector<264x32xf32>
    %c0_26 = arith.constant 0 : index
    %c0_27 = arith.constant 0 : index
    %34 = vector.load %arg19[%c0_26, %c0_27] : memref<264x32xf32, #tpu.memory_space<vmem>>, vector<264x32xf32>
    tpu.vector_store %arg19[%c0_26, %c0_27], %33 {strides = array<i32>} : memref<264x32xf32, #tpu.memory_space<vmem>>, vector<264x32xf32>,
    %c0_28 = arith.constant 0 : index
    %c0_29 = arith.constant 0 : index
    %35 = vector.load %arg19[%c0_28, %c0_29] : memref<264x32xf32, #tpu.memory_space<vmem>>, vector<200x32xf32>
    %36 = arith.truncf %35 : vector<200x32xf32> to vector<200x32xbf16>
    %c0_30 = arith.constant 0 : index
    %c0_31 = arith.constant 0 : index
    %37 = vector.load %arg6[%c0_30, %c0_31] : memref<128x64xbf16, #tpu.memory_space<vmem>>, vector<32x64xbf16>
    %cst_32 = arith.constant dense<0.000000e+00> : vector<200x64xf32>
    %38 = tpu.matmul %36, %37, %cst_32 {dimension_numbers = #tpu.dot_dimension_numbers<[1], [0], [0], [1], [0, 0, 1, 1], [], []>} : vector<200x32xbf16>, vector<32x64xbf16>, vector<200x64xf32> -> vector<200x64xf32>
    %c8_33 = arith.constant 8 : index
    %c0_34 = arith.constant 0 : index
    %39 = vector.load %arg19[%c8_33, %c0_34] : memref<264x32xf32, #tpu.memory_space<vmem>>, vector<200x32xf32>
    %40 = arith.truncf %39 : vector<200x32xf32> to vector<200x32xbf16>
    %c32_35 = arith.constant 32 : index
    %c0_36 = arith.constant 0 : index
    %41 = vector.load %arg6[%c32_35, %c0_36] : memref<128x64xbf16, #tpu.memory_space<vmem>>, vector<32x64xbf16>
    %cst_37 = arith.constant dense<0.000000e+00> : vector<200x64xf32>
    %42 = tpu.matmul %40, %41, %cst_37 {dimension_numbers = #tpu.dot_dimension_numbers<[1], [0], [0], [1], [0, 0, 1, 1], [], []>} : vector<200x32xbf16>, vector<32x64xbf16>, vector<200x64xf32> -> vector<200x64xf32>
    %43 = arith.addf %38, %42 : vector<200x64xf32>
    %c56_38 = arith.constant 56 : index
    %c0_39 = arith.constant 0 : index
    %44 = vector.load %arg19[%c56_38, %c0_39] : memref<264x32xf32, #tpu.memory_space<vmem>>, vector<200x32xf32>
    %45 = arith.truncf %44 : vector<200x32xf32> to vector<200x32xbf16>
    %c64_40 = arith.constant 64 : index
    %c0_41 = arith.constant 0 : index
    %46 = vector.load %arg6[%c64_40, %c0_41] : memref<128x64xbf16, #tpu.memory_space<vmem>>, vector<32x64xbf16>
    %cst_42 = arith.constant dense<0.000000e+00> : vector<200x64xf32>
    %47 = tpu.matmul %45, %46, %cst_42 {dimension_numbers = #tpu.dot_dimension_numbers<[1], [0], [0], [1], [0, 0, 1, 1], [], []>} : vector<200x32xbf16>, vector<32x64xbf16>, vector<200x64xf32> -> vector<200x64xf32>
    %48 = arith.addf %43, %47 : vector<200x64xf32>
    %c64_43 = arith.constant 64 : index
    %c0_44 = arith.constant 0 : index
    %49 = vector.load %arg19[%c64_43, %c0_44] : memref<264x32xf32, #tpu.memory_space<vmem>>, vector<200x32xf32>
    %50 = arith.truncf %49 : vector<200x32xf32> to vector<200x32xbf16>
    %c96 = arith.constant 96 : index
    %c0_45 = arith.constant 0 : index
    %51 = vector.load %arg6[%c96, %c0_45] : memref<128x64xbf16, #tpu.memory_space<vmem>>, vector<32x64xbf16>
    %cst_46 = arith.constant dense<0.000000e+00> : vector<200x64xf32>
    %52 = tpu.matmul %50, %51, %cst_46 {dimension_numbers = #tpu.dot_dimension_numbers<[1], [0], [0], [1], [0, 0, 1, 1], [], []>} : vector<200x32xbf16>, vector<32x64xbf16>, vector<200x64xf32> -> vector<200x64xf32>
    %53 = arith.addf %48, %52 : vector<200x64xf32>
    %c0_47 = arith.constant 0 : index
    %c0_48 = arith.constant 0 : index
    %54 = vector.load %arg7[%c0_47, %c0_48] : memref<1x64xf32, #tpu.memory_space<vmem>>, vector<1x64xf32>
    %55 = vector.broadcast %54 : vector<1x64xf32> to vector<200x64xf32>
    %56 = arith.addf %53, %55 : vector<200x64xf32>
    %cst_49 = arith.constant 0.000000e+00 : f32
    %57 = vector.broadcast %cst_49 : f32 to vector<200x64xf32>
    %58 = arith.maximumf %56, %57 : vector<200x64xf32>
    %c0_50 = arith.constant 0 : index
    %c0_51 = arith.constant 0 : index
    %59 = vector.load %arg20[%c0_50, %c0_51] : memref<200x64xf32, #tpu.memory_space<vmem>>, vector<200x64xf32>
    tpu.vector_store %arg20[%c0_50, %c0_51], %58 {strides = array<i32>} : memref<200x64xf32, #tpu.memory_space<vmem>>, vector<200x64xf32>,
    %c0_52 = arith.constant 0 : index
    %c0_53 = arith.constant 0 : index
    %60 = vector.load %arg20[%c0_52, %c0_53] : memref<200x64xf32, #tpu.memory_space<vmem>>, vector<8x64xf32>
    %c8_54 = arith.constant 8 : index
    %c0_55 = arith.constant 0 : index
    %61 = vector.load %arg20[%c8_54, %c0_55] : memref<200x64xf32, #tpu.memory_space<vmem>>, vector<8x64xf32>
    %c16_56 = arith.constant 16 : index
    %c0_57 = arith.constant 0 : index
    %62 = vector.load %arg20[%c16_56, %c0_57] : memref<200x64xf32, #tpu.memory_space<vmem>>, vector<8x64xf32>
    %c24 = arith.constant 24 : index
    %c0_58 = arith.constant 0 : index
    %63 = vector.load %arg20[%c24, %c0_58] : memref<200x64xf32, #tpu.memory_space<vmem>>, vector<8x64xf32>
    %c56_59 = arith.constant 56 : index
    %c0_60 = arith.constant 0 : index
    %64 = vector.load %arg20[%c56_59, %c0_60] : memref<200x64xf32, #tpu.memory_space<vmem>>, vector<8x64xf32>
    %c64_61 = arith.constant 64 : index
    %c0_62 = arith.constant 0 : index
    %65 = vector.load %arg20[%c64_61, %c0_62] : memref<200x64xf32, #tpu.memory_space<vmem>>, vector<8x64xf32>
    %c72 = arith.constant 72 : index
    %c0_63 = arith.constant 0 : index
    %66 = vector.load %arg20[%c72, %c0_63] : memref<200x64xf32, #tpu.memory_space<vmem>>, vector<8x64xf32>
    %c80 = arith.constant 80 : index
    %c0_64 = arith.constant 0 : index
    %67 = vector.load %arg20[%c80, %c0_64] : memref<200x64xf32, #tpu.memory_space<vmem>>, vector<8x64xf32>
    %c112 = arith.constant 112 : index
    %c0_65 = arith.constant 0 : index
    %68 = vector.load %arg20[%c112, %c0_65] : memref<200x64xf32, #tpu.memory_space<vmem>>, vector<8x64xf32>
    %c120 = arith.constant 120 : index
    %c0_66 = arith.constant 0 : index
    %69 = vector.load %arg20[%c120, %c0_66] : memref<200x64xf32, #tpu.memory_space<vmem>>, vector<8x64xf32>
    %c128 = arith.constant 128 : index
    %c0_67 = arith.constant 0 : index
    %70 = vector.load %arg20[%c128, %c0_67] : memref<200x64xf32, #tpu.memory_space<vmem>>, vector<8x64xf32>
    %c136 = arith.constant 136 : index
    %c0_68 = arith.constant 0 : index
    %71 = vector.load %arg20[%c136, %c0_68] : memref<200x64xf32, #tpu.memory_space<vmem>>, vector<8x64xf32>
    %c168 = arith.constant 168 : index
    %c0_69 = arith.constant 0 : index
    %72 = vector.load %arg20[%c168, %c0_69] : memref<200x64xf32, #tpu.memory_space<vmem>>, vector<8x64xf32>
    %c176 = arith.constant 176 : index
    %c0_70 = arith.constant 0 : index
    %73 = vector.load %arg20[%c176, %c0_70] : memref<200x64xf32, #tpu.memory_space<vmem>>, vector<8x64xf32>
    %c184 = arith.constant 184 : index
    %c0_71 = arith.constant 0 : index
    %74 = vector.load %arg20[%c184, %c0_71] : memref<200x64xf32, #tpu.memory_space<vmem>>, vector<8x64xf32>
    %c192 = arith.constant 192 : index
    %c0_72 = arith.constant 0 : index
    %75 = vector.load %arg20[%c192, %c0_72] : memref<200x64xf32, #tpu.memory_space<vmem>>, vector<8x64xf32>
    %76 = tpu.concatenate %60, %61, %62, %63, %64, %65, %66, %67, %68, %69, %70, %71, %72, %73, %74, %75 in 1 : vector<8x64xf32>, vector<8x64xf32>, vector<8x64xf32>, vector<8x64xf32>, vector<8x64xf32>, vector<8x64xf32>, vector<8x64xf32>, vector<8x64xf32>, vector<8x64xf32>, vector<8x64xf32>, vector<8x64xf32>, vector<8x64xf32>, vector<8x64xf32>, vector<8x64xf32>, vector<8x64xf32>, vector<8x64xf32> -> vector<8x1024xf32>
    %77 = arith.truncf %76 : vector<8x1024xf32> to vector<8x1024xbf16>
    %c0_73 = arith.constant 0 : index
    %c0_74 = arith.constant 0 : index
    %78 = vector.load %arg8[%c0_73, %c0_74] : memref<1024x512xbf16, #tpu.memory_space<vmem>>, vector<1024x512xbf16>
    %cst_75 = arith.constant dense<0.000000e+00> : vector<8x512xf32>
    %79 = tpu.matmul %77, %78, %cst_75 {dimension_numbers = #tpu.dot_dimension_numbers<[1], [0], [0], [1], [0, 0, 1, 1], [], []>} : vector<8x1024xbf16>, vector<1024x512xbf16>, vector<8x512xf32> -> vector<8x512xf32>
    %c0_76 = arith.constant 0 : index
    %c0_77 = arith.constant 0 : index
    %80 = vector.load %arg10[%c0_76, %c0_77] : memref<1x512xf32, #tpu.memory_space<vmem>>, vector<1x512xf32>
    %81 = vector.broadcast %80 : vector<1x512xf32> to vector<8x512xf32>
    %82 = arith.addf %79, %81 : vector<8x512xf32>
    %83 = tpu.iota {dimensions = array<i32: 0>} : vector<8x128xi32>
    %cst_78 = arith.constant 0.000000e+00 : f32
    %84 = vector.broadcast %cst_78 : f32 to vector<8x128xf32>
    %c0_79 = arith.constant 0 : index
    %c0_80 = arith.constant 0 : index
    %c0_81 = arith.constant 0 : index
    %85 = vector.load %arg11[%c0_79, %c0_80, %c0_81] : memref<1x1x128xf32, #tpu.memory_space<vmem>>, vector<1x1x128xf32>
    %86 = vector.shape_cast %85 : vector<1x1x128xf32> to vector<1x128xf32>
    %c0_82 = arith.constant 0 : index
    %c0_83 = arith.constant 0 : index
    %c0_84 = arith.constant 0 : index
    %87 = vector.load %arg12[%c0_82, %c0_83, %c0_84] : memref<1x1x128xf32, #tpu.memory_space<vmem>>, vector<1x1x128xf32>
    %88 = vector.shape_cast %87 : vector<1x1x128xf32> to vector<1x128xf32>
    %89 = vector.extract_strided_slice %82 {offsets = [0, 0], sizes = [1, 512], strides = [1, 1]} : vector<8x512xf32> to vector<1x512xf32>
    %c0_85 = arith.constant 0 : index
    %c0_86 = arith.constant 0 : index
    %90 = vector.load %arg9[%c0_85, %c0_86] : memref<128x512xf32, #tpu.memory_space<vmem>>, vector<128x512xf32>
    %cst_87 = arith.constant dense<0.000000e+00> : vector<1x512xf32>
    %91 = tpu.matmul %86, %90, %cst_87 {dimension_numbers = #tpu.dot_dimension_numbers<[1], [0], [0], [1], [0, 0, 1, 1], [], []>} : vector<1x128xf32>, vector<128x512xf32>, vector<1x512xf32> -> vector<1x512xf32>
    %92 = arith.addf %89, %91 : vector<1x512xf32>
    %93 = vector.extract_strided_slice %92 {offsets = [0, 0], sizes = [1, 128], strides = [1, 1]} : vector<1x512xf32> to vector<1x128xf32>
    %94 = arith.negf %93 : vector<1x128xf32>
    %95 = math.exp %94 : vector<1x128xf32>
    %cst_88 = arith.constant 1.000000e+00 : f32
    %96 = vector.broadcast %cst_88 : f32 to vector<1x128xf32>
    %97 = arith.addf %96, %95 : vector<1x128xf32>
    %98 = arith.divf %96, %97 : vector<1x128xf32>
    %99 = vector.extract_strided_slice %92 {offsets = [0, 128], sizes = [1, 128], strides = [1, 1]} : vector<1x512xf32> to vector<1x128xf32>
    %100 = arith.negf %99 : vector<1x128xf32>
    %101 = math.exp %100 : vector<1x128xf32>
    %cst_89 = arith.constant 1.000000e+00 : f32
    %102 = vector.broadcast %cst_89 : f32 to vector<1x128xf32>
    %103 = arith.addf %102, %101 : vector<1x128xf32>
    %104 = arith.divf %102, %103 : vector<1x128xf32>
    %105 = vector.extract_strided_slice %92 {offsets = [0, 256], sizes = [1, 128], strides = [1, 1]} : vector<1x512xf32> to vector<1x128xf32>
    %106 = math.tanh %105 : vector<1x128xf32>
    %107 = vector.extract_strided_slice %92 {offsets = [0, 384], sizes = [1, 128], strides = [1, 1]} : vector<1x512xf32> to vector<1x128xf32>
    %108 = arith.negf %107 : vector<1x128xf32>
    %109 = math.exp %108 : vector<1x128xf32>
    %cst_90 = arith.constant 1.000000e+00 : f32
    %110 = vector.broadcast %cst_90 : f32 to vector<1x128xf32>
    %111 = arith.addf %110, %109 : vector<1x128xf32>
    %112 = arith.divf %110, %111 : vector<1x128xf32>
    %113 = arith.mulf %104, %88 : vector<1x128xf32>
    %114 = arith.mulf %98, %106 : vector<1x128xf32>
    %115 = arith.addf %113, %114 : vector<1x128xf32>
    %116 = math.tanh %115 : vector<1x128xf32>
    %117 = arith.mulf %112, %116 : vector<1x128xf32>
    %c0_i32 = arith.constant 0 : i32
    %118 = vector.broadcast %c0_i32 : i32 to vector<8x128xi32>
    %119 = arith.cmpi eq, %83, %118 : vector<8x128xi32>
    %120 = vector.shape_cast %117 : vector<1x128xf32> to vector<1x128xf32>
    %121 = vector.broadcast %120 : vector<1x128xf32> to vector<8x128xf32>
    %122 = arith.select %119, %121, %84 : vector<8x128xi1>, vector<8x128xf32>
    %123 = vector.extract_strided_slice %82 {offsets = [1, 0], sizes = [1, 512], strides = [1, 1]} : vector<8x512xf32> to vector<1x512xf32>
    %c0_91 = arith.constant 0 : index
    %c0_92 = arith.constant 0 : index
    %124 = vector.load %arg9[%c0_91, %c0_92] : memref<128x512xf32, #tpu.memory_space<vmem>>, vector<128x512xf32>
    %cst_93 = arith.constant dense<0.000000e+00> : vector<1x512xf32>
    %125 = tpu.matmul %117, %124, %cst_93 {dimension_numbers = #tpu.dot_dimension_numbers<[1], [0], [0], [1], [0, 0, 1, 1], [], []>} : vector<1x128xf32>, vector<128x512xf32>, vector<1x512xf32> -> vector<1x512xf32>
    %126 = arith.addf %123, %125 : vector<1x512xf32>
    %127 = vector.extract_strided_slice %126 {offsets = [0, 0], sizes = [1, 128], strides = [1, 1]} : vector<1x512xf32> to vector<1x128xf32>
    %128 = arith.negf %127 : vector<1x128xf32>
    %129 = math.exp %128 : vector<1x128xf32>
    %cst_94 = arith.constant 1.000000e+00 : f32
    %130 = vector.broadcast %cst_94 : f32 to vector<1x128xf32>
    %131 = arith.addf %130, %129 : vector<1x128xf32>
    %132 = arith.divf %130, %131 : vector<1x128xf32>
    %133 = vector.extract_strided_slice %126 {offsets = [0, 128], sizes = [1, 128], strides = [1, 1]} : vector<1x512xf32> to vector<1x128xf32>
    %134 = arith.negf %133 : vector<1x128xf32>
    %135 = math.exp %134 : vector<1x128xf32>
    %cst_95 = arith.constant 1.000000e+00 : f32
    %136 = vector.broadcast %cst_95 : f32 to vector<1x128xf32>
    %137 = arith.addf %136, %135 : vector<1x128xf32>
    %138 = arith.divf %136, %137 : vector<1x128xf32>
    %139 = vector.extract_strided_slice %126 {offsets = [0, 256], sizes = [1, 128], strides = [1, 1]} : vector<1x512xf32> to vector<1x128xf32>
    %140 = math.tanh %139 : vector<1x128xf32>
    %141 = vector.extract_strided_slice %126 {offsets = [0, 384], sizes = [1, 128], strides = [1, 1]} : vector<1x512xf32> to vector<1x128xf32>
    %142 = arith.negf %141 : vector<1x128xf32>
    %143 = math.exp %142 : vector<1x128xf32>
    %cst_96 = arith.constant 1.000000e+00 : f32
    %144 = vector.broadcast %cst_96 : f32 to vector<1x128xf32>
    %145 = arith.addf %144, %143 : vector<1x128xf32>
    %146 = arith.divf %144, %145 : vector<1x128xf32>
    %147 = arith.mulf %138, %115 : vector<1x128xf32>
    %148 = arith.mulf %132, %140 : vector<1x128xf32>
    %149 = arith.addf %147, %148 : vector<1x128xf32>
    %150 = math.tanh %149 : vector<1x128xf32>
    %151 = arith.mulf %146, %150 : vector<1x128xf32>
    %c1_i32 = arith.constant 1 : i32
    %152 = vector.broadcast %c1_i32 : i32 to vector<8x128xi32>
    %153 = arith.cmpi eq, %83, %152 : vector<8x128xi32>
    %154 = vector.shape_cast %151 : vector<1x128xf32> to vector<1x128xf32>
    %155 = vector.broadcast %154 : vector<1x128xf32> to vector<8x128xf32>
    %156 = arith.select %153, %155, %122 : vector<8x128xi1>, vector<8x128xf32>
    %157 = vector.extract_strided_slice %82 {offsets = [2, 0], sizes = [1, 512], strides = [1, 1]} : vector<8x512xf32> to vector<1x512xf32>
    %c0_97 = arith.constant 0 : index
    %c0_98 = arith.constant 0 : index
    %158 = vector.load %arg9[%c0_97, %c0_98] : memref<128x512xf32, #tpu.memory_space<vmem>>, vector<128x512xf32>
    %cst_99 = arith.constant dense<0.000000e+00> : vector<1x512xf32>
    %159 = tpu.matmul %151, %158, %cst_99 {dimension_numbers = #tpu.dot_dimension_numbers<[1], [0], [0], [1], [0, 0, 1, 1], [], []>} : vector<1x128xf32>, vector<128x512xf32>, vector<1x512xf32> -> vector<1x512xf32>
    %160 = arith.addf %157, %159 : vector<1x512xf32>
    %161 = vector.extract_strided_slice %160 {offsets = [0, 0], sizes = [1, 128], strides = [1, 1]} : vector<1x512xf32> to vector<1x128xf32>
    %162 = arith.negf %161 : vector<1x128xf32>
    %163 = math.exp %162 : vector<1x128xf32>
    %cst_100 = arith.constant 1.000000e+00 : f32
    %164 = vector.broadcast %cst_100 : f32 to vector<1x128xf32>
    %165 = arith.addf %164, %163 : vector<1x128xf32>
    %166 = arith.divf %164, %165 : vector<1x128xf32>
    %167 = vector.extract_strided_slice %160 {offsets = [0, 128], sizes = [1, 128], strides = [1, 1]} : vector<1x512xf32> to vector<1x128xf32>
    %168 = arith.negf %167 : vector<1x128xf32>
    %169 = math.exp %168 : vector<1x128xf32>
    %cst_101 = arith.constant 1.000000e+00 : f32
    %170 = vector.broadcast %cst_101 : f32 to vector<1x128xf32>
    %171 = arith.addf %170, %169 : vector<1x128xf32>
    %172 = arith.divf %170, %171 : vector<1x128xf32>
    %173 = vector.extract_strided_slice %160 {offsets = [0, 256], sizes = [1, 128], strides = [1, 1]} : vector<1x512xf32> to vector<1x128xf32>
    %174 = math.tanh %173 : vector<1x128xf32>
    %175 = vector.extract_strided_slice %160 {offsets = [0, 384], sizes = [1, 128], strides = [1, 1]} : vector<1x512xf32> to vector<1x128xf32>
    %176 = arith.negf %175 : vector<1x128xf32>
    %177 = math.exp %176 : vector<1x128xf32>
    %cst_102 = arith.constant 1.000000e+00 : f32
    %178 = vector.broadcast %cst_102 : f32 to vector<1x128xf32>
    %179 = arith.addf %178, %177 : vector<1x128xf32>
    %180 = arith.divf %178, %179 : vector<1x128xf32>
    %181 = arith.mulf %172, %149 : vector<1x128xf32>
    %182 = arith.mulf %166, %174 : vector<1x128xf32>
    %183 = arith.addf %181, %182 : vector<1x128xf32>
    %184 = math.tanh %183 : vector<1x128xf32>
    %185 = arith.mulf %180, %184 : vector<1x128xf32>
    %c2_i32 = arith.constant 2 : i32
    %186 = vector.broadcast %c2_i32 : i32 to vector<8x128xi32>
    %187 = arith.cmpi eq, %83, %186 : vector<8x128xi32>
    %188 = vector.shape_cast %185 : vector<1x128xf32> to vector<1x128xf32>
    %189 = vector.broadcast %188 : vector<1x128xf32> to vector<8x128xf32>
    %190 = arith.select %187, %189, %156 : vector<8x128xi1>, vector<8x128xf32>
    %191 = vector.extract_strided_slice %82 {offsets = [3, 0], sizes = [1, 512], strides = [1, 1]} : vector<8x512xf32> to vector<1x512xf32>
    %c0_103 = arith.constant 0 : index
    %c0_104 = arith.constant 0 : index
    %192 = vector.load %arg9[%c0_103, %c0_104] : memref<128x512xf32, #tpu.memory_space<vmem>>, vector<128x512xf32>
    %cst_105 = arith.constant dense<0.000000e+00> : vector<1x512xf32>
    %193 = tpu.matmul %185, %192, %cst_105 {dimension_numbers = #tpu.dot_dimension_numbers<[1], [0], [0], [1], [0, 0, 1, 1], [], []>} : vector<1x128xf32>, vector<128x512xf32>, vector<1x512xf32> -> vector<1x512xf32>
    %194 = arith.addf %191, %193 : vector<1x512xf32>
    %195 = vector.extract_strided_slice %194 {offsets = [0, 0], sizes = [1, 128], strides = [1, 1]} : vector<1x512xf32> to vector<1x128xf32>
    %196 = arith.negf %195 : vector<1x128xf32>
    %197 = math.exp %196 : vector<1x128xf32>
    %cst_106 = arith.constant 1.000000e+00 : f32
    %198 = vector.broadcast %cst_106 : f32 to vector<1x128xf32>
    %199 = arith.addf %198, %197 : vector<1x128xf32>
    %200 = arith.divf %198, %199 : vector<1x128xf32>
    %201 = vector.extract_strided_slice %194 {offsets = [0, 128], sizes = [1, 128], strides = [1, 1]} : vector<1x512xf32> to vector<1x128xf32>
    %202 = arith.negf %201 : vector<1x128xf32>
    %203 = math.exp %202 : vector<1x128xf32>
    %cst_107 = arith.constant 1.000000e+00 : f32
    %204 = vector.broadcast %cst_107 : f32 to vector<1x128xf32>
    %205 = arith.addf %204, %203 : vector<1x128xf32>
    %206 = arith.divf %204, %205 : vector<1x128xf32>
    %207 = vector.extract_strided_slice %194 {offsets = [0, 256], sizes = [1, 128], strides = [1, 1]} : vector<1x512xf32> to vector<1x128xf32>
    %208 = math.tanh %207 : vector<1x128xf32>
    %209 = vector.extract_strided_slice %194 {offsets = [0, 384], sizes = [1, 128], strides = [1, 1]} : vector<1x512xf32> to vector<1x128xf32>
    %210 = arith.negf %209 : vector<1x128xf32>
    %211 = math.exp %210 : vector<1x128xf32>
    %cst_108 = arith.constant 1.000000e+00 : f32
    %212 = vector.broadcast %cst_108 : f32 to vector<1x128xf32>
    %213 = arith.addf %212, %211 : vector<1x128xf32>
    %214 = arith.divf %212, %213 : vector<1x128xf32>
    %215 = arith.mulf %206, %183 : vector<1x128xf32>
    %216 = arith.mulf %200, %208 : vector<1x128xf32>
    %217 = arith.addf %215, %216 : vector<1x128xf32>
    %218 = math.tanh %217 : vector<1x128xf32>
    %219 = arith.mulf %214, %218 : vector<1x128xf32>
    %c3_i32 = arith.constant 3 : i32
    %220 = vector.broadcast %c3_i32 : i32 to vector<8x128xi32>
    %221 = arith.cmpi eq, %83, %220 : vector<8x128xi32>
    %222 = vector.shape_cast %219 : vector<1x128xf32> to vector<1x128xf32>
    %223 = vector.broadcast %222 : vector<1x128xf32> to vector<8x128xf32>
    %224 = arith.select %221, %223, %190 : vector<8x128xi1>, vector<8x128xf32>
    %225 = vector.extract_strided_slice %82 {offsets = [4, 0], sizes = [1, 512], strides = [1, 1]} : vector<8x512xf32> to vector<1x512xf32>
    %c0_109 = arith.constant 0 : index
    %c0_110 = arith.constant 0 : index
    %226 = vector.load %arg9[%c0_109, %c0_110] : memref<128x512xf32, #tpu.memory_space<vmem>>, vector<128x512xf32>
    %cst_111 = arith.constant dense<0.000000e+00> : vector<1x512xf32>
    %227 = tpu.matmul %219, %226, %cst_111 {dimension_numbers = #tpu.dot_dimension_numbers<[1], [0], [0], [1], [0, 0, 1, 1], [], []>} : vector<1x128xf32>, vector<128x512xf32>, vector<1x512xf32> -> vector<1x512xf32>
    %228 = arith.addf %225, %227 : vector<1x512xf32>
    %229 = vector.extract_strided_slice %228 {offsets = [0, 0], sizes = [1, 128], strides = [1, 1]} : vector<1x512xf32> to vector<1x128xf32>
    %230 = arith.negf %229 : vector<1x128xf32>
    %231 = math.exp %230 : vector<1x128xf32>
    %cst_112 = arith.constant 1.000000e+00 : f32
    %232 = vector.broadcast %cst_112 : f32 to vector<1x128xf32>
    %233 = arith.addf %232, %231 : vector<1x128xf32>
    %234 = arith.divf %232, %233 : vector<1x128xf32>
    %235 = vector.extract_strided_slice %228 {offsets = [0, 128], sizes = [1, 128], strides = [1, 1]} : vector<1x512xf32> to vector<1x128xf32>
    %236 = arith.negf %235 : vector<1x128xf32>
    %237 = math.exp %236 : vector<1x128xf32>
    %cst_113 = arith.constant 1.000000e+00 : f32
    %238 = vector.broadcast %cst_113 : f32 to vector<1x128xf32>
    %239 = arith.addf %238, %237 : vector<1x128xf32>
    %240 = arith.divf %238, %239 : vector<1x128xf32>
    %241 = vector.extract_strided_slice %228 {offsets = [0, 256], sizes = [1, 128], strides = [1, 1]} : vector<1x512xf32> to vector<1x128xf32>
    %242 = math.tanh %241 : vector<1x128xf32>
    %243 = vector.extract_strided_slice %228 {offsets = [0, 384], sizes = [1, 128], strides = [1, 1]} : vector<1x512xf32> to vector<1x128xf32>
    %244 = arith.negf %243 : vector<1x128xf32>
    %245 = math.exp %244 : vector<1x128xf32>
    %cst_114 = arith.constant 1.000000e+00 : f32
    %246 = vector.broadcast %cst_114 : f32 to vector<1x128xf32>
    %247 = arith.addf %246, %245 : vector<1x128xf32>
    %248 = arith.divf %246, %247 : vector<1x128xf32>
    %249 = arith.mulf %240, %217 : vector<1x128xf32>
    %250 = arith.mulf %234, %242 : vector<1x128xf32>
    %251 = arith.addf %249, %250 : vector<1x128xf32>
    %252 = math.tanh %251 : vector<1x128xf32>
    %253 = arith.mulf %248, %252 : vector<1x128xf32>
    %c4_i32 = arith.constant 4 : i32
    %254 = vector.broadcast %c4_i32 : i32 to vector<8x128xi32>
    %255 = arith.cmpi eq, %83, %254 : vector<8x128xi32>
    %256 = vector.shape_cast %253 : vector<1x128xf32> to vector<1x128xf32>
    %257 = vector.broadcast %256 : vector<1x128xf32> to vector<8x128xf32>
    %258 = arith.select %255, %257, %224 : vector<8x128xi1>, vector<8x128xf32>
    %259 = vector.extract_strided_slice %82 {offsets = [5, 0], sizes = [1, 512], strides = [1, 1]} : vector<8x512xf32> to vector<1x512xf32>
    %c0_115 = arith.constant 0 : index
    %c0_116 = arith.constant 0 : index
    %260 = vector.load %arg9[%c0_115, %c0_116] : memref<128x512xf32, #tpu.memory_space<vmem>>, vector<128x512xf32>
    %cst_117 = arith.constant dense<0.000000e+00> : vector<1x512xf32>
    %261 = tpu.matmul %253, %260, %cst_117 {dimension_numbers = #tpu.dot_dimension_numbers<[1], [0], [0], [1], [0, 0, 1, 1], [], []>} : vector<1x128xf32>, vector<128x512xf32>, vector<1x512xf32> -> vector<1x512xf32>
    %262 = arith.addf %259, %261 : vector<1x512xf32>
    %263 = vector.extract_strided_slice %262 {offsets = [0, 0], sizes = [1, 128], strides = [1, 1]} : vector<1x512xf32> to vector<1x128xf32>
    %264 = arith.negf %263 : vector<1x128xf32>
    %265 = math.exp %264 : vector<1x128xf32>
    %cst_118 = arith.constant 1.000000e+00 : f32
    %266 = vector.broadcast %cst_118 : f32 to vector<1x128xf32>
    %267 = arith.addf %266, %265 : vector<1x128xf32>
    %268 = arith.divf %266, %267 : vector<1x128xf32>
    %269 = vector.extract_strided_slice %262 {offsets = [0, 128], sizes = [1, 128], strides = [1, 1]} : vector<1x512xf32> to vector<1x128xf32>
    %270 = arith.negf %269 : vector<1x128xf32>
    %271 = math.exp %270 : vector<1x128xf32>
    %cst_119 = arith.constant 1.000000e+00 : f32
    %272 = vector.broadcast %cst_119 : f32 to vector<1x128xf32>
    %273 = arith.addf %272, %271 : vector<1x128xf32>
    %274 = arith.divf %272, %273 : vector<1x128xf32>
    %275 = vector.extract_strided_slice %262 {offsets = [0, 256], sizes = [1, 128], strides = [1, 1]} : vector<1x512xf32> to vector<1x128xf32>
    %276 = math.tanh %275 : vector<1x128xf32>
    %277 = vector.extract_strided_slice %262 {offsets = [0, 384], sizes = [1, 128], strides = [1, 1]} : vector<1x512xf32> to vector<1x128xf32>
    %278 = arith.negf %277 : vector<1x128xf32>
    %279 = math.exp %278 : vector<1x128xf32>
    %cst_120 = arith.constant 1.000000e+00 : f32
    %280 = vector.broadcast %cst_120 : f32 to vector<1x128xf32>
    %281 = arith.addf %280, %279 : vector<1x128xf32>
    %282 = arith.divf %280, %281 : vector<1x128xf32>
    %283 = arith.mulf %274, %251 : vector<1x128xf32>
    %284 = arith.mulf %268, %276 : vector<1x128xf32>
    %285 = arith.addf %283, %284 : vector<1x128xf32>
    %286 = math.tanh %285 : vector<1x128xf32>
    %287 = arith.mulf %282, %286 : vector<1x128xf32>
    %c5_i32 = arith.constant 5 : i32
    %288 = vector.broadcast %c5_i32 : i32 to vector<8x128xi32>
    %289 = arith.cmpi eq, %83, %288 : vector<8x128xi32>
    %290 = vector.shape_cast %287 : vector<1x128xf32> to vector<1x128xf32>
    %291 = vector.broadcast %290 : vector<1x128xf32> to vector<8x128xf32>
    %292 = arith.select %289, %291, %258 : vector<8x128xi1>, vector<8x128xf32>
    %293 = vector.extract_strided_slice %82 {offsets = [6, 0], sizes = [1, 512], strides = [1, 1]} : vector<8x512xf32> to vector<1x512xf32>
    %c0_121 = arith.constant 0 : index
    %c0_122 = arith.constant 0 : index
    %294 = vector.load %arg9[%c0_121, %c0_122] : memref<128x512xf32, #tpu.memory_space<vmem>>, vector<128x512xf32>
    %cst_123 = arith.constant dense<0.000000e+00> : vector<1x512xf32>
    %295 = tpu.matmul %287, %294, %cst_123 {dimension_numbers = #tpu.dot_dimension_numbers<[1], [0], [0], [1], [0, 0, 1, 1], [], []>} : vector<1x128xf32>, vector<128x512xf32>, vector<1x512xf32> -> vector<1x512xf32>
    %296 = arith.addf %293, %295 : vector<1x512xf32>
    %297 = vector.extract_strided_slice %296 {offsets = [0, 0], sizes = [1, 128], strides = [1, 1]} : vector<1x512xf32> to vector<1x128xf32>
    %298 = arith.negf %297 : vector<1x128xf32>
    %299 = math.exp %298 : vector<1x128xf32>
    %cst_124 = arith.constant 1.000000e+00 : f32
    %300 = vector.broadcast %cst_124 : f32 to vector<1x128xf32>
    %301 = arith.addf %300, %299 : vector<1x128xf32>
    %302 = arith.divf %300, %301 : vector<1x128xf32>
    %303 = vector.extract_strided_slice %296 {offsets = [0, 128], sizes = [1, 128], strides = [1, 1]} : vector<1x512xf32> to vector<1x128xf32>
    %304 = arith.negf %303 : vector<1x128xf32>
    %305 = math.exp %304 : vector<1x128xf32>
    %cst_125 = arith.constant 1.000000e+00 : f32
    %306 = vector.broadcast %cst_125 : f32 to vector<1x128xf32>
    %307 = arith.addf %306, %305 : vector<1x128xf32>
    %308 = arith.divf %306, %307 : vector<1x128xf32>
    %309 = vector.extract_strided_slice %296 {offsets = [0, 256], sizes = [1, 128], strides = [1, 1]} : vector<1x512xf32> to vector<1x128xf32>
    %310 = math.tanh %309 : vector<1x128xf32>
    %311 = vector.extract_strided_slice %296 {offsets = [0, 384], sizes = [1, 128], strides = [1, 1]} : vector<1x512xf32> to vector<1x128xf32>
    %312 = arith.negf %311 : vector<1x128xf32>
    %313 = math.exp %312 : vector<1x128xf32>
    %cst_126 = arith.constant 1.000000e+00 : f32
    %314 = vector.broadcast %cst_126 : f32 to vector<1x128xf32>
    %315 = arith.addf %314, %313 : vector<1x128xf32>
    %316 = arith.divf %314, %315 : vector<1x128xf32>
    %317 = arith.mulf %308, %285 : vector<1x128xf32>
    %318 = arith.mulf %302, %310 : vector<1x128xf32>
    %319 = arith.addf %317, %318 : vector<1x128xf32>
    %320 = math.tanh %319 : vector<1x128xf32>
    %321 = arith.mulf %316, %320 : vector<1x128xf32>
    %c6_i32 = arith.constant 6 : i32
    %322 = vector.broadcast %c6_i32 : i32 to vector<8x128xi32>
    %323 = arith.cmpi eq, %83, %322 : vector<8x128xi32>
    %324 = vector.shape_cast %321 : vector<1x128xf32> to vector<1x128xf32>
    %325 = vector.broadcast %324 : vector<1x128xf32> to vector<8x128xf32>
    %326 = arith.select %323, %325, %292 : vector<8x128xi1>, vector<8x128xf32>
    %327 = vector.extract_strided_slice %82 {offsets = [7, 0], sizes = [1, 512], strides = [1, 1]} : vector<8x512xf32> to vector<1x512xf32>
    %c0_127 = arith.constant 0 : index
    %c0_128 = arith.constant 0 : index
    %328 = vector.load %arg9[%c0_127, %c0_128] : memref<128x512xf32, #tpu.memory_space<vmem>>, vector<128x512xf32>
    %cst_129 = arith.constant dense<0.000000e+00> : vector<1x512xf32>
    %329 = tpu.matmul %321, %328, %cst_129 {dimension_numbers = #tpu.dot_dimension_numbers<[1], [0], [0], [1], [0, 0, 1, 1], [], []>} : vector<1x128xf32>, vector<128x512xf32>, vector<1x512xf32> -> vector<1x512xf32>
    %330 = arith.addf %327, %329 : vector<1x512xf32>
    %331 = vector.extract_strided_slice %330 {offsets = [0, 0], sizes = [1, 128], strides = [1, 1]} : vector<1x512xf32> to vector<1x128xf32>
    %332 = arith.negf %331 : vector<1x128xf32>
    %333 = math.exp %332 : vector<1x128xf32>
    %cst_130 = arith.constant 1.000000e+00 : f32
    %334 = vector.broadcast %cst_130 : f32 to vector<1x128xf32>
    %335 = arith.addf %334, %333 : vector<1x128xf32>
    %336 = arith.divf %334, %335 : vector<1x128xf32>
    %337 = vector.extract_strided_slice %330 {offsets = [0, 128], sizes = [1, 128], strides = [1, 1]} : vector<1x512xf32> to vector<1x128xf32>
    %338 = arith.negf %337 : vector<1x128xf32>
    %339 = math.exp %338 : vector<1x128xf32>
    %cst_131 = arith.constant 1.000000e+00 : f32
    %340 = vector.broadcast %cst_131 : f32 to vector<1x128xf32>
    %341 = arith.addf %340, %339 : vector<1x128xf32>
    %342 = arith.divf %340, %341 : vector<1x128xf32>
    %343 = vector.extract_strided_slice %330 {offsets = [0, 256], sizes = [1, 128], strides = [1, 1]} : vector<1x512xf32> to vector<1x128xf32>
    %344 = math.tanh %343 : vector<1x128xf32>
    %345 = vector.extract_strided_slice %330 {offsets = [0, 384], sizes = [1, 128], strides = [1, 1]} : vector<1x512xf32> to vector<1x128xf32>
    %346 = arith.negf %345 : vector<1x128xf32>
    %347 = math.exp %346 : vector<1x128xf32>
    %cst_132 = arith.constant 1.000000e+00 : f32
    %348 = vector.broadcast %cst_132 : f32 to vector<1x128xf32>
    %349 = arith.addf %348, %347 : vector<1x128xf32>
    %350 = arith.divf %348, %349 : vector<1x128xf32>
    %351 = arith.mulf %342, %319 : vector<1x128xf32>
    %352 = arith.mulf %336, %344 : vector<1x128xf32>
    %353 = arith.addf %351, %352 : vector<1x128xf32>
    %354 = math.tanh %353 : vector<1x128xf32>
    %355 = arith.mulf %350, %354 : vector<1x128xf32>
    %c7_i32 = arith.constant 7 : i32
    %356 = vector.broadcast %c7_i32 : i32 to vector<8x128xi32>
    %357 = arith.cmpi eq, %83, %356 : vector<8x128xi32>
    %358 = vector.shape_cast %355 : vector<1x128xf32> to vector<1x128xf32>
    %359 = vector.broadcast %358 : vector<1x128xf32> to vector<8x128xf32>
    %360 = arith.select %357, %359, %326 : vector<8x128xi1>, vector<8x128xf32>
    %361 = arith.truncf %360 : vector<8x128xf32> to vector<8x128xbf16>
    %c0_133 = arith.constant 0 : index
    %c0_134 = arith.constant 0 : index
    %362 = vector.load %arg13[%c0_133, %c0_134] : memref<128x128xbf16, #tpu.memory_space<vmem>>, vector<128x128xbf16>
    %cst_135 = arith.constant dense<0.000000e+00> : vector<8x128xf32>
    %363 = tpu.matmul %361, %362, %cst_135 {dimension_numbers = #tpu.dot_dimension_numbers<[1], [0], [0], [1], [0, 0, 1, 1], [], []>} : vector<8x128xbf16>, vector<128x128xbf16>, vector<8x128xf32> -> vector<8x128xf32>
    %c0_136 = arith.constant 0 : index
    %c0_137 = arith.constant 0 : index
    %364 = vector.load %arg14[%c0_136, %c0_137] : memref<1x128xf32, #tpu.memory_space<vmem>>, vector<1x128xf32>
    %365 = vector.broadcast %364 : vector<1x128xf32> to vector<8x128xf32>
    %366 = arith.addf %363, %365 : vector<8x128xf32>
    %cst_138 = arith.constant 0.000000e+00 : f32
    %367 = vector.broadcast %cst_138 : f32 to vector<8x128xf32>
    %368 = arith.maximumf %366, %367 : vector<8x128xf32>
    %369 = arith.truncf %368 : vector<8x128xf32> to vector<8x128xbf16>
    %c0_139 = arith.constant 0 : index
    %c0_140 = arith.constant 0 : index
    %370 = vector.load %arg15[%c0_139, %c0_140] : memref<128x128xbf16, #tpu.memory_space<vmem>>, vector<128x128xbf16>
    %cst_141 = arith.constant dense<0.000000e+00> : vector<8x128xf32>
    %371 = tpu.matmul %369, %370, %cst_141 {dimension_numbers = #tpu.dot_dimension_numbers<[1], [0], [0], [1], [0, 0, 1, 1], [], []>} : vector<8x128xbf16>, vector<128x128xbf16>, vector<8x128xf32> -> vector<8x128xf32>
    %c0_142 = arith.constant 0 : index
    %c0_143 = arith.constant 0 : index
    %372 = vector.load %arg16[%c0_142, %c0_143] : memref<1x128xf32, #tpu.memory_space<vmem>>, vector<1x128xf32>
    %373 = vector.broadcast %372 : vector<1x128xf32> to vector<8x128xf32>
    %374 = arith.addf %371, %373 : vector<8x128xf32>
    %375 = tpu.iota {dimensions = array<i32: 1>} : vector<8x128xi32>
    %c7_i32_144 = arith.constant 7 : i32
    %376 = vector.broadcast %c7_i32_144 : i32 to vector<8x128xi32>
    %377 = arith.cmpi slt, %375, %376 : vector<8x128xi32>
    %cst_145 = arith.constant -1.000000e+30 : f32
    %378 = vector.broadcast %cst_145 : f32 to vector<8x128xf32>
    %379 = arith.select %377, %374, %378 : vector<8x128xi1>, vector<8x128xf32>
    %cst_146 = arith.constant dense<0xFF800000> : vector<8xf32>
    %380 = vector.multi_reduction <maximumf>, %379, %cst_146 [1] : vector<8x128xf32> to vector<8xf32>
    %381 = vector.shape_cast %380 : vector<8xf32> to vector<8x1xf32>
    %382 = vector.broadcast %381 : vector<8x1xf32> to vector<8x128xf32>
    %383 = arith.subf %374, %382 : vector<8x128xf32>
    %384 = math.exp %383 : vector<8x128xf32>
    %cst_147 = arith.constant 0.000000e+00 : f32
    %385 = vector.broadcast %cst_147 : f32 to vector<8x128xf32>
    %386 = arith.select %377, %384, %385 : vector<8x128xi1>, vector<8x128xf32>
    %cst_148 = arith.constant dense<0.000000e+00> : vector<8xf32>
    %387 = vector.multi_reduction <add>, %386, %cst_148 [1] : vector<8x128xf32> to vector<8xf32>
    %388 = vector.shape_cast %387 : vector<8xf32> to vector<8x1xf32>
    %389 = vector.broadcast %388 : vector<8x1xf32> to vector<8x128xf32>
    %390 = arith.divf %386, %389 : vector<8x128xf32>
    %c7_i32_149 = arith.constant 7 : i32
    %391 = vector.broadcast %c7_i32_149 : i32 to vector<8x128xi32>
    %392 = arith.cmpi eq, %375, %391 : vector<8x128xi32>
    %393 = arith.select %392, %374, %390 : vector<8x128xi1>, vector<8x128xf32>
    %c0_150 = arith.constant 0 : index
    %c0_151 = arith.constant 0 : index
    %c0_152 = arith.constant 0 : index
    %394 = vector.load %arg17[%c0_150, %c0_151, %c0_152] : memref<1x16x128xf32, #tpu.memory_space<vmem>>, vector<1x8x128xf32>
    %395 = vector.shape_cast %394 : vector<1x8x128xf32> to vector<8x128xf32>
    %396 = vector.shape_cast %393 : vector<8x128xf32> to vector<1x8x128xf32>
    tpu.vector_store %arg17[%c0_150, %c0_151, %c0_152], %396 {strides = array<i32>} : memref<1x16x128xf32, #tpu.memory_space<vmem>>, vector<1x8x128xf32>,
    %c0_153 = arith.constant 0 : index
    %c8_154 = arith.constant 8 : index
    %c0_155 = arith.constant 0 : index
    %397 = vector.load %arg17[%c0_153, %c8_154, %c0_155] : memref<1x16x128xf32, #tpu.memory_space<vmem>>, vector<1x1x128xf32>
    %398 = vector.shape_cast %397 : vector<1x1x128xf32> to vector<1x128xf32>
    %399 = vector.shape_cast %355 : vector<1x128xf32> to vector<1x1x128xf32>
    tpu.vector_store %arg17[%c0_153, %c8_154, %c0_155], %399 {strides = array<i32>} : memref<1x16x128xf32, #tpu.memory_space<vmem>>, vector<1x1x128xf32>,
    %c0_156 = arith.constant 0 : index
    %c9 = arith.constant 9 : index
    %c0_157 = arith.constant 0 : index
    %400 = vector.load %arg17[%c0_156, %c9, %c0_157] : memref<1x16x128xf32, #tpu.memory_space<vmem>>, vector<1x1x128xf32>
    %401 = vector.shape_cast %400 : vector<1x1x128xf32> to vector<1x128xf32>
    %402 = vector.shape_cast %353 : vector<1x128xf32> to vector<1x1x128xf32>
    tpu.vector_store %arg17[%c0_156, %c9, %c0_157], %402 {strides = array<i32>} : memref<1x16x128xf32, #tpu.memory_space<vmem>>, vector<1x1x128xf32>,
    %cst_158 = arith.constant 0.000000e+00 : f32
    %403 = vector.broadcast %cst_158 : f32 to vector<6x128xf32>
    %c0_159 = arith.constant 0 : index
    %c10 = arith.constant 10 : index
    %c0_160 = arith.constant 0 : index
    %404 = vector.load %arg17[%c0_159, %c10, %c0_160] : memref<1x16x128xf32, #tpu.memory_space<vmem>>, vector<1x6x128xf32>
    %405 = vector.shape_cast %404 : vector<1x6x128xf32> to vector<6x128xf32>
    %406 = vector.shape_cast %403 : vector<6x128xf32> to vector<1x6x128xf32>
    tpu.vector_store %arg17[%c0_159, %c10, %c0_160], %406 {strides = array<i32>} : memref<1x16x128xf32, #tpu.memory_space<vmem>>, vector<1x6x128xf32>,
    return
  }
  func.func @transform_0(%arg0: i32) -> (i32, i32, i32) {
    %c0_i32 = arith.constant 0 : i32
    %c0_i32_0 = arith.constant 0 : i32
    %c0_i32_1 = arith.constant 0 : i32
    return %arg0, %c0_i32, %c0_i32_0 : i32, i32, i32
  }
  func.func @transform_1(%arg0: i32) -> (i32, i32) {
    %c0_i32 = arith.constant 0 : i32
    %c0_i32_0 = arith.constant 0 : i32
    %c0_i32_1 = arith.constant 0 : i32
    return %c0_i32, %c0_i32_0 : i32, i32
  }
  func.func @transform_2(%arg0: i32) -> (i32, i32) {
    %c0_i32 = arith.constant 0 : i32
    %c0_i32_0 = arith.constant 0 : i32
    %c0_i32_1 = arith.constant 0 : i32
    return %c0_i32, %c0_i32_0 : i32, i32
  }
  func.func @transform_3(%arg0: i32) -> (i32, i32) {
    %c0_i32 = arith.constant 0 : i32
    %c0_i32_0 = arith.constant 0 : i32
    %c0_i32_1 = arith.constant 0 : i32
    return %c0_i32, %c0_i32_0 : i32, i32
  }
  func.func @transform_4(%arg0: i32) -> (i32, i32) {
    %c0_i32 = arith.constant 0 : i32
    %c0_i32_0 = arith.constant 0 : i32
    %c0_i32_1 = arith.constant 0 : i32
    return %c0_i32, %c0_i32_0 : i32, i32
  }
  func.func @transform_5(%arg0: i32) -> (i32, i32) {
    %c0_i32 = arith.constant 0 : i32
    %c0_i32_0 = arith.constant 0 : i32
    %c0_i32_1 = arith.constant 0 : i32
    return %c0_i32, %c0_i32_0 : i32, i32
  }
  func.func @transform_6(%arg0: i32) -> (i32, i32) {
    %c0_i32 = arith.constant 0 : i32
    %c0_i32_0 = arith.constant 0 : i32
    %c0_i32_1 = arith.constant 0 : i32
    return %c0_i32, %c0_i32_0 : i32, i32
  }
  func.func @transform_7(%arg0: i32) -> (i32, i32) {
    %c0_i32 = arith.constant 0 : i32
    %c0_i32_0 = arith.constant 0 : i32
    %c0_i32_1 = arith.constant 0 : i32
    return %c0_i32, %c0_i32_0 : i32, i32
  }
  func.func @transform_8(%arg0: i32) -> (i32, i32) {
    %c0_i32 = arith.constant 0 : i32
    %c0_i32_0 = arith.constant 0 : i32
    %c0_i32_1 = arith.constant 0 : i32
    return %c0_i32, %c0_i32_0 : i32, i32
  }
  func.func @transform_9(%arg0: i32) -> (i32, i32) {
    %c0_i32 = arith.constant 0 : i32
    %c0_i32_0 = arith.constant 0 : i32
    %c0_i32_1 = arith.constant 0 : i32
    return %c0_i32, %c0_i32_0 : i32, i32
  }
  func.func @transform_10(%arg0: i32) -> (i32, i32, i32) {
    %c0_i32 = arith.constant 0 : i32
    %c0_i32_0 = arith.constant 0 : i32
    %c0_i32_1 = arith.constant 0 : i32
    return %arg0, %c0_i32, %c0_i32_0 : i32, i32, i32
  }
  func.func @transform_11(%arg0: i32) -> (i32, i32, i32) {
    %c0_i32 = arith.constant 0 : i32
    %c0_i32_0 = arith.constant 0 : i32
    %c0_i32_1 = arith.constant 0 : i32
    return %arg0, %c0_i32, %c0_i32_0 : i32, i32, i32
  }
  func.func @transform_12(%arg0: i32) -> (i32, i32) {
    %c0_i32 = arith.constant 0 : i32
    %c0_i32_0 = arith.constant 0 : i32
    %c0_i32_1 = arith.constant 0 : i32
    return %c0_i32, %c0_i32_0 : i32, i32
  }
  func.func @transform_13(%arg0: i32) -> (i32, i32) {
    %c0_i32 = arith.constant 0 : i32
    %c0_i32_0 = arith.constant 0 : i32
    %c0_i32_1 = arith.constant 0 : i32
    return %c0_i32, %c0_i32_0 : i32, i32
  }
  func.func @transform_14(%arg0: i32) -> (i32, i32) {
    %c0_i32 = arith.constant 0 : i32
    %c0_i32_0 = arith.constant 0 : i32
    %c0_i32_1 = arith.constant 0 : i32
    return %c0_i32, %c0_i32_0 : i32, i32
  }
  func.func @transform_15(%arg0: i32) -> (i32, i32) {
    %c0_i32 = arith.constant 0 : i32
    %c0_i32_0 = arith.constant 0 : i32
    %c0_i32_1 = arith.constant 0 : i32
    return %c0_i32, %c0_i32_0 : i32, i32
  }
  func.func @transform_16(%arg0: i32) -> (i32, i32, i32) {
    %c0_i32 = arith.constant 0 : i32
    %c0_i32_0 = arith.constant 0 : i32
    %c0_i32_1 = arith.constant 0 : i32
    return %arg0, %c0_i32, %c0_i32_0 : i32, i32, i32
  }
}

</mosaic_0001>

<llo_original>
// kernel: ac_model_forward_batched.1
$region0: #{ac_model_forward_batched.1}
  #allocation0 [shape = 'u32[]', space=smem, size = 0x4, offset = 0x4, fixed_abs, tag = 'smem constant byte address 0x4 - core index']
  #allocation1 [shape = 'u32[144,128]{1,0:T(1,128)}', space=vmem, size = 0x12000, scoped, tag = 'internal scratch']
  #allocation2 [shape = 'f32[328,16]{1,0:T(8,128)}', space=vmem, size = 0x29000, scoped, tag = 'scratch operand']
  #allocation3 [shape = 'f32[264,32]{1,0:T(8,128)}', space=vmem, size = 0x21000, scoped, tag = 'scratch operand']
  #allocation4 [shape = 'f32[200,64]{1,0:T(8,128)}', space=vmem, size = 0x19000, scoped, tag = 'scratch operand']
  %s0 = inlined_call_operand.vmem [shape: bf16[4,328,12], index: 0, kind: input, shape index: {}]
  %s1 = inlined_call_operand.vmem [shape: bf16[12,16], index: 1, kind: input, shape index: {}]
  %s2 = inlined_call_operand.vmem [shape: f32[1,16], index: 2, kind: input, shape index: {}]
  %s3 = inlined_call_operand.vmem [shape: bf16[64,32], index: 3, kind: input, shape index: {}]
  %s4 = inlined_call_operand.vmem [shape: f32[1,32], index: 4, kind: input, shape index: {}]
  %s5 = inlined_call_operand.vmem [shape: bf16[128,64], index: 5, kind: input, shape index: {}]
  %s6 = inlined_call_operand.vmem [shape: f32[1,64], index: 6, kind: input, shape index: {}]
  %s7 = inlined_call_operand.vmem [shape: bf16[1024,512], index: 7, kind: input, shape index: {}]
  %s8 = inlined_call_operand.vmem [shape: f32[128,512], index: 8, kind: input, shape index: {}]
  %s9 = inlined_call_operand.vmem [shape: f32[1,512], index: 9, kind: input, shape index: {}]
  %s10 = inlined_call_operand.vmem [shape: f32[4,1,128], index: 10, kind: input, shape index: {}]
  %s11 = inlined_call_operand.vmem [shape: f32[4,1,128], index: 11, kind: input, shape index: {}]
  %s12 = inlined_call_operand.vmem [shape: bf16[128,128], index: 12, kind: input, shape index: {}]
  %s13 = inlined_call_operand.vmem [shape: f32[1,128], index: 13, kind: input, shape index: {}]
  %s14 = inlined_call_operand.vmem [shape: bf16[128,128], index: 14, kind: input, shape index: {}]
  %s15 = inlined_call_operand.vmem [shape: f32[1,128], index: 15, kind: input, shape index: {}]
  %s16 = inlined_call_operand.vmem [shape: f32[4,16,128], index: 16, kind: output, shape index: {}]
  %s17 = sld [smem:[#allocation0]]
  $region97: #{ac_model_forward_batched.1} parent=0
    _
  %s19 = ssub.s32 1, %s17
  %s20 = scalar_select 0, %s19, %s17
  loop: start=0, step=1, limit=6
  $region2: #{ac_model_forward_batched.1} parent=0 // loop_pre_header
    _
  $region3: #{ac_model_forward_batched.1} parent=0 // loop_header
    %s22 = sphi 0, %s26
    %p23 = scmp.ge.s32.totalorder %s22, 6
    %s32 = sphi 0, %s34
    %s35 = sphi 0, %s32
    %s36 = sphi 0, %s35
    %s52 = sphi 0, %s36
    %s56 = sphi 0, %s56
    %s58 = sphi 0, %s56
    %s59 = sphi 0, %s58
    %s73 = sphi 0, %s59
    %s77 = sphi 0, %s77
    %s79 = sphi 0, %s77
    %s80 = sphi 0, %s79
    %s94 = sphi 0, %s80
    %s98 = sphi 0, %s98
    %s100 = sphi 0, %s98
    %s101 = sphi 0, %s100
    %s115 = sphi 0, %s101
    %s119 = sphi 0, %s119
    %s121 = sphi 0, %s119
    %s122 = sphi 0, %s121
    %s136 = sphi 0, %s122
    %s140 = sphi 0, %s140
    %s142 = sphi 0, %s140
    %s143 = sphi 0, %s142
    %s157 = sphi 0, %s143
    %s161 = sphi 0, %s161
    %s163 = sphi 0, %s161
    %s164 = sphi 0, %s163
    %s178 = sphi 0, %s164
    %s182 = sphi 0, %s182
    %s184 = sphi 0, %s182
    %s185 = sphi 0, %s184
    %s199 = sphi 0, %s185
    %s203 = sphi 0, %s203
    %s205 = sphi 0, %s203
    %s206 = sphi 0, %s205
    %s220 = sphi 0, %s206
    %s224 = sphi 0, %s224
    %s226 = sphi 0, %s224
    %s227 = sphi 0, %s226
    %s241 = sphi 0, %s227
    %s247 = sphi 0, %s249
    %s250 = sphi 0, %s247
    %s251 = sphi 0, %s250
    %s267 = sphi 0, %s251
    %s273 = sphi 0, %s275
    %s276 = sphi 0, %s273
    %s277 = sphi 0, %s276
    %s293 = sphi 0, %s277
    %s297 = sphi 0, %s297
    %s299 = sphi 0, %s297
    %s300 = sphi 0, %s299
    %s314 = sphi 0, %s300
    %s318 = sphi 0, %s318
    %s320 = sphi 0, %s318
    %s321 = sphi 0, %s320
    %s335 = sphi 0, %s321
    %s339 = sphi 0, %s339
    %s341 = sphi 0, %s339
    %s342 = sphi 0, %s341
    %s356 = sphi 0, %s342
    %s360 = sphi 0, %s360
    %s362 = sphi 0, %s360
    %s363 = sphi 0, %s362
    %s377 = sphi 0, %s363
    %s383 = sphi 0, %s385
    %s386 = sphi 0, %s383
    %s387 = sphi 0, %s386
    %s403 = sphi 0, %s387
  $region4: #{ac_model_forward_batched.1} parent=0 // loop_header_branch
    %25 = sbr.rel (%p23) target = $region8
  $region5: #{ac_model_forward_batched.1} parent=0 // loop_body
    %s27 = ssub.s32 %s22, 1
    %s28 = ssub.s32 %s22, 2
    %s29 = sadd.s32 %s22, 1
    %s30 = ssub.s32 %s22, %s29
    %p31 = scmp.eq.s32.totalorder %s30, 0
    %s33 = sadd.s32 %s32, 1
    %s34 = scalar_select %p31, %s32, %s33
    %p37 = pneg %p31
    %p38 = scmp.eq.s32.totalorder %s22, 3
    %p39 = por %p37, %p38
    %p40 = scmp.ne.s32.totalorder %s32, %s35
    %p41 = scmp.eq.s32.totalorder %s22, 0
    %p42 = por %p40, %p41
    %p43 = scmp.ne.s32.totalorder %s32, %s35
    %p44 = scmp.eq.s32.totalorder %s27, 3
    %p45 = por %p43, %p44
    %p46 = scmp.ne.s32.totalorder %s35, %s36
    %p47 = scmp.eq.s32.totalorder %s27, 0
    %p48 = por %p46, %p47
    %p49 = scmp.ne.s32.totalorder %s35, %s36
    %p50 = scmp.eq.s32.totalorder %s28, 3
    %p51 = por %p49, %p50
    %p53 = scmp.ne.s32.totalorder %s36, %s52
    %p54 = scmp.eq.s32.totalorder %s28, 0
    %p55 = por %p53, %p54
    %s57 = sadd.s32 %s56, 1
    %p60 = scmp.eq.s32.totalorder %s22, 3
    %p61 = scmp.ne.s32.totalorder %s56, %s58
    %p62 = scmp.eq.s32.totalorder %s22, 0
    %p63 = por %p61, %p62
    %p64 = scmp.ne.s32.totalorder %s56, %s58
    %p65 = scmp.eq.s32.totalorder %s27, 3
    %p66 = por %p64, %p65
    %p67 = scmp.ne.s32.totalorder %s58, %s59
    %p68 = scmp.eq.s32.totalorder %s27, 0
    %p69 = por %p67, %p68
    %p70 = scmp.ne.s32.totalorder %s58, %s59
    %p71 = scmp.eq.s32.totalorder %s28, 3
    %p72 = por %p70, %p71
    %p74 = scmp.ne.s32.totalorder %s59, %s73
    %p75 = scmp.eq.s32.totalorder %s28, 0
    %p76 = por %p74, %p75
    %s78 = sadd.s32 %s77, 1
    %p81 = scmp.eq.s32.totalorder %s22, 3
    %p82 = scmp.ne.s32.totalorder %s77, %s79
    %p83 = scmp.eq.s32.totalorder %s22, 0
    %p84 = por %p82, %p83
    %p85 = scmp.ne.s32.totalorder %s77, %s79
    %p86 = scmp.eq.s32.totalorder %s27, 3
    %p87 = por %p85, %p86
    %p88 = scmp.ne.s32.totalorder %s79, %s80
    %p89 = scmp.eq.s32.totalorder %s27, 0
    %p90 = por %p88, %p89
    %p91 = scmp.ne.s32.totalorder %s79, %s80
    %p92 = scmp.eq.s32.totalorder %s28, 3
    %p93 = por %p91, %p92
    %p95 = scmp.ne.s32.totalorder %s80, %s94
    %p96 = scmp.eq.s32.totalorder %s28, 0
    %p97 = por %p95, %p96
    %s99 = sadd.s32 %s98, 1
    %p102 = scmp.eq.s32.totalorder %s22, 3
    %p103 = scmp.ne.s32.totalorder %s98, %s100
    %p104 = scmp.eq.s32.totalorder %s22, 0
    %p105 = por %p103, %p104
    %p106 = scmp.ne.s32.totalorder %s98, %s100
    %p107 = scmp.eq.s32.totalorder %s27, 3
    %p108 = por %p106, %p107
    %p109 = scmp.ne.s32.totalorder %s100, %s101
    %p110 = scmp.eq.s32.totalorder %s27, 0
    %p111 = por %p109, %p110
    %p112 = scmp.ne.s32.totalorder %s100, %s101
    %p113 = scmp.eq.s32.totalorder %s28, 3
    %p114 = por %p112, %p113
    %p116 = scmp.ne.s32.totalorder %s101, %s115
    %p117 = scmp.eq.s32.totalorder %s28, 0
    %p118 = por %p116, %p117
    %s120 = sadd.s32 %s119, 1
    %p123 = scmp.eq.s32.totalorder %s22, 3
    %p124 = scmp.ne.s32.totalorder %s119, %s121
    %p125 = scmp.eq.s32.totalorder %s22, 0
    %p126 = por %p124, %p125
    %p127 = scmp.ne.s32.totalorder %s119, %s121
    %p128 = scmp.eq.s32.totalorder %s27, 3
    %p129 = por %p127, %p128
    %p130 = scmp.ne.s32.totalorder %s121, %s122
    %p131 = scmp.eq.s32.totalorder %s27, 0
    %p132 = por %p130, %p131
    %p133 = scmp.ne.s32.totalorder %s121, %s122
    %p134 = scmp.eq.s32.totalorder %s28, 3
    %p135 = por %p133, %p134
    %p137 = scmp.ne.s32.totalorder %s122, %s136
    %p138 = scmp.eq.s32.totalorder %s28, 0
    %p139 = por %p137, %p138
    %s141 = sadd.s32 %s140, 1
    %p144 = scmp.eq.s32.totalorder %s22, 3
    %p145 = scmp.ne.s32.totalorder %s140, %s142
    %p146 = scmp.eq.s32.totalorder %s22, 0
    %p147 = por %p145, %p146
    %p148 = scmp.ne.s32.totalorder %s140, %s142
    %p149 = scmp.eq.s32.totalorder %s27, 3
    %p150 = por %p148, %p149
    %p151 = scmp.ne.s32.totalorder %s142, %s143
    %p152 = scmp.eq.s32.totalorder %s27, 0
    %p153 = por %p151, %p152
    %p154 = scmp.ne.s32.totalorder %s142, %s143
    %p155 = scmp.eq.s32.totalorder %s28, 3
    %p156 = por %p154, %p155
    %p158 = scmp.ne.s32.totalorder %s143, %s157
    %p159 = scmp.eq.s32.totalorder %s28, 0
    %p160 = por %p158, %p159
    %s162 = sadd.s32 %s161, 1
    %p165 = scmp.eq.s32.totalorder %s22, 3
    %p166 = scmp.ne.s32.totalorder %s161, %s163
    %p167 = scmp.eq.s32.totalorder %s22, 0
    %p168 = por %p166, %p167
    %p169 = scmp.ne.s32.totalorder %s161, %s163
    %p170 = scmp.eq.s32.totalorder %s27, 3
    %p171 = por %p169, %p170
    %p172 = scmp.ne.s32.totalorder %s163, %s164
    %p173 = scmp.eq.s32.totalorder %s27, 0
    %p174 = por %p172, %p173
    %p175 = scmp.ne.s32.totalorder %s163, %s164
    %p176 = scmp.eq.s32.totalorder %s28, 3
    %p177 = por %p175, %p176
    %p179 = scmp.ne.s32.totalorder %s164, %s178
    %p180 = scmp.eq.s32.totalorder %s28, 0
    %p181 = por %p179, %p180
    %s183 = sadd.s32 %s182, 1
    %p186 = scmp.eq.s32.totalorder %s22, 3
    %p187 = scmp.ne.s32.totalorder %s182, %s184
    %p188 = scmp.eq.s32.totalorder %s22, 0
    %p189 = por %p187, %p188
    %p190 = scmp.ne.s32.totalorder %s182, %s184
    %p191 = scmp.eq.s32.totalorder %s27, 3
    %p192 = por %p190, %p191
    %p193 = scmp.ne.s32.totalorder %s184, %s185
    %p194 = scmp.eq.s32.totalorder %s27, 0
    %p195 = por %p193, %p194
    %p196 = scmp.ne.s32.totalorder %s184, %s185
    %p197 = scmp.eq.s32.totalorder %s28, 3
    %p198 = por %p196, %p197
    %p200 = scmp.ne.s32.totalorder %s185, %s199
    %p201 = scmp.eq.s32.totalorder %s28, 0
    %p202 = por %p200, %p201
    %s204 = sadd.s32 %s203, 1
    %p207 = scmp.eq.s32.totalorder %s22, 3
    %p208 = scmp.ne.s32.totalorder %s203, %s205
    %p209 = scmp.eq.s32.totalorder %s22, 0
    %p210 = por %p208, %p209
    %p211 = scmp.ne.s32.totalorder %s203, %s205
    %p212 = scmp.eq.s32.totalorder %s27, 3
    %p213 = por %p211, %p212
    %p214 = scmp.ne.s32.totalorder %s205, %s206
    %p215 = scmp.eq.s32.totalorder %s27, 0
    %p216 = por %p214, %p215
    %p217 = scmp.ne.s32.totalorder %s205, %s206
    %p218 = scmp.eq.s32.totalorder %s28, 3
    %p219 = por %p217, %p218
    %p221 = scmp.ne.s32.totalorder %s206, %s220
    %p222 = scmp.eq.s32.totalorder %s28, 0
    %p223 = por %p221, %p222
    %s225 = sadd.s32 %s224, 1
    %p228 = scmp.eq.s32.totalorder %s22, 3
    %p229 = scmp.ne.s32.totalorder %s224, %s226
    %p230 = scmp.eq.s32.totalorder %s22, 0
    %p231 = por %p229, %p230
    %p232 = scmp.ne.s32.totalorder %s224, %s226
    %p233 = scmp.eq.s32.totalorder %s27, 3
    %p234 = por %p232, %p233
    %p235 = scmp.ne.s32.totalorder %s226, %s227
    %p236 = scmp.eq.s32.totalorder %s27, 0
    %p237 = por %p235, %p236
    %p238 = scmp.ne.s32.totalorder %s226, %s227
    %p239 = scmp.eq.s32.totalorder %s28, 3
    %p240 = por %p238, %p239
    %p242 = scmp.ne.s32.totalorder %s227, %s241
    %p243 = scmp.eq.s32.totalorder %s28, 0
    %p244 = por %p242, %p243
    %s245 = ssub.s32 %s22, %s29
    %p246 = scmp.eq.s32.totalorder %s245, 0
    %s248 = sadd.s32 %s247, 1
    %s249 = scalar_select %p246, %s247, %s248
    %p252 = pneg %p246
    %p253 = scmp.eq.s32.totalorder %s22, 3
    %p254 = por %p252, %p253
    %p255 = scmp.ne.s32.totalorder %s247, %s250
    %p256 = scmp.eq.s32.totalorder %s22, 0
    %p257 = por %p255, %p256
    %p258 = scmp.ne.s32.totalorder %s247, %s250
    %p259 = scmp.eq.s32.totalorder %s27, 3
    %p260 = por %p258, %p259
    %p261 = scmp.ne.s32.totalorder %s250, %s251
    %p262 = scmp.eq.s32.totalorder %s27, 0
    %p263 = por %p261, %p262
    %p264 = scmp.ne.s32.totalorder %s250, %s251
    %p265 = scmp.eq.s32.totalorder %s28, 3
    %p266 = por %p264, %p265
    %p268 = scmp.ne.s32.totalorder %s251, %s267
    %p269 = scmp.eq.s32.totalorder %s28, 0
    %p270 = por %p268, %p269
    %s271 = ssub.s32 %s22, %s29
    %p272 = scmp.eq.s32.totalorder %s271, 0
    %s274 = sadd.s32 %s273, 1
    %s275 = scalar_select %p272, %s273, %s274
    %p278 = pneg %p272
    %p279 = scmp.eq.s32.totalorder %s22, 3
    %p280 = por %p278, %p279
    %p281 = scmp.ne.s32.totalorder %s273, %s276
    %p282 = scmp.eq.s32.totalorder %s22, 0
    %p283 = por %p281, %p282
    %p284 = scmp.ne.s32.totalorder %s273, %s276
    %p285 = scmp.eq.s32.totalorder %s27, 3
    %p286 = por %p284, %p285
    %p287 = scmp.ne.s32.totalorder %s276, %s277
    %p288 = scmp.eq.s32.totalorder %s27, 0
    %p289 = por %p287, %p288
    %p290 = scmp.ne.s32.totalorder %s276, %s277
    %p291 = scmp.eq.s32.totalorder %s28, 3
    %p292 = por %p290, %p291
    %p294 = scmp.ne.s32.totalorder %s277, %s293
    %p295 = scmp.eq.s32.totalorder %s28, 0
    %p296 = por %p294, %p295
    %s298 = sadd.s32 %s297, 1
    %p301 = scmp.eq.s32.totalorder %s22, 3
    %p302 = scmp.ne.s32.totalorder %s297, %s299
    %p303 = scmp.eq.s32.totalorder %s22, 0
    %p304 = por %p302, %p303
    %p305 = scmp.ne.s32.totalorder %s297, %s299
    %p306 = scmp.eq.s32.totalorder %s27, 3
    %p307 = por %p305, %p306
    %p308 = scmp.ne.s32.totalorder %s299, %s300
    %p309 = scmp.eq.s32.totalorder %s27, 0
    %p310 = por %p308, %p309
    %p311 = scmp.ne.s32.totalorder %s299, %s300
    %p312 = scmp.eq.s32.totalorder %s28, 3
    %p313 = por %p311, %p312
    %p315 = scmp.ne.s32.totalorder %s300, %s314
    %p316 = scmp.eq.s32.totalorder %s28, 0
    %p317 = por %p315, %p316
    %s319 = sadd.s32 %s318, 1
    %p322 = scmp.eq.s32.totalorder %s22, 3
    %p323 = scmp.ne.s32.totalorder %s318, %s320
    %p324 = scmp.eq.s32.totalorder %s22, 0
    %p325 = por %p323, %p324
    %p326 = scmp.ne.s32.totalorder %s318, %s320
    %p327 = scmp.eq.s32.totalorder %s27, 3
    %p328 = por %p326, %p327
    %p329 = scmp.ne.s32.totalorder %s320, %s321
    %p330 = scmp.eq.s32.totalorder %s27, 0
    %p331 = por %p329, %p330
    %p332 = scmp.ne.s32.totalorder %s320, %s321
    %p333 = scmp.eq.s32.totalorder %s28, 3
    %p334 = por %p332, %p333
    %p336 = scmp.ne.s32.totalorder %s321, %s335
    %p337 = scmp.eq.s32.totalorder %s28, 0
    %p338 = por %p336, %p337
    %s340 = sadd.s32 %s339, 1
    %p343 = scmp.eq.s32.totalorder %s22, 3
    %p344 = scmp.ne.s32.totalorder %s339, %s341
    %p345 = scmp.eq.s32.totalorder %s22, 0
    %p346 = por %p344, %p345
    %p347 = scmp.ne.s32.totalorder %s339, %s341
    %p348 = scmp.eq.s32.totalorder %s27, 3
    %p349 = por %p347, %p348
    %p350 = scmp.ne.s32.totalorder %s341, %s342
    %p351 = scmp.eq.s32.totalorder %s27, 0
    %p352 = por %p350, %p351
    %p353 = scmp.ne.s32.totalorder %s341, %s342
    %p354 = scmp.eq.s32.totalorder %s28, 3
    %p355 = por %p353, %p354
    %p357 = scmp.ne.s32.totalorder %s342, %s356
    %p358 = scmp.eq.s32.totalorder %s28, 0
    %p359 = por %p357, %p358
    %s361 = sadd.s32 %s360, 1
    %p364 = scmp.eq.s32.totalorder %s22, 3
    %p365 = scmp.ne.s32.totalorder %s360, %s362
    %p366 = scmp.eq.s32.totalorder %s22, 0
    %p367 = por %p365, %p366
    %p368 = scmp.ne.s32.totalorder %s360, %s362
    %p369 = scmp.eq.s32.totalorder %s27, 3
    %p370 = por %p368, %p369
    %p371 = scmp.ne.s32.totalorder %s362, %s363
    %p372 = scmp.eq.s32.totalorder %s27, 0
    %p373 = por %p371, %p372
    %p374 = scmp.ne.s32.totalorder %s362, %s363
    %p375 = scmp.eq.s32.totalorder %s28, 3
    %p376 = por %p374, %p375
    %p378 = scmp.ne.s32.totalorder %s363, %s377
    %p379 = scmp.eq.s32.totalorder %s28, 0
    %p380 = por %p378, %p379
    %s381 = ssub.s32 %s22, %s29
    %p382 = scmp.eq.s32.totalorder %s381, 0
    %s384 = sadd.s32 %s383, 1
    %s385 = scalar_select %p382, %s383, %s384
    %p388 = pneg %p382
    %p389 = scmp.eq.s32.totalorder %s22, 3
    %p390 = por %p388, %p389
    %p391 = scmp.ne.s32.totalorder %s383, %s386
    %p392 = scmp.eq.s32.totalorder %s22, 0
    %p393 = por %p391, %p392
    %p394 = scmp.ne.s32.totalorder %s383, %s386
    %p395 = scmp.eq.s32.totalorder %s27, 3
    %p396 = por %p394, %p395
    %p397 = scmp.ne.s32.totalorder %s386, %s387
    %p398 = scmp.eq.s32.totalorder %s27, 0
    %p399 = por %p397, %p398
    %p400 = scmp.ne.s32.totalorder %s386, %s387
    %p401 = scmp.eq.s32.totalorder %s28, 3
    %p402 = por %p400, %p401
    %p404 = scmp.ne.s32.totalorder %s387, %s403
    %p405 = scmp.eq.s32.totalorder %s28, 0
    %p406 = por %p404, %p405
    %p407 = scmp.le.s32.totalorder 1, %s22
    %p408 = scmp.lt.s32.totalorder %s22, 5
    %p409 = pnand %p407, %p408
    %p410 = pneg %p409
    // Predicated region
    $region9: #{ac_model_forward_batched.1} parent=5 // pred_check
      _
    $region10: #{ac_model_forward_batched.1} parent=5 // pred_check_branch
      %412 = sbr.rel (%p409) target = $region12
    $region11: #{ac_model_forward_batched.1} parent=5 // pred_region
      %s413 = ssub.s32 %s22, 1
      // Predicated region
      $region13: #{ac_model_forward_batched.1} parent=11 // pred_check
        %p414 = pneg %p69
      $region14: #{ac_model_forward_batched.1} parent=11 // pred_check_branch
        %416 = sbr.rel (%p414) target = $region16
      $region15: #{ac_model_forward_batched.1} parent=11 // pred_region
        _
      $region16: #{ac_model_forward_batched.1} parent=11 // pred_fallthru
        _
      // Predicated region
      $region17: #{ac_model_forward_batched.1} parent=11 // pred_check
        %p417 = pneg %p90
      $region18: #{ac_model_forward_batched.1} parent=11 // pred_check_branch
        %419 = sbr.rel (%p417) target = $region20
      $region19: #{ac_model_forward_batched.1} parent=11 // pred_region
        _
      $region20: #{ac_model_forward_batched.1} parent=11 // pred_fallthru
        _
      // Predicated region
      $region21: #{ac_model_forward_batched.1} parent=11 // pred_check
        %p420 = pneg %p111
      $region22: #{ac_model_forward_batched.1} parent=11 // pred_check_branch
        %422 = sbr.rel (%p420) target = $region24
      $region23: #{ac_model_forward_batched.1} parent=11 // pred_region
        _
      $region24: #{ac_model_forward_batched.1} parent=11 // pred_fallthru
        _
      // Predicated region
      $region25: #{ac_model_forward_batched.1} parent=11 // pred_check
        %p423 = pneg %p132
      $region26: #{ac_model_forward_batched.1} parent=11 // pred_check_branch
        %425 = sbr.rel (%p423) target = $region28
      $region27: #{ac_model_forward_batched.1} parent=11 // pred_region
        _
      $region28: #{ac_model_forward_batched.1} parent=11 // pred_fallthru
        _
      // Predicated region
      $region29: #{ac_model_forward_batched.1} parent=11 // pred_check
        %p426 = pneg %p153
      $region30: #{ac_model_forward_batched.1} parent=11 // pred_check_branch
        %428 = sbr.rel (%p426) target = $region32
      $region31: #{ac_model_forward_batched.1} parent=11 // pred_region
        _
      $region32: #{ac_model_forward_batched.1} parent=11 // pred_fallthru
        _
      // Predicated region
      $region33: #{ac_model_forward_batched.1} parent=11 // pred_check
        %p429 = pneg %p174
      $region34: #{ac_model_forward_batched.1} parent=11 // pred_check_branch
        %431 = sbr.rel (%p429) target = $region36
      $region35: #{ac_model_forward_batched.1} parent=11 // pred_region
        _
      $region36: #{ac_model_forward_batched.1} parent=11 // pred_fallthru
        _
      // Predicated region
      $region37: #{ac_model_forward_batched.1} parent=11 // pred_check
        %p432 = pneg %p195
      $region38: #{ac_model_forward_batched.1} parent=11 // pred_check_branch
        %434 = sbr.rel (%p432) target = $region40
      $region39: #{ac_model_forward_batched.1} parent=11 // pred_region
        _
      $region40: #{ac_model_forward_batched.1} parent=11 // pred_fallthru
        _
      // Predicated region
      $region41: #{ac_model_forward_batched.1} parent=11 // pred_check
        %p435 = pneg %p216
      $region42: #{ac_model_forward_batched.1} parent=11 // pred_check_branch
        %437 = sbr.rel (%p435) target = $region44
      $region43: #{ac_model_forward_batched.1} parent=11 // pred_region
        _
      $region44: #{ac_model_forward_batched.1} parent=11 // pred_fallthru
        _
      // Predicated region
      $region45: #{ac_model_forward_batched.1} parent=11 // pred_check
        %p438 = pneg %p237
      $region46: #{ac_model_forward_batched.1} parent=11 // pred_check_branch
        %440 = sbr.rel (%p438) target = $region48
      $region47: #{ac_model_forward_batched.1} parent=11 // pred_region
        _
      $region48: #{ac_model_forward_batched.1} parent=11 // pred_fallthru
        _
      // Predicated region
      $region49: #{ac_model_forward_batched.1} parent=11 // pred_check
        %p441 = pneg %p310
      $region50: #{ac_model_forward_batched.1} parent=11 // pred_check_branch
        %443 = sbr.rel (%p441) target = $region52
      $region51: #{ac_model_forward_batched.1} parent=11 // pred_region
        _
      $region52: #{ac_model_forward_batched.1} parent=11 // pred_fallthru
        _
      // Predicated region
      $region53: #{ac_model_forward_batched.1} parent=11 // pred_check
        %p444 = pneg %p331
      $region54: #{ac_model_forward_batched.1} parent=11 // pred_check_branch
        %446 = sbr.rel (%p444) target = $region56
      $region55: #{ac_model_forward_batched.1} parent=11 // pred_region
        _
      $region56: #{ac_model_forward_batched.1} parent=11 // pred_fallthru
        _
      // Predicated region
      $region57: #{ac_model_forward_batched.1} parent=11 // pred_check
        %p447 = pneg %p352
      $region58: #{ac_model_forward_batched.1} parent=11 // pred_check_branch
        %449 = sbr.rel (%p447) target = $region60
      $region59: #{ac_model_forward_batched.1} parent=11 // pred_region
        _
      $region60: #{ac_model_forward_batched.1} parent=11 // pred_fallthru
        _
      // Predicated region
      $region61: #{ac_model_forward_batched.1} parent=11 // pred_check
        %p450 = pneg %p373
      $region62: #{ac_model_forward_batched.1} parent=11 // pred_check_branch
        %452 = sbr.rel (%p450) target = $region64
      $region63: #{ac_model_forward_batched.1} parent=11 // pred_region
        _
      $region64: #{ac_model_forward_batched.1} parent=11 // pred_fallthru
        _
    $region12: #{ac_model_forward_batched.1} parent=5 // pred_fallthru
      _
    %p453 = scmp.lt.s32.totalorder %s22, 4
    // Predicated region
    $region65: #{ac_model_forward_batched.1} parent=5 // pred_check
      %p454 = pneg %p453
    $region66: #{ac_model_forward_batched.1} parent=5 // pred_check_branch
      %456 = sbr.rel (%p454) target = $region68
    $region67: #{ac_model_forward_batched.1} parent=5 // pred_region
      // Predicated region
      $region69: #{ac_model_forward_batched.1} parent=67 // pred_check
        %p457 = pneg %p42
      $region70: #{ac_model_forward_batched.1} parent=67 // pred_check_branch
        %459 = sbr.rel (%p457) target = $region72
      $region71: #{ac_model_forward_batched.1} parent=67 // pred_region
        %p460 = scmp.lt.s32.totalorder %s22, 3
        %s461 = scalar_select %p460, %s22, 3
        %s462 = smul.addr %s461, 41
        %s463 = smul.addr %s462, 4
        %s464 = scalar_lea.vmem %s0, %s463
      $region72: #{ac_model_forward_batched.1} parent=67 // pred_fallthru
        _
      // Predicated region
      $region73: #{ac_model_forward_batched.1} parent=67 // pred_check
        %p465 = pneg %p257
      $region74: #{ac_model_forward_batched.1} parent=67 // pred_check_branch
        %467 = sbr.rel (%p465) target = $region76
      $region75: #{ac_model_forward_batched.1} parent=67 // pred_region
        %p468 = scmp.lt.s32.totalorder %s22, 3
        %s469 = scalar_select %p468, %s22, 3
        %s470 = scalar_lea.vmem %s10, %s469
      $region76: #{ac_model_forward_batched.1} parent=67 // pred_fallthru
        _
      // Predicated region
      $region77: #{ac_model_forward_batched.1} parent=67 // pred_check
        %p471 = pneg %p283
      $region78: #{ac_model_forward_batched.1} parent=67 // pred_check_branch
        %473 = sbr.rel (%p471) target = $region80
      $region79: #{ac_model_forward_batched.1} parent=67 // pred_region
        %p474 = scmp.lt.s32.totalorder %s22, 3
        %s475 = scalar_select %p474, %s22, 3
        %s476 = scalar_lea.vmem %s11, %s475
      $region80: #{ac_model_forward_batched.1} parent=67 // pred_fallthru
        _
    $region68: #{ac_model_forward_batched.1} parent=5 // pred_fallthru
      _
    %p477 = scmp.le.s32.totalorder 1, %s22
    %p478 = scmp.lt.s32.totalorder %s22, 5
    %p479 = pnand %p477, %p478
    %p480 = pneg %p479
    // Predicated region
    $region81: #{ac_model_forward_batched.1} parent=5 // pred_check
      _
    $region82: #{ac_model_forward_batched.1} parent=5 // pred_check_branch
      %482 = sbr.rel (%p479) target = $region84
    $region83: #{ac_model_forward_batched.1} parent=5 // pred_region
      %s483 = ssub.s32 %s22, 1
      %p484 = scmp.lt.s32.totalorder %s27, 3
      %s485 = scalar_select %p484, %s27, 3
      %s486 = smul.addr %s485, 41
      %s487 = smul.addr %s486, 4
      %s488 = scalar_lea.vmem %s0, %s487
      %p489 = pneg %p48
      %p490 = pneg %p45
      %p491 = pneg %p69
      %p492 = pneg %p66
      %p493 = pneg %p90
      %p494 = pneg %p87
      %p495 = pneg %p111
      %p496 = pneg %p108
      %p497 = pneg %p132
      %p498 = pneg %p129
      %p499 = pneg %p153
      %p500 = pneg %p150
      %p501 = pneg %p174
      %p502 = pneg %p171
      %p503 = pneg %p195
      %p504 = pneg %p192
      %p505 = pneg %p216
      %p506 = pneg %p213
      %p507 = pneg %p237
      %p508 = pneg %p234
      %p509 = scmp.lt.s32.totalorder %s27, 3
      %s510 = scalar_select %p509, %s27, 3
      %s511 = scalar_lea.vmem %s10, %s510
      %p512 = pneg %p263
      %p513 = pneg %p260
      %p514 = scmp.lt.s32.totalorder %s27, 3
      %s515 = scalar_select %p514, %s27, 3
      %s516 = scalar_lea.vmem %s11, %s515
      %p517 = pneg %p289
      %p518 = pneg %p286
      %p519 = pneg %p310
      %p520 = pneg %p307
      %p521 = pneg %p331
      %p522 = pneg %p328
      %p523 = pneg %p352
      %p524 = pneg %p349
      %p525 = pneg %p373
      %p526 = pneg %p370
      %p527 = pneg %p399
      %p528 = pneg %p396
      %p529 = scmp.lt.s32.totalorder %s27, 3
      %s530 = scalar_select %p529, %s27, 3
      %s531 = smul.addr %s530, 2
      %s532 = smul.addr %s531, 8
      %s533 = scalar_lea.vmem %s16, %s532
      %p534 = scmp.lt.s32.totalorder %s27, 3
      %s535 = scalar_select %p534, %s27, 3
      %s536 = smul.addr %s535, 41
      %s537 = smul.addr %s536, 4
      %s538 = scalar_lea.vmem %s0, %s537
      %p539 = scmp.lt.s32.totalorder %s27, 3
      %s540 = scalar_select %p539, %s27, 3
      %s541 = scalar_lea.vmem %s10, %s540
      %p542 = scmp.lt.s32.totalorder %s27, 3
      %s543 = scalar_select %p542, %s27, 3
      %s544 = scalar_lea.vmem %s11, %s543
      %p545 = scmp.lt.s32.totalorder %s27, 3
      %s546 = scalar_select %p545, %s27, 3
      %s547 = smul.addr %s546, 2
      %s548 = smul.addr %s547, 8
      %s549 = scalar_lea.vmem %s16, %s548
      %v551 = vld [vmem:[%s538] sm:$0xf]
      %v552 = vld [vmem:[%s538 + $0x4] sm:$0xf]
      %v553 = vld [vmem:[%s538 + $0x8] sm:$0xf]
      %v554 = vld [vmem:[%s538 + $0xc] sm:$0xf]
      %v555 = vld [vmem:[%s538 + $0x10] sm:$0xf]
      %v556 = vld [vmem:[%s538 + $0x14] sm:$0xf]
      %v557 = vld [vmem:[%s538 + $0x18] sm:$0xf]
      %v558 = vld [vmem:[%s538 + $0x1c] sm:$0xf]
      %v559 = vld [vmem:[%s538 + $0x20] sm:$0xf]
      %v560 = vld [vmem:[%s538 + $0x24] sm:$0xf]
      %v561 = vld [vmem:[%s538 + $0x28] sm:$0xf]
      %v562 = vld [vmem:[%s538 + $0x2c] sm:$0xf]
      %v563 = vld [vmem:[%s538 + $0x30] sm:$0xf]
      %v564 = vld [vmem:[%s538 + $0x34] sm:$0xf]
      %v565 = vld [vmem:[%s538 + $0x38] sm:$0xf]
      %v566 = vld [vmem:[%s538 + $0x3c] sm:$0xf]
      %v567 = vld [vmem:[%s538 + $0x40] sm:$0xf]
      %v568 = vld [vmem:[%s538 + $0x44] sm:$0xf]
      %v569 = vld [vmem:[%s538 + $0x48] sm:$0xf]
      %v570 = vld [vmem:[%s538 + $0x4c] sm:$0xf]
      %v571 = vld [vmem:[%s538 + $0x50] sm:$0xf]
      %v572 = vld [vmem:[%s538 + $0x54] sm:$0xf]
      %v573 = vld [vmem:[%s538 + $0x58] sm:$0xf]
      %v574 = vld [vmem:[%s538 + $0x5c] sm:$0xf]
      %v575 = vld [vmem:[%s538 + $0x60] sm:$0xf]
      %v576 = vld [vmem:[%s538 + $0x64] sm:$0xf]
      %v577 = vld [vmem:[%s538 + $0x68] sm:$0xf]
      %v578 = vld [vmem:[%s538 + $0x6c] sm:$0xf]
      %v579 = vld [vmem:[%s538 + $0x70] sm:$0xf]
      %v580 = vld [vmem:[%s538 + $0x74] sm:$0xf]
      %v581 = vld [vmem:[%s538 + $0x78] sm:$0xf]
      %v582 = vld [vmem:[%s538 + $0x7c] sm:$0xf]
      %v583 = vld [vmem:[%s538 + $0x80] sm:$0xf]
      %v584 = vld [vmem:[%s538 + $0x84] sm:$0xf]
      %v585 = vld [vmem:[%s538 + $0x88] sm:$0xf]
      %v586 = vld [vmem:[%s538 + $0x8c] sm:$0xf]
      %v587 = vld [vmem:[%s538 + $0x90] sm:$0xf]
      %v588 = vld [vmem:[%s538 + $0x94] sm:$0xf]
      %v589 = vld [vmem:[%s538 + $0x98] sm:$0xf]
      %v590 = vld [vmem:[%s538 + $0x9c] sm:$0xf]
      %v591 = vld [vmem:[%s538 + $0xa0] sm:$0xf]
      %v592 = vld [vmem:[%s1] sm:$0xf]
      %v593 = vld [vmem:[%s1 + $0x4] sm:$0x3]
      %v594 = vld [vmem:[%s2] sm:$0x1]
      %v596 = vlaneseq
      %v597 = vshrl.u32 %v596, 7
      %v598 = vsub.s32 0, %v597
      %v599 = vrot.slane %v594, %v598
      %v642 = vunpack.c.l.b16 %v551
      %v643 = vunpack.c.l.b16 %v552
      %v644 = vunpack.c.l.b16 %v553
      %v645 = vunpack.c.l.b16 %v554
      %v646 = vunpack.c.l.b16 %v555
      %v647 = vunpack.c.l.b16 %v556
      %v648 = vunpack.c.l.b16 %v557
      %v649 = vunpack.c.l.b16 %v558
      %v650 = vunpack.c.l.b16 %v559
      %v651 = vunpack.c.l.b16 %v560
      %v652 = vunpack.c.l.b16 %v561
      %v653 = vunpack.c.l.b16 %v562
      %v654 = vunpack.c.l.b16 %v563
      %v655 = vunpack.c.l.b16 %v564
      %v656 = vunpack.c.l.b16 %v565
      %v657 = vunpack.c.l.b16 %v566
      %v658 = vunpack.c.l.b16 %v567
      %v659 = vunpack.c.l.b16 %v568
      %v660 = vunpack.c.l.b16 %v569
      %v661 = vunpack.c.l.b16 %v570
      %v662 = vunpack.c.l.b16 %v571
      %v663 = vunpack.c.l.b16 %v572
      %v664 = vunpack.c.l.b16 %v573
      %v665 = vunpack.c.l.b16 %v574
      %v666 = vunpack.c.l.b16 %v575
      %v667 = vunpack.c.l.b16 %v576
      %v668 = vunpack.c.l.b16 %v577
      %v669 = vunpack.c.l.b16 %v578
      %v670 = vunpack.c.l.b16 %v579
      %v671 = vunpack.c.l.b16 %v580
      %v672 = vunpack.c.l.b16 %v581
      %v673 = vunpack.c.l.b16 %v582
      %v674 = vunpack.c.l.b16 %v583
      %v675 = vunpack.c.l.b16 %v584
      %v676 = vunpack.c.l.b16 %v585
      %v677 = vunpack.c.l.b16 %v586
      %v678 = vunpack.c.l.b16 %v587
      %v679 = vunpack.c.l.b16 %v588
      %v680 = vunpack.c.l.b16 %v589
      %v681 = vunpack.c.l.b16 %v590
      %v682 = vunpack.c.l.b16 %v591
      %v683 = vpack.c.b16 %v643, %v642
      %v684 = vpack.c.b16 %v645, %v644
      %v685 = vpack.c.b16 %v647, %v646
      %v686 = vpack.c.b16 %v649, %v648
      %v687 = vpack.c.b16 %v651, %v650
      %v688 = vpack.c.b16 %v653, %v652
      %v689 = vpack.c.b16 %v655, %v654
      %v690 = vpack.c.b16 %v657, %v656
      %v691 = vpack.c.b16 %v659, %v658
      %v692 = vpack.c.b16 %v661, %v660
      %v693 = vpack.c.b16 %v663, %v662
      %v694 = vpack.c.b16 %v665, %v664
      %v695 = vpack.c.b16 %v667, %v666
      %v696 = vpack.c.b16 %v669, %v668
      %v697 = vpack.c.b16 %v671, %v670
      %v698 = vpack.c.b16 %v673, %v672
      %v699 = vpack.c.b16 %v675, %v674
      %v700 = vpack.c.b16 %v677, %v676
      %v701 = vpack.c.b16 %v679, %v678
      %v702 = vpack.c.b16 %v681, %v680
      %v703 = vpack.c.b16 %v682, %v682
      %v706 = vunpack.c.l.b16 %v592
      %v707 = vunpack.c.l.b16 %v593
      %v708 = vpack.c.b16 %v707, %v706
      %vm709 = vcmask 97280
      %v711 = vsel %vm709, %v683, 0
      %v714 = vsel %vm709, %v684, 0
      %v717 = vsel %vm709, %v685, 0
      %v720 = vsel %vm709, %v686, 0
      %v723 = vsel %vm709, %v687, 0
      %v726 = vsel %vm709, %v688, 0
      %v729 = vsel %vm709, %v689, 0
      %v732 = vsel %vm709, %v690, 0
      %v735 = vsel %vm709, %v691, 0
      %v738 = vsel %vm709, %v692, 0
      %v741 = vsel %vm709, %v693, 0
      %v744 = vsel %vm709, %v694, 0
      %v747 = vsel %vm709, %v695, 0
      %v750 = vsel %vm709, %v696, 0
      %v753 = vsel %vm709, %v697, 0
      %v756 = vsel %vm709, %v698, 0
      %v759 = vsel %vm709, %v699, 0
      %v762 = vsel %vm709, %v700, 0
      %v765 = vsel %vm709, %v701, 0
      %v768 = vsel %vm709, %v702, 0
      %v771 = vsel %vm709, %v703, 0
      %vm773 = vcmask 1045504
      %v775 = vsel %vm773, %v708, 0
      %777 = vmatprep.subr.bf16.mxu0 0
      %778 = vmatpush1.bf16.msra.mxu0 %v775
      %779 = vmatprep.subr.bf16.mxu0 0
      %780 = vmatpush1.bf16.msra.mxu0 0
      %781 = vmatprep.subr.bf16.mxu0 0
      %782 = vmatpush1.bf16.msra.mxu0 0
      %783 = vmatprep.subr.bf16.mxu0 0
      %784 = vmatpush1.bf16.msra.mxu0 0
      %785 = vmatprep.subr.bf16.mxu0 0
      %786 = vmatpush1.bf16.msra.mxu0 0
      %787 = vmatprep.subr.bf16.mxu0 0
      %788 = vmatpush1.bf16.msra.mxu0 0
      %789 = vmatprep.subr.bf16.mxu0 0
      %790 = vmatpush1.bf16.msra.mxu0 0
      %791 = vmatprep.subr.bf16.mxu0 0
      %792 = vmatpush1.bf16.msra.mxu0 0
      %793 = vmatprep.subr.bf16.mxu0 0
      %794 = vmatpush1.bf16.msra.mxu0 0
      %795 = vmatprep.subr.bf16.mxu0 0
      %796 = vmatpush1.bf16.msra.mxu0 0
      %797 = vmatprep.subr.bf16.mxu0 0
      %798 = vmatpush1.bf16.msra.mxu0 0
      %799 = vmatprep.subr.bf16.mxu0 0
      %800 = vmatpush1.bf16.msra.mxu0 0
      %801 = vmatprep.subr.bf16.mxu0 0
      %802 = vmatpush1.bf16.msra.mxu0 0
      %803 = vmatprep.subr.bf16.mxu0 0
      %804 = vmatpush1.bf16.msra.mxu0 0
      %805 = vmatprep.subr.bf16.mxu0 0
      %806 = vmatpush1.bf16.msra.mxu0 0
      %807 = vmatprep.subr.bf16.mxu0 0
      %808 = vmatpush1.bf16.msra.mxu0 0
      %809 = vmatprep.mubr.bf16.mxu0 0
      %810 = vmatmul.mubr.bf16.gmra.mrb[0].mxu0 %v711
      %v811 = vpop.f32.mrb[0].mxu0
      %v812 = vadd.f32 %v599, %v811
      %v813 = vpop.f32.mrb[0].mxu0
      %v814 = vpop.f32.mrb[0].mxu0
      %v815 = vadd.f32 %v599, %v814
      %v816 = vpop.f32.mrb[0].mxu0
      %817 = vmatprep.mubr.bf16.mxu0 0
      %818 = vmatmul.mubr.bf16.gmra.mrb[0].mxu0 %v714
      %v819 = vpop.f32.mrb[0].mxu0
      %v820 = vadd.f32 %v599, %v819
      %v821 = vpop.f32.mrb[0].mxu0
      %v822 = vpop.f32.mrb[0].mxu0
      %v823 = vadd.f32 %v599, %v822
      %v824 = vpop.f32.mrb[0].mxu0
      %825 = vmatprep.mubr.bf16.mxu0 0
      %826 = vmatmul.mubr.bf16.gmra.mrb[0].mxu0 %v717
      %v827 = vpop.f32.mrb[0].mxu0
      %v828 = vadd.f32 %v599, %v827
      %v829 = vpop.f32.mrb[0].mxu0
      %v830 = vpop.f32.mrb[0].mxu0
      %v831 = vadd.f32 %v599, %v830
      %v832 = vpop.f32.mrb[0].mxu0
      %833 = vmatprep.mubr.bf16.mxu0 0
      %834 = vmatmul.mubr.bf16.gmra.mrb[0].mxu0 %v720
      %v835 = vpop.f32.mrb[0].mxu0
      %v836 = vadd.f32 %v599, %v835
      %v837 = vpop.f32.mrb[0].mxu0
      %v838 = vpop.f32.mrb[0].mxu0
      %v839 = vadd.f32 %v599, %v838
      %v840 = vpop.f32.mrb[0].mxu0
      %841 = vmatprep.mubr.bf16.mxu0 0
      %842 = vmatmul.mubr.bf16.gmra.mrb[0].mxu0 %v723
      %v843 = vpop.f32.mrb[0].mxu0
      %v844 = vadd.f32 %v599, %v843
      %v845 = vpop.f32.mrb[0].mxu0
      %v846 = vpop.f32.mrb[0].mxu0
      %v847 = vadd.f32 %v599, %v846
      %v848 = vpop.f32.mrb[0].mxu0
      %849 = vmatprep.mubr.bf16.mxu0 0
      %850 = vmatmul.mubr.bf16.gmra.mrb[0].mxu0 %v726
      %v851 = vpop.f32.mrb[0].mxu0
      %v852 = vadd.f32 %v599, %v851
      %v853 = vpop.f32.mrb[0].mxu0
      %v854 = vpop.f32.mrb[0].mxu0
      %v855 = vadd.f32 %v599, %v854
      %v856 = vpop.f32.mrb[0].mxu0
      %857 = vmatprep.mubr.bf16.mxu0 0
      %858 = vmatmul.mubr.bf16.gmra.mrb[0].mxu0 %v729
      %v859 = vpop.f32.mrb[0].mxu0
      %v860 = vadd.f32 %v599, %v859
      %v861 = vpop.f32.mrb[0].mxu0
      %v862 = vpop.f32.mrb[0].mxu0
      %v863 = vadd.f32 %v599, %v862
      %v864 = vpop.f32.mrb[0].mxu0
      %865 = vmatprep.mubr.bf16.mxu0 0
      %866 = vmatmul.mubr.bf16.gmra.mrb[0].mxu0 %v732
      %v867 = vpop.f32.mrb[0].mxu0
      %v868 = vadd.f32 %v599, %v867
      %v869 = vpop.f32.mrb[0].mxu0
      %v870 = vpop.f32.mrb[0].mxu0
      %v871 = vadd.f32 %v599, %v870
      %v872 = vpop.f32.mrb[0].mxu0
      %873 = vmatprep.mubr.bf16.mxu0 0
      %874 = vmatmul.mubr.bf16.gmra.mrb[0].mxu0 %v735
      %v875 = vpop.f32.mrb[0].mxu0
      %v876 = vadd.f32 %v599, %v875
      %v877 = vpop.f32.mrb[0].mxu0
      %v878 = vpop.f32.mrb[0].mxu0
      %v879 = vadd.f32 %v599, %v878
      %v880 = vpop.f32.mrb[0].mxu0
      %881 = vmatprep.mubr.bf16.mxu0 0
      %882 = vmatmul.mubr.bf16.gmra.mrb[0].mxu0 %v738
      %v883 = vpop.f32.mrb[0].mxu0
      %v884 = vadd.f32 %v599, %v883
      %v885 = vpop.f32.mrb[0].mxu0
      %v886 = vpop.f32.mrb[0].mxu0
      %v887 = vadd.f32 %v599, %v886
      %v888 = vpop.f32.mrb[0].mxu0
      %889 = vmatprep.mubr.bf16.mxu0 0
      %890 = vmatmul.mubr.bf16.gmra.mrb[0].mxu0 %v741
      %v891 = vpop.f32.mrb[0].mxu0
      %v892 = vadd.f32 %v599, %v891
      %v893 = vpop.f32.mrb[0].mxu0
      %v894 = vpop.f32.mrb[0].mxu0
      %v895 = vadd.f32 %v599, %v894
      %v896 = vpop.f32.mrb[0].mxu0
      %897 = vmatprep.mubr.bf16.mxu0 0
      %898 = vmatmul.mubr.bf16.gmra.mrb[0].mxu0 %v744
      %v899 = vpop.f32.mrb[0].mxu0
      %v900 = vadd.f32 %v599, %v899
      %v901 = vpop.f32.mrb[0].mxu0
      %v902 = vpop.f32.mrb[0].mxu0
      %v903 = vadd.f32 %v599, %v902
      %v904 = vpop.f32.mrb[0].mxu0
      %905 = vmatprep.mubr.bf16.mxu0 0
      %906 = vmatmul.mubr.bf16.gmra.mrb[0].mxu0 %v747
      %v907 = vpop.f32.mrb[0].mxu0
      %v908 = vadd.f32 %v599, %v907
      %v909 = vpop.f32.mrb[0].mxu0
      %v910 = vpop.f32.mrb[0].mxu0
      %v911 = vadd.f32 %v599, %v910
      %v912 = vpop.f32.mrb[0].mxu0
      %913 = vmatprep.mubr.bf16.mxu0 0
      %914 = vmatmul.mubr.bf16.gmra.mrb[0].mxu0 %v750
      %v915 = vpop.f32.mrb[0].mxu0
      %v916 = vadd.f32 %v599, %v915
      %v917 = vpop.f32.mrb[0].mxu0
      %v918 = vpop.f32.mrb[0].mxu0
      %v919 = vadd.f32 %v599, %v918
      %v920 = vpop.f32.mrb[0].mxu0
      %921 = vmatprep.mubr.bf16.mxu0 0
      %922 = vmatmul.mubr.bf16.gmra.mrb[0].mxu0 %v753
      %v923 = vpop.f32.mrb[0].mxu0
      %v924 = vadd.f32 %v599, %v923
      %v925 = vpop.f32.mrb[0].mxu0
      %v926 = vpop.f32.mrb[0].mxu0
      %v927 = vadd.f32 %v599, %v926
      %v928 = vpop.f32.mrb[0].mxu0
      %929 = vmatprep.mubr.bf16.mxu0 0
      %930 = vmatmul.mubr.bf16.gmra.mrb[0].mxu0 %v756
      %v931 = vpop.f32.mrb[0].mxu0
      %v932 = vadd.f32 %v599, %v931
      %v933 = vpop.f32.mrb[0].mxu0
      %v934 = vpop.f32.mrb[0].mxu0
      %v935 = vadd.f32 %v599, %v934
      %v936 = vpop.f32.mrb[0].mxu0
      %937 = vmatprep.mubr.bf16.mxu0 0
      %938 = vmatmul.mubr.bf16.gmra.mrb[0].mxu0 %v759
      %v939 = vpop.f32.mrb[0].mxu0
      %v940 = vadd.f32 %v599, %v939
      %v941 = vpop.f32.mrb[0].mxu0
      %v942 = vpop.f32.mrb[0].mxu0
      %v943 = vadd.f32 %v599, %v942
      %v944 = vpop.f32.mrb[0].mxu0
      %945 = vmatprep.mubr.bf16.mxu0 0
      %946 = vmatmul.mubr.bf16.gmra.mrb[0].mxu0 %v762
      %v947 = vpop.f32.mrb[0].mxu0
      %v948 = vadd.f32 %v599, %v947
      %v949 = vpop.f32.mrb[0].mxu0
      %v950 = vpop.f32.mrb[0].mxu0
      %v951 = vadd.f32 %v599, %v950
      %v952 = vpop.f32.mrb[0].mxu0
      %953 = vmatprep.mubr.bf16.mxu0 0
      %954 = vmatmul.mubr.bf16.gmra.mrb[0].mxu0 %v765
      %v955 = vpop.f32.mrb[0].mxu0
      %v956 = vadd.f32 %v599, %v955
      %v957 = vpop.f32.mrb[0].mxu0
      %v958 = vpop.f32.mrb[0].mxu0
      %v959 = vadd.f32 %v599, %v958
      %v960 = vpop.f32.mrb[0].mxu0
      %961 = vmatprep.mubr.bf16.mxu0 0
      %962 = vmatmul.mubr.bf16.gmra.mrb[0].mxu0 %v768
      %v963 = vpop.f32.mrb[0].mxu0
      %v964 = vadd.f32 %v599, %v963
      %v965 = vpop.f32.mrb[0].mxu0
      %v966 = vpop.f32.mrb[0].mxu0
      %v967 = vadd.f32 %v599, %v966
      %v968 = vpop.f32.mrb[0].mxu0
      %969 = vmatprep.mubr.bf16.mxu0 0
      %970 = vmatmul.mubr.bf16.gmra.mrb[0].mxu0 %v771
      %v971 = vpop.f32.mrb[0].mxu0
      %v972 = vadd.f32 %v599, %v971
      %v973 = vpop.f32.mrb[0].mxu0
      %v974 = vpop.f32.mrb[0].mxu0
      %v975 = vpop.f32.mrb[0].mxu0
      %976 = vdwg.mxu0
      %v977 = vmax.f32 %v812, 0.0
      %v978 = vmax.f32 %v815, 0.0
      %v979 = vmax.f32 %v820, 0.0
      %v980 = vmax.f32 %v823, 0.0
      %v981 = vmax.f32 %v828, 0.0
      %v982 = vmax.f32 %v831, 0.0
      %v983 = vmax.f32 %v836, 0.0
      %v984 = vmax.f32 %v839, 0.0
      %v985 = vmax.f32 %v844, 0.0
      %v986 = vmax.f32 %v847, 0.0
      %v987 = vmax.f32 %v852, 0.0
      %v988 = vmax.f32 %v855, 0.0
      %v989 = vmax.f32 %v860, 0.0
      %v990 = vmax.f32 %v863, 0.0
      %v991 = vmax.f32 %v868, 0.0
      %v992 = vmax.f32 %v871, 0.0
      %v993 = vmax.f32 %v876, 0.0
      %v994 = vmax.f32 %v879, 0.0
      %v995 = vmax.f32 %v884, 0.0
      %v996 = vmax.f32 %v887, 0.0
      %v997 = vmax.f32 %v892, 0.0
      %v998 = vmax.f32 %v895, 0.0
      %v999 = vmax.f32 %v900, 0.0
      %v1000 = vmax.f32 %v903, 0.0
      %v1001 = vmax.f32 %v908, 0.0
      %v1002 = vmax.f32 %v911, 0.0
      %v1003 = vmax.f32 %v916, 0.0
      %v1004 = vmax.f32 %v919, 0.0
      %v1005 = vmax.f32 %v924, 0.0
      %v1006 = vmax.f32 %v927, 0.0
      %v1007 = vmax.f32 %v932, 0.0
      %v1008 = vmax.f32 %v935, 0.0
      %v1009 = vmax.f32 %v940, 0.0
      %v1010 = vmax.f32 %v943, 0.0
      %v1011 = vmax.f32 %v948, 0.0
      %v1012 = vmax.f32 %v951, 0.0
      %v1013 = vmax.f32 %v956, 0.0
      %v1014 = vmax.f32 %v959, 0.0
      %v1015 = vmax.f32 %v964, 0.0
      %v1016 = vmax.f32 %v967, 0.0
      %v1017 = vmax.f32 %v972, 0.0
      %vm1018 = vcmask 130048
      %1019 = vst.msk [vmem:[#allocation2] sm:$0xff] %vm1018, %v977
      %1020 = vst.msk [vmem:[#allocation2 + $0x8] sm:$0xff] %vm1018, %v978
      %1021 = vst.msk [vmem:[#allocation2 + $0x10] sm:$0xff] %vm1018, %v979
      %1022 = vst.msk [vmem:[#allocation2 + $0x18] sm:$0xff] %vm1018, %v980
      %1023 = vst.msk [vmem:[#allocation2 + $0x20] sm:$0xff] %vm1018, %v981
      %1024 = vst.msk [vmem:[#allocation2 + $0x28] sm:$0xff] %vm1018, %v982
      %1025 = vst.msk [vmem:[#allocation2 + $0x30] sm:$0xff] %vm1018, %v983
      %1026 = vst.msk [vmem:[#allocation2 + $0x38] sm:$0xff] %vm1018, %v984
      %1027 = vst.msk [vmem:[#allocation2 + $0x40] sm:$0xff] %vm1018, %v985
      %1028 = vst.msk [vmem:[#allocation2 + $0x48] sm:$0xff] %vm1018, %v986
      %1029 = vst.msk [vmem:[#allocation2 + $0x50] sm:$0xff] %vm1018, %v987
      %1030 = vst.msk [vmem:[#allocation2 + $0x58] sm:$0xff] %vm1018, %v988
      %1031 = vst.msk [vmem:[#allocation2 + $0x60] sm:$0xff] %vm1018, %v989
      %1032 = vst.msk [vmem:[#allocation2 + $0x68] sm:$0xff] %vm1018, %v990
      %1033 = vst.msk [vmem:[#allocation2 + $0x70] sm:$0xff] %vm1018, %v991
      %1034 = vst.msk [vmem:[#allocation2 + $0x78] sm:$0xff] %vm1018, %v992
      %1035 = vst.msk [vmem:[#allocation2 + $0x80] sm:$0xff] %vm1018, %v993
      %1036 = vst.msk [vmem:[#allocation2 + $0x88] sm:$0xff] %vm1018, %v994
      %1037 = vst.msk [vmem:[#allocation2 + $0x90] sm:$0xff] %vm1018, %v995
      %1038 = vst.msk [vmem:[#allocation2 + $0x98] sm:$0xff] %vm1018, %v996
      %1039 = vst.msk [vmem:[#allocation2 + $0xa0] sm:$0xff] %vm1018, %v997
      %1040 = vst.msk [vmem:[#allocation2 + $0xa8] sm:$0xff] %vm1018, %v998
      %1041 = vst.msk [vmem:[#allocation2 + $0xb0] sm:$0xff] %vm1018, %v999
      %1042 = vst.msk [vmem:[#allocation2 + $0xb8] sm:$0xff] %vm1018, %v1000
      %1043 = vst.msk [vmem:[#allocation2 + $0xc0] sm:$0xff] %vm1018, %v1001
      %1044 = vst.msk [vmem:[#allocation2 + $0xc8] sm:$0xff] %vm1018, %v1002
      %1045 = vst.msk [vmem:[#allocation2 + $0xd0] sm:$0xff] %vm1018, %v1003
      %1046 = vst.msk [vmem:[#allocation2 + $0xd8] sm:$0xff] %vm1018, %v1004
      %1047 = vst.msk [vmem:[#allocation2 + $0xe0] sm:$0xff] %vm1018, %v1005
      %1048 = vst.msk [vmem:[#allocation2 + $0xe8] sm:$0xff] %vm1018, %v1006
      %1049 = vst.msk [vmem:[#allocation2 + $0xf0] sm:$0xff] %vm1018, %v1007
      %1050 = vst.msk [vmem:[#allocation2 + $0xf8] sm:$0xff] %vm1018, %v1008
      %1051 = vst.msk [vmem:[#allocation2 + $0x100] sm:$0xff] %vm1018, %v1009
      %1052 = vst.msk [vmem:[#allocation2 + $0x108] sm:$0xff] %vm1018, %v1010
      %1053 = vst.msk [vmem:[#allocation2 + $0x110] sm:$0xff] %vm1018, %v1011
      %1054 = vst.msk [vmem:[#allocation2 + $0x118] sm:$0xff] %vm1018, %v1012
      %1055 = vst.msk [vmem:[#allocation2 + $0x120] sm:$0xff] %vm1018, %v1013
      %1056 = vst.msk [vmem:[#allocation2 + $0x128] sm:$0xff] %vm1018, %v1014
      %1057 = vst.msk [vmem:[#allocation2 + $0x130] sm:$0xff] %vm1018, %v1015
      %1058 = vst.msk [vmem:[#allocation2 + $0x138] sm:$0xff] %vm1018, %v1016
      %1059 = vst.msk [vmem:[#allocation2 + $0x140] sm:$0xff] %vm1018, %v1017
      %v1060 = vld [vmem:[#allocation2] sm:$0xff]
      %v1061 = vld [vmem:[#allocation2 + $0x8] sm:$0xff]
      %v1062 = vld [vmem:[#allocation2 + $0x10] sm:$0xff]
      %v1063 = vld [vmem:[#allocation2 + $0x18] sm:$0xff]
      %v1064 = vld [vmem:[#allocation2 + $0x20] sm:$0xff]
      %v1065 = vld [vmem:[#allocation2 + $0x28] sm:$0xff]
      %v1066 = vld [vmem:[#allocation2 + $0x30] sm:$0xff]
      %v1067 = vld [vmem:[#allocation2 + $0x38] sm:$0xff]
      %v1068 = vld [vmem:[#allocation2 + $0x40] sm:$0xff]
      %v1069 = vld [vmem:[#allocation2 + $0x48] sm:$0xff]
      %v1070 = vld [vmem:[#allocation2 + $0x50] sm:$0xff]
      %v1071 = vld [vmem:[#allocation2 + $0x58] sm:$0xff]
      %v1072 = vld [vmem:[#allocation2 + $0x60] sm:$0xff]
      %v1073 = vld [vmem:[#allocation2 + $0x68] sm:$0xff]
      %v1074 = vld [vmem:[#allocation2 + $0x70] sm:$0xff]
      %v1075 = vld [vmem:[#allocation2 + $0x78] sm:$0xff]
      %v1076 = vld [vmem:[#allocation2 + $0x80] sm:$0xff]
      %v1077 = vld [vmem:[#allocation2 + $0x88] sm:$0xff]
      %v1078 = vld [vmem:[#allocation2 + $0x90] sm:$0xff]
      %v1079 = vld [vmem:[#allocation2 + $0x98] sm:$0xff]
      %v1080 = vld [vmem:[#allocation2 + $0xa0] sm:$0xff]
      %v1081 = vld [vmem:[#allocation2 + $0xa8] sm:$0xff]
      %v1082 = vld [vmem:[#allocation2 + $0xb0] sm:$0xff]
      %v1083 = vld [vmem:[#allocation2 + $0xb8] sm:$0xff]
      %v1084 = vld [vmem:[#allocation2 + $0xc0] sm:$0xff]
      %v1085 = vld [vmem:[#allocation2 + $0xc8] sm:$0xff]
      %v1086 = vld [vmem:[#allocation2 + $0xd0] sm:$0xff]
      %v1087 = vld [vmem:[#allocation2 + $0xd8] sm:$0xff]
      %v1088 = vld [vmem:[#allocation2 + $0xe0] sm:$0xff]
      %v1089 = vld [vmem:[#allocation2 + $0xe8] sm:$0xff]
      %v1090 = vld [vmem:[#allocation2 + $0xf0] sm:$0xff]
      %v1091 = vld [vmem:[#allocation2 + $0xf8] sm:$0xff]
      %v1092 = vld [vmem:[#allocation2 + $0x100] sm:$0xff]
      %v1093 = vpack.c.bf16 %v1061, %v1060
      %v1094 = vpack.c.bf16 %v1063, %v1062
      %v1095 = vpack.c.bf16 %v1065, %v1064
      %v1096 = vpack.c.bf16 %v1067, %v1066
      %v1097 = vpack.c.bf16 %v1069, %v1068
      %v1098 = vpack.c.bf16 %v1071, %v1070
      %v1099 = vpack.c.bf16 %v1073, %v1072
      %v1100 = vpack.c.bf16 %v1075, %v1074
      %v1101 = vpack.c.bf16 %v1077, %v1076
      %v1102 = vpack.c.bf16 %v1079, %v1078
      %v1103 = vpack.c.bf16 %v1081, %v1080
      %v1104 = vpack.c.bf16 %v1083, %v1082
      %v1105 = vpack.c.bf16 %v1085, %v1084
      %v1106 = vpack.c.bf16 %v1087, %v1086
      %v1107 = vpack.c.bf16 %v1089, %v1088
      %v1108 = vpack.c.bf16 %v1091, %v1090
      %v1109 = vpack.c.bf16 %v1092, %v1092
      %v1110 = vld [vmem:[%s3] sm:$0xf]
      %v1111 = vld [vmem:[%s3 + $0x4] sm:$0xf]
      %v1112 = vld [vmem:[#allocation2 + $0x108] sm:$0xff]
      %v1113 = vpack.c.bf16 %v1062, %v1061
      %v1114 = vpack.c.bf16 %v1064, %v1063
      %v1115 = vpack.c.bf16 %v1066, %v1065
      %v1116 = vpack.c.bf16 %v1068, %v1067
      %v1117 = vpack.c.bf16 %v1070, %v1069
      %v1118 = vpack.c.bf16 %v1072, %v1071
      %v1119 = vpack.c.bf16 %v1074, %v1073
      %v1120 = vpack.c.bf16 %v1076, %v1075
      %v1121 = vpack.c.bf16 %v1078, %v1077
      %v1122 = vpack.c.bf16 %v1080, %v1079
      %v1123 = vpack.c.bf16 %v1082, %v1081
      %v1124 = vpack.c.bf16 %v1084, %v1083
      %v1125 = vpack.c.bf16 %v1086, %v1085
      %v1126 = vpack.c.bf16 %v1088, %v1087
      %v1127 = vpack.c.bf16 %v1090, %v1089
      %v1128 = vpack.c.bf16 %v1092, %v1091
      %v1129 = vpack.c.bf16 %v1112, %v1112
      %v1130 = vld [vmem:[%s3 + $0x8] sm:$0xf]
      %v1131 = vld [vmem:[%s3 + $0xc] sm:$0xf]
      %v1134 = vunpack.c.l.b16 %v1130
      %v1135 = vunpack.c.l.b16 %v1131
      %v1136 = vpack.c.b16 %v1135, %v1134
      %v1139 = vsel %vm1018, %v1113, 0
      %v1142 = vsel %vm1018, %v1114, 0
      %v1145 = vsel %vm1018, %v1115, 0
      %v1148 = vsel %vm1018, %v1116, 0
      %v1151 = vsel %vm1018, %v1117, 0
      %v1154 = vsel %vm1018, %v1118, 0
      %v1157 = vsel %vm1018, %v1119, 0
      %v1160 = vsel %vm1018, %v1120, 0
      %v1163 = vsel %vm1018, %v1121, 0
      %v1166 = vsel %vm1018, %v1122, 0
      %v1169 = vsel %vm1018, %v1123, 0
      %v1172 = vsel %vm1018, %v1124, 0
      %v1175 = vsel %vm1018, %v1125, 0
      %v1178 = vsel %vm1018, %v1126, 0
      %v1181 = vsel %vm1018, %v1127, 0
      %v1184 = vsel %vm1018, %v1128, 0
      %v1187 = vsel %vm1018, %v1129, 0
      %1189 = vmatprep.subr.bf16.mxu0 0
      %1190 = vmatpush1.bf16.msra.mxu0 %v1136
      %1191 = vmatprep.subr.bf16.mxu0 0
      %1192 = vmatpush1.bf16.msra.mxu0 0
      %1193 = vmatprep.subr.bf16.mxu0 0
      %1194 = vmatpush1.bf16.msra.mxu0 0
      %1195 = vmatprep.subr.bf16.mxu0 0
      %1196 = vmatpush1.bf16.msra.mxu0 0
      %1197 = vmatprep.subr.bf16.mxu0 0
      %1198 = vmatpush1.bf16.msra.mxu0 0
      %1199 = vmatprep.subr.bf16.mxu0 0
      %1200 = vmatpush1.bf16.msra.mxu0 0
      %1201 = vmatprep.subr.bf16.mxu0 0
      %1202 = vmatpush1.bf16.msra.mxu0 0
      %1203 = vmatprep.subr.bf16.mxu0 0
      %1204 = vmatpush1.bf16.msra.mxu0 0
      %1205 = vmatprep.subr.bf16.mxu0 0
      %1206 = vmatpush1.bf16.msra.mxu0 0
      %1207 = vmatprep.subr.bf16.mxu0 0
      %1208 = vmatpush1.bf16.msra.mxu0 0
      %1209 = vmatprep.subr.bf16.mxu0 0
      %1210 = vmatpush1.bf16.msra.mxu0 0
      %1211 = vmatprep.subr.bf16.mxu0 0
      %1212 = vmatpush1.bf16.msra.mxu0 0
      %1213 = vmatprep.subr.bf16.mxu0 0
      %1214 = vmatpush1.bf16.msra.mxu0 0
      %1215 = vmatprep.subr.bf16.mxu0 0
      %1216 = vmatpush1.bf16.msra.mxu0 0
      %1217 = vmatprep.subr.bf16.mxu0 0
      %1218 = vmatpush1.bf16.msra.mxu0 0
      %1219 = vmatprep.subr.bf16.mxu0 0
      %1220 = vmatpush1.bf16.msra.mxu0 0
      %1221 = vmatprep.mubr.bf16.mxu0 0
      %1222 = vmatmul.mubr.bf16.gmra.mrb[0].mxu0 %v1139
      %v1223 = vpop.f32.mrb[0].mxu0
      %v1224 = vadd.f32 0.0, %v1223
      %v1225 = vpop.f32.mrb[0].mxu0
      %v1226 = vpop.f32.mrb[0].mxu0
      %v1227 = vadd.f32 0.0, %v1226
      %v1228 = vpop.f32.mrb[0].mxu0
      %1229 = vmatprep.mubr.bf16.mxu0 0
      %1230 = vmatmul.mubr.bf16.gmra.mrb[0].mxu0 %v1142
      %v1231 = vpop.f32.mrb[0].mxu0
      %v1232 = vadd.f32 0.0, %v1231
      %v1233 = vpop.f32.mrb[0].mxu0
      %v1234 = vpop.f32.mrb[0].mxu0
      %v1235 = vadd.f32 0.0, %v1234
      %v1236 = vpop.f32.mrb[0].mxu0
      %1237 = vmatprep.mubr.bf16.mxu0 0
      %1238 = vmatmul.mubr.bf16.gmra.mrb[0].mxu0 %v1145
      %v1239 = vpop.f32.mrb[0].mxu0
      %v1240 = vadd.f32 0.0, %v1239
      %v1241 = vpop.f32.mrb[0].mxu0
      %v1242 = vpop.f32.mrb[0].mxu0
      %v1243 = vadd.f32 0.0, %v1242
      %v1244 = vpop.f32.mrb[0].mxu0
      %1245 = vmatprep.mubr.bf16.mxu0 0
      %1246 = vmatmul.mubr.bf16.gmra.mrb[0].mxu0 %v1148
      %v1247 = vpop.f32.mrb[0].mxu0
      %v1248 = vadd.f32 0.0, %v1247
      %v1249 = vpop.f32.mrb[0].mxu0
      %v1250 = vpop.f32.mrb[0].mxu0
      %v1251 = vadd.f32 0.0, %v1250
      %v1252 = vpop.f32.mrb[0].mxu0
      %1253 = vmatprep.mubr.bf16.mxu0 0
      %1254 = vmatmul.mubr.bf16.gmra.mrb[0].mxu0 %v1151
      %v1255 = vpop.f32.mrb[0].mxu0
      %v1256 = vadd.f32 0.0, %v1255
      %v1257 = vpop.f32.mrb[0].mxu0
      %v1258 = vpop.f32.mrb[0].mxu0
      %v1259 = vadd.f32 0.0, %v1258
      %v1260 = vpop.f32.mrb[0].mxu0
      %1261 = vmatprep.mubr.bf16.mxu0 0
      %1262 = vmatmul.mubr.bf16.gmra.mrb[0].mxu0 %v1154
      %v1263 = vpop.f32.mrb[0].mxu0
      %v1264 = vadd.f32 0.0, %v1263
      %v1265 = vpop.f32.mrb[0].mxu0
      %v1266 = vpop.f32.mrb[0].mxu0
      %v1267 = vadd.f32 0.0, %v1266
      %v1268 = vpop.f32.mrb[0].mxu0
      %1269 = vmatprep.mubr.bf16.mxu0 0
      %1270 = vmatmul.mubr.bf16.gmra.mrb[0].mxu0 %v1157
      %v1271 = vpop.f32.mrb[0].mxu0
      %v1272 = vadd.f32 0.0, %v1271
      %v1273 = vpop.f32.mrb[0].mxu0
      %v1274 = vpop.f32.mrb[0].mxu0
      %v1275 = vadd.f32 0.0, %v1274
      %v1276 = vpop.f32.mrb[0].mxu0
      %1277 = vmatprep.mubr.bf16.mxu0 0
      %1278 = vmatmul.mubr.bf16.gmra.mrb[0].mxu0 %v1160
      %v1279 = vpop.f32.mrb[0].mxu0
      %v1280 = vadd.f32 0.0, %v1279
      %v1281 = vpop.f32.mrb[0].mxu0
      %v1282 = vpop.f32.mrb[0].mxu0
      %v1283 = vadd.f32 0.0, %v1282
      %v1284 = vpop.f32.mrb[0].mxu0
      %1285 = vmatprep.mubr.bf16.mxu0 0
      %1286 = vmatmul.mubr.bf16.gmra.mrb[0].mxu0 %v1163
      %v1287 = vpop.f32.mrb[0].mxu0
      %v1288 = vadd.f32 0.0, %v1287
      %v1289 = vpop.f32.mrb[0].mxu0
      %v1290 = vpop.f32.mrb[0].mxu0
      %v1291 = vadd.f32 0.0, %v1290
      %v1292 = vpop.f32.mrb[0].mxu0
      %1293 = vmatprep.mubr.bf16.mxu0 0
      %1294 = vmatmul.mubr.bf16.gmra.mrb[0].mxu0 %v1166
      %v1295 = vpop.f32.mrb[0].mxu0
      %v1296 = vadd.f32 0.0, %v1295
      %v1297 = vpop.f32.mrb[0].mxu0
      %v1298 = vpop.f32.mrb[0].mxu0
      %v1299 = vadd.f32 0.0, %v1298
      %v1300 = vpop.f32.mrb[0].mxu0
      %1301 = vmatprep.mubr.bf16.mxu0 0
      %1302 = vmatmul.mubr.bf16.gmra.mrb[0].mxu0 %v1169
      %v1303 = vpop.f32.mrb[0].mxu0
      %v1304 = vadd.f32 0.0, %v1303
      %v1305 = vpop.f32.mrb[0].mxu0
      %v1306 = vpop.f32.mrb[0].mxu0
      %v1307 = vadd.f32 0.0, %v1306
      %v1308 = vpop.f32.mrb[0].mxu0
      %1309 = vmatprep.mubr.bf16.mxu0 0
      %1310 = vmatmul.mubr.bf16.gmra.mrb[0].mxu0 %v1172
      %v1311 = vpop.f32.mrb[0].mxu0
      %v1312 = vadd.f32 0.0, %v1311
      %v1313 = vpop.f32.mrb[0].mxu0
      %v1314 = vpop.f32.mrb[0].mxu0
      %v1315 = vadd.f32 0.0, %v1314
      %v1316 = vpop.f32.mrb[0].mxu0
      %1317 = vmatprep.mubr.bf16.mxu0 0
      %1318 = vmatmul.mubr.bf16.gmra.mrb[0].mxu0 %v1175
      %v1319 = vpop.f32.mrb[0].mxu0
      %v1320 = vadd.f32 0.0, %v1319
      %v1321 = vpop.f32.mrb[0].mxu0
      %v1322 = vpop.f32.mrb[0].mxu0
      %v1323 = vadd.f32 0.0, %v1322
      %v1324 = vpop.f32.mrb[0].mxu0
      %1325 = vmatprep.mubr.bf16.mxu0 0
      %1326 = vmatmul.mubr.bf16.gmra.mrb[0].mxu0 %v1178
      %v1327 = vpop.f32.mrb[0].mxu0
      %v1328 = vadd.f32 0.0, %v1327
      %v1329 = vpop.f32.mrb[0].mxu0
      %v1330 = vpop.f32.mrb[0].mxu0
      %v1331 = vadd.f32 0.0, %v1330
      %v1332 = vpop.f32.mrb[0].mxu0
      %1333 = vmatprep.mubr.bf16.mxu0 0
      %1334 = vmatmul.mubr.bf16.gmra.mrb[0].mxu0 %v1181
      %v1335 = vpop.f32.mrb[0].mxu0
      %v1336 = vadd.f32 0.0, %v1335
      %v1337 = vpop.f32.mrb[0].mxu0
      %v1338 = vpop.f32.mrb[0].mxu0
      %v1339 = vadd.f32 0.0, %v1338
      %v1340 = vpop.f32.mrb[0].mxu0
      %1341 = vmatprep.mubr.bf16.mxu0 0
      %1342 = vmatmul.mubr.bf16.gmra.mrb[0].mxu0 %v1184
      %v1343 = vpop.f32.mrb[0].mxu0
      %v1344 = vadd.f32 0.0, %v1343
      %v1345 = vpop.f32.mrb[0].mxu0
      %v1346 = vpop.f32.mrb[0].mxu0
      %v1347 = vadd.f32 0.0, %v1346
      %v1348 = vpop.f32.mrb[0].mxu0
      %1349 = vmatprep.mubr.bf16.mxu0 0
      %1350 = vmatmul.mubr.bf16.gmra.mrb[0].mxu0 %v1187
      %v1351 = vpop.f32.mrb[0].mxu0
      %v1352 = vadd.f32 0.0, %v1351
      %v1353 = vpop.f32.mrb[0].mxu0
      %v1354 = vpop.f32.mrb[0].mxu0
      %v1355 = vpop.f32.mrb[0].mxu0
      %1356 = vdwg.mxu0
      %v1359 = vunpack.c.l.b16 %v1110
      %v1360 = vunpack.c.l.b16 %v1111
      %v1361 = vpack.c.b16 %v1360, %v1359
      %v1364 = vsel %vm1018, %v1093, 0
      %v1367 = vsel %vm1018, %v1094, 0
      %v1370 = vsel %vm1018, %v1095, 0
      %v1373 = vsel %vm1018, %v1096, 0
      %v1376 = vsel %vm1018, %v1097, 0
      %v1379 = vsel %vm1018, %v1098, 0
      %v1382 = vsel %vm1018, %v1099, 0
      %v1385 = vsel %vm1018, %v1100, 0
      %v1388 = vsel %vm1018, %v1101, 0
      %v1391 = vsel %vm1018, %v1102, 0
      %v1394 = vsel %vm1018, %v1103, 0
      %v1397 = vsel %vm1018, %v1104, 0
      %v1400 = vsel %vm1018, %v1105, 0
      %v1403 = vsel %vm1018, %v1106, 0
      %v1406 = vsel %vm1018, %v1107, 0
      %v1409 = vsel %vm1018, %v1108, 0
      %v1412 = vsel %vm1018, %v1109, 0
      %1414 = vmatprep.subr.bf16.mxu0 0
      %1415 = vmatpush1.bf16.msra.mxu0 %v1361
      %1416 = vmatprep.subr.bf16.mxu0 0
      %1417 = vmatpush1.bf16.msra.mxu0 0
      %1418 = vmatprep.subr.bf16.mxu0 0
      %1419 = vmatpush1.bf16.msra.mxu0 0
      %1420 = vmatprep.subr.bf16.mxu0 0
      %1421 = vmatpush1.bf16.msra.mxu0 0
      %1422 = vmatprep.subr.bf16.mxu0 0
      %1423 = vmatpush1.bf16.msra.mxu0 0
      %1424 = vmatprep.subr.bf16.mxu0 0
      %1425 = vmatpush1.bf16.msra.mxu0 0
      %1426 = vmatprep.subr.bf16.mxu0 0
      %1427 = vmatpush1.bf16.msra.mxu0 0
      %1428 = vmatprep.subr.bf16.mxu0 0
      %1429 = vmatpush1.bf16.msra.mxu0 0
      %1430 = vmatprep.subr.bf16.mxu0 0
      %1431 = vmatpush1.bf16.msra.mxu0 0
      %1432 = vmatprep.subr.bf16.mxu0 0
      %1433 = vmatpush1.bf16.msra.mxu0 0
      %1434 = vmatprep.subr.bf16.mxu0 0
      %1435 = vmatpush1.bf16.msra.mxu0 0
      %1436 = vmatprep.subr.bf16.mxu0 0
      %1437 = vmatpush1.bf16.msra.mxu0 0
      %1438 = vmatprep.subr.bf16.mxu0 0
      %1439 = vmatpush1.bf16.msra.mxu0 0
      %1440 = vmatprep.subr.bf16.mxu0 0
      %1441 = vmatpush1.bf16.msra.mxu0 0
      %1442 = vmatprep.subr.bf16.mxu0 0
      %1443 = vmatpush1.bf16.msra.mxu0 0
      %1444 = vmatprep.subr.bf16.mxu0 0
      %1445 = vmatpush1.bf16.msra.mxu0 0
      %1446 = vmatprep.mubr.bf16.mxu0 0
      %1447 = vmatmul.mubr.bf16.gmra.mrb[0].mxu0 %v1364
      %v1448 = vpop.f32.mrb[0].mxu0
      %v1449 = vadd.f32 %v1224, %v1448
      %v1450 = vpop.f32.mrb[0].mxu0
      %v1451 = vpop.f32.mrb[0].mxu0
      %v1452 = vadd.f32 %v1227, %v1451
      %v1453 = vpop.f32.mrb[0].mxu0
      %1454 = vmatprep.mubr.bf16.mxu0 0
      %1455 = vmatmul.mubr.bf16.gmra.mrb[0].mxu0 %v1367
      %v1456 = vpop.f32.mrb[0].mxu0
      %v1457 = vadd.f32 %v1232, %v1456
      %v1458 = vpop.f32.mrb[0].mxu0
      %v1459 = vpop.f32.mrb[0].mxu0
      %v1460 = vadd.f32 %v1235, %v1459
      %v1461 = vpop.f32.mrb[0].mxu0
      %1462 = vmatprep.mubr.bf16.mxu0 0
      %1463 = vmatmul.mubr.bf16.gmra.mrb[0].mxu0 %v1370
      %v1464 = vpop.f32.mrb[0].mxu0
      %v1465 = vadd.f32 %v1240, %v1464
      %v1466 = vpop.f32.mrb[0].mxu0
      %v1467 = vpop.f32.mrb[0].mxu0
      %v1468 = vadd.f32 %v1243, %v1467
      %v1469 = vpop.f32.mrb[0].mxu0
      %1470 = vmatprep.mubr.bf16.mxu0 0
      %1471 = vmatmul.mubr.bf16.gmra.mrb[0].mxu0 %v1373
      %v1472 = vpop.f32.mrb[0].mxu0
      %v1473 = vadd.f32 %v1248, %v1472
      %v1474 = vpop.f32.mrb[0].mxu0
      %v1475 = vpop.f32.mrb[0].mxu0
      %v1476 = vadd.f32 %v1251, %v1475
      %v1477 = vpop.f32.mrb[0].mxu0
      %1478 = vmatprep.mubr.bf16.mxu0 0
      %1479 = vmatmul.mubr.bf16.gmra.mrb[0].mxu0 %v1376
      %v1480 = vpop.f32.mrb[0].mxu0
      %v1481 = vadd.f32 %v1256, %v1480
      %v1482 = vpop.f32.mrb[0].mxu0
      %v1483 = vpop.f32.mrb[0].mxu0
      %v1484 = vadd.f32 %v1259, %v1483
      %v1485 = vpop.f32.mrb[0].mxu0
      %1486 = vmatprep.mubr.bf16.mxu0 0
      %1487 = vmatmul.mubr.bf16.gmra.mrb[0].mxu0 %v1379
      %v1488 = vpop.f32.mrb[0].mxu0
      %v1489 = vadd.f32 %v1264, %v1488
      %v1490 = vpop.f32.mrb[0].mxu0
      %v1491 = vpop.f32.mrb[0].mxu0
      %v1492 = vadd.f32 %v1267, %v1491
      %v1493 = vpop.f32.mrb[0].mxu0
      %1494 = vmatprep.mubr.bf16.mxu0 0
      %1495 = vmatmul.mubr.bf16.gmra.mrb[0].mxu0 %v1382
      %v1496 = vpop.f32.mrb[0].mxu0
      %v1497 = vadd.f32 %v1272, %v1496
      %v1498 = vpop.f32.mrb[0].mxu0
      %v1499 = vpop.f32.mrb[0].mxu0
      %v1500 = vadd.f32 %v1275, %v1499
      %v1501 = vpop.f32.mrb[0].mxu0
      %1502 = vmatprep.mubr.bf16.mxu0 0
      %1503 = vmatmul.mubr.bf16.gmra.mrb[0].mxu0 %v1385
      %v1504 = vpop.f32.mrb[0].mxu0
      %v1505 = vadd.f32 %v1280, %v1504
      %v1506 = vpop.f32.mrb[0].mxu0
      %v1507 = vpop.f32.mrb[0].mxu0
      %v1508 = vadd.f32 %v1283, %v1507
      %v1509 = vpop.f32.mrb[0].mxu0
      %1510 = vmatprep.mubr.bf16.mxu0 0
      %1511 = vmatmul.mubr.bf16.gmra.mrb[0].mxu0 %v1388
      %v1512 = vpop.f32.mrb[0].mxu0
      %v1513 = vadd.f32 %v1288, %v1512
      %v1514 = vpop.f32.mrb[0].mxu0
      %v1515 = vpop.f32.mrb[0].mxu0
      %v1516 = vadd.f32 %v1291, %v1515
      %v1517 = vpop.f32.mrb[0].mxu0
      %1518 = vmatprep.mubr.bf16.mxu0 0
      %1519 = vmatmul.mubr.bf16.gmra.mrb[0].mxu0 %v1391
      %v1520 = vpop.f32.mrb[0].mxu0
      %v1521 = vadd.f32 %v1296, %v1520
      %v1522 = vpop.f32.mrb[0].mxu0
      %v1523 = vpop.f32.mrb[0].mxu0
      %v1524 = vadd.f32 %v1299, %v1523
      %v1525 = vpop.f32.mrb[0].mxu0
      %1526 = vmatprep.mubr.bf16.mxu0 0
      %1527 = vmatmul.mubr.bf16.gmra.mrb[0].mxu0 %v1394
      %v1528 = vpop.f32.mrb[0].mxu0
      %v1529 = vadd.f32 %v1304, %v1528
      %v1530 = vpop.f32.mrb[0].mxu0
      %v1531 = vpop.f32.mrb[0].mxu0
      %v1532 = vadd.f32 %v1307, %v1531
      %v1533 = vpop.f32.mrb[0].mxu0
      %1534 = vmatprep.mubr.bf16.mxu0 0
      %1535 = vmatmul.mubr.bf16.gmra.mrb[0].mxu0 %v1397
      %v1536 = vpop.f32.mrb[0].mxu0
      %v1537 = vadd.f32 %v1312, %v1536
      %v1538 = vpop.f32.mrb[0].mxu0
      %v1539 = vpop.f32.mrb[0].mxu0
      %v1540 = vadd.f32 %v1315, %v1539
      %v1541 = vpop.f32.mrb[0].mxu0
      %1542 = vmatprep.mubr.bf16.mxu0 0
      %1543 = vmatmul.mubr.bf16.gmra.mrb[0].mxu0 %v1400
      %v1544 = vpop.f32.mrb[0].mxu0
      %v1545 = vadd.f32 %v1320, %v1544
      %v1546 = vpop.f32.mrb[0].mxu0
      %v1547 = vpop.f32.mrb[0].mxu0
      %v1548 = vadd.f32 %v1323, %v1547
      %v1549 = vpop.f32.mrb[0].mxu0
      %1550 = vmatprep.mubr.bf16.mxu0 0
      %1551 = vmatmul.mubr.bf16.gmra.mrb[0].mxu0 %v1403
      %v1552 = vpop.f32.mrb[0].mxu0
      %v1553 = vadd.f32 %v1328, %v1552
      %v1554 = vpop.f32.mrb[0].mxu0
      %v1555 = vpop.f32.mrb[0].mxu0
      %v1556 = vadd.f32 %v1331, %v1555
      %v1557 = vpop.f32.mrb[0].mxu0
      %1558 = vmatprep.mubr.bf16.mxu0 0
      %1559 = vmatmul.mubr.bf16.gmra.mrb[0].mxu0 %v1406
      %v1560 = vpop.f32.mrb[0].mxu0
      %v1561 = vadd.f32 %v1336, %v1560
      %v1562 = vpop.f32.mrb[0].mxu0
      %v1563 = vpop.f32.mrb[0].mxu0
      %v1564 = vadd.f32 %v1339, %v1563
      %v1565 = vpop.f32.mrb[0].mxu0
      %1566 = vmatprep.mubr.bf16.mxu0 0
      %1567 = vmatmul.mubr.bf16.gmra.mrb[0].mxu0 %v1409
      %v1568 = vpop.f32.mrb[0].mxu0
      %v1569 = vadd.f32 %v1344, %v1568
      %v1570 = vpop.f32.mrb[0].mxu0
      %v1571 = vpop.f32.mrb[0].mxu0
      %v1572 = vadd.f32 %v1347, %v1571
      %v1573 = vpop.f32.mrb[0].mxu0
      %1574 = vmatprep.mubr.bf16.mxu0 0
      %1575 = vmatmul.mubr.bf16.gmra.mrb[0].mxu0 %v1412
      %v1576 = vpop.f32.mrb[0].mxu0
      %v1577 = vadd.f32 %v1352, %v1576
      %v1578 = vpop.f32.mrb[0].mxu0
      %v1579 = vpop.f32.mrb[0].mxu0
      %v1580 = vpop.f32.mrb[0].mxu0
      %1581 = vdwg.mxu0
      %v1582 = vld [vmem:[#allocation2 + $0x38] sm:$0xff]
      %v1583 = vld [vmem:[#allocation2 + $0x40] sm:$0xff]
      %v1584 = vld [vmem:[#allocation2 + $0x48] sm:$0xff]
      %v1585 = vld [vmem:[#allocation2 + $0x50] sm:$0xff]
      %v1586 = vld [vmem:[#allocation2 + $0x58] sm:$0xff]
      %v1587 = vld [vmem:[#allocation2 + $0x60] sm:$0xff]
      %v1588 = vld [vmem:[#allocation2 + $0x68] sm:$0xff]
      %v1589 = vld [vmem:[#allocation2 + $0x70] sm:$0xff]
      %v1590 = vld [vmem:[#allocation2 + $0x78] sm:$0xff]
      %v1591 = vld [vmem:[#allocation2 + $0x80] sm:$0xff]
      %v1592 = vld [vmem:[#allocation2 + $0x88] sm:$0xff]
      %v1593 = vld [vmem:[#allocation2 + $0x90] sm:$0xff]
      %v1594 = vld [vmem:[#allocation2 + $0x98] sm:$0xff]
      %v1595 = vld [vmem:[#allocation2 + $0xa0] sm:$0xff]
      %v1596 = vld [vmem:[#allocation2 + $0xa8] sm:$0xff]
      %v1597 = vld [vmem:[#allocation2 + $0xb0] sm:$0xff]
      %v1598 = vld [vmem:[#allocation2 + $0xb8] sm:$0xff]
      %v1599 = vld [vmem:[#allocation2 + $0xc0] sm:$0xff]
      %v1600 = vld [vmem:[#allocation2 + $0xc8] sm:$0xff]
      %v1601 = vld [vmem:[#allocation2 + $0xd0] sm:$0xff]
      %v1602 = vld [vmem:[#allocation2 + $0xd8] sm:$0xff]
      %v1603 = vld [vmem:[#allocation2 + $0xe0] sm:$0xff]
      %v1604 = vld [vmem:[#allocation2 + $0xe8] sm:$0xff]
      %v1605 = vld [vmem:[#allocation2 + $0xf0] sm:$0xff]
      %v1606 = vld [vmem:[#allocation2 + $0xf8] sm:$0xff]
      %v1607 = vld [vmem:[#allocation2 + $0x100] sm:$0xff]
      %v1608 = vld [vmem:[#allocation2 + $0x108] sm:$0xff]
      %v1609 = vld [vmem:[#allocation2 + $0x110] sm:$0xff]
      %v1610 = vld [vmem:[#allocation2 + $0x118] sm:$0xff]
      %v1611 = vld [vmem:[#allocation2 + $0x120] sm:$0xff]
      %v1612 = vld [vmem:[#allocation2 + $0x128] sm:$0xff]
      %v1613 = vld [vmem:[#allocation2 + $0x130] sm:$0xff]
      %v1614 = vld [vmem:[#allocation2 + $0x138] sm:$0xff]
      %v1615 = vpack.c.bf16 %v1583, %v1582
      %v1616 = vpack.c.bf16 %v1585, %v1584
      %v1617 = vpack.c.bf16 %v1587, %v1586
      %v1618 = vpack.c.bf16 %v1589, %v1588
      %v1619 = vpack.c.bf16 %v1591, %v1590
      %v1620 = vpack.c.bf16 %v1593, %v1592
      %v1621 = vpack.c.bf16 %v1595, %v1594
      %v1622 = vpack.c.bf16 %v1597, %v1596
      %v1623 = vpack.c.bf16 %v1599, %v1598
      %v1624 = vpack.c.bf16 %v1601, %v1600
      %v1625 = vpack.c.bf16 %v1603, %v1602
      %v1626 = vpack.c.bf16 %v1605, %v1604
      %v1627 = vpack.c.bf16 %v1607, %v1606
      %v1628 = vpack.c.bf16 %v1609, %v1608
      %v1629 = vpack.c.bf16 %v1611, %v1610
      %v1630 = vpack.c.bf16 %v1613, %v1612
      %v1631 = vpack.c.bf16 %v1614, %v1614
      %v1632 = vld [vmem:[%s3 + $0x10] sm:$0xf]
      %v1633 = vld [vmem:[%s3 + $0x14] sm:$0xf]
      %v1636 = vunpack.c.l.b16 %v1632
      %v1637 = vunpack.c.l.b16 %v1633
      %v1638 = vpack.c.b16 %v1637, %v1636
      %v1641 = vsel %vm1018, %v1615, 0
      %v1644 = vsel %vm1018, %v1616, 0
      %v1647 = vsel %vm1018, %v1617, 0
      %v1650 = vsel %vm1018, %v1618, 0
      %v1653 = vsel %vm1018, %v1619, 0
      %v1656 = vsel %vm1018, %v1620, 0
      %v1659 = vsel %vm1018, %v1621, 0
      %v1662 = vsel %vm1018, %v1622, 0
      %v1665 = vsel %vm1018, %v1623, 0
      %v1668 = vsel %vm1018, %v1624, 0
      %v1671 = vsel %vm1018, %v1625, 0
      %v1674 = vsel %vm1018, %v1626, 0
      %v1677 = vsel %vm1018, %v1627, 0
      %v1680 = vsel %vm1018, %v1628, 0
      %v1683 = vsel %vm1018, %v1629, 0
      %v1686 = vsel %vm1018, %v1630, 0
      %v1689 = vsel %vm1018, %v1631, 0
      %1691 = vmatprep.subr.bf16.mxu0 0
      %1692 = vmatpush1.bf16.msra.mxu0 %v1638
      %1693 = vmatprep.subr.bf16.mxu0 0
      %1694 = vmatpush1.bf16.msra.mxu0 0
      %1695 = vmatprep.subr.bf16.mxu0 0
      %1696 = vmatpush1.bf16.msra.mxu0 0
      %1697 = vmatprep.subr.bf16.mxu0 0
      %1698 = vmatpush1.bf16.msra.mxu0 0
      %1699 = vmatprep.subr.bf16.mxu0 0
      %1700 = vmatpush1.bf16.msra.mxu0 0
      %1701 = vmatprep.subr.bf16.mxu0 0
      %1702 = vmatpush1.bf16.msra.mxu0 0
      %1703 = vmatprep.subr.bf16.mxu0 0
      %1704 = vmatpush1.bf16.msra.mxu0 0
      %1705 = vmatprep.subr.bf16.mxu0 0
      %1706 = vmatpush1.bf16.msra.mxu0 0
      %1707 = vmatprep.subr.bf16.mxu0 0
      %1708 = vmatpush1.bf16.msra.mxu0 0
      %1709 = vmatprep.subr.bf16.mxu0 0
      %1710 = vmatpush1.bf16.msra.mxu0 0
      %1711 = vmatprep.subr.bf16.mxu0 0
      %1712 = vmatpush1.bf16.msra.mxu0 0
      %1713 = vmatprep.subr.bf16.mxu0 0
      %1714 = vmatpush1.bf16.msra.mxu0 0
      %1715 = vmatprep.subr.bf16.mxu0 0
      %1716 = vmatpush1.bf16.msra.mxu0 0
      %1717 = vmatprep.subr.bf16.mxu0 0
      %1718 = vmatpush1.bf16.msra.mxu0 0
      %1719 = vmatprep.subr.bf16.mxu0 0
      %1720 = vmatpush1.bf16.msra.mxu0 0
      %1721 = vmatprep.subr.bf16.mxu0 0
      %1722 = vmatpush1.bf16.msra.mxu0 0
      %1723 = vmatprep.mubr.bf16.mxu0 0
      %1724 = vmatmul.mubr.bf16.gmra.mrb[0].mxu0 %v1641
      %v1725 = vpop.f32.mrb[0].mxu0
      %v1726 = vadd.f32 0.0, %v1725
      %v1727 = vpop.f32.mrb[0].mxu0
      %v1728 = vpop.f32.mrb[0].mxu0
      %v1729 = vadd.f32 0.0, %v1728
      %v1730 = vpop.f32.mrb[0].mxu0
      %1731 = vmatprep.mubr.bf16.mxu0 0
      %1732 = vmatmul.mubr.bf16.gmra.mrb[0].mxu0 %v1644
      %v1733 = vpop.f32.mrb[0].mxu0
      %v1734 = vadd.f32 0.0, %v1733
      %v1735 = vpop.f32.mrb[0].mxu0
      %v1736 = vpop.f32.mrb[0].mxu0
      %v1737 = vadd.f32 0.0, %v1736
      %v1738 = vpop.f32.mrb[0].mxu0
      %1739 = vmatprep.mubr.bf16.mxu0 0
      %1740 = vmatmul.mubr.bf16.gmra.mrb[0].mxu0 %v1647
      %v1741 = vpop.f32.mrb[0].mxu0
      %v1742 = vadd.f32 0.0, %v1741
      %v1743 = vpop.f32.mrb[0].mxu0
      %v1744 = vpop.f32.mrb[0].mxu0
      %v1745 = vadd.f32 0.0, %v1744
      %v1746 = vpop.f32.mrb[0].mxu0
      %1747 = vmatprep.mubr.bf16.mxu0 0
      %1748 = vmatmul.mubr.bf16.gmra.mrb[0].mxu0 %v1650
      %v1749 = vpop.f32.mrb[0].mxu0
      %v1750 = vadd.f32 0.0, %v1749
      %v1751 = vpop.f32.mrb[0].mxu0
      %v1752 = vpop.f32.mrb[0].mxu0
      %v1753 = vadd.f32 0.0, %v1752
      %v1754 = vpop.f32.mrb[0].mxu0
      %1755 = vmatprep.mubr.bf16.mxu0 0
      %1756 = vmatmul.mubr.bf16.gmra.mrb[0].mxu0 %v1653
      %v1757 = vpop.f32.mrb[0].mxu0
      %v1758 = vadd.f32 0.0, %v1757
      %v1759 = vpop.f32.mrb[0].mxu0
      %v1760 = vpop.f32.mrb[0].mxu0
      %v1761 = vadd.f32 0.0, %v1760
      %v1762 = vpop.f32.mrb[0].mxu0
      %1763 = vmatprep.mubr.bf16.mxu0 0
      %1764 = vmatmul.mubr.bf16.gmra.mrb[0].mxu0 %v1656
      %v1765 = vpop.f32.mrb[0].mxu0
      %v1766 = vadd.f32 0.0, %v1765
      %v1767 = vpop.f32.mrb[0].mxu0
      %v1768 = vpop.f32.mrb[0].mxu0
      %v1769 = vadd.f32 0.0, %v1768
      %v1770 = vpop.f32.mrb[0].mxu0
      %1771 = vmatprep.mubr.bf16.mxu0 0
      %1772 = vmatmul.mubr.bf16.gmra.mrb[0].mxu0 %v1659
      %v1773 = vpop.f32.mrb[0].mxu0
      %v1774 = vadd.f32 0.0, %v1773
      %v1775 = vpop.f32.mrb[0].mxu0
      %v1776 = vpop.f32.mrb[0].mxu0
      %v1777 = vadd.f32 0.0, %v1776
      %v1778 = vpop.f32.mrb[0].mxu0
      %1779 = vmatprep.mubr.bf16.mxu0 0
      %1780 = vmatmul.mubr.bf16.gmra.mrb[0].mxu0 %v1662
      %v1781 = vpop.f32.mrb[0].mxu0
      %v1782 = vadd.f32 0.0, %v1781
      %v1783 = vpop.f32.mrb[0].mxu0
      %v1784 = vpop.f32.mrb[0].mxu0
      %v1785 = vadd.f32 0.0, %v1784
      %v1786 = vpop.f32.mrb[0].mxu0
      %1787 = vmatprep.mubr.bf16.mxu0 0
      %1788 = vmatmul.mubr.bf16.gmra.mrb[0].mxu0 %v1665
      %v1789 = vpop.f32.mrb[0].mxu0
      %v1790 = vadd.f32 0.0, %v1789
      %v1791 = vpop.f32.mrb[0].mxu0
      %v1792 = vpop.f32.mrb[0].mxu0
      %v1793 = vadd.f32 0.0, %v1792
      %v1794 = vpop.f32.mrb[0].mxu0
      %1795 = vmatprep.mubr.bf16.mxu0 0
      %1796 = vmatmul.mubr.bf16.gmra.mrb[0].mxu0 %v1668
      %v1797 = vpop.f32.mrb[0].mxu0
      %v1798 = vadd.f32 0.0, %v1797
      %v1799 = vpop.f32.mrb[0].mxu0
      %v1800 = vpop.f32.mrb[0].mxu0
      %v1801 = vadd.f32 0.0, %v1800
      %v1802 = vpop.f32.mrb[0].mxu0
      %1803 = vmatprep.mubr.bf16.mxu0 0
      %1804 = vmatmul.mubr.bf16.gmra.mrb[0].mxu0 %v1671
      %v1805 = vpop.f32.mrb[0].mxu0
      %v1806 = vadd.f32 0.0, %v1805
      %v1807 = vpop.f32.mrb[0].mxu0
      %v1808 = vpop.f32.mrb[0].mxu0
      %v1809 = vadd.f32 0.0, %v1808
      %v1810 = vpop.f32.mrb[0].mxu0
      %1811 = vmatprep.mubr.bf16.mxu0 0
      %1812 = vmatmul.mubr.bf16.gmra.mrb[0].mxu0 %v1674
      %v1813 = vpop.f32.mrb[0].mxu0
      %v1814 = vadd.f32 0.0, %v1813
      %v1815 = vpop.f32.mrb[0].mxu0
      %v1816 = vpop.f32.mrb[0].mxu0
      %v1817 = vadd.f32 0.0, %v1816
      %v1818 = vpop.f32.mrb[0].mxu0
      %1819 = vmatprep.mubr.bf16.mxu0 0
      %1820 = vmatmul.mubr.bf16.gmra.mrb[0].mxu0 %v1677
      %v1821 = vpop.f32.mrb[0].mxu0
      %v1822 = vadd.f32 0.0, %v1821
      %v1823 = vpop.f32.mrb[0].mxu0
      %v1824 = vpop.f32.mrb[0].mxu0
      %v1825 = vadd.f32 0.0, %v1824
      %v1826 = vpop.f32.mrb[0].mxu0
      %1827 = vmatprep.mubr.bf16.mxu0 0
      %1828 = vmatmul.mubr.bf16.gmra.mrb[0].mxu0 %v1680
      %v1829 = vpop.f32.mrb[0].mxu0
      %v1830 = vadd.f32 0.0, %v1829
      %v1831 = vpop.f32.mrb[0].mxu0
      %v1832 = vpop.f32.mrb[0].mxu0
      %v1833 = vadd.f32 0.0, %v1832
      %v1834 = vpop.f32.mrb[0].mxu0
      %1835 = vmatprep.mubr.bf16.mxu0 0
      %1836 = vmatmul.mubr.bf16.gmra.mrb[0].mxu0 %v1683
      %v1837 = vpop.f32.mrb[0].mxu0
      %v1838 = vadd.f32 0.0, %v1837
      %v1839 = vpop.f32.mrb[0].mxu0
      %v1840 = vpop.f32.mrb[0].mxu0
      %v1841 = vadd.f32 0.0, %v1840
      %v1842 = vpop.f32.mrb[0].mxu0
      %1843 = vmatprep.mubr.bf16.mxu0 0
      %1844 = vmatmul.mubr.bf16.gmra.mrb[0].mxu0 %v1686
      %v1845 = vpop.f32.mrb[0].mxu0
      %v1846 = vadd.f32 0.0, %v1845
      %v1847 = vpop.f32.mrb[0].mxu0
      %v1848 = vpop.f32.mrb[0].mxu0
      %v1849 = vadd.f32 0.0, %v1848
      %v1850 = vpop.f32.mrb[0].mxu0
      %1851 = vmatprep.mubr.bf16.mxu0 0
      %1852 = vmatmul.mubr.bf16.gmra.mrb[0].mxu0 %v1689
      %v1853 = vpop.f32.mrb[0].mxu0
      %v1854 = vadd.f32 0.0, %v1853
      %v1855 = vpop.f32.mrb[0].mxu0
      %v1856 = vpop.f32.mrb[0].mxu0
      %v1857 = vpop.f32.mrb[0].mxu0
      %1858 = vdwg.mxu0
      %v1859 = vadd.f32 %v1449, %v1726
      %v1860 = vadd.f32 %v1452, %v1729
      %v1861 = vadd.f32 %v1457, %v1734
      %v1862 = vadd.f32 %v1460, %v1737
      %v1863 = vadd.f32 %v1465, %v1742
      %v1864 = vadd.f32 %v1468, %v1745
      %v1865 = vadd.f32 %v1473, %v1750
      %v1866 = vadd.f32 %v1476, %v1753
      %v1867 = vadd.f32 %v1481, %v1758
      %v1868 = vadd.f32 %v1484, %v1761
      %v1869 = vadd.f32 %v1489, %v1766
      %v1870 = vadd.f32 %v1492, %v1769
      %v1871 = vadd.f32 %v1497, %v1774
      %v1872 = vadd.f32 %v1500, %v1777
      %v1873 = vadd.f32 %v1505, %v1782
      %v1874 = vadd.f32 %v1508, %v1785
      %v1875 = vadd.f32 %v1513, %v1790
      %v1876 = vadd.f32 %v1516, %v1793
      %v1877 = vadd.f32 %v1521, %v1798
      %v1878 = vadd.f32 %v1524, %v1801
      %v1879 = vadd.f32 %v1529, %v1806
      %v1880 = vadd.f32 %v1532, %v1809
      %v1881 = vadd.f32 %v1537, %v1814
      %v1882 = vadd.f32 %v1540, %v1817
      %v1883 = vadd.f32 %v1545, %v1822
      %v1884 = vadd.f32 %v1548, %v1825
      %v1885 = vadd.f32 %v1553, %v1830
      %v1886 = vadd.f32 %v1556, %v1833
      %v1887 = vadd.f32 %v1561, %v1838
      %v1888 = vadd.f32 %v1564, %v1841
      %v1889 = vadd.f32 %v1569, %v1846
      %v1890 = vadd.f32 %v1572, %v1849
      %v1891 = vadd.f32 %v1577, %v1854
      %v1892 = vld [vmem:[#allocation2 + $0x40] sm:$0xff]
      %v1893 = vld [vmem:[#allocation2 + $0x48] sm:$0xff]
      %v1894 = vld [vmem:[#allocation2 + $0x50] sm:$0xff]
      %v1895 = vld [vmem:[#allocation2 + $0x58] sm:$0xff]
      %v1896 = vld [vmem:[#allocation2 + $0x60] sm:$0xff]
      %v1897 = vld [vmem:[#allocation2 + $0x68] sm:$0xff]
      %v1898 = vld [vmem:[#allocation2 + $0x70] sm:$0xff]
      %v1899 = vld [vmem:[#allocation2 + $0x78] sm:$0xff]
      %v1900 = vld [vmem:[#allocation2 + $0x80] sm:$0xff]
      %v1901 = vld [vmem:[#allocation2 + $0x88] sm:$0xff]
      %v1902 = vld [vmem:[#allocation2 + $0x90] sm:$0xff]
      %v1903 = vld [vmem:[#allocation2 + $0x98] sm:$0xff]
      %v1904 = vld [vmem:[#allocation2 + $0xa0] sm:$0xff]
      %v1905 = vld [vmem:[#allocation2 + $0xa8] sm:$0xff]
      %v1906 = vld [vmem:[#allocation2 + $0xb0] sm:$0xff]
      %v1907 = vld [vmem:[#allocation2 + $0xb8] sm:$0xff]
      %v1908 = vld [vmem:[#allocation2 + $0xc0] sm:$0xff]
      %v1909 = vld [vmem:[#allocation2 + $0xc8] sm:$0xff]
      %v1910 = vld [vmem:[#allocation2 + $0xd0] sm:$0xff]
      %v1911 = vld [vmem:[#allocation2 + $0xd8] sm:$0xff]
      %v1912 = vld [vmem:[#allocation2 + $0xe0] sm:$0xff]
      %v1913 = vld [vmem:[#allocation2 + $0xe8] sm:$0xff]
      %v1914 = vld [vmem:[#allocation2 + $0xf0] sm:$0xff]
      %v1915 = vld [vmem:[#allocation2 + $0xf8] sm:$0xff]
      %v1916 = vld [vmem:[#allocation2 + $0x100] sm:$0xff]
      %v1917 = vld [vmem:[#allocation2 + $0x108] sm:$0xff]
      %v1918 = vld [vmem:[#allocation2 + $0x110] sm:$0xff]
      %v1919 = vld [vmem:[#allocation2 + $0x118] sm:$0xff]
      %v1920 = vld [vmem:[#allocation2 + $0x120] sm:$0xff]
      %v1921 = vld [vmem:[#allocation2 + $0x128] sm:$0xff]
      %v1922 = vld [vmem:[#allocation2 + $0x130] sm:$0xff]
      %v1923 = vld [vmem:[#allocation2 + $0x138] sm:$0xff]
      %v1924 = vld [vmem:[#allocation2 + $0x140] sm:$0xff]
      %v1925 = vpack.c.bf16 %v1893, %v1892
      %v1926 = vpack.c.bf16 %v1895, %v1894
      %v1927 = vpack.c.bf16 %v1897, %v1896
      %v1928 = vpack.c.bf16 %v1899, %v1898
      %v1929 = vpack.c.bf16 %v1901, %v1900
      %v1930 = vpack.c.bf16 %v1903, %v1902
      %v1931 = vpack.c.bf16 %v1905, %v1904
      %v1932 = vpack.c.bf16 %v1907, %v1906
      %v1933 = vpack.c.bf16 %v1909, %v1908
      %v1934 = vpack.c.bf16 %v1911, %v1910
      %v1935 = vpack.c.bf16 %v1913, %v1912
      %v1936 = vpack.c.bf16 %v1915, %v1914
      %v1937 = vpack.c.bf16 %v1917, %v1916
      %v1938 = vpack.c.bf16 %v1919, %v1918
      %v1939 = vpack.c.bf16 %v1921, %v1920
      %v1940 = vpack.c.bf16 %v1923, %v1922
      %v1941 = vpack.c.bf16 %v1924, %v1924
      %v1942 = vld [vmem:[%s3 + $0x18] sm:$0xf]
      %v1943 = vld [vmem:[%s3 + $0x1c] sm:$0xf]
      %v1946 = vunpack.c.l.b16 %v1942
      %v1947 = vunpack.c.l.b16 %v1943
      %v1948 = vpack.c.b16 %v1947, %v1946
      %v1951 = vsel %vm1018, %v1925, 0
      %v1954 = vsel %vm1018, %v1926, 0
      %v1957 = vsel %vm1018, %v1927, 0
      %v1960 = vsel %vm1018, %v1928, 0
      %v1963 = vsel %vm1018, %v1929, 0
      %v1966 = vsel %vm1018, %v1930, 0
      %v1969 = vsel %vm1018, %v1931, 0
      %v1972 = vsel %vm1018, %v1932, 0
      %v1975 = vsel %vm1018, %v1933, 0
      %v1978 = vsel %vm1018, %v1934, 0
      %v1981 = vsel %vm1018, %v1935, 0
      %v1984 = vsel %vm1018, %v1936, 0
      %v1987 = vsel %vm1018, %v1937, 0
      %v1990 = vsel %vm1018, %v1938, 0
      %v1993 = vsel %vm1018, %v1939, 0
      %v1996 = vsel %vm1018, %v1940, 0
      %v1999 = vsel %vm1018, %v1941, 0
      %2001 = vmatprep.subr.bf16.mxu0 0
      %2002 = vmatpush1.bf16.msra.mxu0 %v1948
      %2003 = vmatprep.subr.bf16.mxu0 0
      %2004 = vmatpush1.bf16.msra.mxu0 0
      %2005 = vmatprep.subr.bf16.mxu0 0
      %2006 = vmatpush1.bf16.msra.mxu0 0
      %2007 = vmatprep.subr.bf16.mxu0 0
      %2008 = vmatpush1.bf16.msra.mxu0 0
      %2009 = vmatprep.subr.bf16.mxu0 0
      %2010 = vmatpush1.bf16.msra.mxu0 0
      %2011 = vmatprep.subr.bf16.mxu0 0
      %2012 = vmatpush1.bf16.msra.mxu0 0
      %2013 = vmatprep.subr.bf16.mxu0 0
      %2014 = vmatpush1.bf16.msra.mxu0 0
      %2015 = vmatprep.subr.bf16.mxu0 0
      %2016 = vmatpush1.bf16.msra.mxu0 0
      %2017 = vmatprep.subr.bf16.mxu0 0
      %2018 = vmatpush1.bf16.msra.mxu0 0
      %2019 = vmatprep.subr.bf16.mxu0 0
      %2020 = vmatpush1.bf16.msra.mxu0 0
      %2021 = vmatprep.subr.bf16.mxu0 0
      %2022 = vmatpush1.bf16.msra.mxu0 0
      %2023 = vmatprep.subr.bf16.mxu0 0
      %2024 = vmatpush1.bf16.msra.mxu0 0
      %2025 = vmatprep.subr.bf16.mxu0 0
      %2026 = vmatpush1.bf16.msra.mxu0 0
      %2027 = vmatprep.subr.bf16.mxu0 0
      %2028 = vmatpush1.bf16.msra.mxu0 0
      %2029 = vmatprep.subr.bf16.mxu0 0
      %2030 = vmatpush1.bf16.msra.mxu0 0
      %2031 = vmatprep.subr.bf16.mxu0 0
      %2032 = vmatpush1.bf16.msra.mxu0 0
      %2033 = vmatprep.mubr.bf16.mxu0 0
      %2034 = vmatmul.mubr.bf16.gmra.mrb[0].mxu0 %v1951
      %v2035 = vpop.f32.mrb[0].mxu0
      %v2036 = vadd.f32 0.0, %v2035
      %v2037 = vpop.f32.mrb[0].mxu0
      %v2038 = vpop.f32.mrb[0].mxu0
      %v2039 = vadd.f32 0.0, %v2038
      %v2040 = vpop.f32.mrb[0].mxu0
      %2041 = vmatprep.mubr.bf16.mxu0 0
      %2042 = vmatmul.mubr.bf16.gmra.mrb[0].mxu0 %v1954
      %v2043 = vpop.f32.mrb[0].mxu0
      %v2044 = vadd.f32 0.0, %v2043
      %v2045 = vpop.f32.mrb[0].mxu0
      %v2046 = vpop.f32.mrb[0].mxu0
      %v2047 = vadd.f32 0.0, %v2046
      %v2048 = vpop.f32.mrb[0].mxu0
      %2049 = vmatprep.mubr.bf16.mxu0 0
      %2050 = vmatmul.mubr.bf16.gmra.mrb[0].mxu0 %v1957
      %v2051 = vpop.f32.mrb[0].mxu0
      %v2052 = vadd.f32 0.0, %v2051
      %v2053 = vpop.f32.mrb[0].mxu0
      %v2054 = vpop.f32.mrb[0].mxu0
      %v2055 = vadd.f32 0.0, %v2054
      %v2056 = vpop.f32.mrb[0].mxu0
      %2057 = vmatprep.mubr.bf16.mxu0 0
      %2058 = vmatmul.mubr.bf16.gmra.mrb[0].mxu0 %v1960
      %v2059 = vpop.f32.mrb[0].mxu0
      %v2060 = vadd.f32 0.0, %v2059
      %v2061 = vpop.f32.mrb[0].mxu0
      %v2062 = vpop.f32.mrb[0].mxu0
      %v2063 = vadd.f32 0.0, %v2062
      %v2064 = vpop.f32.mrb[0].mxu0
      %2065 = vmatprep.mubr.bf16.mxu0 0
      %2066 = vmatmul.mubr.bf16.gmra.mrb[0].mxu0 %v1963
      %v2067 = vpop.f32.mrb[0].mxu0
      %v2068 = vadd.f32 0.0, %v2067
      %v2069 = vpop.f32.mrb[0].mxu0
      %v2070 = vpop.f32.mrb[0].mxu0
      %v2071 = vadd.f32 0.0, %v2070
      %v2072 = vpop.f32.mrb[0].mxu0
      %2073 = vmatprep.mubr.bf16.mxu0 0
      %2074 = vmatmul.mubr.bf16.gmra.mrb[0].mxu0 %v1966
      %v2075 = vpop.f32.mrb[0].mxu0
      %v2076 = vadd.f32 0.0, %v2075
      %v2077 = vpop.f32.mrb[0].mxu0
      %v2078 = vpop.f32.mrb[0].mxu0
      %v2079 = vadd.f32 0.0, %v2078
      %v2080 = vpop.f32.mrb[0].mxu0
      %2081 = vmatprep.mubr.bf16.mxu0 0
      %2082 = vmatmul.mubr.bf16.gmra.mrb[0].mxu0 %v1969
      %v2083 = vpop.f32.mrb[0].mxu0
      %v2084 = vadd.f32 0.0, %v2083
      %v2085 = vpop.f32.mrb[0].mxu0
      %v2086 = vpop.f32.mrb[0].mxu0
      %v2087 = vadd.f32 0.0, %v2086
      %v2088 = vpop.f32.mrb[0].mxu0
      %2089 = vmatprep.mubr.bf16.mxu0 0
      %2090 = vmatmul.mubr.bf16.gmra.mrb[0].mxu0 %v1972
      %v2091 = vpop.f32.mrb[0].mxu0
      %v2092 = vadd.f32 0.0, %v2091
      %v2093 = vpop.f32.mrb[0].mxu0
      %v2094 = vpop.f32.mrb[0].mxu0
      %v2095 = vadd.f32 0.0, %v2094
      %v2096 = vpop.f32.mrb[0].mxu0
      %2097 = vmatprep.mubr.bf16.mxu0 0
      %2098 = vmatmul.mubr.bf16.gmra.mrb[0].mxu0 %v1975
      %v2099 = vpop.f32.mrb[0].mxu0
      %v2100 = vadd.f32 0.0, %v2099
      %v2101 = vpop.f32.mrb[0].mxu0
      %v2102 = vpop.f32.mrb[0].mxu0
      %v2103 = vadd.f32 0.0, %v2102
      %v2104 = vpop.f32.mrb[0].mxu0
      %2105 = vmatprep.mubr.bf16.mxu0 0
      %2106 = vmatmul.mubr.bf16.gmra.mrb[0].mxu0 %v1978
      %v2107 = vpop.f32.mrb[0].mxu0
      %v2108 = vadd.f32 0.0, %v2107
      %v2109 = vpop.f32.mrb[0].mxu0
      %v2110 = vpop.f32.mrb[0].mxu0
      %v2111 = vadd.f32 0.0, %v2110
      %v2112 = vpop.f32.mrb[0].mxu0
      %2113 = vmatprep.mubr.bf16.mxu0 0
      %2114 = vmatmul.mubr.bf16.gmra.mrb[0].mxu0 %v1981
      %v2115 = vpop.f32.mrb[0].mxu0
      %v2116 = vadd.f32 0.0, %v2115
      %v2117 = vpop.f32.mrb[0].mxu0
      %v2118 = vpop.f32.mrb[0].mxu0
      %v2119 = vadd.f32 0.0, %v2118
      %v2120 = vpop.f32.mrb[0].mxu0
      %2121 = vmatprep.mubr.bf16.mxu0 0
      %2122 = vmatmul.mubr.bf16.gmra.mrb[0].mxu0 %v1984
      %v2123 = vpop.f32.mrb[0].mxu0
      %v2124 = vadd.f32 0.0, %v2123
      %v2125 = vpop.f32.mrb[0].mxu0
      %v2126 = vpop.f32.mrb[0].mxu0
      %v2127 = vadd.f32 0.0, %v2126
      %v2128 = vpop.f32.mrb[0].mxu0
      %2129 = vmatprep.mubr.bf16.mxu0 0
      %2130 = vmatmul.mubr.bf16.gmra.mrb[0].mxu0 %v1987
      %v2131 = vpop.f32.mrb[0].mxu0
      %v2132 = vadd.f32 0.0, %v2131
      %v2133 = vpop.f32.mrb[0].mxu0
      %v2134 = vpop.f32.mrb[0].mxu0
      %v2135 = vadd.f32 0.0, %v2134
      %v2136 = vpop.f32.mrb[0].mxu0
      %2137 = vmatprep.mubr.bf16.mxu0 0
      %2138 = vmatmul.mubr.bf16.gmra.mrb[0].mxu0 %v1990
      %v2139 = vpop.f32.mrb[0].mxu0
      %v2140 = vadd.f32 0.0, %v2139
      %v2141 = vpop.f32.mrb[0].mxu0
      %v2142 = vpop.f32.mrb[0].mxu0
      %v2143 = vadd.f32 0.0, %v2142
      %v2144 = vpop.f32.mrb[0].mxu0
      %2145 = vmatprep.mubr.bf16.mxu0 0
      %2146 = vmatmul.mubr.bf16.gmra.mrb[0].mxu0 %v1993
      %v2147 = vpop.f32.mrb[0].mxu0
      %v2148 = vadd.f32 0.0, %v2147
      %v2149 = vpop.f32.mrb[0].mxu0
      %v2150 = vpop.f32.mrb[0].mxu0
      %v2151 = vadd.f32 0.0, %v2150
      %v2152 = vpop.f32.mrb[0].mxu0
      %2153 = vmatprep.mubr.bf16.mxu0 0
      %2154 = vmatmul.mubr.bf16.gmra.mrb[0].mxu0 %v1996
      %v2155 = vpop.f32.mrb[0].mxu0
      %v2156 = vadd.f32 0.0, %v2155
      %v2157 = vpop.f32.mrb[0].mxu0
      %v2158 = vpop.f32.mrb[0].mxu0
      %v2159 = vadd.f32 0.0, %v2158
      %v2160 = vpop.f32.mrb[0].mxu0
      %2161 = vmatprep.mubr.bf16.mxu0 0
      %2162 = vmatmul.mubr.bf16.gmra.mrb[0].mxu0 %v1999
      %v2163 = vpop.f32.mrb[0].mxu0
      %v2164 = vadd.f32 0.0, %v2163
      %v2165 = vpop.f32.mrb[0].mxu0
      %v2166 = vpop.f32.mrb[0].mxu0
      %v2167 = vpop.f32.mrb[0].mxu0
      %2168 = vdwg.mxu0
      %v2169 = vadd.f32 %v1859, %v2036
      %v2170 = vadd.f32 %v1860, %v2039
      %v2171 = vadd.f32 %v1861, %v2044
      %v2172 = vadd.f32 %v1862, %v2047
      %v2173 = vadd.f32 %v1863, %v2052
      %v2174 = vadd.f32 %v1864, %v2055
      %v2175 = vadd.f32 %v1865, %v2060
      %v2176 = vadd.f32 %v1866, %v2063
      %v2177 = vadd.f32 %v1867, %v2068
      %v2178 = vadd.f32 %v1868, %v2071
      %v2179 = vadd.f32 %v1869, %v2076
      %v2180 = vadd.f32 %v1870, %v2079
      %v2181 = vadd.f32 %v1871, %v2084
      %v2182 = vadd.f32 %v1872, %v2087
      %v2183 = vadd.f32 %v1873, %v2092
      %v2184 = vadd.f32 %v1874, %v2095
      %v2185 = vadd.f32 %v1875, %v2100
      %v2186 = vadd.f32 %v1876, %v2103
      %v2187 = vadd.f32 %v1877, %v2108
      %v2188 = vadd.f32 %v1878, %v2111
      %v2189 = vadd.f32 %v1879, %v2116
      %v2190 = vadd.f32 %v1880, %v2119
      %v2191 = vadd.f32 %v1881, %v2124
      %v2192 = vadd.f32 %v1882, %v2127
      %v2193 = vadd.f32 %v1883, %v2132
      %v2194 = vadd.f32 %v1884, %v2135
      %v2195 = vadd.f32 %v1885, %v2140
      %v2196 = vadd.f32 %v1886, %v2143
      %v2197 = vadd.f32 %v1887, %v2148
      %v2198 = vadd.f32 %v1888, %v2151
      %v2199 = vadd.f32 %v1889, %v2156
      %v2200 = vadd.f32 %v1890, %v2159
      %v2201 = vadd.f32 %v1891, %v2164
      %v2202 = vld [vmem:[%s4] sm:$0x1]
      %v2204 = vlaneseq
      %v2205 = vshrl.u32 %v2204, 7
      %v2206 = vsub.s32 0, %v2205
      %v2207 = vrot.slane %v2202, %v2206
      %v2209 = vadd.f32 %v2169, %v2207
      %v2210 = vadd.f32 %v2170, %v2207
      %v2211 = vadd.f32 %v2171, %v2207
      %v2212 = vadd.f32 %v2172, %v2207
      %v2213 = vadd.f32 %v2173, %v2207
      %v2214 = vadd.f32 %v2174, %v2207
      %v2215 = vadd.f32 %v2175, %v2207
      %v2216 = vadd.f32 %v2176, %v2207
      %v2217 = vadd.f32 %v2177, %v2207
      %v2218 = vadd.f32 %v2178, %v2207
      %v2219 = vadd.f32 %v2179, %v2207
      %v2220 = vadd.f32 %v2180, %v2207
      %v2221 = vadd.f32 %v2181, %v2207
      %v2222 = vadd.f32 %v2182, %v2207
      %v2223 = vadd.f32 %v2183, %v2207
      %v2224 = vadd.f32 %v2184, %v2207
      %v2225 = vadd.f32 %v2185, %v2207
      %v2226 = vadd.f32 %v2186, %v2207
      %v2227 = vadd.f32 %v2187, %v2207
      %v2228 = vadd.f32 %v2188, %v2207
      %v2229 = vadd.f32 %v2189, %v2207
      %v2230 = vadd.f32 %v2190, %v2207
      %v2231 = vadd.f32 %v2191, %v2207
      %v2232 = vadd.f32 %v2192, %v2207
      %v2233 = vadd.f32 %v2193, %v2207
      %v2234 = vadd.f32 %v2194, %v2207
      %v2235 = vadd.f32 %v2195, %v2207
      %v2236 = vadd.f32 %v2196, %v2207
      %v2237 = vadd.f32 %v2197, %v2207
      %v2238 = vadd.f32 %v2198, %v2207
      %v2239 = vadd.f32 %v2199, %v2207
      %v2240 = vadd.f32 %v2200, %v2207
      %v2241 = vadd.f32 %v2201, %v2207
      %v2242 = vmax.f32 %v2209, 0.0
      %v2243 = vmax.f32 %v2210, 0.0
      %v2244 = vmax.f32 %v2211, 0.0
      %v2245 = vmax.f32 %v2212, 0.0
      %v2246 = vmax.f32 %v2213, 0.0
      %v2247 = vmax.f32 %v2214, 0.0
      %v2248 = vmax.f32 %v2215, 0.0
      %v2249 = vmax.f32 %v2216, 0.0
      %v2250 = vmax.f32 %v2217, 0.0
      %v2251 = vmax.f32 %v2218, 0.0
      %v2252 = vmax.f32 %v2219, 0.0
      %v2253 = vmax.f32 %v2220, 0.0
      %v2254 = vmax.f32 %v2221, 0.0
      %v2255 = vmax.f32 %v2222, 0.0
      %v2256 = vmax.f32 %v2223, 0.0
      %v2257 = vmax.f32 %v2224, 0.0
      %v2258 = vmax.f32 %v2225, 0.0
      %v2259 = vmax.f32 %v2226, 0.0
      %v2260 = vmax.f32 %v2227, 0.0
      %v2261 = vmax.f32 %v2228, 0.0
      %v2262 = vmax.f32 %v2229, 0.0
      %v2263 = vmax.f32 %v2230, 0.0
      %v2264 = vmax.f32 %v2231, 0.0
      %v2265 = vmax.f32 %v2232, 0.0
      %v2266 = vmax.f32 %v2233, 0.0
      %v2267 = vmax.f32 %v2234, 0.0
      %v2268 = vmax.f32 %v2235, 0.0
      %v2269 = vmax.f32 %v2236, 0.0
      %v2270 = vmax.f32 %v2237, 0.0
      %v2271 = vmax.f32 %v2238, 0.0
      %v2272 = vmax.f32 %v2239, 0.0
      %v2273 = vmax.f32 %v2240, 0.0
      %v2274 = vmax.f32 %v2241, 0.0
      %vm2275 = vcmask 261120
      %2276 = vst.msk [vmem:[#allocation3] sm:$0xff] %vm2275, %v2242
      %2277 = vst.msk [vmem:[#allocation3 + $0x8] sm:$0xff] %vm2275, %v2243
      %2278 = vst.msk [vmem:[#allocation3 + $0x10] sm:$0xff] %vm2275, %v2244
      %2279 = vst.msk [vmem:[#allocation3 + $0x18] sm:$0xff] %vm2275, %v2245
      %2280 = vst.msk [vmem:[#allocation3 + $0x20] sm:$0xff] %vm2275, %v2246
      %2281 = vst.msk [vmem:[#allocation3 + $0x28] sm:$0xff] %vm2275, %v2247
      %2282 = vst.msk [vmem:[#allocation3 + $0x30] sm:$0xff] %vm2275, %v2248
      %2283 = vst.msk [vmem:[#allocation3 + $0x38] sm:$0xff] %vm2275, %v2249
      %2284 = vst.msk [vmem:[#allocation3 + $0x40] sm:$0xff] %vm2275, %v2250
      %2285 = vst.msk [vmem:[#allocation3 + $0x48] sm:$0xff] %vm2275, %v2251
      %2286 = vst.msk [vmem:[#allocation3 + $0x50] sm:$0xff] %vm2275, %v2252
      %2287 = vst.msk [vmem:[#allocation3 + $0x58] sm:$0xff] %vm2275, %v2253
      %2288 = vst.msk [vmem:[#allocation3 + $0x60] sm:$0xff] %vm2275, %v2254
      %2289 = vst.msk [vmem:[#allocation3 + $0x68] sm:$0xff] %vm2275, %v2255
      %2290 = vst.msk [vmem:[#allocation3 + $0x70] sm:$0xff] %vm2275, %v2256
      %2291 = vst.msk [vmem:[#allocation3 + $0x78] sm:$0xff] %vm2275, %v2257
      %2292 = vst.msk [vmem:[#allocation3 + $0x80] sm:$0xff] %vm2275, %v2258
      %2293 = vst.msk [vmem:[#allocation3 + $0x88] sm:$0xff] %vm2275, %v2259
      %2294 = vst.msk [vmem:[#allocation3 + $0x90] sm:$0xff] %vm2275, %v2260
      %2295 = vst.msk [vmem:[#allocation3 + $0x98] sm:$0xff] %vm2275, %v2261
      %2296 = vst.msk [vmem:[#allocation3 + $0xa0] sm:$0xff] %vm2275, %v2262
      %2297 = vst.msk [vmem:[#allocation3 + $0xa8] sm:$0xff] %vm2275, %v2263
      %2298 = vst.msk [vmem:[#allocation3 + $0xb0] sm:$0xff] %vm2275, %v2264
      %2299 = vst.msk [vmem:[#allocation3 + $0xb8] sm:$0xff] %vm2275, %v2265
      %2300 = vst.msk [vmem:[#allocation3 + $0xc0] sm:$0xff] %vm2275, %v2266
      %2301 = vst.msk [vmem:[#allocation3 + $0xc8] sm:$0xff] %vm2275, %v2267
      %2302 = vst.msk [vmem:[#allocation3 + $0xd0] sm:$0xff] %vm2275, %v2268
      %2303 = vst.msk [vmem:[#allocation3 + $0xd8] sm:$0xff] %vm2275, %v2269
      %2304 = vst.msk [vmem:[#allocation3 + $0xe0] sm:$0xff] %vm2275, %v2270
      %2305 = vst.msk [vmem:[#allocation3 + $0xe8] sm:$0xff] %vm2275, %v2271
      %2306 = vst.msk [vmem:[#allocation3 + $0xf0] sm:$0xff] %vm2275, %v2272
      %2307 = vst.msk [vmem:[#allocation3 + $0xf8] sm:$0xff] %vm2275, %v2273
      %2308 = vst.msk [vmem:[#allocation3 + $0x100] sm:$0xff] %vm2275, %v2274
      %v2309 = vld [vmem:[#allocation3] sm:$0xff]
      %v2310 = vld [vmem:[#allocation3 + $0x8] sm:$0xff]
      %v2311 = vld [vmem:[#allocation3 + $0x10] sm:$0xff]
      %v2312 = vld [vmem:[#allocation3 + $0x18] sm:$0xff]
      %v2313 = vld [vmem:[#allocation3 + $0x20] sm:$0xff]
      %v2314 = vld [vmem:[#allocation3 + $0x28] sm:$0xff]
      %v2315 = vld [vmem:[#allocation3 + $0x30] sm:$0xff]
      %v2316 = vld [vmem:[#allocation3 + $0x38] sm:$0xff]
      %v2317 = vld [vmem:[#allocation3 + $0x40] sm:$0xff]
      %v2318 = vld [vmem:[#allocation3 + $0x48] sm:$0xff]
      %v2319 = vld [vmem:[#allocation3 + $0x50] sm:$0xff]
      %v2320 = vld [vmem:[#allocation3 + $0x58] sm:$0xff]
      %v2321 = vld [vmem:[#allocation3 + $0x60] sm:$0xff]
      %v2322 = vld [vmem:[#allocation3 + $0x68] sm:$0xff]
      %v2323 = vld [vmem:[#allocation3 + $0x70] sm:$0xff]
      %v2324 = vld [vmem:[#allocation3 + $0x78] sm:$0xff]
      %v2325 = vld [vmem:[#allocation3 + $0x80] sm:$0xff]
      %v2326 = vld [vmem:[#allocation3 + $0x88] sm:$0xff]
      %v2327 = vld [vmem:[#allocation3 + $0x90] sm:$0xff]
      %v2328 = vld [vmem:[#allocation3 + $0x98] sm:$0xff]
      %v2329 = vld [vmem:[#allocation3 + $0xa0] sm:$0xff]
      %v2330 = vld [vmem:[#allocation3 + $0xa8] sm:$0xff]
      %v2331 = vld [vmem:[#allocation3 + $0xb0] sm:$0xff]
      %v2332 = vld [vmem:[#allocation3 + $0xb8] sm:$0xff]
      %v2333 = vld [vmem:[#allocation3 + $0xc0] sm:$0xff]
      %v2334 = vpack.c.bf16 %v2310, %v2309
      %v2335 = vpack.c.bf16 %v2312, %v2311
      %v2336 = vpack.c.bf16 %v2314, %v2313
      %v2337 = vpack.c.bf16 %v2316, %v2315
      %v2338 = vpack.c.bf16 %v2318, %v2317
      %v2339 = vpack.c.bf16 %v2320, %v2319
      %v2340 = vpack.c.bf16 %v2322, %v2321
      %v2341 = vpack.c.bf16 %v2324, %v2323
      %v2342 = vpack.c.bf16 %v2326, %v2325
      %v2343 = vpack.c.bf16 %v2328, %v2327
      %v2344 = vpack.c.bf16 %v2330, %v2329
      %v2345 = vpack.c.bf16 %v2332, %v2331
      %v2346 = vpack.c.bf16 %v2333, %v2333
      %v2347 = vld [vmem:[%s5] sm:$0xf]
      %v2348 = vld [vmem:[%s5 + $0x4] sm:$0xf]
      %v2349 = vld [vmem:[%s5 + $0x8] sm:$0xf]
      %v2350 = vld [vmem:[%s5 + $0xc] sm:$0xf]
      %v2351 = vld [vmem:[#allocation3 + $0xc8] sm:$0xff]
      %v2352 = vpack.c.bf16 %v2311, %v2310
      %v2353 = vpack.c.bf16 %v2313, %v2312
      %v2354 = vpack.c.bf16 %v2315, %v2314
      %v2355 = vpack.c.bf16 %v2317, %v2316
      %v2356 = vpack.c.bf16 %v2319, %v2318
      %v2357 = vpack.c.bf16 %v2321, %v2320
      %v2358 = vpack.c.bf16 %v2323, %v2322
      %v2359 = vpack.c.bf16 %v2325, %v2324
      %v2360 = vpack.c.bf16 %v2327, %v2326
      %v2361 = vpack.c.bf16 %v2329, %v2328
      %v2362 = vpack.c.bf16 %v2331, %v2330
      %v2363 = vpack.c.bf16 %v2333, %v2332
      %v2364 = vpack.c.bf16 %v2351, %v2351
      %v2365 = vld [vmem:[%s5 + $0x10] sm:$0xf]
      %v2366 = vld [vmem:[%s5 + $0x14] sm:$0xf]
      %v2367 = vld [vmem:[%s5 + $0x18] sm:$0xf]
      %v2368 = vld [vmem:[%s5 + $0x1c] sm:$0xf]
      %v2373 = vunpack.c.l.b16 %v2365
      %v2374 = vunpack.c.l.b16 %v2366
      %v2375 = vunpack.c.l.b16 %v2367
      %v2376 = vunpack.c.l.b16 %v2368
      %v2377 = vpack.c.b16 %v2374, %v2373
      %v2378 = vpack.c.b16 %v2376, %v2375
      %v2382 = vsel %vm2275, %v2352, 0
      %v2385 = vsel %vm2275, %v2353, 0
      %v2388 = vsel %vm2275, %v2354, 0
      %v2391 = vsel %vm2275, %v2355, 0
      %v2394 = vsel %vm2275, %v2356, 0
      %v2397 = vsel %vm2275, %v2357, 0
      %v2400 = vsel %vm2275, %v2358, 0
      %v2403 = vsel %vm2275, %v2359, 0
      %v2406 = vsel %vm2275, %v2360, 0
      %v2409 = vsel %vm2275, %v2361, 0
      %v2412 = vsel %vm2275, %v2362, 0
      %v2415 = vsel %vm2275, %v2363, 0
      %v2418 = vsel %vm2275, %v2364, 0
      %2420 = vmatprep.subr.bf16.mxu0 0
      %2421 = vmatpush1.bf16.msra.mxu0 %v2377
      %2422 = vmatprep.subr.bf16.mxu0 0
      %2423 = vmatpush1.bf16.msra.mxu0 %v2378
      %2424 = vmatprep.subr.bf16.mxu0 0
      %2425 = vmatpush1.bf16.msra.mxu0 0
      %2426 = vmatprep.subr.bf16.mxu0 0
      %2427 = vmatpush1.bf16.msra.mxu0 0
      %2428 = vmatprep.subr.bf16.mxu0 0
      %2429 = vmatpush1.bf16.msra.mxu0 0
      %2430 = vmatprep.subr.bf16.mxu0 0
      %2431 = vmatpush1.bf16.msra.mxu0 0
      %2432 = vmatprep.subr.bf16.mxu0 0
      %2433 = vmatpush1.bf16.msra.mxu0 0
      %2434 = vmatprep.subr.bf16.mxu0 0
      %2435 = vmatpush1.bf16.msra.mxu0 0
      %2436 = vmatprep.subr.bf16.mxu0 0
      %2437 = vmatpush1.bf16.msra.mxu0 0
      %2438 = vmatprep.subr.bf16.mxu0 0
      %2439 = vmatpush1.bf16.msra.mxu0 0
      %2440 = vmatprep.subr.bf16.mxu0 0
      %2441 = vmatpush1.bf16.msra.mxu0 0
      %2442 = vmatprep.subr.bf16.mxu0 0
      %2443 = vmatpush1.bf16.msra.mxu0 0
      %2444 = vmatprep.subr.bf16.mxu0 0
      %2445 = vmatpush1.bf16.msra.mxu0 0
      %2446 = vmatprep.subr.bf16.mxu0 0
      %2447 = vmatpush1.bf16.msra.mxu0 0
      %2448 = vmatprep.subr.bf16.mxu0 0
      %2449 = vmatpush1.bf16.msra.mxu0 0
      %2450 = vmatprep.subr.bf16.mxu0 0
      %2451 = vmatpush1.bf16.msra.mxu0 0
      %2452 = vmatprep.mubr.bf16.mxu0 0
      %2453 = vmatmul.mubr.bf16.gmra.mrb[0].mxu0 %v2382
      %v2454 = vpop.f32.mrb[0].mxu0
      %v2455 = vadd.f32 0.0, %v2454
      %v2456 = vpop.f32.mrb[0].mxu0
      %v2457 = vpop.f32.mrb[0].mxu0
      %v2458 = vadd.f32 0.0, %v2457
      %v2459 = vpop.f32.mrb[0].mxu0
      %2460 = vmatprep.mubr.bf16.mxu0 0
      %2461 = vmatmul.mubr.bf16.gmra.mrb[0].mxu0 %v2385
      %v2462 = vpop.f32.mrb[0].mxu0
      %v2463 = vadd.f32 0.0, %v2462
      %v2464 = vpop.f32.mrb[0].mxu0
      %v2465 = vpop.f32.mrb[0].mxu0
      %v2466 = vadd.f32 0.0, %v2465
      %v2467 = vpop.f32.mrb[0].mxu0
      %2468 = vmatprep.mubr.bf16.mxu0 0
      %2469 = vmatmul.mubr.bf16.gmra.mrb[0].mxu0 %v2388
      %v2470 = vpop.f32.mrb[0].mxu0
      %v2471 = vadd.f32 0.0, %v2470
      %v2472 = vpop.f32.mrb[0].mxu0
      %v2473 = vpop.f32.mrb[0].mxu0
      %v2474 = vadd.f32 0.0, %v2473
      %v2475 = vpop.f32.mrb[0].mxu0
      %2476 = vmatprep.mubr.bf16.mxu0 0
      %2477 = vmatmul.mubr.bf16.gmra.mrb[0].mxu0 %v2391
      %v2478 = vpop.f32.mrb[0].mxu0
      %v2479 = vadd.f32 0.0, %v2478
      %v2480 = vpop.f32.mrb[0].mxu0
      %v2481 = vpop.f32.mrb[0].mxu0
      %v2482 = vadd.f32 0.0, %v2481
      %v2483 = vpop.f32.mrb[0].mxu0
      %2484 = vmatprep.mubr.bf16.mxu0 0
      %2485 = vmatmul.mubr.bf16.gmra.mrb[0].mxu0 %v2394
      %v2486 = vpop.f32.mrb[0].mxu0
      %v2487 = vadd.f32 0.0, %v2486
      %v2488 = vpop.f32.mrb[0].mxu0
      %v2489 = vpop.f32.mrb[0].mxu0
      %v2490 = vadd.f32 0.0, %v2489
      %v2491 = vpop.f32.mrb[0].mxu0
      %2492 = vmatprep.mubr.bf16.mxu0 0
      %2493 = vmatmul.mubr.bf16.gmra.mrb[0].mxu0 %v2397
      %v2494 = vpop.f32.mrb[0].mxu0
      %v2495 = vadd.f32 0.0, %v2494
      %v2496 = vpop.f32.mrb[0].mxu0
      %v2497 = vpop.f32.mrb[0].mxu0
      %v2498 = vadd.f32 0.0, %v2497
      %v2499 = vpop.f32.mrb[0].mxu0
      %2500 = vmatprep.mubr.bf16.mxu0 0
      %2501 = vmatmul.mubr.bf16.gmra.mrb[0].mxu0 %v2400
      %v2502 = vpop.f32.mrb[0].mxu0
      %v2503 = vadd.f32 0.0, %v2502
      %v2504 = vpop.f32.mrb[0].mxu0
      %v2505 = vpop.f32.mrb[0].mxu0
      %v2506 = vadd.f32 0.0, %v2505
      %v2507 = vpop.f32.mrb[0].mxu0
      %2508 = vmatprep.mubr.bf16.mxu0 0
      %2509 = vmatmul.mubr.bf16.gmra.mrb[0].mxu0 %v2403
      %v2510 = vpop.f32.mrb[0].mxu0
      %v2511 = vadd.f32 0.0, %v2510
      %v2512 = vpop.f32.mrb[0].mxu0
      %v2513 = vpop.f32.mrb[0].mxu0
      %v2514 = vadd.f32 0.0, %v2513
      %v2515 = vpop.f32.mrb[0].mxu0
      %2516 = vmatprep.mubr.bf16.mxu0 0
      %2517 = vmatmul.mubr.bf16.gmra.mrb[0].mxu0 %v2406
      %v2518 = vpop.f32.mrb[0].mxu0
      %v2519 = vadd.f32 0.0, %v2518
      %v2520 = vpop.f32.mrb[0].mxu0
      %v2521 = vpop.f32.mrb[0].mxu0
      %v2522 = vadd.f32 0.0, %v2521
      %v2523 = vpop.f32.mrb[0].mxu0
      %2524 = vmatprep.mubr.bf16.mxu0 0
      %2525 = vmatmul.mubr.bf16.gmra.mrb[0].mxu0 %v2409
      %v2526 = vpop.f32.mrb[0].mxu0
      %v2527 = vadd.f32 0.0, %v2526
      %v2528 = vpop.f32.mrb[0].mxu0
      %v2529 = vpop.f32.mrb[0].mxu0
      %v2530 = vadd.f32 0.0, %v2529
      %v2531 = vpop.f32.mrb[0].mxu0
      %2532 = vmatprep.mubr.bf16.mxu0 0
      %2533 = vmatmul.mubr.bf16.gmra.mrb[0].mxu0 %v2412
      %v2534 = vpop.f32.mrb[0].mxu0
      %v2535 = vadd.f32 0.0, %v2534
      %v2536 = vpop.f32.mrb[0].mxu0
      %v2537 = vpop.f32.mrb[0].mxu0
      %v2538 = vadd.f32 0.0, %v2537
      %v2539 = vpop.f32.mrb[0].mxu0
      %2540 = vmatprep.mubr.bf16.mxu0 0
      %2541 = vmatmul.mubr.bf16.gmra.mrb[0].mxu0 %v2415
      %v2542 = vpop.f32.mrb[0].mxu0
      %v2543 = vadd.f32 0.0, %v2542
      %v2544 = vpop.f32.mrb[0].mxu0
      %v2545 = vpop.f32.mrb[0].mxu0
      %v2546 = vadd.f32 0.0, %v2545
      %v2547 = vpop.f32.mrb[0].mxu0
      %2548 = vmatprep.mubr.bf16.mxu0 0
      %2549 = vmatmul.mubr.bf16.gmra.mrb[0].mxu0 %v2418
      %v2550 = vpop.f32.mrb[0].mxu0
      %v2551 = vadd.f32 0.0, %v2550
      %v2552 = vpop.f32.mrb[0].mxu0
      %v2553 = vpop.f32.mrb[0].mxu0
      %v2554 = vpop.f32.mrb[0].mxu0
      %2555 = vdwg.mxu0
      %v2560 = vunpack.c.l.b16 %v2347
      %v2561 = vunpack.c.l.b16 %v2348
      %v2562 = vunpack.c.l.b16 %v2349
      %v2563 = vunpack.c.l.b16 %v2350
      %v2564 = vpack.c.b16 %v2561, %v2560
      %v2565 = vpack.c.b16 %v2563, %v2562
      %v2569 = vsel %vm2275, %v2334, 0
      %v2572 = vsel %vm2275, %v2335, 0
      %v2575 = vsel %vm2275, %v2336, 0
      %v2578 = vsel %vm2275, %v2337, 0
      %v2581 = vsel %vm2275, %v2338, 0
      %v2584 = vsel %vm2275, %v2339, 0
      %v2587 = vsel %vm2275, %v2340, 0
      %v2590 = vsel %vm2275, %v2341, 0
      %v2593 = vsel %vm2275, %v2342, 0
      %v2596 = vsel %vm2275, %v2343, 0
      %v2599 = vsel %vm2275, %v2344, 0
      %v2602 = vsel %vm2275, %v2345, 0
      %v2605 = vsel %vm2275, %v2346, 0
      %2607 = vmatprep.subr.bf16.mxu0 0
      %2608 = vmatpush1.bf16.msra.mxu0 %v2564
      %2609 = vmatprep.subr.bf16.mxu0 0
      %2610 = vmatpush1.bf16.msra.mxu0 %v2565
      %2611 = vmatprep.subr.bf16.mxu0 0
      %2612 = vmatpush1.bf16.msra.mxu0 0
      %2613 = vmatprep.subr.bf16.mxu0 0
      %2614 = vmatpush1.bf16.msra.mxu0 0
      %2615 = vmatprep.subr.bf16.mxu0 0
      %2616 = vmatpush1.bf16.msra.mxu0 0
      %2617 = vmatprep.subr.bf16.mxu0 0
      %2618 = vmatpush1.bf16.msra.mxu0 0
      %2619 = vmatprep.subr.bf16.mxu0 0
      %2620 = vmatpush1.bf16.msra.mxu0 0
      %2621 = vmatprep.subr.bf16.mxu0 0
      %2622 = vmatpush1.bf16.msra.mxu0 0
      %2623 = vmatprep.subr.bf16.mxu0 0
      %2624 = vmatpush1.bf16.msra.mxu0 0
      %2625 = vmatprep.subr.bf16.mxu0 0
      %2626 = vmatpush1.bf16.msra.mxu0 0
      %2627 = vmatprep.subr.bf16.mxu0 0
      %2628 = vmatpush1.bf16.msra.mxu0 0
      %2629 = vmatprep.subr.bf16.mxu0 0
      %2630 = vmatpush1.bf16.msra.mxu0 0
      %2631 = vmatprep.subr.bf16.mxu0 0
      %2632 = vmatpush1.bf16.msra.mxu0 0
      %2633 = vmatprep.subr.bf16.mxu0 0
      %2634 = vmatpush1.bf16.msra.mxu0 0
      %2635 = vmatprep.subr.bf16.mxu0 0
      %2636 = vmatpush1.bf16.msra.mxu0 0
      %2637 = vmatprep.subr.bf16.mxu0 0
      %2638 = vmatpush1.bf16.msra.mxu0 0
      %2639 = vmatprep.mubr.bf16.mxu0 0
      %2640 = vmatmul.mubr.bf16.gmra.mrb[0].mxu0 %v2569
      %v2641 = vpop.f32.mrb[0].mxu0
      %v2642 = vadd.f32 %v2455, %v2641
      %v2643 = vpop.f32.mrb[0].mxu0
      %v2644 = vpop.f32.mrb[0].mxu0
      %v2645 = vadd.f32 %v2458, %v2644
      %v2646 = vpop.f32.mrb[0].mxu0
      %2647 = vmatprep.mubr.bf16.mxu0 0
      %2648 = vmatmul.mubr.bf16.gmra.mrb[0].mxu0 %v2572
      %v2649 = vpop.f32.mrb[0].mxu0
      %v2650 = vadd.f32 %v2463, %v2649
      %v2651 = vpop.f32.mrb[0].mxu0
      %v2652 = vpop.f32.mrb[0].mxu0
      %v2653 = vadd.f32 %v2466, %v2652
      %v2654 = vpop.f32.mrb[0].mxu0
      %2655 = vmatprep.mubr.bf16.mxu0 0
      %2656 = vmatmul.mubr.bf16.gmra.mrb[0].mxu0 %v2575
      %v2657 = vpop.f32.mrb[0].mxu0
      %v2658 = vadd.f32 %v2471, %v2657
      %v2659 = vpop.f32.mrb[0].mxu0
      %v2660 = vpop.f32.mrb[0].mxu0
      %v2661 = vadd.f32 %v2474, %v2660
      %v2662 = vpop.f32.mrb[0].mxu0
      %2663 = vmatprep.mubr.bf16.mxu0 0
      %2664 = vmatmul.mubr.bf16.gmra.mrb[0].mxu0 %v2578
      %v2665 = vpop.f32.mrb[0].mxu0
      %v2666 = vadd.f32 %v2479, %v2665
      %v2667 = vpop.f32.mrb[0].mxu0
      %v2668 = vpop.f32.mrb[0].mxu0
      %v2669 = vadd.f32 %v2482, %v2668
      %v2670 = vpop.f32.mrb[0].mxu0
      %2671 = vmatprep.mubr.bf16.mxu0 0
      %2672 = vmatmul.mubr.bf16.gmra.mrb[0].mxu0 %v2581
      %v2673 = vpop.f32.mrb[0].mxu0
      %v2674 = vadd.f32 %v2487, %v2673
      %v2675 = vpop.f32.mrb[0].mxu0
      %v2676 = vpop.f32.mrb[0].mxu0
      %v2677 = vadd.f32 %v2490, %v2676
      %v2678 = vpop.f32.mrb[0].mxu0
      %2679 = vmatprep.mubr.bf16.mxu0 0
      %2680 = vmatmul.mubr.bf16.gmra.mrb[0].mxu0 %v2584
      %v2681 = vpop.f32.mrb[0].mxu0
      %v2682 = vadd.f32 %v2495, %v2681
      %v2683 = vpop.f32.mrb[0].mxu0
      %v2684 = vpop.f32.mrb[0].mxu0
      %v2685 = vadd.f32 %v2498, %v2684
      %v2686 = vpop.f32.mrb[0].mxu0
      %2687 = vmatprep.mubr.bf16.mxu0 0
      %2688 = vmatmul.mubr.bf16.gmra.mrb[0].mxu0 %v2587
      %v2689 = vpop.f32.mrb[0].mxu0
      %v2690 = vadd.f32 %v2503, %v2689
      %v2691 = vpop.f32.mrb[0].mxu0
      %v2692 = vpop.f32.mrb[0].mxu0
      %v2693 = vadd.f32 %v2506, %v2692
      %v2694 = vpop.f32.mrb[0].mxu0
      %2695 = vmatprep.mubr.bf16.mxu0 0
      %2696 = vmatmul.mubr.bf16.gmra.mrb[0].mxu0 %v2590
      %v2697 = vpop.f32.mrb[0].mxu0
      %v2698 = vadd.f32 %v2511, %v2697
      %v2699 = vpop.f32.mrb[0].mxu0
      %v2700 = vpop.f32.mrb[0].mxu0
      %v2701 = vadd.f32 %v2514, %v2700
      %v2702 = vpop.f32.mrb[0].mxu0
      %2703 = vmatprep.mubr.bf16.mxu0 0
      %2704 = vmatmul.mubr.bf16.gmra.mrb[0].mxu0 %v2593
      %v2705 = vpop.f32.mrb[0].mxu0
      %v2706 = vadd.f32 %v2519, %v2705
      %v2707 = vpop.f32.mrb[0].mxu0
      %v2708 = vpop.f32.mrb[0].mxu0
      %v2709 = vadd.f32 %v2522, %v2708
      %v2710 = vpop.f32.mrb[0].mxu0
      %2711 = vmatprep.mubr.bf16.mxu0 0
      %2712 = vmatmul.mubr.bf16.gmra.mrb[0].mxu0 %v2596
      %v2713 = vpop.f32.mrb[0].mxu0
      %v2714 = vadd.f32 %v2527, %v2713
      %v2715 = vpop.f32.mrb[0].mxu0
      %v2716 = vpop.f32.mrb[0].mxu0
      %v2717 = vadd.f32 %v2530, %v2716
      %v2718 = vpop.f32.mrb[0].mxu0
      %2719 = vmatprep.mubr.bf16.mxu0 0
      %2720 = vmatmul.mubr.bf16.gmra.mrb[0].mxu0 %v2599
      %v2721 = vpop.f32.mrb[0].mxu0
      %v2722 = vadd.f32 %v2535, %v2721
      %v2723 = vpop.f32.mrb[0].mxu0
      %v2724 = vpop.f32.mrb[0].mxu0
      %v2725 = vadd.f32 %v2538, %v2724
      %v2726 = vpop.f32.mrb[0].mxu0
      %2727 = vmatprep.mubr.bf16.mxu0 0
      %2728 = vmatmul.mubr.bf16.gmra.mrb[0].mxu0 %v2602
      %v2729 = vpop.f32.mrb[0].mxu0
      %v2730 = vadd.f32 %v2543, %v2729
      %v2731 = vpop.f32.mrb[0].mxu0
      %v2732 = vpop.f32.mrb[0].mxu0
      %v2733 = vadd.f32 %v2546, %v2732
      %v2734 = vpop.f32.mrb[0].mxu0
      %2735 = vmatprep.mubr.bf16.mxu0 0
      %2736 = vmatmul.mubr.bf16.gmra.mrb[0].mxu0 %v2605
      %v2737 = vpop.f32.mrb[0].mxu0
      %v2738 = vadd.f32 %v2551, %v2737
      %v2739 = vpop.f32.mrb[0].mxu0
      %v2740 = vpop.f32.mrb[0].mxu0
      %v2741 = vpop.f32.mrb[0].mxu0
      %2742 = vdwg.mxu0
      %v2743 = vld [vmem:[#allocation3 + $0x38] sm:$0xff]
      %v2744 = vld [vmem:[#allocation3 + $0x40] sm:$0xff]
      %v2745 = vld [vmem:[#allocation3 + $0x48] sm:$0xff]
      %v2746 = vld [vmem:[#allocation3 + $0x50] sm:$0xff]
      %v2747 = vld [vmem:[#allocation3 + $0x58] sm:$0xff]
      %v2748 = vld [vmem:[#allocation3 + $0x60] sm:$0xff]
      %v2749 = vld [vmem:[#allocation3 + $0x68] sm:$0xff]
      %v2750 = vld [vmem:[#allocation3 + $0x70] sm:$0xff]
      %v2751 = vld [vmem:[#allocation3 + $0x78] sm:$0xff]
      %v2752 = vld [vmem:[#allocation3 + $0x80] sm:$0xff]
      %v2753 = vld [vmem:[#allocation3 + $0x88] sm:$0xff]
      %v2754 = vld [vmem:[#allocation3 + $0x90] sm:$0xff]
      %v2755 = vld [vmem:[#allocation3 + $0x98] sm:$0xff]
      %v2756 = vld [vmem:[#allocation3 + $0xa0] sm:$0xff]
      %v2757 = vld [vmem:[#allocation3 + $0xa8] sm:$0xff]
      %v2758 = vld [vmem:[#allocation3 + $0xb0] sm:$0xff]
      %v2759 = vld [vmem:[#allocation3 + $0xb8] sm:$0xff]
      %v2760 = vld [vmem:[#allocation3 + $0xc0] sm:$0xff]
      %v2761 = vld [vmem:[#allocation3 + $0xc8] sm:$0xff]
      %v2762 = vld [vmem:[#allocation3 + $0xd0] sm:$0xff]
      %v2763 = vld [vmem:[#allocation3 + $0xd8] sm:$0xff]
      %v2764 = vld [vmem:[#allocation3 + $0xe0] sm:$0xff]
      %v2765 = vld [vmem:[#allocation3 + $0xe8] sm:$0xff]
      %v2766 = vld [vmem:[#allocation3 + $0xf0] sm:$0xff]
      %v2767 = vld [vmem:[#allocation3 + $0xf8] sm:$0xff]
      %v2768 = vpack.c.bf16 %v2744, %v2743
      %v2769 = vpack.c.bf16 %v2746, %v2745
      %v2770 = vpack.c.bf16 %v2748, %v2747
      %v2771 = vpack.c.bf16 %v2750, %v2749
      %v2772 = vpack.c.bf16 %v2752, %v2751
      %v2773 = vpack.c.bf16 %v2754, %v2753
      %v2774 = vpack.c.bf16 %v2756, %v2755
      %v2775 = vpack.c.bf16 %v2758, %v2757
      %v2776 = vpack.c.bf16 %v2760, %v2759
      %v2777 = vpack.c.bf16 %v2762, %v2761
      %v2778 = vpack.c.bf16 %v2764, %v2763
      %v2779 = vpack.c.bf16 %v2766, %v2765
      %v2780 = vpack.c.bf16 %v2767, %v2767
      %v2781 = vld [vmem:[%s5 + $0x20] sm:$0xf]
      %v2782 = vld [vmem:[%s5 + $0x24] sm:$0xf]
      %v2783 = vld [vmem:[%s5 + $0x28] sm:$0xf]
      %v2784 = vld [vmem:[%s5 + $0x2c] sm:$0xf]
      %v2789 = vunpack.c.l.b16 %v2781
      %v2790 = vunpack.c.l.b16 %v2782
      %v2791 = vunpack.c.l.b16 %v2783
      %v2792 = vunpack.c.l.b16 %v2784
      %v2793 = vpack.c.b16 %v2790, %v2789
      %v2794 = vpack.c.b16 %v2792, %v2791
      %v2798 = vsel %vm2275, %v2768, 0
      %v2801 = vsel %vm2275, %v2769, 0
      %v2804 = vsel %vm2275, %v2770, 0
      %v2807 = vsel %vm2275, %v2771, 0
      %v2810 = vsel %vm2275, %v2772, 0
      %v2813 = vsel %vm2275, %v2773, 0
      %v2816 = vsel %vm2275, %v2774, 0
      %v2819 = vsel %vm2275, %v2775, 0
      %v2822 = vsel %vm2275, %v2776, 0
      %v2825 = vsel %vm2275, %v2777, 0
      %v2828 = vsel %vm2275, %v2778, 0
      %v2831 = vsel %vm2275, %v2779, 0
      %v2834 = vsel %vm2275, %v2780, 0
      %2836 = vmatprep.subr.bf16.mxu0 0
      %2837 = vmatpush1.bf16.msra.mxu0 %v2793
      %2838 = vmatprep.subr.bf16.mxu0 0
      %2839 = vmatpush1.bf16.msra.mxu0 %v2794
      %2840 = vmatprep.subr.bf16.mxu0 0
      %2841 = vmatpush1.bf16.msra.mxu0 0
      %2842 = vmatprep.subr.bf16.mxu0 0
      %2843 = vmatpush1.bf16.msra.mxu0 0
      %2844 = vmatprep.subr.bf16.mxu0 0
      %2845 = vmatpush1.bf16.msra.mxu0 0
      %2846 = vmatprep.subr.bf16.mxu0 0
      %2847 = vmatpush1.bf16.msra.mxu0 0
      %2848 = vmatprep.subr.bf16.mxu0 0
      %2849 = vmatpush1.bf16.msra.mxu0 0
      %2850 = vmatprep.subr.bf16.mxu0 0
      %2851 = vmatpush1.bf16.msra.mxu0 0
      %2852 = vmatprep.subr.bf16.mxu0 0
      %2853 = vmatpush1.bf16.msra.mxu0 0
      %2854 = vmatprep.subr.bf16.mxu0 0
      %2855 = vmatpush1.bf16.msra.mxu0 0
      %2856 = vmatprep.subr.bf16.mxu0 0
      %2857 = vmatpush1.bf16.msra.mxu0 0
      %2858 = vmatprep.subr.bf16.mxu0 0
      %2859 = vmatpush1.bf16.msra.mxu0 0
      %2860 = vmatprep.subr.bf16.mxu0 0
      %2861 = vmatpush1.bf16.msra.mxu0 0
      %2862 = vmatprep.subr.bf16.mxu0 0
      %2863 = vmatpush1.bf16.msra.mxu0 0
      %2864 = vmatprep.subr.bf16.mxu0 0
      %2865 = vmatpush1.bf16.msra.mxu0 0
      %2866 = vmatprep.subr.bf16.mxu0 0
      %2867 = vmatpush1.bf16.msra.mxu0 0
      %2868 = vmatprep.mubr.bf16.mxu0 0
      %2869 = vmatmul.mubr.bf16.gmra.mrb[0].mxu0 %v2798
      %v2870 = vpop.f32.mrb[0].mxu0
      %v2871 = vadd.f32 0.0, %v2870
      %v2872 = vpop.f32.mrb[0].mxu0
      %v2873 = vpop.f32.mrb[0].mxu0
      %v2874 = vadd.f32 0.0, %v2873
      %v2875 = vpop.f32.mrb[0].mxu0
      %2876 = vmatprep.mubr.bf16.mxu0 0
      %2877 = vmatmul.mubr.bf16.gmra.mrb[0].mxu0 %v2801
      %v2878 = vpop.f32.mrb[0].mxu0
      %v2879 = vadd.f32 0.0, %v2878
      %v2880 = vpop.f32.mrb[0].mxu0
      %v2881 = vpop.f32.mrb[0].mxu0
      %v2882 = vadd.f32 0.0, %v2881
      %v2883 = vpop.f32.mrb[0].mxu0
      %2884 = vmatprep.mubr.bf16.mxu0 0
      %2885 = vmatmul.mubr.bf16.gmra.mrb[0].mxu0 %v2804
      %v2886 = vpop.f32.mrb[0].mxu0
      %v2887 = vadd.f32 0.0, %v2886
      %v2888 = vpop.f32.mrb[0].mxu0
      %v2889 = vpop.f32.mrb[0].mxu0
      %v2890 = vadd.f32 0.0, %v2889
      %v2891 = vpop.f32.mrb[0].mxu0
      %2892 = vmatprep.mubr.bf16.mxu0 0
      %2893 = vmatmul.mubr.bf16.gmra.mrb[0].mxu0 %v2807
      %v2894 = vpop.f32.mrb[0].mxu0
      %v2895 = vadd.f32 0.0, %v2894
      %v2896 = vpop.f32.mrb[0].mxu0
      %v2897 = vpop.f32.mrb[0].mxu0
      %v2898 = vadd.f32 0.0, %v2897
      %v2899 = vpop.f32.mrb[0].mxu0
      %2900 = vmatprep.mubr.bf16.mxu0 0
      %2901 = vmatmul.mubr.bf16.gmra.mrb[0].mxu0 %v2810
      %v2902 = vpop.f32.mrb[0].mxu0
      %v2903 = vadd.f32 0.0, %v2902
      %v2904 = vpop.f32.mrb[0].mxu0
      %v2905 = vpop.f32.mrb[0].mxu0
      %v2906 = vadd.f32 0.0, %v2905
      %v2907 = vpop.f32.mrb[0].mxu0
      %2908 = vmatprep.mubr.bf16.mxu0 0
      %2909 = vmatmul.mubr.bf16.gmra.mrb[0].mxu0 %v2813
      %v2910 = vpop.f32.mrb[0].mxu0
      %v2911 = vadd.f32 0.0, %v2910
      %v2912 = vpop.f32.mrb[0].mxu0
      %v2913 = vpop.f32.mrb[0].mxu0
      %v2914 = vadd.f32 0.0, %v2913
      %v2915 = vpop.f32.mrb[0].mxu0
      %2916 = vmatprep.mubr.bf16.mxu0 0
      %2917 = vmatmul.mubr.bf16.gmra.mrb[0].mxu0 %v2816
      %v2918 = vpop.f32.mrb[0].mxu0
      %v2919 = vadd.f32 0.0, %v2918
      %v2920 = vpop.f32.mrb[0].mxu0
      %v2921 = vpop.f32.mrb[0].mxu0
      %v2922 = vadd.f32 0.0, %v2921
      %v2923 = vpop.f32.mrb[0].mxu0
      %2924 = vmatprep.mubr.bf16.mxu0 0
      %2925 = vmatmul.mubr.bf16.gmra.mrb[0].mxu0 %v2819
      %v2926 = vpop.f32.mrb[0].mxu0
      %v2927 = vadd.f32 0.0, %v2926
      %v2928 = vpop.f32.mrb[0].mxu0
      %v2929 = vpop.f32.mrb[0].mxu0
      %v2930 = vadd.f32 0.0, %v2929
      %v2931 = vpop.f32.mrb[0].mxu0
      %2932 = vmatprep.mubr.bf16.mxu0 0
      %2933 = vmatmul.mubr.bf16.gmra.mrb[0].mxu0 %v2822
      %v2934 = vpop.f32.mrb[0].mxu0
      %v2935 = vadd.f32 0.0, %v2934
      %v2936 = vpop.f32.mrb[0].mxu0
      %v2937 = vpop.f32.mrb[0].mxu0
      %v2938 = vadd.f32 0.0, %v2937
      %v2939 = vpop.f32.mrb[0].mxu0
      %2940 = vmatprep.mubr.bf16.mxu0 0
      %2941 = vmatmul.mubr.bf16.gmra.mrb[0].mxu0 %v2825
      %v2942 = vpop.f32.mrb[0].mxu0
      %v2943 = vadd.f32 0.0, %v2942
      %v2944 = vpop.f32.mrb[0].mxu0
      %v2945 = vpop.f32.mrb[0].mxu0
      %v2946 = vadd.f32 0.0, %v2945
      %v2947 = vpop.f32.mrb[0].mxu0
      %2948 = vmatprep.mubr.bf16.mxu0 0
      %2949 = vmatmul.mubr.bf16.gmra.mrb[0].mxu0 %v2828
      %v2950 = vpop.f32.mrb[0].mxu0
      %v2951 = vadd.f32 0.0, %v2950
      %v2952 = vpop.f32.mrb[0].mxu0
      %v2953 = vpop.f32.mrb[0].mxu0
      %v2954 = vadd.f32 0.0, %v2953
      %v2955 = vpop.f32.mrb[0].mxu0
      %2956 = vmatprep.mubr.bf16.mxu0 0
      %2957 = vmatmul.mubr.bf16.gmra.mrb[0].mxu0 %v2831
      %v2958 = vpop.f32.mrb[0].mxu0
      %v2959 = vadd.f32 0.0, %v2958
      %v2960 = vpop.f32.mrb[0].mxu0
      %v2961 = vpop.f32.mrb[0].mxu0
      %v2962 = vadd.f32 0.0, %v2961
      %v2963 = vpop.f32.mrb[0].mxu0
      %2964 = vmatprep.mubr.bf16.mxu0 0
      %2965 = vmatmul.mubr.bf16.gmra.mrb[0].mxu0 %v2834
      %v2966 = vpop.f32.mrb[0].mxu0
      %v2967 = vadd.f32 0.0, %v2966
      %v2968 = vpop.f32.mrb[0].mxu0
      %v2969 = vpop.f32.mrb[0].mxu0
      %v2970 = vpop.f32.mrb[0].mxu0
      %2971 = vdwg.mxu0
      %v2972 = vadd.f32 %v2642, %v2871
      %v2973 = vadd.f32 %v2645, %v2874
      %v2974 = vadd.f32 %v2650, %v2879
      %v2975 = vadd.f32 %v2653, %v2882
      %v2976 = vadd.f32 %v2658, %v2887
      %v2977 = vadd.f32 %v2661, %v2890
      %v2978 = vadd.f32 %v2666, %v2895
      %v2979 = vadd.f32 %v2669, %v2898
      %v2980 = vadd.f32 %v2674, %v2903
      %v2981 = vadd.f32 %v2677, %v2906
      %v2982 = vadd.f32 %v2682, %v2911
      %v2983 = vadd.f32 %v2685, %v2914
      %v2984 = vadd.f32 %v2690, %v2919
      %v2985 = vadd.f32 %v2693, %v2922
      %v2986 = vadd.f32 %v2698, %v2927
      %v2987 = vadd.f32 %v2701, %v2930
      %v2988 = vadd.f32 %v2706, %v2935
      %v2989 = vadd.f32 %v2709, %v2938
      %v2990 = vadd.f32 %v2714, %v2943
      %v2991 = vadd.f32 %v2717, %v2946
      %v2992 = vadd.f32 %v2722, %v2951
      %v2993 = vadd.f32 %v2725, %v2954
      %v2994 = vadd.f32 %v2730, %v2959
      %v2995 = vadd.f32 %v2733, %v2962
      %v2996 = vadd.f32 %v2738, %v2967
      %v2997 = vld [vmem:[#allocation3 + $0x40] sm:$0xff]
      %v2998 = vld [vmem:[#allocation3 + $0x48] sm:$0xff]
      %v2999 = vld [vmem:[#allocation3 + $0x50] sm:$0xff]
      %v3000 = vld [vmem:[#allocation3 + $0x58] sm:$0xff]
      %v3001 = vld [vmem:[#allocation3 + $0x60] sm:$0xff]
      %v3002 = vld [vmem:[#allocation3 + $0x68] sm:$0xff]
      %v3003 = vld [vmem:[#allocation3 + $0x70] sm:$0xff]
      %v3004 = vld [vmem:[#allocation3 + $0x78] sm:$0xff]
      %v3005 = vld [vmem:[#allocation3 + $0x80] sm:$0xff]
      %v3006 = vld [vmem:[#allocation3 + $0x88] sm:$0xff]
      %v3007 = vld [vmem:[#allocation3 + $0x90] sm:$0xff]
      %v3008 = vld [vmem:[#allocation3 + $0x98] sm:$0xff]
      %v3009 = vld [vmem:[#allocation3 + $0xa0] sm:$0xff]
      %v3010 = vld [vmem:[#allocation3 + $0xa8] sm:$0xff]
      %v3011 = vld [vmem:[#allocation3 + $0xb0] sm:$0xff]
      %v3012 = vld [vmem:[#allocation3 + $0xb8] sm:$0xff]
      %v3013 = vld [vmem:[#allocation3 + $0xc0] sm:$0xff]
      %v3014 = vld [vmem:[#allocation3 + $0xc8] sm:$0xff]
      %v3015 = vld [vmem:[#allocation3 + $0xd0] sm:$0xff]
      %v3016 = vld [vmem:[#allocation3 + $0xd8] sm:$0xff]
      %v3017 = vld [vmem:[#allocation3 + $0xe0] sm:$0xff]
      %v3018 = vld [vmem:[#allocation3 + $0xe8] sm:$0xff]
      %v3019 = vld [vmem:[#allocation3 + $0xf0] sm:$0xff]
      %v3020 = vld [vmem:[#allocation3 + $0xf8] sm:$0xff]
      %v3021 = vld [vmem:[#allocation3 + $0x100] sm:$0xff]
      %v3022 = vpack.c.bf16 %v2998, %v2997
      %v3023 = vpack.c.bf16 %v3000, %v2999
      %v3024 = vpack.c.bf16 %v3002, %v3001
      %v3025 = vpack.c.bf16 %v3004, %v3003
      %v3026 = vpack.c.bf16 %v3006, %v3005
      %v3027 = vpack.c.bf16 %v3008, %v3007
      %v3028 = vpack.c.bf16 %v3010, %v3009
      %v3029 = vpack.c.bf16 %v3012, %v3011
      %v3030 = vpack.c.bf16 %v3014, %v3013
      %v3031 = vpack.c.bf16 %v3016, %v3015
      %v3032 = vpack.c.bf16 %v3018, %v3017
      %v3033 = vpack.c.bf16 %v3020, %v3019
      %v3034 = vpack.c.bf16 %v3021, %v3021
      %v3035 = vld [vmem:[%s5 + $0x30] sm:$0xf]
      %v3036 = vld [vmem:[%s5 + $0x34] sm:$0xf]
      %v3037 = vld [vmem:[%s5 + $0x38] sm:$0xf]
      %v3038 = vld [vmem:[%s5 + $0x3c] sm:$0xf]
      %v3043 = vunpack.c.l.b16 %v3035
      %v3044 = vunpack.c.l.b16 %v3036
      %v3045 = vunpack.c.l.b16 %v3037
      %v3046 = vunpack.c.l.b16 %v3038
      %v3047 = vpack.c.b16 %v3044, %v3043
      %v3048 = vpack.c.b16 %v3046, %v3045
      %v3052 = vsel %vm2275, %v3022, 0
      %v3055 = vsel %vm2275, %v3023, 0
      %v3058 = vsel %vm2275, %v3024, 0
      %v3061 = vsel %vm2275, %v3025, 0
      %v3064 = vsel %vm2275, %v3026, 0
      %v3067 = vsel %vm2275, %v3027, 0
      %v3070 = vsel %vm2275, %v3028, 0
      %v3073 = vsel %vm2275, %v3029, 0
      %v3076 = vsel %vm2275, %v3030, 0
      %v3079 = vsel %vm2275, %v3031, 0
      %v3082 = vsel %vm2275, %v3032, 0
      %v3085 = vsel %vm2275, %v3033, 0
      %v3088 = vsel %vm2275, %v3034, 0
      %3090 = vmatprep.subr.bf16.mxu0 0
      %3091 = vmatpush1.bf16.msra.mxu0 %v3047
      %3092 = vmatprep.subr.bf16.mxu0 0
      %3093 = vmatpush1.bf16.msra.mxu0 %v3048
      %3094 = vmatprep.subr.bf16.mxu0 0
      %3095 = vmatpush1.bf16.msra.mxu0 0
      %3096 = vmatprep.subr.bf16.mxu0 0
      %3097 = vmatpush1.bf16.msra.mxu0 0
      %3098 = vmatprep.subr.bf16.mxu0 0
      %3099 = vmatpush1.bf16.msra.mxu0 0
      %3100 = vmatprep.subr.bf16.mxu0 0
      %3101 = vmatpush1.bf16.msra.mxu0 0
      %3102 = vmatprep.subr.bf16.mxu0 0
      %3103 = vmatpush1.bf16.msra.mxu0 0
      %3104 = vmatprep.subr.bf16.mxu0 0
      %3105 = vmatpush1.bf16.msra.mxu0 0
      %3106 = vmatprep.subr.bf16.mxu0 0
      %3107 = vmatpush1.bf16.msra.mxu0 0
      %3108 = vmatprep.subr.bf16.mxu0 0
      %3109 = vmatpush1.bf16.msra.mxu0 0
      %3110 = vmatprep.subr.bf16.mxu0 0
      %3111 = vmatpush1.bf16.msra.mxu0 0
      %3112 = vmatprep.subr.bf16.mxu0 0
      %3113 = vmatpush1.bf16.msra.mxu0 0
      %3114 = vmatprep.subr.bf16.mxu0 0
      %3115 = vmatpush1.bf16.msra.mxu0 0
      %3116 = vmatprep.subr.bf16.mxu0 0
      %3117 = vmatpush1.bf16.msra.mxu0 0
      %3118 = vmatprep.subr.bf16.mxu0 0
      %3119 = vmatpush1.bf16.msra.mxu0 0
      %3120 = vmatprep.subr.bf16.mxu0 0
      %3121 = vmatpush1.bf16.msra.mxu0 0
      %3122 = vmatprep.mubr.bf16.mxu0 0
      %3123 = vmatmul.mubr.bf16.gmra.mrb[0].mxu0 %v3052
      %v3124 = vpop.f32.mrb[0].mxu0
      %v3125 = vadd.f32 0.0, %v3124
      %v3126 = vpop.f32.mrb[0].mxu0
      %v3127 = vpop.f32.mrb[0].mxu0
      %v3128 = vadd.f32 0.0, %v3127
      %v3129 = vpop.f32.mrb[0].mxu0
      %3130 = vmatprep.mubr.bf16.mxu0 0
      %3131 = vmatmul.mubr.bf16.gmra.mrb[0].mxu0 %v3055
      %v3132 = vpop.f32.mrb[0].mxu0
      %v3133 = vadd.f32 0.0, %v3132
      %v3134 = vpop.f32.mrb[0].mxu0
      %v3135 = vpop.f32.mrb[0].mxu0
      %v3136 = vadd.f32 0.0, %v3135
      %v3137 = vpop.f32.mrb[0].mxu0
      %3138 = vmatprep.mubr.bf16.mxu0 0
      %3139 = vmatmul.mubr.bf16.gmra.mrb[0].mxu0 %v3058
      %v3140 = vpop.f32.mrb[0].mxu0
      %v3141 = vadd.f32 0.0, %v3140
      %v3142 = vpop.f32.mrb[0].mxu0
      %v3143 = vpop.f32.mrb[0].mxu0
      %v3144 = vadd.f32 0.0, %v3143
      %v3145 = vpop.f32.mrb[0].mxu0
      %3146 = vmatprep.mubr.bf16.mxu0 0
      %3147 = vmatmul.mubr.bf16.gmra.mrb[0].mxu0 %v3061
      %v3148 = vpop.f32.mrb[0].mxu0
      %v3149 = vadd.f32 0.0, %v3148
      %v3150 = vpop.f32.mrb[0].mxu0
      %v3151 = vpop.f32.mrb[0].mxu0
      %v3152 = vadd.f32 0.0, %v3151
      %v3153 = vpop.f32.mrb[0].mxu0
      %3154 = vmatprep.mubr.bf16.mxu0 0
      %3155 = vmatmul.mubr.bf16.gmra.mrb[0].mxu0 %v3064
      %v3156 = vpop.f32.mrb[0].mxu0
      %v3157 = vadd.f32 0.0, %v3156
      %v3158 = vpop.f32.mrb[0].mxu0
      %v3159 = vpop.f32.mrb[0].mxu0
      %v3160 = vadd.f32 0.0, %v3159
      %v3161 = vpop.f32.mrb[0].mxu0
      %3162 = vmatprep.mubr.bf16.mxu0 0
      %3163 = vmatmul.mubr.bf16.gmra.mrb[0].mxu0 %v3067
      %v3164 = vpop.f32.mrb[0].mxu0
      %v3165 = vadd.f32 0.0, %v3164
      %v3166 = vpop.f32.mrb[0].mxu0
      %v3167 = vpop.f32.mrb[0].mxu0
      %v3168 = vadd.f32 0.0, %v3167
      %v3169 = vpop.f32.mrb[0].mxu0
      %3170 = vmatprep.mubr.bf16.mxu0 0
      %3171 = vmatmul.mubr.bf16.gmra.mrb[0].mxu0 %v3070
      %v3172 = vpop.f32.mrb[0].mxu0
      %v3173 = vadd.f32 0.0, %v3172
      %v3174 = vpop.f32.mrb[0].mxu0
      %v3175 = vpop.f32.mrb[0].mxu0
      %v3176 = vadd.f32 0.0, %v3175
      %v3177 = vpop.f32.mrb[0].mxu0
      %3178 = vmatprep.mubr.bf16.mxu0 0
      %3179 = vmatmul.mubr.bf16.gmra.mrb[0].mxu0 %v3073
      %v3180 = vpop.f32.mrb[0].mxu0
      %v3181 = vadd.f32 0.0, %v3180
      %v3182 = vpop.f32.mrb[0].mxu0
      %v3183 = vpop.f32.mrb[0].mxu0
      %v3184 = vadd.f32 0.0, %v3183
      %v3185 = vpop.f32.mrb[0].mxu0
      %3186 = vmatprep.mubr.bf16.mxu0 0
      %3187 = vmatmul.mubr.bf16.gmra.mrb[0].mxu0 %v3076
      %v3188 = vpop.f32.mrb[0].mxu0
      %v3189 = vadd.f32 0.0, %v3188
      %v3190 = vpop.f32.mrb[0].mxu0
      %v3191 = vpop.f32.mrb[0].mxu0
      %v3192 = vadd.f32 0.0, %v3191
      %v3193 = vpop.f32.mrb[0].mxu0
      %3194 = vmatprep.mubr.bf16.mxu0 0
      %3195 = vmatmul.mubr.bf16.gmra.mrb[0].mxu0 %v3079
      %v3196 = vpop.f32.mrb[0].mxu0
      %v3197 = vadd.f32 0.0, %v3196
      %v3198 = vpop.f32.mrb[0].mxu0
      %v3199 = vpop.f32.mrb[0].mxu0
      %v3200 = vadd.f32 0.0, %v3199
      %v3201 = vpop.f32.mrb[0].mxu0
      %3202 = vmatprep.mubr.bf16.mxu0 0
      %3203 = vmatmul.mubr.bf16.gmra.mrb[0].mxu0 %v3082
      %v3204 = vpop.f32.mrb[0].mxu0
      %v3205 = vadd.f32 0.0, %v3204
      %v3206 = vpop.f32.mrb[0].mxu0
      %v3207 = vpop.f32.mrb[0].mxu0
      %v3208 = vadd.f32 0.0, %v3207
      %v3209 = vpop.f32.mrb[0].mxu0
      %3210 = vmatprep.mubr.bf16.mxu0 0
      %3211 = vmatmul.mubr.bf16.gmra.mrb[0].mxu0 %v3085
      %v3212 = vpop.f32.mrb[0].mxu0
      %v3213 = vadd.f32 0.0, %v3212
      %v3214 = vpop.f32.mrb[0].mxu0
      %v3215 = vpop.f32.mrb[0].mxu0
      %v3216 = vadd.f32 0.0, %v3215
      %v3217 = vpop.f32.mrb[0].mxu0
      %3218 = vmatprep.mubr.bf16.mxu0 0
      %3219 = vmatmul.mubr.bf16.gmra.mrb[0].mxu0 %v3088
      %v3220 = vpop.f32.mrb[0].mxu0
      %v3221 = vadd.f32 0.0, %v3220
      %v3222 = vpop.f32.mrb[0].mxu0
      %v3223 = vpop.f32.mrb[0].mxu0
      %v3224 = vpop.f32.mrb[0].mxu0
      %3225 = vdwg.mxu0
      %v3226 = vadd.f32 %v2972, %v3125
      %v3227 = vadd.f32 %v2973, %v3128
      %v3228 = vadd.f32 %v2974, %v3133
      %v3229 = vadd.f32 %v2975, %v3136
      %v3230 = vadd.f32 %v2976, %v3141
      %v3231 = vadd.f32 %v2977, %v3144
      %v3232 = vadd.f32 %v2978, %v3149
      %v3233 = vadd.f32 %v2979, %v3152
      %v3234 = vadd.f32 %v2980, %v3157
      %v3235 = vadd.f32 %v2981, %v3160
      %v3236 = vadd.f32 %v2982, %v3165
      %v3237 = vadd.f32 %v2983, %v3168
      %v3238 = vadd.f32 %v2984, %v3173
      %v3239 = vadd.f32 %v2985, %v3176
      %v3240 = vadd.f32 %v2986, %v3181
      %v3241 = vadd.f32 %v2987, %v3184
      %v3242 = vadd.f32 %v2988, %v3189
      %v3243 = vadd.f32 %v2989, %v3192
      %v3244 = vadd.f32 %v2990, %v3197
      %v3245 = vadd.f32 %v2991, %v3200
      %v3246 = vadd.f32 %v2992, %v3205
      %v3247 = vadd.f32 %v2993, %v3208
      %v3248 = vadd.f32 %v2994, %v3213
      %v3249 = vadd.f32 %v2995, %v3216
      %v3250 = vadd.f32 %v2996, %v3221
      %v3251 = vld [vmem:[%s6] sm:$0x1]
      %v3253 = vlaneseq
      %v3254 = vshrl.u32 %v3253, 7
      %v3255 = vsub.s32 0, %v3254
      %v3256 = vrot.slane %v3251, %v3255
      %v3258 = vadd.f32 %v3226, %v3256
      %v3259 = vadd.f32 %v3227, %v3256
      %v3260 = vadd.f32 %v3228, %v3256
      %v3261 = vadd.f32 %v3229, %v3256
      %v3262 = vadd.f32 %v3230, %v3256
      %v3263 = vadd.f32 %v3231, %v3256
      %v3264 = vadd.f32 %v3232, %v3256
      %v3265 = vadd.f32 %v3233, %v3256
      %v3266 = vadd.f32 %v3234, %v3256
      %v3267 = vadd.f32 %v3235, %v3256
      %v3268 = vadd.f32 %v3236, %v3256
      %v3269 = vadd.f32 %v3237, %v3256
      %v3270 = vadd.f32 %v3238, %v3256
      %v3271 = vadd.f32 %v3239, %v3256
      %v3272 = vadd.f32 %v3240, %v3256
      %v3273 = vadd.f32 %v3241, %v3256
      %v3274 = vadd.f32 %v3242, %v3256
      %v3275 = vadd.f32 %v3243, %v3256
      %v3276 = vadd.f32 %v3244, %v3256
      %v3277 = vadd.f32 %v3245, %v3256
      %v3278 = vadd.f32 %v3246, %v3256
      %v3279 = vadd.f32 %v3247, %v3256
      %v3280 = vadd.f32 %v3248, %v3256
      %v3281 = vadd.f32 %v3249, %v3256
      %v3282 = vadd.f32 %v3250, %v3256
      %v3283 = vmax.f32 %v3258, 0.0
      %v3284 = vmax.f32 %v3259, 0.0
      %v3285 = vmax.f32 %v3260, 0.0
      %v3286 = vmax.f32 %v3261, 0.0
      %v3287 = vmax.f32 %v3262, 0.0
      %v3288 = vmax.f32 %v3263, 0.0
      %v3289 = vmax.f32 %v3264, 0.0
      %v3290 = vmax.f32 %v3265, 0.0
      %v3291 = vmax.f32 %v3266, 0.0
      %v3292 = vmax.f32 %v3267, 0.0
      %v3293 = vmax.f32 %v3268, 0.0
      %v3294 = vmax.f32 %v3269, 0.0
      %v3295 = vmax.f32 %v3270, 0.0
      %v3296 = vmax.f32 %v3271, 0.0
      %v3297 = vmax.f32 %v3272, 0.0
      %v3298 = vmax.f32 %v3273, 0.0
      %v3299 = vmax.f32 %v3274, 0.0
      %v3300 = vmax.f32 %v3275, 0.0
      %v3301 = vmax.f32 %v3276, 0.0
      %v3302 = vmax.f32 %v3277, 0.0
      %v3303 = vmax.f32 %v3278, 0.0
      %v3304 = vmax.f32 %v3279, 0.0
      %v3305 = vmax.f32 %v3280, 0.0
      %v3306 = vmax.f32 %v3281, 0.0
      %v3307 = vmax.f32 %v3282, 0.0
      %vm3308 = vcmask 523264
      %3309 = vst.msk [vmem:[#allocation4] sm:$0xff] %vm3308, %v3283
      %3310 = vst.msk [vmem:[#allocation4 + $0x8] sm:$0xff] %vm3308, %v3284
      %3311 = vst.msk [vmem:[#allocation4 + $0x10] sm:$0xff] %vm3308, %v3285
      %3312 = vst.msk [vmem:[#allocation4 + $0x18] sm:$0xff] %vm3308, %v3286
      %3313 = vst.msk [vmem:[#allocation4 + $0x20] sm:$0xff] %vm3308, %v3287
      %3314 = vst.msk [vmem:[#allocation4 + $0x28] sm:$0xff] %vm3308, %v3288
      %3315 = vst.msk [vmem:[#allocation4 + $0x30] sm:$0xff] %vm3308, %v3289
      %3316 = vst.msk [vmem:[#allocation4 + $0x38] sm:$0xff] %vm3308, %v3290
      %3317 = vst.msk [vmem:[#allocation4 + $0x40] sm:$0xff] %vm3308, %v3291
      %3318 = vst.msk [vmem:[#allocation4 + $0x48] sm:$0xff] %vm3308, %v3292
      %3319 = vst.msk [vmem:[#allocation4 + $0x50] sm:$0xff] %vm3308, %v3293
      %3320 = vst.msk [vmem:[#allocation4 + $0x58] sm:$0xff] %vm3308, %v3294
      %3321 = vst.msk [vmem:[#allocation4 + $0x60] sm:$0xff] %vm3308, %v3295
      %3322 = vst.msk [vmem:[#allocation4 + $0x68] sm:$0xff] %vm3308, %v3296
      %3323 = vst.msk [vmem:[#allocation4 + $0x70] sm:$0xff] %vm3308, %v3297
      %3324 = vst.msk [vmem:[#allocation4 + $0x78] sm:$0xff] %vm3308, %v3298
      %3325 = vst.msk [vmem:[#allocation4 + $0x80] sm:$0xff] %vm3308, %v3299
      %3326 = vst.msk [vmem:[#allocation4 + $0x88] sm:$0xff] %vm3308, %v3300
      %3327 = vst.msk [vmem:[#allocation4 + $0x90] sm:$0xff] %vm3308, %v3301
      %3328 = vst.msk [vmem:[#allocation4 + $0x98] sm:$0xff] %vm3308, %v3302
      %3329 = vst.msk [vmem:[#allocation4 + $0xa0] sm:$0xff] %vm3308, %v3303
      %3330 = vst.msk [vmem:[#allocation4 + $0xa8] sm:$0xff] %vm3308, %v3304
      %3331 = vst.msk [vmem:[#allocation4 + $0xb0] sm:$0xff] %vm3308, %v3305
      %3332 = vst.msk [vmem:[#allocation4 + $0xb8] sm:$0xff] %vm3308, %v3306
      %3333 = vst.msk [vmem:[#allocation4 + $0xc0] sm:$0xff] %vm3308, %v3307
      %v3334 = vld [vmem:[#allocation4] sm:$0xff]
      %v3335 = vld [vmem:[#allocation4 + $0x8] sm:$0xff]
      %v3336 = vld [vmem:[#allocation4 + $0x10] sm:$0xff]
      %v3337 = vld [vmem:[#allocation4 + $0x18] sm:$0xff]
      %v3338 = vld [vmem:[#allocation4 + $0x38] sm:$0xff]
      %v3339 = vld [vmem:[#allocation4 + $0x40] sm:$0xff]
      %v3340 = vld [vmem:[#allocation4 + $0x48] sm:$0xff]
      %v3341 = vld [vmem:[#allocation4 + $0x50] sm:$0xff]
      %v3342 = vld [vmem:[#allocation4 + $0x70] sm:$0xff]
      %v3343 = vld [vmem:[#allocation4 + $0x78] sm:$0xff]
      %v3344 = vld [vmem:[#allocation4 + $0x80] sm:$0xff]
      %v3345 = vld [vmem:[#allocation4 + $0x88] sm:$0xff]
      %v3346 = vld [vmem:[#allocation4 + $0xa8] sm:$0xff]
      %v3347 = vld [vmem:[#allocation4 + $0xb0] sm:$0xff]
      %v3348 = vld [vmem:[#allocation4 + $0xb8] sm:$0xff]
      %v3349 = vld [vmem:[#allocation4 + $0xc0] sm:$0xff]
      %3351 = vrot.lane.b32.xlu0 %v3335, 64
      %v3352 = vpop.permute.xlu0 %3351
      %3355 = vrot.lane.b32.xlu0 %v3337, 64
      %v3356 = vpop.permute.xlu0 %3355
      %3359 = vrot.lane.b32.xlu0 %v3339, 64
      %v3360 = vpop.permute.xlu0 %3359
      %3363 = vrot.lane.b32.xlu0 %v3341, 64
      %v3364 = vpop.permute.xlu0 %3363
      %3367 = vrot.lane.b32.xlu0 %v3343, 64
      %v3368 = vpop.permute.xlu0 %3367
      %3371 = vrot.lane.b32.xlu0 %v3345, 64
      %v3372 = vpop.permute.xlu0 %3371
      %3375 = vrot.lane.b32.xlu0 %v3347, 64
      %v3376 = vpop.permute.xlu0 %3375
      %3379 = vrot.lane.b32.xlu0 %v3349, 64
      %v3380 = vpop.permute.xlu0 %3379
      %v3382 = vsel %vm3308, %v3334, %v3352
      %v3383 = vsel %vm3308, %v3336, %v3356
      %v3384 = vsel %vm3308, %v3338, %v3360
      %v3385 = vsel %vm3308, %v3340, %v3364
      %v3386 = vsel %vm3308, %v3342, %v3368
      %v3387 = vsel %vm3308, %v3344, %v3372
      %v3388 = vsel %vm3308, %v3346, %v3376
      %v3389 = vsel %vm3308, %v3348, %v3380
      %v3390 = vpack.c.bf16 %v3382, %v3382
      %v3391 = vpack.c.bf16 %v3383, %v3383
      %v3392 = vpack.c.bf16 %v3384, %v3384
      %v3393 = vpack.c.bf16 %v3385, %v3385
      %v3394 = vpack.c.bf16 %v3386, %v3386
      %v3395 = vpack.c.bf16 %v3387, %v3387
      %v3396 = vpack.c.bf16 %v3388, %v3388
      %v3397 = vpack.c.bf16 %v3389, %v3389
      %v3398 = vld [vmem:[%s7] sm:$0xff]
      %v3399 = vld [vmem:[%s7 + $0x8] sm:$0xff]
      %v3400 = vld [vmem:[%s7 + $0x10] sm:$0xff]
      %v3401 = vld [vmem:[%s7 + $0x18] sm:$0xff]
      %v3402 = vld [vmem:[%s7 + $0x20] sm:$0xff]
      %v3403 = vld [vmem:[%s7 + $0x28] sm:$0xff]
      %v3404 = vld [vmem:[%s7 + $0x30] sm:$0xff]
      %v3405 = vld [vmem:[%s7 + $0x38] sm:$0xff]
      %v3406 = vld [vmem:[%s7 + $0x40] sm:$0xff]
      %v3407 = vld [vmem:[%s7 + $0x48] sm:$0xff]
      %v3408 = vld [vmem:[%s7 + $0x50] sm:$0xff]
      %v3409 = vld [vmem:[%s7 + $0x58] sm:$0xff]
      %v3410 = vld [vmem:[%s7 + $0x60] sm:$0xff]
      %v3411 = vld [vmem:[%s7 + $0x68] sm:$0xff]
      %v3412 = vld [vmem:[%s7 + $0x70] sm:$0xff]
      %v3413 = vld [vmem:[%s7 + $0x78] sm:$0xff]
      %v3414 = vld [vmem:[%s7 + $0x80] sm:$0xff]
      %v3415 = vld [vmem:[%s7 + $0x88] sm:$0xff]
      %v3416 = vld [vmem:[%s7 + $0x90] sm:$0xff]
      %v3417 = vld [vmem:[%s7 + $0x98] sm:$0xff]
      %v3418 = vld [vmem:[%s7 + $0xa0] sm:$0xff]
      %v3419 = vld [vmem:[%s7 + $0xa8] sm:$0xff]
      %v3420 = vld [vmem:[%s7 + $0xb0] sm:$0xff]
      %v3421 = vld [vmem:[%s7 + $0xb8] sm:$0xff]
      %v3422 = vld [vmem:[%s7 + $0xc0] sm:$0xff]
      %v3423 = vld [vmem:[%s7 + $0xc8] sm:$0xff]
      %v3424 = vld [vmem:[%s7 + $0xd0] sm:$0xff]
      %v3425 = vld [vmem:[%s7 + $0xd8] sm:$0xff]
      %v3426 = vld [vmem:[%s7 + $0xe0] sm:$0xff]
      %v3427 = vld [vmem:[%s7 + $0xe8] sm:$0xff]
      %v3428 = vld [vmem:[%s7 + $0xf0] sm:$0xff]
      %v3429 = vld [vmem:[%s7 + $0xf8] sm:$0xff]
      %v3430 = vld [vmem:[%s7 + $0x100] sm:$0xff]
      %v3431 = vld [vmem:[%s7 + $0x108] sm:$0xff]
      %v3432 = vld [vmem:[%s7 + $0x110] sm:$0xff]
      %v3433 = vld [vmem:[%s7 + $0x118] sm:$0xff]
      %v3434 = vld [vmem:[%s7 + $0x120] sm:$0xff]
      %v3435 = vld [vmem:[%s7 + $0x128] sm:$0xff]
      %v3436 = vld [vmem:[%s7 + $0x130] sm:$0xff]
      %v3437 = vld [vmem:[%s7 + $0x138] sm:$0xff]
      %v3438 = vld [vmem:[%s7 + $0x140] sm:$0xff]
      %v3439 = vld [vmem:[%s7 + $0x148] sm:$0xff]
      %v3440 = vld [vmem:[%s7 + $0x150] sm:$0xff]
      %v3441 = vld [vmem:[%s7 + $0x158] sm:$0xff]
      %v3442 = vld [vmem:[%s7 + $0x160] sm:$0xff]
      %v3443 = vld [vmem:[%s7 + $0x168] sm:$0xff]
      %v3444 = vld [vmem:[%s7 + $0x170] sm:$0xff]
      %v3445 = vld [vmem:[%s7 + $0x178] sm:$0xff]
      %v3446 = vld [vmem:[%s7 + $0x180] sm:$0xff]
      %v3447 = vld [vmem:[%s7 + $0x188] sm:$0xff]
      %v3448 = vld [vmem:[%s7 + $0x190] sm:$0xff]
      %v3449 = vld [vmem:[%s7 + $0x198] sm:$0xff]
      %v3450 = vld [vmem:[%s7 + $0x1a0] sm:$0xff]
      %v3451 = vld [vmem:[%s7 + $0x1a8] sm:$0xff]
      %v3452 = vld [vmem:[%s7 + $0x1b0] sm:$0xff]
      %v3453 = vld [vmem:[%s7 + $0x1b8] sm:$0xff]
      %v3454 = vld [vmem:[%s7 + $0x1c0] sm:$0xff]
      %v3455 = vld [vmem:[%s7 + $0x1c8] sm:$0xff]
      %v3456 = vld [vmem:[%s7 + $0x1d0] sm:$0xff]
      %v3457 = vld [vmem:[%s7 + $0x1d8] sm:$0xff]
      %v3458 = vld [vmem:[%s7 + $0x1e0] sm:$0xff]
      %v3459 = vld [vmem:[%s7 + $0x1e8] sm:$0xff]
      %v3460 = vld [vmem:[%s7 + $0x1f0] sm:$0xff]
      %v3461 = vld [vmem:[%s7 + $0x1f8] sm:$0xff]
      %v3462 = vld [vmem:[%s7 + $0x200] sm:$0xff]
      %v3463 = vld [vmem:[%s7 + $0x208] sm:$0xff]
      %v3464 = vld [vmem:[%s7 + $0x210] sm:$0xff]
      %v3465 = vld [vmem:[%s7 + $0x218] sm:$0xff]
      %v3466 = vld [vmem:[%s7 + $0x220] sm:$0xff]
      %v3467 = vld [vmem:[%s7 + $0x228] sm:$0xff]
      %v3468 = vld [vmem:[%s7 + $0x230] sm:$0xff]
      %v3469 = vld [vmem:[%s7 + $0x238] sm:$0xff]
      %v3470 = vld [vmem:[%s7 + $0x240] sm:$0xff]
      %v3471 = vld [vmem:[%s7 + $0x248] sm:$0xff]
      %v3472 = vld [vmem:[%s7 + $0x250] sm:$0xff]
      %v3473 = vld [vmem:[%s7 + $0x258] sm:$0xff]
      %v3474 = vld [vmem:[%s7 + $0x260] sm:$0xff]
      %v3475 = vld [vmem:[%s7 + $0x268] sm:$0xff]
      %v3476 = vld [vmem:[%s7 + $0x270] sm:$0xff]
      %v3477 = vld [vmem:[%s7 + $0x278] sm:$0xff]
      %v3478 = vld [vmem:[%s7 + $0x280] sm:$0xff]
      %v3479 = vld [vmem:[%s7 + $0x288] sm:$0xff]
      %v3480 = vld [vmem:[%s7 + $0x290] sm:$0xff]
      %v3481 = vld [vmem:[%s7 + $0x298] sm:$0xff]
      %v3482 = vld [vmem:[%s7 + $0x2a0] sm:$0xff]
      %v3483 = vld [vmem:[%s7 + $0x2a8] sm:$0xff]
      %v3484 = vld [vmem:[%s7 + $0x2b0] sm:$0xff]
      %v3485 = vld [vmem:[%s7 + $0x2b8] sm:$0xff]
      %v3486 = vld [vmem:[%s7 + $0x2c0] sm:$0xff]
      %v3487 = vld [vmem:[%s7 + $0x2c8] sm:$0xff]
      %v3488 = vld [vmem:[%s7 + $0x2d0] sm:$0xff]
      %v3489 = vld [vmem:[%s7 + $0x2d8] sm:$0xff]
      %v3490 = vld [vmem:[%s7 + $0x2e0] sm:$0xff]
      %v3491 = vld [vmem:[%s7 + $0x2e8] sm:$0xff]
      %v3492 = vld [vmem:[%s7 + $0x2f0] sm:$0xff]
      %v3493 = vld [vmem:[%s7 + $0x2f8] sm:$0xff]
      %v3494 = vld [vmem:[%s7 + $0x300] sm:$0xff]
      %v3495 = vld [vmem:[%s7 + $0x308] sm:$0xff]
      %v3496 = vld [vmem:[%s7 + $0x310] sm:$0xff]
      %v3497 = vld [vmem:[%s7 + $0x318] sm:$0xff]
      %v3498 = vld [vmem:[%s7 + $0x320] sm:$0xff]
      %v3499 = vld [vmem:[%s7 + $0x328] sm:$0xff]
      %v3500 = vld [vmem:[%s7 + $0x330] sm:$0xff]
      %v3501 = vld [vmem:[%s7 + $0x338] sm:$0xff]
      %v3502 = vld [vmem:[%s7 + $0x340] sm:$0xff]
      %v3503 = vld [vmem:[%s7 + $0x348] sm:$0xff]
      %v3504 = vld [vmem:[%s7 + $0x350] sm:$0xff]
      %v3505 = vld [vmem:[%s7 + $0x358] sm:$0xff]
      %v3506 = vld [vmem:[%s7 + $0x360] sm:$0xff]
      %v3507 = vld [vmem:[%s7 + $0x368] sm:$0xff]
      %v3508 = vld [vmem:[%s7 + $0x370] sm:$0xff]
      %v3509 = vld [vmem:[%s7 + $0x378] sm:$0xff]
      %v3510 = vld [vmem:[%s7 + $0x380] sm:$0xff]
      %v3511 = vld [vmem:[%s7 + $0x388] sm:$0xff]
      %v3512 = vld [vmem:[%s7 + $0x390] sm:$0xff]
      %v3513 = vld [vmem:[%s7 + $0x398] sm:$0xff]
      %v3514 = vld [vmem:[%s7 + $0x3a0] sm:$0xff]
      %v3515 = vld [vmem:[%s7 + $0x3a8] sm:$0xff]
      %v3516 = vld [vmem:[%s7 + $0x3b0] sm:$0xff]
      %v3517 = vld [vmem:[%s7 + $0x3b8] sm:$0xff]
      %v3518 = vld [vmem:[%s7 + $0x3c0] sm:$0xff]
      %v3519 = vld [vmem:[%s7 + $0x3c8] sm:$0xff]
      %v3520 = vld [vmem:[%s7 + $0x3d0] sm:$0xff]
      %v3521 = vld [vmem:[%s7 + $0x3d8] sm:$0xff]
      %v3522 = vld [vmem:[%s7 + $0x3e0] sm:$0xff]
      %v3523 = vld [vmem:[%s7 + $0x3e8] sm:$0xff]
      %v3524 = vld [vmem:[%s7 + $0x3f0] sm:$0xff]
      %v3525 = vld [vmem:[%s7 + $0x3f8] sm:$0xff]
      %v3526 = vld [vmem:[%s7 + $0x400] sm:$0xff]
      %v3527 = vld [vmem:[%s7 + $0x408] sm:$0xff]
      %v3528 = vld [vmem:[%s7 + $0x410] sm:$0xff]
      %v3529 = vld [vmem:[%s7 + $0x418] sm:$0xff]
      %v3530 = vld [vmem:[%s7 + $0x420] sm:$0xff]
      %v3531 = vld [vmem:[%s7 + $0x428] sm:$0xff]
      %v3532 = vld [vmem:[%s7 + $0x430] sm:$0xff]
      %v3533 = vld [vmem:[%s7 + $0x438] sm:$0xff]
      %v3534 = vld [vmem:[%s7 + $0x440] sm:$0xff]
      %v3535 = vld [vmem:[%s7 + $0x448] sm:$0xff]
      %v3536 = vld [vmem:[%s7 + $0x450] sm:$0xff]
      %v3537 = vld [vmem:[%s7 + $0x458] sm:$0xff]
      %v3538 = vld [vmem:[%s7 + $0x460] sm:$0xff]
      %v3539 = vld [vmem:[%s7 + $0x468] sm:$0xff]
      %v3540 = vld [vmem:[%s7 + $0x470] sm:$0xff]
      %v3541 = vld [vmem:[%s7 + $0x478] sm:$0xff]
      %v3542 = vld [vmem:[%s7 + $0x480] sm:$0xff]
      %v3543 = vld [vmem:[%s7 + $0x488] sm:$0xff]
      %v3544 = vld [vmem:[%s7 + $0x490] sm:$0xff]
      %v3545 = vld [vmem:[%s7 + $0x498] sm:$0xff]
      %v3546 = vld [vmem:[%s7 + $0x4a0] sm:$0xff]
      %v3547 = vld [vmem:[%s7 + $0x4a8] sm:$0xff]
      %v3548 = vld [vmem:[%s7 + $0x4b0] sm:$0xff]
      %v3549 = vld [vmem:[%s7 + $0x4b8] sm:$0xff]
      %v3550 = vld [vmem:[%s7 + $0x4c0] sm:$0xff]
      %v3551 = vld [vmem:[%s7 + $0x4c8] sm:$0xff]
      %v3552 = vld [vmem:[%s7 + $0x4d0] sm:$0xff]
      %v3553 = vld [vmem:[%s7 + $0x4d8] sm:$0xff]
      %v3554 = vld [vmem:[%s7 + $0x4e0] sm:$0xff]
      %v3555 = vld [vmem:[%s7 + $0x4e8] sm:$0xff]
      %v3556 = vld [vmem:[%s7 + $0x4f0] sm:$0xff]
      %v3557 = vld [vmem:[%s7 + $0x4f8] sm:$0xff]
      %v3558 = vld [vmem:[%s7 + $0x500] sm:$0xff]
      %v3559 = vld [vmem:[%s7 + $0x508] sm:$0xff]
      %v3560 = vld [vmem:[%s7 + $0x510] sm:$0xff]
      %v3561 = vld [vmem:[%s7 + $0x518] sm:$0xff]
      %v3562 = vld [vmem:[%s7 + $0x520] sm:$0xff]
      %v3563 = vld [vmem:[%s7 + $0x528] sm:$0xff]
      %v3564 = vld [vmem:[%s7 + $0x530] sm:$0xff]
      %v3565 = vld [vmem:[%s7 + $0x538] sm:$0xff]
      %v3566 = vld [vmem:[%s7 + $0x540] sm:$0xff]
      %v3567 = vld [vmem:[%s7 + $0x548] sm:$0xff]
      %v3568 = vld [vmem:[%s7 + $0x550] sm:$0xff]
      %v3569 = vld [vmem:[%s7 + $0x558] sm:$0xff]
      %v3570 = vld [vmem:[%s7 + $0x560] sm:$0xff]
      %v3571 = vld [vmem:[%s7 + $0x568] sm:$0xff]
      %v3572 = vld [vmem:[%s7 + $0x570] sm:$0xff]
      %v3573 = vld [vmem:[%s7 + $0x578] sm:$0xff]
      %v3574 = vld [vmem:[%s7 + $0x580] sm:$0xff]
      %v3575 = vld [vmem:[%s7 + $0x588] sm:$0xff]
      %v3576 = vld [vmem:[%s7 + $0x590] sm:$0xff]
      %v3577 = vld [vmem:[%s7 + $0x598] sm:$0xff]
      %v3578 = vld [vmem:[%s7 + $0x5a0] sm:$0xff]
      %v3579 = vld [vmem:[%s7 + $0x5a8] sm:$0xff]
      %v3580 = vld [vmem:[%s7 + $0x5b0] sm:$0xff]
      %v3581 = vld [vmem:[%s7 + $0x5b8] sm:$0xff]
      %v3582 = vld [vmem:[%s7 + $0x5c0] sm:$0xff]
      %v3583 = vld [vmem:[%s7 + $0x5c8] sm:$0xff]
      %v3584 = vld [vmem:[%s7 + $0x5d0] sm:$0xff]
      %v3585 = vld [vmem:[%s7 + $0x5d8] sm:$0xff]
      %v3586 = vld [vmem:[%s7 + $0x5e0] sm:$0xff]
      %v3587 = vld [vmem:[%s7 + $0x5e8] sm:$0xff]
      %v3588 = vld [vmem:[%s7 + $0x5f0] sm:$0xff]
      %v3589 = vld [vmem:[%s7 + $0x5f8] sm:$0xff]
      %v3590 = vld [vmem:[%s7 + $0x600] sm:$0xff]
      %v3591 = vld [vmem:[%s7 + $0x608] sm:$0xff]
      %v3592 = vld [vmem:[%s7 + $0x610] sm:$0xff]
      %v3593 = vld [vmem:[%s7 + $0x618] sm:$0xff]
      %v3594 = vld [vmem:[%s7 + $0x620] sm:$0xff]
      %v3595 = vld [vmem:[%s7 + $0x628] sm:$0xff]
      %v3596 = vld [vmem:[%s7 + $0x630] sm:$0xff]
      %v3597 = vld [vmem:[%s7 + $0x638] sm:$0xff]
      %v3598 = vld [vmem:[%s7 + $0x640] sm:$0xff]
      %v3599 = vld [vmem:[%s7 + $0x648] sm:$0xff]
      %v3600 = vld [vmem:[%s7 + $0x650] sm:$0xff]
      %v3601 = vld [vmem:[%s7 + $0x658] sm:$0xff]
      %v3602 = vld [vmem:[%s7 + $0x660] sm:$0xff]
      %v3603 = vld [vmem:[%s7 + $0x668] sm:$0xff]
      %v3604 = vld [vmem:[%s7 + $0x670] sm:$0xff]
      %v3605 = vld [vmem:[%s7 + $0x678] sm:$0xff]
      %v3606 = vld [vmem:[%s7 + $0x680] sm:$0xff]
      %v3607 = vld [vmem:[%s7 + $0x688] sm:$0xff]
      %v3608 = vld [vmem:[%s7 + $0x690] sm:$0xff]
      %v3609 = vld [vmem:[%s7 + $0x698] sm:$0xff]
      %v3610 = vld [vmem:[%s7 + $0x6a0] sm:$0xff]
      %v3611 = vld [vmem:[%s7 + $0x6a8] sm:$0xff]
      %v3612 = vld [vmem:[%s7 + $0x6b0] sm:$0xff]
      %v3613 = vld [vmem:[%s7 + $0x6b8] sm:$0xff]
      %v3614 = vld [vmem:[%s7 + $0x6c0] sm:$0xff]
      %v3615 = vld [vmem:[%s7 + $0x6c8] sm:$0xff]
      %v3616 = vld [vmem:[%s7 + $0x6d0] sm:$0xff]
      %v3617 = vld [vmem:[%s7 + $0x6d8] sm:$0xff]
      %v3618 = vld [vmem:[%s7 + $0x6e0] sm:$0xff]
      %v3619 = vld [vmem:[%s7 + $0x6e8] sm:$0xff]
      %v3620 = vld [vmem:[%s7 + $0x6f0] sm:$0xff]
      %v3621 = vld [vmem:[%s7 + $0x6f8] sm:$0xff]
      %v3622 = vld [vmem:[%s7 + $0x700] sm:$0xff]
      %v3623 = vld [vmem:[%s7 + $0x708] sm:$0xff]
      %v3624 = vld [vmem:[%s7 + $0x710] sm:$0xff]
      %v3625 = vld [vmem:[%s7 + $0x718] sm:$0xff]
      %v3626 = vld [vmem:[%s7 + $0x720] sm:$0xff]
      %v3627 = vld [vmem:[%s7 + $0x728] sm:$0xff]
      %v3628 = vld [vmem:[%s7 + $0x730] sm:$0xff]
      %v3629 = vld [vmem:[%s7 + $0x738] sm:$0xff]
      %v3630 = vld [vmem:[%s7 + $0x740] sm:$0xff]
      %v3631 = vld [vmem:[%s7 + $0x748] sm:$0xff]
      %v3632 = vld [vmem:[%s7 + $0x750] sm:$0xff]
      %v3633 = vld [vmem:[%s7 + $0x758] sm:$0xff]
      %v3634 = vld [vmem:[%s7 + $0x760] sm:$0xff]
      %v3635 = vld [vmem:[%s7 + $0x768] sm:$0xff]
      %v3636 = vld [vmem:[%s7 + $0x770] sm:$0xff]
      %v3637 = vld [vmem:[%s7 + $0x778] sm:$0xff]
      %v3638 = vld [vmem:[%s7 + $0x780] sm:$0xff]
      %v3639 = vld [vmem:[%s7 + $0x788] sm:$0xff]
      %v3640 = vld [vmem:[%s7 + $0x790] sm:$0xff]
      %v3641 = vld [vmem:[%s7 + $0x798] sm:$0xff]
      %v3642 = vld [vmem:[%s7 + $0x7a0] sm:$0xff]
      %v3643 = vld [vmem:[%s7 + $0x7a8] sm:$0xff]
      %v3644 = vld [vmem:[%s7 + $0x7b0] sm:$0xff]
      %v3645 = vld [vmem:[%s7 + $0x7b8] sm:$0xff]
      %v3646 = vld [vmem:[%s7 + $0x7c0] sm:$0xff]
      %v3647 = vld [vmem:[%s7 + $0x7c8] sm:$0xff]
      %v3648 = vld [vmem:[%s7 + $0x7d0] sm:$0xff]
      %v3649 = vld [vmem:[%s7 + $0x7d8] sm:$0xff]
      %v3650 = vld [vmem:[%s7 + $0x7e0] sm:$0xff]
      %v3651 = vld [vmem:[%s7 + $0x7e8] sm:$0xff]
      %v3652 = vld [vmem:[%s7 + $0x7f0] sm:$0xff]
      %v3653 = vld [vmem:[%s7 + $0x7f8] sm:$0xff]
      %v3654 = vld [vmem:[%s9] sm:$0xf]
      %v3656 = vlaneseq
      %v3657 = vshrl.u32 %v3656, 7
      %v3658 = vsub.s32 0, %v3657
      %v3659 = vrot.slane %v3654, %v3658
      %v3660 = vlaneseq
      %v3661 = vshrl.u32 %v3660, 7
      %v3662 = vsub.s32 1, %v3661
      %v3663 = vrot.slane %v3654, %v3662
      %v3664 = vlaneseq
      %v3665 = vshrl.u32 %v3664, 7
      %v3666 = vsub.s32 2, %v3665
      %v3667 = vrot.slane %v3654, %v3666
      %v3668 = vlaneseq
      %v3669 = vshrl.u32 %v3668, 7
      %v3670 = vsub.s32 3, %v3669
      %v3671 = vrot.slane %v3654, %v3670
      %v3932 = vunpack.c.l.b16 %v3398
      %v3933 = vunpack.c.h.b16 %v3398
      %v3934 = vunpack.c.l.b16 %v3399
      %v3935 = vunpack.c.h.b16 %v3399
      %v3936 = vunpack.c.l.b16 %v3400
      %v3937 = vunpack.c.h.b16 %v3400
      %v3938 = vunpack.c.l.b16 %v3401
      %v3939 = vunpack.c.h.b16 %v3401
      %v3940 = vunpack.c.l.b16 %v3402
      %v3941 = vunpack.c.h.b16 %v3402
      %v3942 = vunpack.c.l.b16 %v3403
      %v3943 = vunpack.c.h.b16 %v3403
      %v3944 = vunpack.c.l.b16 %v3404
      %v3945 = vunpack.c.h.b16 %v3404
      %v3946 = vunpack.c.l.b16 %v3405
      %v3947 = vunpack.c.h.b16 %v3405
      %v3948 = vunpack.c.l.b16 %v3406
      %v3949 = vunpack.c.h.b16 %v3406
      %v3950 = vunpack.c.l.b16 %v3407
      %v3951 = vunpack.c.h.b16 %v3407
      %v3952 = vunpack.c.l.b16 %v3408
      %v3953 = vunpack.c.h.b16 %v3408
      %v3954 = vunpack.c.l.b16 %v3409
      %v3955 = vunpack.c.h.b16 %v3409
      %v3956 = vunpack.c.l.b16 %v3410
      %v3957 = vunpack.c.h.b16 %v3410
      %v3958 = vunpack.c.l.b16 %v3411
      %v3959 = vunpack.c.h.b16 %v3411
      %v3960 = vunpack.c.l.b16 %v3412
      %v3961 = vunpack.c.h.b16 %v3412
      %v3962 = vunpack.c.l.b16 %v3413
      %v3963 = vunpack.c.h.b16 %v3413
      %v3964 = vunpack.c.l.b16 %v3414
      %v3965 = vunpack.c.h.b16 %v3414
      %v3966 = vunpack.c.l.b16 %v3415
      %v3967 = vunpack.c.h.b16 %v3415
      %v3968 = vunpack.c.l.b16 %v3416
      %v3969 = vunpack.c.h.b16 %v3416
      %v3970 = vunpack.c.l.b16 %v3417
      %v3971 = vunpack.c.h.b16 %v3417
      %v3972 = vunpack.c.l.b16 %v3418
      %v3973 = vunpack.c.h.b16 %v3418
      %v3974 = vunpack.c.l.b16 %v3419
      %v3975 = vunpack.c.h.b16 %v3419
      %v3976 = vunpack.c.l.b16 %v3420
      %v3977 = vunpack.c.h.b16 %v3420
      %v3978 = vunpack.c.l.b16 %v3421
      %v3979 = vunpack.c.h.b16 %v3421
      %v3980 = vunpack.c.l.b16 %v3422
      %v3981 = vunpack.c.h.b16 %v3422
      %v3982 = vunpack.c.l.b16 %v3423
      %v3983 = vunpack.c.h.b16 %v3423
      %v3984 = vunpack.c.l.b16 %v3424
      %v3985 = vunpack.c.h.b16 %v3424
      %v3986 = vunpack.c.l.b16 %v3425
      %v3987 = vunpack.c.h.b16 %v3425
      %v3988 = vunpack.c.l.b16 %v3426
      %v3989 = vunpack.c.h.b16 %v3426
      %v3990 = vunpack.c.l.b16 %v3427
      %v3991 = vunpack.c.h.b16 %v3427
      %v3992 = vunpack.c.l.b16 %v3428
      %v3993 = vunpack.c.h.b16 %v3428
      %v3994 = vunpack.c.l.b16 %v3429
      %v3995 = vunpack.c.h.b16 %v3429
      %v3996 = vunpack.c.l.b16 %v3430
      %v3997 = vunpack.c.h.b16 %v3430
      %v3998 = vunpack.c.l.b16 %v3431
      %v3999 = vunpack.c.h.b16 %v3431
      %v4000 = vunpack.c.l.b16 %v3432
      %v4001 = vunpack.c.h.b16 %v3432
      %v4002 = vunpack.c.l.b16 %v3433
      %v4003 = vunpack.c.h.b16 %v3433
      %v4004 = vunpack.c.l.b16 %v3434
      %v4005 = vunpack.c.h.b16 %v3434
      %v4006 = vunpack.c.l.b16 %v3435
      %v4007 = vunpack.c.h.b16 %v3435
      %v4008 = vunpack.c.l.b16 %v3436
      %v4009 = vunpack.c.h.b16 %v3436
      %v4010 = vunpack.c.l.b16 %v3437
      %v4011 = vunpack.c.h.b16 %v3437
      %v4012 = vunpack.c.l.b16 %v3438
      %v4013 = vunpack.c.h.b16 %v3438
      %v4014 = vunpack.c.l.b16 %v3439
      %v4015 = vunpack.c.h.b16 %v3439
      %v4016 = vunpack.c.l.b16 %v3440
      %v4017 = vunpack.c.h.b16 %v3440
      %v4018 = vunpack.c.l.b16 %v3441
      %v4019 = vunpack.c.h.b16 %v3441
      %v4020 = vunpack.c.l.b16 %v3442
      %v4021 = vunpack.c.h.b16 %v3442
      %v4022 = vunpack.c.l.b16 %v3443
      %v4023 = vunpack.c.h.b16 %v3443
      %v4024 = vunpack.c.l.b16 %v3444
      %v4025 = vunpack.c.h.b16 %v3444
      %v4026 = vunpack.c.l.b16 %v3445
      %v4027 = vunpack.c.h.b16 %v3445
      %v4028 = vunpack.c.l.b16 %v3446
      %v4029 = vunpack.c.h.b16 %v3446
      %v4030 = vunpack.c.l.b16 %v3447
      %v4031 = vunpack.c.h.b16 %v3447
      %v4032 = vunpack.c.l.b16 %v3448
      %v4033 = vunpack.c.h.b16 %v3448
      %v4034 = vunpack.c.l.b16 %v3449
      %v4035 = vunpack.c.h.b16 %v3449
      %v4036 = vunpack.c.l.b16 %v3450
      %v4037 = vunpack.c.h.b16 %v3450
      %v4038 = vunpack.c.l.b16 %v3451
      %v4039 = vunpack.c.h.b16 %v3451
      %v4040 = vunpack.c.l.b16 %v3452
      %v4041 = vunpack.c.h.b16 %v3452
      %v4042 = vunpack.c.l.b16 %v3453
      %v4043 = vunpack.c.h.b16 %v3453
      %v4044 = vunpack.c.l.b16 %v3454
      %v4045 = vunpack.c.h.b16 %v3454
      %v4046 = vunpack.c.l.b16 %v3455
      %v4047 = vunpack.c.h.b16 %v3455
      %v4048 = vunpack.c.l.b16 %v3456
      %v4049 = vunpack.c.h.b16 %v3456
      %v4050 = vunpack.c.l.b16 %v3457
      %v4051 = vunpack.c.h.b16 %v3457
      %v4052 = vunpack.c.l.b16 %v3458
      %v4053 = vunpack.c.h.b16 %v3458
      %v4054 = vunpack.c.l.b16 %v3459
      %v4055 = vunpack.c.h.b16 %v3459
      %v4056 = vunpack.c.l.b16 %v3460
      %v4057 = vunpack.c.h.b16 %v3460
      %v4058 = vunpack.c.l.b16 %v3461
      %v4059 = vunpack.c.h.b16 %v3461
      %v4060 = vunpack.c.l.b16 %v3462
      %v4061 = vunpack.c.h.b16 %v3462
      %v4062 = vunpack.c.l.b16 %v3463
      %v4063 = vunpack.c.h.b16 %v3463
      %v4064 = vunpack.c.l.b16 %v3464
      %v4065 = vunpack.c.h.b16 %v3464
      %v4066 = vunpack.c.l.b16 %v3465
      %v4067 = vunpack.c.h.b16 %v3465
      %v4068 = vunpack.c.l.b16 %v3466
      %v4069 = vunpack.c.h.b16 %v3466
      %v4070 = vunpack.c.l.b16 %v3467
      %v4071 = vunpack.c.h.b16 %v3467
      %v4072 = vunpack.c.l.b16 %v3468
      %v4073 = vunpack.c.h.b16 %v3468
      %v4074 = vunpack.c.l.b16 %v3469
      %v4075 = vunpack.c.h.b16 %v3469
      %v4076 = vunpack.c.l.b16 %v3470
      %v4077 = vunpack.c.h.b16 %v3470
      %v4078 = vunpack.c.l.b16 %v3471
      %v4079 = vunpack.c.h.b16 %v3471
      %v4080 = vunpack.c.l.b16 %v3472
      %v4081 = vunpack.c.h.b16 %v3472
      %v4082 = vunpack.c.l.b16 %v3473
      %v4083 = vunpack.c.h.b16 %v3473
      %v4084 = vunpack.c.l.b16 %v3474
      %v4085 = vunpack.c.h.b16 %v3474
      %v4086 = vunpack.c.l.b16 %v3475
      %v4087 = vunpack.c.h.b16 %v3475
      %v4088 = vunpack.c.l.b16 %v3476
      %v4089 = vunpack.c.h.b16 %v3476
      %v4090 = vunpack.c.l.b16 %v3477
      %v4091 = vunpack.c.h.b16 %v3477
      %v4092 = vunpack.c.l.b16 %v3478
      %v4093 = vunpack.c.h.b16 %v3478
      %v4094 = vunpack.c.l.b16 %v3479
      %v4095 = vunpack.c.h.b16 %v3479
      %v4096 = vunpack.c.l.b16 %v3480
      %v4097 = vunpack.c.h.b16 %v3480
      %v4098 = vunpack.c.l.b16 %v3481
      %v4099 = vunpack.c.h.b16 %v3481
      %v4100 = vunpack.c.l.b16 %v3482
      %v4101 = vunpack.c.h.b16 %v3482
      %v4102 = vunpack.c.l.b16 %v3483
      %v4103 = vunpack.c.h.b16 %v3483
      %v4104 = vunpack.c.l.b16 %v3484
      %v4105 = vunpack.c.h.b16 %v3484
      %v4106 = vunpack.c.l.b16 %v3485
      %v4107 = vunpack.c.h.b16 %v3485
      %v4108 = vunpack.c.l.b16 %v3486
      %v4109 = vunpack.c.h.b16 %v3486
      %v4110 = vunpack.c.l.b16 %v3487
      %v4111 = vunpack.c.h.b16 %v3487
      %v4112 = vunpack.c.l.b16 %v3488
      %v4113 = vunpack.c.h.b16 %v3488
      %v4114 = vunpack.c.l.b16 %v3489
      %v4115 = vunpack.c.h.b16 %v3489
      %v4116 = vunpack.c.l.b16 %v3490
      %v4117 = vunpack.c.h.b16 %v3490
      %v4118 = vunpack.c.l.b16 %v3491
      %v4119 = vunpack.c.h.b16 %v3491
      %v4120 = vunpack.c.l.b16 %v3492
      %v4121 = vunpack.c.h.b16 %v3492
      %v4122 = vunpack.c.l.b16 %v3493
      %v4123 = vunpack.c.h.b16 %v3493
      %v4124 = vunpack.c.l.b16 %v3494
      %v4125 = vunpack.c.h.b16 %v3494
      %v4126 = vunpack.c.l.b16 %v3495
      %v4127 = vunpack.c.h.b16 %v3495
      %v4128 = vunpack.c.l.b16 %v3496
      %v4129 = vunpack.c.h.b16 %v3496
      %v4130 = vunpack.c.l.b16 %v3497
      %v4131 = vunpack.c.h.b16 %v3497
      %v4132 = vunpack.c.l.b16 %v3498
      %v4133 = vunpack.c.h.b16 %v3498
      %v4134 = vunpack.c.l.b16 %v3499
      %v4135 = vunpack.c.h.b16 %v3499
      %v4136 = vunpack.c.l.b16 %v3500
      %v4137 = vunpack.c.h.b16 %v3500
      %v4138 = vunpack.c.l.b16 %v3501
      %v4139 = vunpack.c.h.b16 %v3501
      %v4140 = vunpack.c.l.b16 %v3502
      %v4141 = vunpack.c.h.b16 %v3502
      %v4142 = vunpack.c.l.b16 %v3503
      %v4143 = vunpack.c.h.b16 %v3503
      %v4144 = vunpack.c.l.b16 %v3504
      %v4145 = vunpack.c.h.b16 %v3504
      %v4146 = vunpack.c.l.b16 %v3505
      %v4147 = vunpack.c.h.b16 %v3505
      %v4148 = vunpack.c.l.b16 %v3506
      %v4149 = vunpack.c.h.b16 %v3506
      %v4150 = vunpack.c.l.b16 %v3507
      %v4151 = vunpack.c.h.b16 %v3507
      %v4152 = vunpack.c.l.b16 %v3508
      %v4153 = vunpack.c.h.b16 %v3508
      %v4154 = vunpack.c.l.b16 %v3509
      %v4155 = vunpack.c.h.b16 %v3509
      %v4156 = vunpack.c.l.b16 %v3510
      %v4157 = vunpack.c.h.b16 %v3510
      %v4158 = vunpack.c.l.b16 %v3511
      %v4159 = vunpack.c.h.b16 %v3511
      %v4160 = vunpack.c.l.b16 %v3512
      %v4161 = vunpack.c.h.b16 %v3512
      %v4162 = vunpack.c.l.b16 %v3513
      %v4163 = vunpack.c.h.b16 %v3513
      %v4164 = vunpack.c.l.b16 %v3514
      %v4165 = vunpack.c.h.b16 %v3514
      %v4166 = vunpack.c.l.b16 %v3515
      %v4167 = vunpack.c.h.b16 %v3515
      %v4168 = vunpack.c.l.b16 %v3516
      %v4169 = vunpack.c.h.b16 %v3516
      %v4170 = vunpack.c.l.b16 %v3517
      %v4171 = vunpack.c.h.b16 %v3517
      %v4172 = vunpack.c.l.b16 %v3518
      %v4173 = vunpack.c.h.b16 %v3518
      %v4174 = vunpack.c.l.b16 %v3519
      %v4175 = vunpack.c.h.b16 %v3519
      %v4176 = vunpack.c.l.b16 %v3520
      %v4177 = vunpack.c.h.b16 %v3520
      %v4178 = vunpack.c.l.b16 %v3521
      %v4179 = vunpack.c.h.b16 %v3521
      %v4180 = vunpack.c.l.b16 %v3522
      %v4181 = vunpack.c.h.b16 %v3522
      %v4182 = vunpack.c.l.b16 %v3523
      %v4183 = vunpack.c.h.b16 %v3523
      %v4184 = vunpack.c.l.b16 %v3524
      %v4185 = vunpack.c.h.b16 %v3524
      %v4186 = vunpack.c.l.b16 %v3525
      %v4187 = vunpack.c.h.b16 %v3525
      %v4188 = vunpack.c.l.b16 %v3526
      %v4189 = vunpack.c.h.b16 %v3526
      %v4190 = vunpack.c.l.b16 %v3527
      %v4191 = vunpack.c.h.b16 %v3527
      %v4192 = vunpack.c.l.b16 %v3528
      %v4193 = vunpack.c.h.b16 %v3528
      %v4194 = vunpack.c.l.b16 %v3529
      %v4195 = vunpack.c.h.b16 %v3529
      %v4196 = vunpack.c.l.b16 %v3530
      %v4197 = vunpack.c.h.b16 %v3530
      %v4198 = vunpack.c.l.b16 %v3531
      %v4199 = vunpack.c.h.b16 %v3531
      %v4200 = vunpack.c.l.b16 %v3532
      %v4201 = vunpack.c.h.b16 %v3532
      %v4202 = vunpack.c.l.b16 %v3533
      %v4203 = vunpack.c.h.b16 %v3533
      %v4204 = vunpack.c.l.b16 %v3534
      %v4205 = vunpack.c.h.b16 %v3534
      %v4206 = vunpack.c.l.b16 %v3535
      %v4207 = vunpack.c.h.b16 %v3535
      %v4208 = vunpack.c.l.b16 %v3536
      %v4209 = vunpack.c.h.b16 %v3536
      %v4210 = vunpack.c.l.b16 %v3537
      %v4211 = vunpack.c.h.b16 %v3537
      %v4212 = vunpack.c.l.b16 %v3538
      %v4213 = vunpack.c.h.b16 %v3538
      %v4214 = vunpack.c.l.b16 %v3539
      %v4215 = vunpack.c.h.b16 %v3539
      %v4216 = vunpack.c.l.b16 %v3540
      %v4217 = vunpack.c.h.b16 %v3540
      %v4218 = vunpack.c.l.b16 %v3541
      %v4219 = vunpack.c.h.b16 %v3541
      %v4220 = vunpack.c.l.b16 %v3542
      %v4221 = vunpack.c.h.b16 %v3542
      %v4222 = vunpack.c.l.b16 %v3543
      %v4223 = vunpack.c.h.b16 %v3543
      %v4224 = vunpack.c.l.b16 %v3544
      %v4225 = vunpack.c.h.b16 %v3544
      %v4226 = vunpack.c.l.b16 %v3545
      %v4227 = vunpack.c.h.b16 %v3545
      %v4228 = vunpack.c.l.b16 %v3546
      %v4229 = vunpack.c.h.b16 %v3546
      %v4230 = vunpack.c.l.b16 %v3547
      %v4231 = vunpack.c.h.b16 %v3547
      %v4232 = vunpack.c.l.b16 %v3548
      %v4233 = vunpack.c.h.b16 %v3548
      %v4234 = vunpack.c.l.b16 %v3549
      %v4235 = vunpack.c.h.b16 %v3549
      %v4236 = vunpack.c.l.b16 %v3550
      %v4237 = vunpack.c.h.b16 %v3550
      %v4238 = vunpack.c.l.b16 %v3551
      %v4239 = vunpack.c.h.b16 %v3551
      %v4240 = vunpack.c.l.b16 %v3552
      %v4241 = vunpack.c.h.b16 %v3552
      %v4242 = vunpack.c.l.b16 %v3553
      %v4243 = vunpack.c.h.b16 %v3553
      %v4244 = vunpack.c.l.b16 %v3554
      %v4245 = vunpack.c.h.b16 %v3554
      %v4246 = vunpack.c.l.b16 %v3555
      %v4247 = vunpack.c.h.b16 %v3555
      %v4248 = vunpack.c.l.b16 %v3556
      %v4249 = vunpack.c.h.b16 %v3556
      %v4250 = vunpack.c.l.b16 %v3557
      %v4251 = vunpack.c.h.b16 %v3557
      %v4252 = vunpack.c.l.b16 %v3558
      %v4253 = vunpack.c.h.b16 %v3558
      %v4254 = vunpack.c.l.b16 %v3559
      %v4255 = vunpack.c.h.b16 %v3559
      %v4256 = vunpack.c.l.b16 %v3560
      %v4257 = vunpack.c.h.b16 %v3560
      %v4258 = vunpack.c.l.b16 %v3561
      %v4259 = vunpack.c.h.b16 %v3561
      %v4260 = vunpack.c.l.b16 %v3562
      %v4261 = vunpack.c.h.b16 %v3562
      %v4262 = vunpack.c.l.b16 %v3563
      %v4263 = vunpack.c.h.b16 %v3563
      %v4264 = vunpack.c.l.b16 %v3564
      %v4265 = vunpack.c.h.b16 %v3564
      %v4266 = vunpack.c.l.b16 %v3565
      %v4267 = vunpack.c.h.b16 %v3565
      %v4268 = vunpack.c.l.b16 %v3566
      %v4269 = vunpack.c.h.b16 %v3566
      %v4270 = vunpack.c.l.b16 %v3567
      %v4271 = vunpack.c.h.b16 %v3567
      %v4272 = vunpack.c.l.b16 %v3568
      %v4273 = vunpack.c.h.b16 %v3568
      %v4274 = vunpack.c.l.b16 %v3569
      %v4275 = vunpack.c.h.b16 %v3569
      %v4276 = vunpack.c.l.b16 %v3570
      %v4277 = vunpack.c.h.b16 %v3570
      %v4278 = vunpack.c.l.b16 %v3571
      %v4279 = vunpack.c.h.b16 %v3571
      %v4280 = vunpack.c.l.b16 %v3572
      %v4281 = vunpack.c.h.b16 %v3572
      %v4282 = vunpack.c.l.b16 %v3573
      %v4283 = vunpack.c.h.b16 %v3573
      %v4284 = vunpack.c.l.b16 %v3574
      %v4285 = vunpack.c.h.b16 %v3574
      %v4286 = vunpack.c.l.b16 %v3575
      %v4287 = vunpack.c.h.b16 %v3575
      %v4288 = vunpack.c.l.b16 %v3576
      %v4289 = vunpack.c.h.b16 %v3576
      %v4290 = vunpack.c.l.b16 %v3577
      %v4291 = vunpack.c.h.b16 %v3577
      %v4292 = vunpack.c.l.b16 %v3578
      %v4293 = vunpack.c.h.b16 %v3578
      %v4294 = vunpack.c.l.b16 %v3579
      %v4295 = vunpack.c.h.b16 %v3579
      %v4296 = vunpack.c.l.b16 %v3580
      %v4297 = vunpack.c.h.b16 %v3580
      %v4298 = vunpack.c.l.b16 %v3581
      %v4299 = vunpack.c.h.b16 %v3581
      %v4300 = vunpack.c.l.b16 %v3582
      %v4301 = vunpack.c.h.b16 %v3582
      %v4302 = vunpack.c.l.b16 %v3583
      %v4303 = vunpack.c.h.b16 %v3583
      %v4304 = vunpack.c.l.b16 %v3584
      %v4305 = vunpack.c.h.b16 %v3584
      %v4306 = vunpack.c.l.b16 %v3585
      %v4307 = vunpack.c.h.b16 %v3585
      %v4308 = vunpack.c.l.b16 %v3586
      %v4309 = vunpack.c.h.b16 %v3586
      %v4310 = vunpack.c.l.b16 %v3587
      %v4311 = vunpack.c.h.b16 %v3587
      %v4312 = vunpack.c.l.b16 %v3588
      %v4313 = vunpack.c.h.b16 %v3588
      %v4314 = vunpack.c.l.b16 %v3589
      %v4315 = vunpack.c.h.b16 %v3589
      %v4316 = vunpack.c.l.b16 %v3590
      %v4317 = vunpack.c.h.b16 %v3590
      %v4318 = vunpack.c.l.b16 %v3591
      %v4319 = vunpack.c.h.b16 %v3591
      %v4320 = vunpack.c.l.b16 %v3592
      %v4321 = vunpack.c.h.b16 %v3592
      %v4322 = vunpack.c.l.b16 %v3593
      %v4323 = vunpack.c.h.b16 %v3593
      %v4324 = vunpack.c.l.b16 %v3594
      %v4325 = vunpack.c.h.b16 %v3594
      %v4326 = vunpack.c.l.b16 %v3595
      %v4327 = vunpack.c.h.b16 %v3595
      %v4328 = vunpack.c.l.b16 %v3596
      %v4329 = vunpack.c.h.b16 %v3596
      %v4330 = vunpack.c.l.b16 %v3597
      %v4331 = vunpack.c.h.b16 %v3597
      %v4332 = vunpack.c.l.b16 %v3598
      %v4333 = vunpack.c.h.b16 %v3598
      %v4334 = vunpack.c.l.b16 %v3599
      %v4335 = vunpack.c.h.b16 %v3599
      %v4336 = vunpack.c.l.b16 %v3600
      %v4337 = vunpack.c.h.b16 %v3600
      %v4338 = vunpack.c.l.b16 %v3601
      %v4339 = vunpack.c.h.b16 %v3601
      %v4340 = vunpack.c.l.b16 %v3602
      %v4341 = vunpack.c.h.b16 %v3602
      %v4342 = vunpack.c.l.b16 %v3603
      %v4343 = vunpack.c.h.b16 %v3603
      %v4344 = vunpack.c.l.b16 %v3604
      %v4345 = vunpack.c.h.b16 %v3604
      %v4346 = vunpack.c.l.b16 %v3605
      %v4347 = vunpack.c.h.b16 %v3605
      %v4348 = vunpack.c.l.b16 %v3606
      %v4349 = vunpack.c.h.b16 %v3606
      %v4350 = vunpack.c.l.b16 %v3607
      %v4351 = vunpack.c.h.b16 %v3607
      %v4352 = vunpack.c.l.b16 %v3608
      %v4353 = vunpack.c.h.b16 %v3608
      %v4354 = vunpack.c.l.b16 %v3609
      %v4355 = vunpack.c.h.b16 %v3609
      %v4356 = vunpack.c.l.b16 %v3610
      %v4357 = vunpack.c.h.b16 %v3610
      %v4358 = vunpack.c.l.b16 %v3611
      %v4359 = vunpack.c.h.b16 %v3611
      %v4360 = vunpack.c.l.b16 %v3612
      %v4361 = vunpack.c.h.b16 %v3612
      %v4362 = vunpack.c.l.b16 %v3613
      %v4363 = vunpack.c.h.b16 %v3613
      %v4364 = vunpack.c.l.b16 %v3614
      %v4365 = vunpack.c.h.b16 %v3614
      %v4366 = vunpack.c.l.b16 %v3615
      %v4367 = vunpack.c.h.b16 %v3615
      %v4368 = vunpack.c.l.b16 %v3616
      %v4369 = vunpack.c.h.b16 %v3616
      %v4370 = vunpack.c.l.b16 %v3617
      %v4371 = vunpack.c.h.b16 %v3617
      %v4372 = vunpack.c.l.b16 %v3618
      %v4373 = vunpack.c.h.b16 %v3618
      %v4374 = vunpack.c.l.b16 %v3619
      %v4375 = vunpack.c.h.b16 %v3619
      %v4376 = vunpack.c.l.b16 %v3620
      %v4377 = vunpack.c.h.b16 %v3620
      %v4378 = vunpack.c.l.b16 %v3621
      %v4379 = vunpack.c.h.b16 %v3621
      %v4380 = vunpack.c.l.b16 %v3622
      %v4381 = vunpack.c.h.b16 %v3622
      %v4382 = vunpack.c.l.b16 %v3623
      %v4383 = vunpack.c.h.b16 %v3623
      %v4384 = vunpack.c.l.b16 %v3624
      %v4385 = vunpack.c.h.b16 %v3624
      %v4386 = vunpack.c.l.b16 %v3625
      %v4387 = vunpack.c.h.b16 %v3625
      %v4388 = vunpack.c.l.b16 %v3626
      %v4389 = vunpack.c.h.b16 %v3626
      %v4390 = vunpack.c.l.b16 %v3627
      %v4391 = vunpack.c.h.b16 %v3627
      %v4392 = vunpack.c.l.b16 %v3628
      %v4393 = vunpack.c.h.b16 %v3628
      %v4394 = vunpack.c.l.b16 %v3629
      %v4395 = vunpack.c.h.b16 %v3629
      %v4396 = vunpack.c.l.b16 %v3630
      %v4397 = vunpack.c.h.b16 %v3630
      %v4398 = vunpack.c.l.b16 %v3631
      %v4399 = vunpack.c.h.b16 %v3631
      %v4400 = vunpack.c.l.b16 %v3632
      %v4401 = vunpack.c.h.b16 %v3632
      %v4402 = vunpack.c.l.b16 %v3633
      %v4403 = vunpack.c.h.b16 %v3633
      %v4404 = vunpack.c.l.b16 %v3634
      %v4405 = vunpack.c.h.b16 %v3634
      %v4406 = vunpack.c.l.b16 %v3635
      %v4407 = vunpack.c.h.b16 %v3635
      %v4408 = vunpack.c.l.b16 %v3636
      %v4409 = vunpack.c.h.b16 %v3636
      %v4410 = vunpack.c.l.b16 %v3637
      %v4411 = vunpack.c.h.b16 %v3637
      %v4412 = vunpack.c.l.b16 %v3638
      %v4413 = vunpack.c.h.b16 %v3638
      %v4414 = vunpack.c.l.b16 %v3639
      %v4415 = vunpack.c.h.b16 %v3639
      %v4416 = vunpack.c.l.b16 %v3640
      %v4417 = vunpack.c.h.b16 %v3640
      %v4418 = vunpack.c.l.b16 %v3641
      %v4419 = vunpack.c.h.b16 %v3641
      %v4420 = vunpack.c.l.b16 %v3642
      %v4421 = vunpack.c.h.b16 %v3642
      %v4422 = vunpack.c.l.b16 %v3643
      %v4423 = vunpack.c.h.b16 %v3643
      %v4424 = vunpack.c.l.b16 %v3644
      %v4425 = vunpack.c.h.b16 %v3644
      %v4426 = vunpack.c.l.b16 %v3645
      %v4427 = vunpack.c.h.b16 %v3645
      %v4428 = vunpack.c.l.b16 %v3646
      %v4429 = vunpack.c.h.b16 %v3646
      %v4430 = vunpack.c.l.b16 %v3647
      %v4431 = vunpack.c.h.b16 %v3647
      %v4432 = vunpack.c.l.b16 %v3648
      %v4433 = vunpack.c.h.b16 %v3648
      %v4434 = vunpack.c.l.b16 %v3649
      %v4435 = vunpack.c.h.b16 %v3649
      %v4436 = vunpack.c.l.b16 %v3650
      %v4437 = vunpack.c.h.b16 %v3650
      %v4438 = vunpack.c.l.b16 %v3651
      %v4439 = vunpack.c.h.b16 %v3651
      %v4440 = vunpack.c.l.b16 %v3652
      %v4441 = vunpack.c.h.b16 %v3652
      %v4442 = vunpack.c.l.b16 %v3653
      %v4443 = vunpack.c.h.b16 %v3653
      %v4444 = vpack.c.b16 %v3936, %v3932
      %v4445 = vpack.c.b16 %v3937, %v3933
      %v4446 = vpack.c.b16 %v3938, %v3934
      %v4447 = vpack.c.b16 %v3939, %v3935
      %v4448 = vpack.c.b16 %v3944, %v3940
      %v4449 = vpack.c.b16 %v3945, %v3941
      %v4450 = vpack.c.b16 %v3946, %v3942
      %v4451 = vpack.c.b16 %v3947, %v3943
      %v4452 = vpack.c.b16 %v3952, %v3948
      %v4453 = vpack.c.b16 %v3953, %v3949
      %v4454 = vpack.c.b16 %v3954, %v3950
      %v4455 = vpack.c.b16 %v3955, %v3951
      %v4456 = vpack.c.b16 %v3960, %v3956
      %v4457 = vpack.c.b16 %v3961, %v3957
      %v4458 = vpack.c.b16 %v3962, %v3958
      %v4459 = vpack.c.b16 %v3963, %v3959
      %v4460 = vpack.c.b16 %v3968, %v3964
      %v4461 = vpack.c.b16 %v3969, %v3965
      %v4462 = vpack.c.b16 %v3970, %v3966
      %v4463 = vpack.c.b16 %v3971, %v3967
      %v4464 = vpack.c.b16 %v3976, %v3972
      %v4465 = vpack.c.b16 %v3977, %v3973
      %v4466 = vpack.c.b16 %v3978, %v3974
      %v4467 = vpack.c.b16 %v3979, %v3975
      %v4468 = vpack.c.b16 %v3984, %v3980
      %v4469 = vpack.c.b16 %v3985, %v3981
      %v4470 = vpack.c.b16 %v3986, %v3982
      %v4471 = vpack.c.b16 %v3987, %v3983
      %v4472 = vpack.c.b16 %v3992, %v3988
      %v4473 = vpack.c.b16 %v3993, %v3989
      %v4474 = vpack.c.b16 %v3994, %v3990
      %v4475 = vpack.c.b16 %v3995, %v3991
      %v4476 = vpack.c.b16 %v4000, %v3996
      %v4477 = vpack.c.b16 %v4001, %v3997
      %v4478 = vpack.c.b16 %v4002, %v3998
      %v4479 = vpack.c.b16 %v4003, %v3999
      %v4480 = vpack.c.b16 %v4008, %v4004
      %v4481 = vpack.c.b16 %v4009, %v4005
      %v4482 = vpack.c.b16 %v4010, %v4006
      %v4483 = vpack.c.b16 %v4011, %v4007
      %v4484 = vpack.c.b16 %v4016, %v4012
      %v4485 = vpack.c.b16 %v4017, %v4013
      %v4486 = vpack.c.b16 %v4018, %v4014
      %v4487 = vpack.c.b16 %v4019, %v4015
      %v4488 = vpack.c.b16 %v4024, %v4020
      %v4489 = vpack.c.b16 %v4025, %v4021
      %v4490 = vpack.c.b16 %v4026, %v4022
      %v4491 = vpack.c.b16 %v4027, %v4023
      %v4492 = vpack.c.b16 %v4032, %v4028
      %v4493 = vpack.c.b16 %v4033, %v4029
      %v4494 = vpack.c.b16 %v4034, %v4030
      %v4495 = vpack.c.b16 %v4035, %v4031
      %v4496 = vpack.c.b16 %v4040, %v4036
      %v4497 = vpack.c.b16 %v4041, %v4037
      %v4498 = vpack.c.b16 %v4042, %v4038
      %v4499 = vpack.c.b16 %v4043, %v4039
      %v4500 = vpack.c.b16 %v4048, %v4044
      %v4501 = vpack.c.b16 %v4049, %v4045
      %v4502 = vpack.c.b16 %v4050, %v4046
      %v4503 = vpack.c.b16 %v4051, %v4047
      %v4504 = vpack.c.b16 %v4056, %v4052
      %v4505 = vpack.c.b16 %v4057, %v4053
      %v4506 = vpack.c.b16 %v4058, %v4054
      %v4507 = vpack.c.b16 %v4059, %v4055
      %v4508 = vpack.c.b16 %v4064, %v4060
      %v4509 = vpack.c.b16 %v4065, %v4061
      %v4510 = vpack.c.b16 %v4066, %v4062
      %v4511 = vpack.c.b16 %v4067, %v4063
      %v4512 = vpack.c.b16 %v4072, %v4068
      %v4513 = vpack.c.b16 %v4073, %v4069
      %v4514 = vpack.c.b16 %v4074, %v4070
      %v4515 = vpack.c.b16 %v4075, %v4071
      %v4516 = vpack.c.b16 %v4080, %v4076
      %v4517 = vpack.c.b16 %v4081, %v4077
      %v4518 = vpack.c.b16 %v4082, %v4078
      %v4519 = vpack.c.b16 %v4083, %v4079
      %v4520 = vpack.c.b16 %v4088, %v4084
      %v4521 = vpack.c.b16 %v4089, %v4085
      %v4522 = vpack.c.b16 %v4090, %v4086
      %v4523 = vpack.c.b16 %v4091, %v4087
      %v4524 = vpack.c.b16 %v4096, %v4092
      %v4525 = vpack.c.b16 %v4097, %v4093
      %v4526 = vpack.c.b16 %v4098, %v4094
      %v4527 = vpack.c.b16 %v4099, %v4095
      %v4528 = vpack.c.b16 %v4104, %v4100
      %v4529 = vpack.c.b16 %v4105, %v4101
      %v4530 = vpack.c.b16 %v4106, %v4102
      %v4531 = vpack.c.b16 %v4107, %v4103
      %v4532 = vpack.c.b16 %v4112, %v4108
      %v4533 = vpack.c.b16 %v4113, %v4109
      %v4534 = vpack.c.b16 %v4114, %v4110
      %v4535 = vpack.c.b16 %v4115, %v4111
      %v4536 = vpack.c.b16 %v4120, %v4116
      %v4537 = vpack.c.b16 %v4121, %v4117
      %v4538 = vpack.c.b16 %v4122, %v4118
      %v4539 = vpack.c.b16 %v4123, %v4119
      %v4540 = vpack.c.b16 %v4128, %v4124
      %v4541 = vpack.c.b16 %v4129, %v4125
      %v4542 = vpack.c.b16 %v4130, %v4126
      %v4543 = vpack.c.b16 %v4131, %v4127
      %v4544 = vpack.c.b16 %v4136, %v4132
      %v4545 = vpack.c.b16 %v4137, %v4133
      %v4546 = vpack.c.b16 %v4138, %v4134
      %v4547 = vpack.c.b16 %v4139, %v4135
      %v4548 = vpack.c.b16 %v4144, %v4140
      %v4549 = vpack.c.b16 %v4145, %v4141
      %v4550 = vpack.c.b16 %v4146, %v4142
      %v4551 = vpack.c.b16 %v4147, %v4143
      %v4552 = vpack.c.b16 %v4152, %v4148
      %v4553 = vpack.c.b16 %v4153, %v4149
      %v4554 = vpack.c.b16 %v4154, %v4150
      %v4555 = vpack.c.b16 %v4155, %v4151
      %v4556 = vpack.c.b16 %v4160, %v4156
      %v4557 = vpack.c.b16 %v4161, %v4157
      %v4558 = vpack.c.b16 %v4162, %v4158
      %v4559 = vpack.c.b16 %v4163, %v4159
      %v4560 = vpack.c.b16 %v4168, %v4164
      %v4561 = vpack.c.b16 %v4169, %v4165
      %v4562 = vpack.c.b16 %v4170, %v4166
      %v4563 = vpack.c.b16 %v4171, %v4167
      %v4564 = vpack.c.b16 %v4176, %v4172
      %v4565 = vpack.c.b16 %v4177, %v4173
      %v4566 = vpack.c.b16 %v4178, %v4174
      %v4567 = vpack.c.b16 %v4179, %v4175
      %v4568 = vpack.c.b16 %v4184, %v4180
      %v4569 = vpack.c.b16 %v4185, %v4181
      %v4570 = vpack.c.b16 %v4186, %v4182
      %v4571 = vpack.c.b16 %v4187, %v4183
      %v4572 = vpack.c.b16 %v4192, %v4188
      %v4573 = vpack.c.b16 %v4193, %v4189
      %v4574 = vpack.c.b16 %v4194, %v4190
      %v4575 = vpack.c.b16 %v4195, %v4191
      %v4576 = vpack.c.b16 %v4200, %v4196
      %v4577 = vpack.c.b16 %v4201, %v4197
      %v4578 = vpack.c.b16 %v4202, %v4198
      %v4579 = vpack.c.b16 %v4203, %v4199
      %v4580 = vpack.c.b16 %v4208, %v4204
      %v4581 = vpack.c.b16 %v4209, %v4205
      %v4582 = vpack.c.b16 %v4210, %v4206
      %v4583 = vpack.c.b16 %v4211, %v4207
      %v4584 = vpack.c.b16 %v4216, %v4212
      %v4585 = vpack.c.b16 %v4217, %v4213
      %v4586 = vpack.c.b16 %v4218, %v4214
      %v4587 = vpack.c.b16 %v4219, %v4215
      %v4588 = vpack.c.b16 %v4224, %v4220
      %v4589 = vpack.c.b16 %v4225, %v4221
      %v4590 = vpack.c.b16 %v4226, %v4222
      %v4591 = vpack.c.b16 %v4227, %v4223
      %v4592 = vpack.c.b16 %v4232, %v4228
      %v4593 = vpack.c.b16 %v4233, %v4229
      %v4594 = vpack.c.b16 %v4234, %v4230
      %v4595 = vpack.c.b16 %v4235, %v4231
      %v4596 = vpack.c.b16 %v4240, %v4236
      %v4597 = vpack.c.b16 %v4241, %v4237
      %v4598 = vpack.c.b16 %v4242, %v4238
      %v4599 = vpack.c.b16 %v4243, %v4239
      %v4600 = vpack.c.b16 %v4248, %v4244
      %v4601 = vpack.c.b16 %v4249, %v4245
      %v4602 = vpack.c.b16 %v4250, %v4246
      %v4603 = vpack.c.b16 %v4251, %v4247
      %v4604 = vpack.c.b16 %v4256, %v4252
      %v4605 = vpack.c.b16 %v4257, %v4253
      %v4606 = vpack.c.b16 %v4258, %v4254
      %v4607 = vpack.c.b16 %v4259, %v4255
      %v4608 = vpack.c.b16 %v4264, %v4260
      %v4609 = vpack.c.b16 %v4265, %v4261
      %v4610 = vpack.c.b16 %v4266, %v4262
      %v4611 = vpack.c.b16 %v4267, %v4263
      %v4612 = vpack.c.b16 %v4272, %v4268
      %v4613 = vpack.c.b16 %v4273, %v4269
      %v4614 = vpack.c.b16 %v4274, %v4270
      %v4615 = vpack.c.b16 %v4275, %v4271
      %v4616 = vpack.c.b16 %v4280, %v4276
      %v4617 = vpack.c.b16 %v4281, %v4277
      %v4618 = vpack.c.b16 %v4282, %v4278
      %v4619 = vpack.c.b16 %v4283, %v4279
      %v4620 = vpack.c.b16 %v4288, %v4284
      %v4621 = vpack.c.b16 %v4289, %v4285
      %v4622 = vpack.c.b16 %v4290, %v4286
      %v4623 = vpack.c.b16 %v4291, %v4287
      %v4624 = vpack.c.b16 %v4296, %v4292
      %v4625 = vpack.c.b16 %v4297, %v4293
      %v4626 = vpack.c.b16 %v4298, %v4294
      %v4627 = vpack.c.b16 %v4299, %v4295
      %v4628 = vpack.c.b16 %v4304, %v4300
      %v4629 = vpack.c.b16 %v4305, %v4301
      %v4630 = vpack.c.b16 %v4306, %v4302
      %v4631 = vpack.c.b16 %v4307, %v4303
      %v4632 = vpack.c.b16 %v4312, %v4308
      %v4633 = vpack.c.b16 %v4313, %v4309
      %v4634 = vpack.c.b16 %v4314, %v4310
      %v4635 = vpack.c.b16 %v4315, %v4311
      %v4636 = vpack.c.b16 %v4320, %v4316
      %v4637 = vpack.c.b16 %v4321, %v4317
      %v4638 = vpack.c.b16 %v4322, %v4318
      %v4639 = vpack.c.b16 %v4323, %v4319
      %v4640 = vpack.c.b16 %v4328, %v4324
      %v4641 = vpack.c.b16 %v4329, %v4325
      %v4642 = vpack.c.b16 %v4330, %v4326
      %v4643 = vpack.c.b16 %v4331, %v4327
      %v4644 = vpack.c.b16 %v4336, %v4332
      %v4645 = vpack.c.b16 %v4337, %v4333
      %v4646 = vpack.c.b16 %v4338, %v4334
      %v4647 = vpack.c.b16 %v4339, %v4335
      %v4648 = vpack.c.b16 %v4344, %v4340
      %v4649 = vpack.c.b16 %v4345, %v4341
      %v4650 = vpack.c.b16 %v4346, %v4342
      %v4651 = vpack.c.b16 %v4347, %v4343
      %v4652 = vpack.c.b16 %v4352, %v4348
      %v4653 = vpack.c.b16 %v4353, %v4349
      %v4654 = vpack.c.b16 %v4354, %v4350
      %v4655 = vpack.c.b16 %v4355, %v4351
      %v4656 = vpack.c.b16 %v4360, %v4356
      %v4657 = vpack.c.b16 %v4361, %v4357
      %v4658 = vpack.c.b16 %v4362, %v4358
      %v4659 = vpack.c.b16 %v4363, %v4359
      %v4660 = vpack.c.b16 %v4368, %v4364
      %v4661 = vpack.c.b16 %v4369, %v4365
      %v4662 = vpack.c.b16 %v4370, %v4366
      %v4663 = vpack.c.b16 %v4371, %v4367
      %v4664 = vpack.c.b16 %v4376, %v4372
      %v4665 = vpack.c.b16 %v4377, %v4373
      %v4666 = vpack.c.b16 %v4378, %v4374
      %v4667 = vpack.c.b16 %v4379, %v4375
      %v4668 = vpack.c.b16 %v4384, %v4380
      %v4669 = vpack.c.b16 %v4385, %v4381
      %v4670 = vpack.c.b16 %v4386, %v4382
      %v4671 = vpack.c.b16 %v4387, %v4383
      %v4672 = vpack.c.b16 %v4392, %v4388
      %v4673 = vpack.c.b16 %v4393, %v4389
      %v4674 = vpack.c.b16 %v4394, %v4390
      %v4675 = vpack.c.b16 %v4395, %v4391
      %v4676 = vpack.c.b16 %v4400, %v4396
      %v4677 = vpack.c.b16 %v4401, %v4397
      %v4678 = vpack.c.b16 %v4402, %v4398
      %v4679 = vpack.c.b16 %v4403, %v4399
      %v4680 = vpack.c.b16 %v4408, %v4404
      %v4681 = vpack.c.b16 %v4409, %v4405
      %v4682 = vpack.c.b16 %v4410, %v4406
      %v4683 = vpack.c.b16 %v4411, %v4407
      %v4684 = vpack.c.b16 %v4416, %v4412
      %v4685 = vpack.c.b16 %v4417, %v4413
      %v4686 = vpack.c.b16 %v4418, %v4414
      %v4687 = vpack.c.b16 %v4419, %v4415
      %v4688 = vpack.c.b16 %v4424, %v4420
      %v4689 = vpack.c.b16 %v4425, %v4421
      %v4690 = vpack.c.b16 %v4426, %v4422
      %v4691 = vpack.c.b16 %v4427, %v4423
      %v4692 = vpack.c.b16 %v4432, %v4428
      %v4693 = vpack.c.b16 %v4433, %v4429
      %v4694 = vpack.c.b16 %v4434, %v4430
      %v4695 = vpack.c.b16 %v4435, %v4431
      %v4696 = vpack.c.b16 %v4440, %v4436
      %v4697 = vpack.c.b16 %v4441, %v4437
      %v4698 = vpack.c.b16 %v4442, %v4438
      %v4699 = vpack.c.b16 %v4443, %v4439
      %4956 = vmatprep.subr.bf16.mxu0 %v4445
      %4957 = vmatpush1.bf16.msra.mxu0 %v4444
      %4958 = vmatprep.subr.bf16.mxu0 %v4449
      %4959 = vmatpush1.bf16.msra.mxu0 %v4448
      %4960 = vmatprep.subr.bf16.mxu0 %v4453
      %4961 = vmatpush1.bf16.msra.mxu0 %v4452
      %4962 = vmatprep.subr.bf16.mxu0 %v4457
      %4963 = vmatpush1.bf16.msra.mxu0 %v4456
      %4964 = vmatprep.subr.bf16.mxu0 %v4461
      %4965 = vmatpush1.bf16.msra.mxu0 %v4460
      %4966 = vmatprep.subr.bf16.mxu0 %v4465
      %4967 = vmatpush1.bf16.msra.mxu0 %v4464
      %4968 = vmatprep.subr.bf16.mxu0 %v4469
      %4969 = vmatpush1.bf16.msra.mxu0 %v4468
      %4970 = vmatprep.subr.bf16.mxu0 %v4473
      %4971 = vmatpush1.bf16.msra.mxu0 %v4472
      %4972 = vmatprep.subr.bf16.mxu0 %v4477
      %4973 = vmatpush1.bf16.msra.mxu0 %v4476
      %4974 = vmatprep.subr.bf16.mxu0 %v4481
      %4975 = vmatpush1.bf16.msra.mxu0 %v4480
      %4976 = vmatprep.subr.bf16.mxu0 %v4485
      %4977 = vmatpush1.bf16.msra.mxu0 %v4484
      %4978 = vmatprep.subr.bf16.mxu0 %v4489
      %4979 = vmatpush1.bf16.msra.mxu0 %v4488
      %4980 = vmatprep.subr.bf16.mxu0 %v4493
      %4981 = vmatpush1.bf16.msra.mxu0 %v4492
      %4982 = vmatprep.subr.bf16.mxu0 %v4497
      %4983 = vmatpush1.bf16.msra.mxu0 %v4496
      %4984 = vmatprep.subr.bf16.mxu0 %v4501
      %4985 = vmatpush1.bf16.msra.mxu0 %v4500
      %4986 = vmatprep.subr.bf16.mxu0 %v4505
      %4987 = vmatpush1.bf16.msra.mxu0 %v4504
      %4988 = vmatprep.mubr.bf16.mxu0 %v3391
      %4989 = vmatmul.mubr.bf16.gmra.mrb[0].mxu0 %v3390
      %v4990 = vpop.f32.mrb[0].mxu0
      %v4991 = vadd.f32 %v3659, %v4990
      %v4992 = vpop.f32.mrb[0].mxu0
      %v4993 = vadd.f32 %v3663, %v4992
      %v4994 = vpop.f32.mrb[0].mxu0
      %v4995 = vpop.f32.mrb[0].mxu0
      %4996 = vdwg.mxu0
      %4997 = vmatprep.subr.bf16.mxu0 %v4509
      %4998 = vmatpush1.bf16.msra.mxu0 %v4508
      %4999 = vmatprep.subr.bf16.mxu0 %v4513
      %5000 = vmatpush1.bf16.msra.mxu0 %v4512
      %5001 = vmatprep.subr.bf16.mxu0 %v4517
      %5002 = vmatpush1.bf16.msra.mxu0 %v4516
      %5003 = vmatprep.subr.bf16.mxu0 %v4521
      %5004 = vmatpush1.bf16.msra.mxu0 %v4520
      %5005 = vmatprep.subr.bf16.mxu0 %v4525
      %5006 = vmatpush1.bf16.msra.mxu0 %v4524
      %5007 = vmatprep.subr.bf16.mxu0 %v4529
      %5008 = vmatpush1.bf16.msra.mxu0 %v4528
      %5009 = vmatprep.subr.bf16.mxu0 %v4533
      %5010 = vmatpush1.bf16.msra.mxu0 %v4532
      %5011 = vmatprep.subr.bf16.mxu0 %v4537
      %5012 = vmatpush1.bf16.msra.mxu0 %v4536
      %5013 = vmatprep.subr.bf16.mxu0 %v4541
      %5014 = vmatpush1.bf16.msra.mxu0 %v4540
      %5015 = vmatprep.subr.bf16.mxu0 %v4545
      %5016 = vmatpush1.bf16.msra.mxu0 %v4544
      %5017 = vmatprep.subr.bf16.mxu0 %v4549
      %5018 = vmatpush1.bf16.msra.mxu0 %v4548
      %5019 = vmatprep.subr.bf16.mxu0 %v4553
      %5020 = vmatpush1.bf16.msra.mxu0 %v4552
      %5021 = vmatprep.subr.bf16.mxu0 %v4557
      %5022 = vmatpush1.bf16.msra.mxu0 %v4556
      %5023 = vmatprep.subr.bf16.mxu0 %v4561
      %5024 = vmatpush1.bf16.msra.mxu0 %v4560
      %5025 = vmatprep.subr.bf16.mxu0 %v4565
      %5026 = vmatpush1.bf16.msra.mxu0 %v4564
      %5027 = vmatprep.subr.bf16.mxu0 %v4569
      %5028 = vmatpush1.bf16.msra.mxu0 %v4568
      %5029 = vmatprep.mubr.bf16.mxu0 %v3393
      %5030 = vmatmul.mubr.bf16.gmra.mrb[0].mxu0 %v3392
      %v5031 = vpop.f32.mrb[0].mxu0
      %v5032 = vadd.f32 %v4991, %v5031
      %v5033 = vpop.f32.mrb[0].mxu0
      %v5034 = vadd.f32 %v4993, %v5033
      %v5035 = vpop.f32.mrb[0].mxu0
      %v5036 = vpop.f32.mrb[0].mxu0
      %5037 = vdwg.mxu0
      %5038 = vmatprep.subr.bf16.mxu0 %v4573
      %5039 = vmatpush1.bf16.msra.mxu0 %v4572
      %5040 = vmatprep.subr.bf16.mxu0 %v4577
      %5041 = vmatpush1.bf16.msra.mxu0 %v4576
      %5042 = vmatprep.subr.bf16.mxu0 %v4581
      %5043 = vmatpush1.bf16.msra.mxu0 %v4580
      %5044 = vmatprep.subr.bf16.mxu0 %v4585
      %5045 = vmatpush1.bf16.msra.mxu0 %v4584
      %5046 = vmatprep.subr.bf16.mxu0 %v4589
      %5047 = vmatpush1.bf16.msra.mxu0 %v4588
      %5048 = vmatprep.subr.bf16.mxu0 %v4593
      %5049 = vmatpush1.bf16.msra.mxu0 %v4592
      %5050 = vmatprep.subr.bf16.mxu0 %v4597
      %5051 = vmatpush1.bf16.msra.mxu0 %v4596
      %5052 = vmatprep.subr.bf16.mxu0 %v4601
      %5053 = vmatpush1.bf16.msra.mxu0 %v4600
      %5054 = vmatprep.subr.bf16.mxu0 %v4605
      %5055 = vmatpush1.bf16.msra.mxu0 %v4604
      %5056 = vmatprep.subr.bf16.mxu0 %v4609
      %5057 = vmatpush1.bf16.msra.mxu0 %v4608
      %5058 = vmatprep.subr.bf16.mxu0 %v4613
      %5059 = vmatpush1.bf16.msra.mxu0 %v4612
      %5060 = vmatprep.subr.bf16.mxu0 %v4617
      %5061 = vmatpush1.bf16.msra.mxu0 %v4616
      %5062 = vmatprep.subr.bf16.mxu0 %v4621
      %5063 = vmatpush1.bf16.msra.mxu0 %v4620
      %5064 = vmatprep.subr.bf16.mxu0 %v4625
      %5065 = vmatpush1.bf16.msra.mxu0 %v4624
      %5066 = vmatprep.subr.bf16.mxu0 %v4629
      %5067 = vmatpush1.bf16.msra.mxu0 %v4628
      %5068 = vmatprep.subr.bf16.mxu0 %v4633
      %5069 = vmatpush1.bf16.msra.mxu0 %v4632
      %5070 = vmatprep.mubr.bf16.mxu0 %v3395
      %5071 = vmatmul.mubr.bf16.gmra.mrb[0].mxu0 %v3394
      %v5072 = vpop.f32.mrb[0].mxu0
      %v5073 = vadd.f32 %v5032, %v5072
      %v5074 = vpop.f32.mrb[0].mxu0
      %v5075 = vadd.f32 %v5034, %v5074
      %v5076 = vpop.f32.mrb[0].mxu0
      %v5077 = vpop.f32.mrb[0].mxu0
      %5078 = vdwg.mxu0
      %5079 = vmatprep.subr.bf16.mxu0 %v4637
      %5080 = vmatpush1.bf16.msra.mxu0 %v4636
      %5081 = vmatprep.subr.bf16.mxu0 %v4641
      %5082 = vmatpush1.bf16.msra.mxu0 %v4640
      %5083 = vmatprep.subr.bf16.mxu0 %v4645
      %5084 = vmatpush1.bf16.msra.mxu0 %v4644
      %5085 = vmatprep.subr.bf16.mxu0 %v4649
      %5086 = vmatpush1.bf16.msra.mxu0 %v4648
      %5087 = vmatprep.subr.bf16.mxu0 %v4653
      %5088 = vmatpush1.bf16.msra.mxu0 %v4652
      %5089 = vmatprep.subr.bf16.mxu0 %v4657
      %5090 = vmatpush1.bf16.msra.mxu0 %v4656
      %5091 = vmatprep.subr.bf16.mxu0 %v4661
      %5092 = vmatpush1.bf16.msra.mxu0 %v4660
      %5093 = vmatprep.subr.bf16.mxu0 %v4665
      %5094 = vmatpush1.bf16.msra.mxu0 %v4664
      %5095 = vmatprep.subr.bf16.mxu0 %v4669
      %5096 = vmatpush1.bf16.msra.mxu0 %v4668
      %5097 = vmatprep.subr.bf16.mxu0 %v4673
      %5098 = vmatpush1.bf16.msra.mxu0 %v4672
      %5099 = vmatprep.subr.bf16.mxu0 %v4677
      %5100 = vmatpush1.bf16.msra.mxu0 %v4676
      %5101 = vmatprep.subr.bf16.mxu0 %v4681
      %5102 = vmatpush1.bf16.msra.mxu0 %v4680
      %5103 = vmatprep.subr.bf16.mxu0 %v4685
      %5104 = vmatpush1.bf16.msra.mxu0 %v4684
      %5105 = vmatprep.subr.bf16.mxu0 %v4689
      %5106 = vmatpush1.bf16.msra.mxu0 %v4688
      %5107 = vmatprep.subr.bf16.mxu0 %v4693
      %5108 = vmatpush1.bf16.msra.mxu0 %v4692
      %5109 = vmatprep.subr.bf16.mxu0 %v4697
      %5110 = vmatpush1.bf16.msra.mxu0 %v4696
      %5111 = vmatprep.mubr.bf16.mxu0 %v3397
      %5112 = vmatmul.mubr.bf16.gmra.mrb[0].mxu0 %v3396
      %v5113 = vpop.f32.mrb[0].mxu0
      %v5114 = vadd.f32 %v5073, %v5113
      %v5115 = vpop.f32.mrb[0].mxu0
      %v5116 = vadd.f32 %v5075, %v5115
      %v5117 = vpop.f32.mrb[0].mxu0
      %v5118 = vpop.f32.mrb[0].mxu0
      %5119 = vdwg.mxu0
      %5120 = vmatprep.subr.bf16.mxu0 %v4447
      %5121 = vmatpush1.bf16.msra.mxu0 %v4446
      %5122 = vmatprep.subr.bf16.mxu0 %v4451
      %5123 = vmatpush1.bf16.msra.mxu0 %v4450
      %5124 = vmatprep.subr.bf16.mxu0 %v4455
      %5125 = vmatpush1.bf16.msra.mxu0 %v4454
      %5126 = vmatprep.subr.bf16.mxu0 %v4459
      %5127 = vmatpush1.bf16.msra.mxu0 %v4458
      %5128 = vmatprep.subr.bf16.mxu0 %v4463
      %5129 = vmatpush1.bf16.msra.mxu0 %v4462
      %5130 = vmatprep.subr.bf16.mxu0 %v4467
      %5131 = vmatpush1.bf16.msra.mxu0 %v4466
      %5132 = vmatprep.subr.bf16.mxu0 %v4471
      %5133 = vmatpush1.bf16.msra.mxu0 %v4470
      %5134 = vmatprep.subr.bf16.mxu0 %v4475
      %5135 = vmatpush1.bf16.msra.mxu0 %v4474
      %5136 = vmatprep.subr.bf16.mxu0 %v4479
      %5137 = vmatpush1.bf16.msra.mxu0 %v4478
      %5138 = vmatprep.subr.bf16.mxu0 %v4483
      %5139 = vmatpush1.bf16.msra.mxu0 %v4482
      %5140 = vmatprep.subr.bf16.mxu0 %v4487
      %5141 = vmatpush1.bf16.msra.mxu0 %v4486
      %5142 = vmatprep.subr.bf16.mxu0 %v4491
      %5143 = vmatpush1.bf16.msra.mxu0 %v4490
      %5144 = vmatprep.subr.bf16.mxu0 %v4495
      %5145 = vmatpush1.bf16.msra.mxu0 %v4494
      %5146 = vmatprep.subr.bf16.mxu0 %v4499
      %5147 = vmatpush1.bf16.msra.mxu0 %v4498
      %5148 = vmatprep.subr.bf16.mxu0 %v4503
      %5149 = vmatpush1.bf16.msra.mxu0 %v4502
      %5150 = vmatprep.subr.bf16.mxu0 %v4507
      %5151 = vmatpush1.bf16.msra.mxu0 %v4506
      %5152 = vmatprep.mubr.bf16.mxu0 %v3391
      %5153 = vmatmul.mubr.bf16.gmra.mrb[0].mxu0 %v3390
      %v5154 = vpop.f32.mrb[0].mxu0
      %v5155 = vadd.f32 %v3667, %v5154
      %v5156 = vpop.f32.mrb[0].mxu0
      %v5157 = vadd.f32 %v3671, %v5156
      %v5158 = vpop.f32.mrb[0].mxu0
      %v5159 = vpop.f32.mrb[0].mxu0
      %5160 = vdwg.mxu0
      %5161 = vmatprep.subr.bf16.mxu0 %v4511
      %5162 = vmatpush1.bf16.msra.mxu0 %v4510
      %5163 = vmatprep.subr.bf16.mxu0 %v4515
      %5164 = vmatpush1.bf16.msra.mxu0 %v4514
      %5165 = vmatprep.subr.bf16.mxu0 %v4519
      %5166 = vmatpush1.bf16.msra.mxu0 %v4518
      %5167 = vmatprep.subr.bf16.mxu0 %v4523
      %5168 = vmatpush1.bf16.msra.mxu0 %v4522
      %5169 = vmatprep.subr.bf16.mxu0 %v4527
      %5170 = vmatpush1.bf16.msra.mxu0 %v4526
      %5171 = vmatprep.subr.bf16.mxu0 %v4531
      %5172 = vmatpush1.bf16.msra.mxu0 %v4530
      %5173 = vmatprep.subr.bf16.mxu0 %v4535
      %5174 = vmatpush1.bf16.msra.mxu0 %v4534
      %5175 = vmatprep.subr.bf16.mxu0 %v4539
      %5176 = vmatpush1.bf16.msra.mxu0 %v4538
      %5177 = vmatprep.subr.bf16.mxu0 %v4543
      %5178 = vmatpush1.bf16.msra.mxu0 %v4542
      %5179 = vmatprep.subr.bf16.mxu0 %v4547
      %5180 = vmatpush1.bf16.msra.mxu0 %v4546
      %5181 = vmatprep.subr.bf16.mxu0 %v4551
      %5182 = vmatpush1.bf16.msra.mxu0 %v4550
      %5183 = vmatprep.subr.bf16.mxu0 %v4555
      %5184 = vmatpush1.bf16.msra.mxu0 %v4554
      %5185 = vmatprep.subr.bf16.mxu0 %v4559
      %5186 = vmatpush1.bf16.msra.mxu0 %v4558
      %5187 = vmatprep.subr.bf16.mxu0 %v4563
      %5188 = vmatpush1.bf16.msra.mxu0 %v4562
      %5189 = vmatprep.subr.bf16.mxu0 %v4567
      %5190 = vmatpush1.bf16.msra.mxu0 %v4566
      %5191 = vmatprep.subr.bf16.mxu0 %v4571
      %5192 = vmatpush1.bf16.msra.mxu0 %v4570
      %5193 = vmatprep.mubr.bf16.mxu0 %v3393
      %5194 = vmatmul.mubr.bf16.gmra.mrb[0].mxu0 %v3392
      %v5195 = vpop.f32.mrb[0].mxu0
      %v5196 = vadd.f32 %v5155, %v5195
      %v5197 = vpop.f32.mrb[0].mxu0
      %v5198 = vadd.f32 %v5157, %v5197
      %v5199 = vpop.f32.mrb[0].mxu0
      %v5200 = vpop.f32.mrb[0].mxu0
      %5201 = vdwg.mxu0
      %5202 = vmatprep.subr.bf16.mxu0 %v4575
      %5203 = vmatpush1.bf16.msra.mxu0 %v4574
      %5204 = vmatprep.subr.bf16.mxu0 %v4579
      %5205 = vmatpush1.bf16.msra.mxu0 %v4578
      %5206 = vmatprep.subr.bf16.mxu0 %v4583
      %5207 = vmatpush1.bf16.msra.mxu0 %v4582
      %5208 = vmatprep.subr.bf16.mxu0 %v4587
      %5209 = vmatpush1.bf16.msra.mxu0 %v4586
      %5210 = vmatprep.subr.bf16.mxu0 %v4591
      %5211 = vmatpush1.bf16.msra.mxu0 %v4590
      %5212 = vmatprep.subr.bf16.mxu0 %v4595
      %5213 = vmatpush1.bf16.msra.mxu0 %v4594
      %5214 = vmatprep.subr.bf16.mxu0 %v4599
      %5215 = vmatpush1.bf16.msra.mxu0 %v4598
      %5216 = vmatprep.subr.bf16.mxu0 %v4603
      %5217 = vmatpush1.bf16.msra.mxu0 %v4602
      %5218 = vmatprep.subr.bf16.mxu0 %v4607
      %5219 = vmatpush1.bf16.msra.mxu0 %v4606
      %5220 = vmatprep.subr.bf16.mxu0 %v4611
      %5221 = vmatpush1.bf16.msra.mxu0 %v4610
      %5222 = vmatprep.subr.bf16.mxu0 %v4615
      %5223 = vmatpush1.bf16.msra.mxu0 %v4614
      %5224 = vmatprep.subr.bf16.mxu0 %v4619
      %5225 = vmatpush1.bf16.msra.mxu0 %v4618
      %5226 = vmatprep.subr.bf16.mxu0 %v4623
      %5227 = vmatpush1.bf16.msra.mxu0 %v4622
      %5228 = vmatprep.subr.bf16.mxu0 %v4627
      %5229 = vmatpush1.bf16.msra.mxu0 %v4626
      %5230 = vmatprep.subr.bf16.mxu0 %v4631
      %5231 = vmatpush1.bf16.msra.mxu0 %v4630
      %5232 = vmatprep.subr.bf16.mxu0 %v4635
      %5233 = vmatpush1.bf16.msra.mxu0 %v4634
      %5234 = vmatprep.mubr.bf16.mxu0 %v3395
      %5235 = vmatmul.mubr.bf16.gmra.mrb[0].mxu0 %v3394
      %v5236 = vpop.f32.mrb[0].mxu0
      %v5237 = vadd.f32 %v5196, %v5236
      %v5238 = vpop.f32.mrb[0].mxu0
      %v5239 = vadd.f32 %v5198, %v5238
      %v5240 = vpop.f32.mrb[0].mxu0
      %v5241 = vpop.f32.mrb[0].mxu0
      %5242 = vdwg.mxu0
      %5243 = vmatprep.subr.bf16.mxu0 %v4639
      %5244 = vmatpush1.bf16.msra.mxu0 %v4638
      %5245 = vmatprep.subr.bf16.mxu0 %v4643
      %5246 = vmatpush1.bf16.msra.mxu0 %v4642
      %5247 = vmatprep.subr.bf16.mxu0 %v4647
      %5248 = vmatpush1.bf16.msra.mxu0 %v4646
      %5249 = vmatprep.subr.bf16.mxu0 %v4651
      %5250 = vmatpush1.bf16.msra.mxu0 %v4650
      %5251 = vmatprep.subr.bf16.mxu0 %v4655
      %5252 = vmatpush1.bf16.msra.mxu0 %v4654
      %5253 = vmatprep.subr.bf16.mxu0 %v4659
      %5254 = vmatpush1.bf16.msra.mxu0 %v4658
      %5255 = vmatprep.subr.bf16.mxu0 %v4663
      %5256 = vmatpush1.bf16.msra.mxu0 %v4662
      %5257 = vmatprep.subr.bf16.mxu0 %v4667
      %5258 = vmatpush1.bf16.msra.mxu0 %v4666
      %5259 = vmatprep.subr.bf16.mxu0 %v4671
      %5260 = vmatpush1.bf16.msra.mxu0 %v4670
      %5261 = vmatprep.subr.bf16.mxu0 %v4675
      %5262 = vmatpush1.bf16.msra.mxu0 %v4674
      %5263 = vmatprep.subr.bf16.mxu0 %v4679
      %5264 = vmatpush1.bf16.msra.mxu0 %v4678
      %5265 = vmatprep.subr.bf16.mxu0 %v4683
      %5266 = vmatpush1.bf16.msra.mxu0 %v4682
      %5267 = vmatprep.subr.bf16.mxu0 %v4687
      %5268 = vmatpush1.bf16.msra.mxu0 %v4686
      %5269 = vmatprep.subr.bf16.mxu0 %v4691
      %5270 = vmatpush1.bf16.msra.mxu0 %v4690
      %5271 = vmatprep.subr.bf16.mxu0 %v4695
      %5272 = vmatpush1.bf16.msra.mxu0 %v4694
      %5273 = vmatprep.subr.bf16.mxu0 %v4699
      %5274 = vmatpush1.bf16.msra.mxu0 %v4698
      %5275 = vmatprep.mubr.bf16.mxu0 %v3397
      %5276 = vmatmul.mubr.bf16.gmra.mrb[0].mxu0 %v3396
      %v5277 = vpop.f32.mrb[0].mxu0
      %v5278 = vadd.f32 %v5237, %v5277
      %v5279 = vpop.f32.mrb[0].mxu0
      %v5280 = vadd.f32 %v5239, %v5279
      %v5281 = vpop.f32.mrb[0].mxu0
      %v5282 = vpop.f32.mrb[0].mxu0
      %5283 = vdwg.mxu0
      %v5284 = vlaneseq
      %v5285 = vshrl.u32 %v5284, 7
      %v5286 = vld [vmem:[%s541] sm:$0x1]
      %v5287 = vld [vmem:[%s544] sm:$0x1]
      %v5288 = vld [vmem:[%s8] sm:$0xff]
      %v5289 = vld [vmem:[%s8 + $0x8] sm:$0xff]
      %v5290 = vld [vmem:[%s8 + $0x10] sm:$0xff]
      %v5291 = vld [vmem:[%s8 + $0x18] sm:$0xff]
      %v5292 = vld [vmem:[%s8 + $0x20] sm:$0xff]
      %v5293 = vld [vmem:[%s8 + $0x28] sm:$0xff]
      %v5294 = vld [vmem:[%s8 + $0x30] sm:$0xff]
      %v5295 = vld [vmem:[%s8 + $0x38] sm:$0xff]
      %v5296 = vld [vmem:[%s8 + $0x40] sm:$0xff]
      %v5297 = vld [vmem:[%s8 + $0x48] sm:$0xff]
      %v5298 = vld [vmem:[%s8 + $0x50] sm:$0xff]
      %v5299 = vld [vmem:[%s8 + $0x58] sm:$0xff]
      %v5300 = vld [vmem:[%s8 + $0x60] sm:$0xff]
      %v5301 = vld [vmem:[%s8 + $0x68] sm:$0xff]
      %v5302 = vld [vmem:[%s8 + $0x70] sm:$0xff]
      %v5303 = vld [vmem:[%s8 + $0x78] sm:$0xff]
      %v5304 = vld [vmem:[%s8 + $0x80] sm:$0xff]
      %v5305 = vld [vmem:[%s8 + $0x88] sm:$0xff]
      %v5306 = vld [vmem:[%s8 + $0x90] sm:$0xff]
      %v5307 = vld [vmem:[%s8 + $0x98] sm:$0xff]
      %v5308 = vld [vmem:[%s8 + $0xa0] sm:$0xff]
      %v5309 = vld [vmem:[%s8 + $0xa8] sm:$0xff]
      %v5310 = vld [vmem:[%s8 + $0xb0] sm:$0xff]
      %v5311 = vld [vmem:[%s8 + $0xb8] sm:$0xff]
      %v5312 = vld [vmem:[%s8 + $0xc0] sm:$0xff]
      %v5313 = vld [vmem:[%s8 + $0xc8] sm:$0xff]
      %v5314 = vld [vmem:[%s8 + $0xd0] sm:$0xff]
      %v5315 = vld [vmem:[%s8 + $0xd8] sm:$0xff]
      %v5316 = vld [vmem:[%s8 + $0xe0] sm:$0xff]
      %v5317 = vld [vmem:[%s8 + $0xe8] sm:$0xff]
      %v5318 = vld [vmem:[%s8 + $0xf0] sm:$0xff]
      %v5319 = vld [vmem:[%s8 + $0xf8] sm:$0xff]
      %v5320 = vld [vmem:[%s8 + $0x100] sm:$0xff]
      %v5321 = vld [vmem:[%s8 + $0x108] sm:$0xff]
      %v5322 = vld [vmem:[%s8 + $0x110] sm:$0xff]
      %v5323 = vld [vmem:[%s8 + $0x118] sm:$0xff]
      %v5324 = vld [vmem:[%s8 + $0x120] sm:$0xff]
      %v5325 = vld [vmem:[%s8 + $0x128] sm:$0xff]
      %v5326 = vld [vmem:[%s8 + $0x130] sm:$0xff]
      %v5327 = vld [vmem:[%s8 + $0x138] sm:$0xff]
      %v5328 = vld [vmem:[%s8 + $0x140] sm:$0xff]
      %v5329 = vld [vmem:[%s8 + $0x148] sm:$0xff]
      %v5330 = vld [vmem:[%s8 + $0x150] sm:$0xff]
      %v5331 = vld [vmem:[%s8 + $0x158] sm:$0xff]
      %v5332 = vld [vmem:[%s8 + $0x160] sm:$0xff]
      %v5333 = vld [vmem:[%s8 + $0x168] sm:$0xff]
      %v5334 = vld [vmem:[%s8 + $0x170] sm:$0xff]
      %v5335 = vld [vmem:[%s8 + $0x178] sm:$0xff]
      %v5336 = vld [vmem:[%s8 + $0x180] sm:$0xff]
      %v5337 = vld [vmem:[%s8 + $0x188] sm:$0xff]
      %v5338 = vld [vmem:[%s8 + $0x190] sm:$0xff]
      %v5339 = vld [vmem:[%s8 + $0x198] sm:$0xff]
      %v5340 = vld [vmem:[%s8 + $0x1a0] sm:$0xff]
      %v5341 = vld [vmem:[%s8 + $0x1a8] sm:$0xff]
      %v5342 = vld [vmem:[%s8 + $0x1b0] sm:$0xff]
      %v5343 = vld [vmem:[%s8 + $0x1b8] sm:$0xff]
      %v5344 = vld [vmem:[%s8 + $0x1c0] sm:$0xff]
      %v5345 = vld [vmem:[%s8 + $0x1c8] sm:$0xff]
      %v5346 = vld [vmem:[%s8 + $0x1d0] sm:$0xff]
      %v5347 = vld [vmem:[%s8 + $0x1d8] sm:$0xff]
      %v5348 = vld [vmem:[%s8 + $0x1e0] sm:$0xff]
      %v5349 = vld [vmem:[%s8 + $0x1e8] sm:$0xff]
      %v5350 = vld [vmem:[%s8 + $0x1f0] sm:$0xff]
      %v5351 = vld [vmem:[%s8 + $0x1f8] sm:$0xff]
      %5352 = vmatprep.subr.mxu0 %v5289
      %5353 = vmatpush1.msra.mxu0 %v5288
      %5354 = vmatprep.subr.mxu0 %v5293
      %5355 = vmatpush1.msra.mxu0 %v5292
      %5356 = vmatprep.subr.mxu0 %v5297
      %5357 = vmatpush1.msra.mxu0 %v5296
      %5358 = vmatprep.subr.mxu0 %v5301
      %5359 = vmatpush1.msra.mxu0 %v5300
      %5360 = vmatprep.subr.mxu0 %v5305
      %5361 = vmatpush1.msra.mxu0 %v5304
      %5362 = vmatprep.subr.mxu0 %v5309
      %5363 = vmatpush1.msra.mxu0 %v5308
      %5364 = vmatprep.subr.mxu0 %v5313
      %5365 = vmatpush1.msra.mxu0 %v5312
      %5366 = vmatprep.subr.mxu0 %v5317
      %5367 = vmatpush1.msra.mxu0 %v5316
      %5368 = vmatprep.subr.mxu0 %v5321
      %5369 = vmatpush1.msra.mxu0 %v5320
      %5370 = vmatprep.subr.mxu0 %v5325
      %5371 = vmatpush1.msra.mxu0 %v5324
      %5372 = vmatprep.subr.mxu0 %v5329
      %5373 = vmatpush1.msra.mxu0 %v5328
      %5374 = vmatprep.subr.mxu0 %v5333
      %5375 = vmatpush1.msra.mxu0 %v5332
      %5376 = vmatprep.subr.mxu0 %v5337
      %5377 = vmatpush1.msra.mxu0 %v5336
      %5378 = vmatprep.subr.mxu0 %v5341
      %5379 = vmatpush1.msra.mxu0 %v5340
      %5380 = vmatprep.subr.mxu0 %v5345
      %5381 = vmatpush1.msra.mxu0 %v5344
      %5382 = vmatprep.subr.mxu0 %v5349
      %5383 = vmatpush1.msra.mxu0 %v5348
      %5384 = vmatprep.subr.mxu0 0.0
      %5385 = vmatpush1.msra.mxu0 0.0
      %5386 = vmatprep.subr.mxu0 0.0
      %5387 = vmatpush1.msra.mxu0 0.0
      %5388 = vmatprep.subr.mxu0 0.0
      %5389 = vmatpush1.msra.mxu0 0.0
      %5390 = vmatprep.subr.mxu0 0.0
      %5391 = vmatpush1.msra.mxu0 0.0
      %5392 = vmatprep.subr.mxu0 0.0
      %5393 = vmatpush1.msra.mxu0 0.0
      %5394 = vmatprep.subr.mxu0 0.0
      %5395 = vmatpush1.msra.mxu0 0.0
      %5396 = vmatprep.subr.mxu0 0.0
      %5397 = vmatpush1.msra.mxu0 0.0
      %5398 = vmatprep.subr.mxu0 0.0
      %5399 = vmatpush1.msra.mxu0 0.0
      %5400 = vmatprep.subr.mxu0 0.0
      %5401 = vmatpush1.msra.mxu0 0.0
      %5402 = vmatprep.subr.mxu0 0.0
      %5403 = vmatpush1.msra.mxu0 0.0
      %5404 = vmatprep.subr.mxu0 0.0
      %5405 = vmatpush1.msra.mxu0 0.0
      %5406 = vmatprep.subr.mxu0 0.0
      %5407 = vmatpush1.msra.mxu0 0.0
      %5408 = vmatprep.subr.mxu0 0.0
      %5409 = vmatpush1.msra.mxu0 0.0
      %5410 = vmatprep.subr.mxu0 0.0
      %5411 = vmatpush1.msra.mxu0 0.0
      %5412 = vmatprep.subr.mxu0 0.0
      %5413 = vmatpush1.msra.mxu0 0.0
      %5414 = vmatprep.subr.mxu0 0.0
      %5415 = vmatpush1.msra.mxu0 0.0
      %5416 = vmatprep.mubr.f32.mxu0 0.0
      %5417 = vmatmul.mubr.f32.gmra.mrb[0].mxu0 %v5286
      %v5418 = vpop.f32.mrb[0].mxu0
      %v5419 = vadd.f32 0.0, %v5418
      %v5420 = vpop.f32.mrb[0].mxu0
      %v5421 = vadd.f32 0.0, %v5420
      %5422 = vdwg.mxu0
      %5423 = vmatprep.subr.mxu0 %v5291
      %5424 = vmatpush1.msra.mxu0 %v5290
      %5425 = vmatprep.subr.mxu0 %v5295
      %5426 = vmatpush1.msra.mxu0 %v5294
      %5427 = vmatprep.subr.mxu0 %v5299
      %5428 = vmatpush1.msra.mxu0 %v5298
      %5429 = vmatprep.subr.mxu0 %v5303
      %5430 = vmatpush1.msra.mxu0 %v5302
      %5431 = vmatprep.subr.mxu0 %v5307
      %5432 = vmatpush1.msra.mxu0 %v5306
      %5433 = vmatprep.subr.mxu0 %v5311
      %5434 = vmatpush1.msra.mxu0 %v5310
      %5435 = vmatprep.subr.mxu0 %v5315
      %5436 = vmatpush1.msra.mxu0 %v5314
      %5437 = vmatprep.subr.mxu0 %v5319
      %5438 = vmatpush1.msra.mxu0 %v5318
      %5439 = vmatprep.subr.mxu0 %v5323
      %5440 = vmatpush1.msra.mxu0 %v5322
      %5441 = vmatprep.subr.mxu0 %v5327
      %5442 = vmatpush1.msra.mxu0 %v5326
      %5443 = vmatprep.subr.mxu0 %v5331
      %5444 = vmatpush1.msra.mxu0 %v5330
      %5445 = vmatprep.subr.mxu0 %v5335
      %5446 = vmatpush1.msra.mxu0 %v5334
      %5447 = vmatprep.subr.mxu0 %v5339
      %5448 = vmatpush1.msra.mxu0 %v5338
      %5449 = vmatprep.subr.mxu0 %v5343
      %5450 = vmatpush1.msra.mxu0 %v5342
      %5451 = vmatprep.subr.mxu0 %v5347
      %5452 = vmatpush1.msra.mxu0 %v5346
      %5453 = vmatprep.subr.mxu0 %v5351
      %5454 = vmatpush1.msra.mxu0 %v5350
      %5455 = vmatprep.subr.mxu0 0.0
      %5456 = vmatpush1.msra.mxu0 0.0
      %5457 = vmatprep.subr.mxu0 0.0
      %5458 = vmatpush1.msra.mxu0 0.0
      %5459 = vmatprep.subr.mxu0 0.0
      %5460 = vmatpush1.msra.mxu0 0.0
      %5461 = vmatprep.subr.mxu0 0.0
      %5462 = vmatpush1.msra.mxu0 0.0
      %5463 = vmatprep.subr.mxu0 0.0
      %5464 = vmatpush1.msra.mxu0 0.0
      %5465 = vmatprep.subr.mxu0 0.0
      %5466 = vmatpush1.msra.mxu0 0.0
      %5467 = vmatprep.subr.mxu0 0.0
      %5468 = vmatpush1.msra.mxu0 0.0
      %5469 = vmatprep.subr.mxu0 0.0
      %5470 = vmatpush1.msra.mxu0 0.0
      %5471 = vmatprep.subr.mxu0 0.0
      %5472 = vmatpush1.msra.mxu0 0.0
      %5473 = vmatprep.subr.mxu0 0.0
      %5474 = vmatpush1.msra.mxu0 0.0
      %5475 = vmatprep.subr.mxu0 0.0
      %5476 = vmatpush1.msra.mxu0 0.0
      %5477 = vmatprep.subr.mxu0 0.0
      %5478 = vmatpush1.msra.mxu0 0.0
      %5479 = vmatprep.subr.mxu0 0.0
      %5480 = vmatpush1.msra.mxu0 0.0
      %5481 = vmatprep.subr.mxu0 0.0
      %5482 = vmatpush1.msra.mxu0 0.0
      %5483 = vmatprep.subr.mxu0 0.0
      %5484 = vmatpush1.msra.mxu0 0.0
      %5485 = vmatprep.subr.mxu0 0.0
      %5486 = vmatpush1.msra.mxu0 0.0
      %5487 = vmatprep.mubr.f32.mxu0 0.0
      %5488 = vmatmul.mubr.f32.gmra.mrb[0].mxu0 %v5286
      %v5489 = vpop.f32.mrb[0].mxu0
      %v5490 = vadd.f32 0.0, %v5489
      %v5491 = vpop.f32.mrb[0].mxu0
      %v5492 = vadd.f32 0.0, %v5491
      %5493 = vdwg.mxu0
      %v5494 = vadd.f32 %v5114, %v5419
      %v5495 = vadd.f32 %v5116, %v5421
      %v5496 = vadd.f32 %v5278, %v5490
      %v5497 = vadd.f32 %v5280, %v5492
      %v5498 = vxor.u32 %v5494, 2147483648
      %v5499 = vmul.f32 %v5498, 1.442695
      %v5500 = vpow.pop %v5499
      %v5501 = vadd.f32 %v5500, 1.0
      %v5502 = vrcp.pop %v5501
      %v5503 = vmul.f32 1.0, %v5502
      %v5504 = vxor.u32 %v5495, 2147483648
      %v5505 = vmul.f32 %v5504, 1.442695
      %v5506 = vpow.pop %v5505
      %v5507 = vadd.f32 %v5506, 1.0
      %v5508 = vrcp.pop %v5507
      %v5509 = vmul.f32 1.0, %v5508
      %v5510 = vtanh.pop %v5496
      %v5511 = vxor.u32 %v5497, 2147483648
      %v5512 = vmul.f32 %v5511, 1.442695
      %v5513 = vpow.pop %v5512
      %v5514 = vadd.f32 %v5513, 1.0
      %v5515 = vrcp.pop %v5514
      %v5516 = vmul.f32 1.0, %v5515
      %v5517 = vmul.f32 %v5509, %v5287
      %v5518 = vmul.f32 %v5503, %v5510
      %v5519 = vadd.f32 %v5517, %v5518
      %v5520 = vtanh.pop %v5519
      %v5521 = vmul.f32 %v5516, %v5520
      %vm5522 = vcmp.eq.s32.totalorder %v5285, 0
      %v5523 = vlaneseq
      %v5524 = vshrl.u32 %v5523, 7
      %v5525 = vsub.s32 0, %v5524
      %v5526 = vrot.slane %v5521, %v5525
      %v5527 = vsel %vm5522, %v5526, 0.0
      %5528 = vmatprep.subr.mxu0 %v5289
      %5529 = vmatpush1.msra.mxu0 %v5288
      %5530 = vmatprep.subr.mxu0 %v5293
      %5531 = vmatpush1.msra.mxu0 %v5292
      %5532 = vmatprep.subr.mxu0 %v5297
      %5533 = vmatpush1.msra.mxu0 %v5296
      %5534 = vmatprep.subr.mxu0 %v5301
      %5535 = vmatpush1.msra.mxu0 %v5300
      %5536 = vmatprep.subr.mxu0 %v5305
      %5537 = vmatpush1.msra.mxu0 %v5304
      %5538 = vmatprep.subr.mxu0 %v5309
      %5539 = vmatpush1.msra.mxu0 %v5308
      %5540 = vmatprep.subr.mxu0 %v5313
      %5541 = vmatpush1.msra.mxu0 %v5312
      %5542 = vmatprep.subr.mxu0 %v5317
      %5543 = vmatpush1.msra.mxu0 %v5316
      %5544 = vmatprep.subr.mxu0 %v5321
      %5545 = vmatpush1.msra.mxu0 %v5320
      %5546 = vmatprep.subr.mxu0 %v5325
      %5547 = vmatpush1.msra.mxu0 %v5324
      %5548 = vmatprep.subr.mxu0 %v5329
      %5549 = vmatpush1.msra.mxu0 %v5328
      %5550 = vmatprep.subr.mxu0 %v5333
      %5551 = vmatpush1.msra.mxu0 %v5332
      %5552 = vmatprep.subr.mxu0 %v5337
      %5553 = vmatpush1.msra.mxu0 %v5336
      %5554 = vmatprep.subr.mxu0 %v5341
      %5555 = vmatpush1.msra.mxu0 %v5340
      %5556 = vmatprep.subr.mxu0 %v5345
      %5557 = vmatpush1.msra.mxu0 %v5344
      %5558 = vmatprep.subr.mxu0 %v5349
      %5559 = vmatpush1.msra.mxu0 %v5348
      %5560 = vmatprep.subr.mxu0 0.0
      %5561 = vmatpush1.msra.mxu0 0.0
      %5562 = vmatprep.subr.mxu0 0.0
      %5563 = vmatpush1.msra.mxu0 0.0
      %5564 = vmatprep.subr.mxu0 0.0
      %5565 = vmatpush1.msra.mxu0 0.0
      %5566 = vmatprep.subr.mxu0 0.0
      %5567 = vmatpush1.msra.mxu0 0.0
      %5568 = vmatprep.subr.mxu0 0.0
      %5569 = vmatpush1.msra.mxu0 0.0
      %5570 = vmatprep.subr.mxu0 0.0
      %5571 = vmatpush1.msra.mxu0 0.0
      %5572 = vmatprep.subr.mxu0 0.0
      %5573 = vmatpush1.msra.mxu0 0.0
      %5574 = vmatprep.subr.mxu0 0.0
      %5575 = vmatpush1.msra.mxu0 0.0
      %5576 = vmatprep.subr.mxu0 0.0
      %5577 = vmatpush1.msra.mxu0 0.0
      %5578 = vmatprep.subr.mxu0 0.0
      %5579 = vmatpush1.msra.mxu0 0.0
      %5580 = vmatprep.subr.mxu0 0.0
      %5581 = vmatpush1.msra.mxu0 0.0
      %5582 = vmatprep.subr.mxu0 0.0
      %5583 = vmatpush1.msra.mxu0 0.0
      %5584 = vmatprep.subr.mxu0 0.0
      %5585 = vmatpush1.msra.mxu0 0.0
      %5586 = vmatprep.subr.mxu0 0.0
      %5587 = vmatpush1.msra.mxu0 0.0
      %5588 = vmatprep.subr.mxu0 0.0
      %5589 = vmatpush1.msra.mxu0 0.0
      %5590 = vmatprep.subr.mxu0 0.0
      %5591 = vmatpush1.msra.mxu0 0.0
      %5592 = vmatprep.mubr.f32.mxu0 0.0
      %5593 = vmatmul.mubr.f32.gmra.mrb[0].mxu0 %v5521
      %v5594 = vpop.f32.mrb[0].mxu0
      %v5595 = vadd.f32 0.0, %v5594
      %v5596 = vpop.f32.mrb[0].mxu0
      %v5597 = vadd.f32 0.0, %v5596
      %5598 = vdwg.mxu0
      %5599 = vmatprep.subr.mxu0 %v5291
      %5600 = vmatpush1.msra.mxu0 %v5290
      %5601 = vmatprep.subr.mxu0 %v5295
      %5602 = vmatpush1.msra.mxu0 %v5294
      %5603 = vmatprep.subr.mxu0 %v5299
      %5604 = vmatpush1.msra.mxu0 %v5298
      %5605 = vmatprep.subr.mxu0 %v5303
      %5606 = vmatpush1.msra.mxu0 %v5302
      %5607 = vmatprep.subr.mxu0 %v5307
      %5608 = vmatpush1.msra.mxu0 %v5306
      %5609 = vmatprep.subr.mxu0 %v5311
      %5610 = vmatpush1.msra.mxu0 %v5310
      %5611 = vmatprep.subr.mxu0 %v5315
      %5612 = vmatpush1.msra.mxu0 %v5314
      %5613 = vmatprep.subr.mxu0 %v5319
      %5614 = vmatpush1.msra.mxu0 %v5318
      %5615 = vmatprep.subr.mxu0 %v5323
      %5616 = vmatpush1.msra.mxu0 %v5322
      %5617 = vmatprep.subr.mxu0 %v5327
      %5618 = vmatpush1.msra.mxu0 %v5326
      %5619 = vmatprep.subr.mxu0 %v5331
      %5620 = vmatpush1.msra.mxu0 %v5330
      %5621 = vmatprep.subr.mxu0 %v5335
      %5622 = vmatpush1.msra.mxu0 %v5334
      %5623 = vmatprep.subr.mxu0 %v5339
      %5624 = vmatpush1.msra.mxu0 %v5338
      %5625 = vmatprep.subr.mxu0 %v5343
      %5626 = vmatpush1.msra.mxu0 %v5342
      %5627 = vmatprep.subr.mxu0 %v5347
      %5628 = vmatpush1.msra.mxu0 %v5346
      %5629 = vmatprep.subr.mxu0 %v5351
      %5630 = vmatpush1.msra.mxu0 %v5350
      %5631 = vmatprep.subr.mxu0 0.0
      %5632 = vmatpush1.msra.mxu0 0.0
      %5633 = vmatprep.subr.mxu0 0.0
      %5634 = vmatpush1.msra.mxu0 0.0
      %5635 = vmatprep.subr.mxu0 0.0
      %5636 = vmatpush1.msra.mxu0 0.0
      %5637 = vmatprep.subr.mxu0 0.0
      %5638 = vmatpush1.msra.mxu0 0.0
      %5639 = vmatprep.subr.mxu0 0.0
      %5640 = vmatpush1.msra.mxu0 0.0
      %5641 = vmatprep.subr.mxu0 0.0
      %5642 = vmatpush1.msra.mxu0 0.0
      %5643 = vmatprep.subr.mxu0 0.0
      %5644 = vmatpush1.msra.mxu0 0.0
      %5645 = vmatprep.subr.mxu0 0.0
      %5646 = vmatpush1.msra.mxu0 0.0
      %5647 = vmatprep.subr.mxu0 0.0
      %5648 = vmatpush1.msra.mxu0 0.0
      %5649 = vmatprep.subr.mxu0 0.0
      %5650 = vmatpush1.msra.mxu0 0.0
      %5651 = vmatprep.subr.mxu0 0.0
      %5652 = vmatpush1.msra.mxu0 0.0
      %5653 = vmatprep.subr.mxu0 0.0
      %5654 = vmatpush1.msra.mxu0 0.0
      %5655 = vmatprep.subr.mxu0 0.0
      %5656 = vmatpush1.msra.mxu0 0.0
      %5657 = vmatprep.subr.mxu0 0.0
      %5658 = vmatpush1.msra.mxu0 0.0
      %5659 = vmatprep.subr.mxu0 0.0
      %5660 = vmatpush1.msra.mxu0 0.0
      %5661 = vmatprep.subr.mxu0 0.0
      %5662 = vmatpush1.msra.mxu0 0.0
      %5663 = vmatprep.mubr.f32.mxu0 0.0
      %5664 = vmatmul.mubr.f32.gmra.mrb[0].mxu0 %v5521
      %v5665 = vpop.f32.mrb[0].mxu0
      %v5666 = vadd.f32 0.0, %v5665
      %v5667 = vpop.f32.mrb[0].mxu0
      %v5668 = vadd.f32 0.0, %v5667
      %5669 = vdwg.mxu0
      %v5674 = vrot.slane %v5595, 7
      %v5675 = vrot.slane %v5597, 7
      %v5676 = vrot.slane %v5666, 7
      %v5677 = vrot.slane %v5668, 7
      %v5682 = vadd.f32 %v5114, %v5674
      %v5683 = vadd.f32 %v5116, %v5675
      %v5684 = vadd.f32 %v5278, %v5676
      %v5685 = vadd.f32 %v5280, %v5677
      %v5686 = vxor.u32 %v5682, 2147483648
      %v5687 = vmul.f32 %v5686, 1.442695
      %v5688 = vpow.pop %v5687
      %v5689 = vadd.f32 %v5688, 1.0
      %v5690 = vrcp.pop %v5689
      %v5691 = vmul.f32 1.0, %v5690
      %v5692 = vxor.u32 %v5683, 2147483648
      %v5693 = vmul.f32 %v5692, 1.442695
      %v5694 = vpow.pop %v5693
      %v5695 = vadd.f32 %v5694, 1.0
      %v5696 = vrcp.pop %v5695
      %v5697 = vmul.f32 1.0, %v5696
      %v5698 = vtanh.pop %v5684
      %v5699 = vxor.u32 %v5685, 2147483648
      %v5700 = vmul.f32 %v5699, 1.442695
      %v5701 = vpow.pop %v5700
      %v5702 = vadd.f32 %v5701, 1.0
      %v5703 = vrcp.pop %v5702
      %v5704 = vmul.f32 1.0, %v5703
      %v5706 = vrot.slane %v5519, 7
      %v5708 = vmul.f32 %v5697, %v5706
      %v5709 = vmul.f32 %v5691, %v5698
      %v5710 = vadd.f32 %v5708, %v5709
      %v5711 = vtanh.pop %v5710
      %v5712 = vmul.f32 %v5704, %v5711
      %vm5713 = vcmp.eq.s32.totalorder %v5285, 1
      %v5714 = vlaneseq
      %v5715 = vshrl.u32 %v5714, 7
      %v5716 = vsub.s32 1, %v5715
      %v5717 = vrot.slane %v5712, %v5716
      %v5718 = vsel %vm5713, %v5717, %v5527
      %v5720 = vrot.slane %v5712, 1
      %5722 = vmatprep.subr.mxu0 %v5289
      %5723 = vmatpush1.msra.mxu0 %v5288
      %5724 = vmatprep.subr.mxu0 %v5293
      %5725 = vmatpush1.msra.mxu0 %v5292
      %5726 = vmatprep.subr.mxu0 %v5297
      %5727 = vmatpush1.msra.mxu0 %v5296
      %5728 = vmatprep.subr.mxu0 %v5301
      %5729 = vmatpush1.msra.mxu0 %v5300
      %5730 = vmatprep.subr.mxu0 %v5305
      %5731 = vmatpush1.msra.mxu0 %v5304
      %5732 = vmatprep.subr.mxu0 %v5309
      %5733 = vmatpush1.msra.mxu0 %v5308
      %5734 = vmatprep.subr.mxu0 %v5313
      %5735 = vmatpush1.msra.mxu0 %v5312
      %5736 = vmatprep.subr.mxu0 %v5317
      %5737 = vmatpush1.msra.mxu0 %v5316
      %5738 = vmatprep.subr.mxu0 %v5321
      %5739 = vmatpush1.msra.mxu0 %v5320
      %5740 = vmatprep.subr.mxu0 %v5325
      %5741 = vmatpush1.msra.mxu0 %v5324
      %5742 = vmatprep.subr.mxu0 %v5329
      %5743 = vmatpush1.msra.mxu0 %v5328
      %5744 = vmatprep.subr.mxu0 %v5333
      %5745 = vmatpush1.msra.mxu0 %v5332
      %5746 = vmatprep.subr.mxu0 %v5337
      %5747 = vmatpush1.msra.mxu0 %v5336
      %5748 = vmatprep.subr.mxu0 %v5341
      %5749 = vmatpush1.msra.mxu0 %v5340
      %5750 = vmatprep.subr.mxu0 %v5345
      %5751 = vmatpush1.msra.mxu0 %v5344
      %5752 = vmatprep.subr.mxu0 %v5349
      %5753 = vmatpush1.msra.mxu0 %v5348
      %5754 = vmatprep.subr.mxu0 0.0
      %5755 = vmatpush1.msra.mxu0 0.0
      %5756 = vmatprep.subr.mxu0 0.0
      %5757 = vmatpush1.msra.mxu0 0.0
      %5758 = vmatprep.subr.mxu0 0.0
      %5759 = vmatpush1.msra.mxu0 0.0
      %5760 = vmatprep.subr.mxu0 0.0
      %5761 = vmatpush1.msra.mxu0 0.0
      %5762 = vmatprep.subr.mxu0 0.0
      %5763 = vmatpush1.msra.mxu0 0.0
      %5764 = vmatprep.subr.mxu0 0.0
      %5765 = vmatpush1.msra.mxu0 0.0
      %5766 = vmatprep.subr.mxu0 0.0
      %5767 = vmatpush1.msra.mxu0 0.0
      %5768 = vmatprep.subr.mxu0 0.0
      %5769 = vmatpush1.msra.mxu0 0.0
      %5770 = vmatprep.subr.mxu0 0.0
      %5771 = vmatpush1.msra.mxu0 0.0
      %5772 = vmatprep.subr.mxu0 0.0
      %5773 = vmatpush1.msra.mxu0 0.0
      %5774 = vmatprep.subr.mxu0 0.0
      %5775 = vmatpush1.msra.mxu0 0.0
      %5776 = vmatprep.subr.mxu0 0.0
      %5777 = vmatpush1.msra.mxu0 0.0
      %5778 = vmatprep.subr.mxu0 0.0
      %5779 = vmatpush1.msra.mxu0 0.0
      %5780 = vmatprep.subr.mxu0 0.0
      %5781 = vmatpush1.msra.mxu0 0.0
      %5782 = vmatprep.subr.mxu0 0.0
      %5783 = vmatpush1.msra.mxu0 0.0
      %5784 = vmatprep.subr.mxu0 0.0
      %5785 = vmatpush1.msra.mxu0 0.0
      %5786 = vmatprep.mubr.f32.mxu0 0.0
      %5787 = vmatmul.mubr.f32.gmra.mrb[0].mxu0 %v5720
      %v5788 = vpop.f32.mrb[0].mxu0
      %v5789 = vadd.f32 0.0, %v5788
      %v5790 = vpop.f32.mrb[0].mxu0
      %v5791 = vadd.f32 0.0, %v5790
      %5792 = vdwg.mxu0
      %5793 = vmatprep.subr.mxu0 %v5291
      %5794 = vmatpush1.msra.mxu0 %v5290
      %5795 = vmatprep.subr.mxu0 %v5295
      %5796 = vmatpush1.msra.mxu0 %v5294
      %5797 = vmatprep.subr.mxu0 %v5299
      %5798 = vmatpush1.msra.mxu0 %v5298
      %5799 = vmatprep.subr.mxu0 %v5303
      %5800 = vmatpush1.msra.mxu0 %v5302
      %5801 = vmatprep.subr.mxu0 %v5307
      %5802 = vmatpush1.msra.mxu0 %v5306
      %5803 = vmatprep.subr.mxu0 %v5311
      %5804 = vmatpush1.msra.mxu0 %v5310
      %5805 = vmatprep.subr.mxu0 %v5315
      %5806 = vmatpush1.msra.mxu0 %v5314
      %5807 = vmatprep.subr.mxu0 %v5319
      %5808 = vmatpush1.msra.mxu0 %v5318
      %5809 = vmatprep.subr.mxu0 %v5323
      %5810 = vmatpush1.msra.mxu0 %v5322
      %5811 = vmatprep.subr.mxu0 %v5327
      %5812 = vmatpush1.msra.mxu0 %v5326
      %5813 = vmatprep.subr.mxu0 %v5331
      %5814 = vmatpush1.msra.mxu0 %v5330
      %5815 = vmatprep.subr.mxu0 %v5335
      %5816 = vmatpush1.msra.mxu0 %v5334
      %5817 = vmatprep.subr.mxu0 %v5339
      %5818 = vmatpush1.msra.mxu0 %v5338
      %5819 = vmatprep.subr.mxu0 %v5343
      %5820 = vmatpush1.msra.mxu0 %v5342
      %5821 = vmatprep.subr.mxu0 %v5347
      %5822 = vmatpush1.msra.mxu0 %v5346
      %5823 = vmatprep.subr.mxu0 %v5351
      %5824 = vmatpush1.msra.mxu0 %v5350
      %5825 = vmatprep.subr.mxu0 0.0
      %5826 = vmatpush1.msra.mxu0 0.0
      %5827 = vmatprep.subr.mxu0 0.0
      %5828 = vmatpush1.msra.mxu0 0.0
      %5829 = vmatprep.subr.mxu0 0.0
      %5830 = vmatpush1.msra.mxu0 0.0
      %5831 = vmatprep.subr.mxu0 0.0
      %5832 = vmatpush1.msra.mxu0 0.0
      %5833 = vmatprep.subr.mxu0 0.0
      %5834 = vmatpush1.msra.mxu0 0.0
      %5835 = vmatprep.subr.mxu0 0.0
      %5836 = vmatpush1.msra.mxu0 0.0
      %5837 = vmatprep.subr.mxu0 0.0
      %5838 = vmatpush1.msra.mxu0 0.0
      %5839 = vmatprep.subr.mxu0 0.0
      %5840 = vmatpush1.msra.mxu0 0.0
      %5841 = vmatprep.subr.mxu0 0.0
      %5842 = vmatpush1.msra.mxu0 0.0
      %5843 = vmatprep.subr.mxu0 0.0
      %5844 = vmatpush1.msra.mxu0 0.0
      %5845 = vmatprep.subr.mxu0 0.0
      %5846 = vmatpush1.msra.mxu0 0.0
      %5847 = vmatprep.subr.mxu0 0.0
      %5848 = vmatpush1.msra.mxu0 0.0
      %5849 = vmatprep.subr.mxu0 0.0
      %5850 = vmatpush1.msra.mxu0 0.0
      %5851 = vmatprep.subr.mxu0 0.0
      %5852 = vmatpush1.msra.mxu0 0.0
      %5853 = vmatprep.subr.mxu0 0.0
      %5854 = vmatpush1.msra.mxu0 0.0
      %5855 = vmatprep.subr.mxu0 0.0
      %5856 = vmatpush1.msra.mxu0 0.0
      %5857 = vmatprep.mubr.f32.mxu0 0.0
      %5858 = vmatmul.mubr.f32.gmra.mrb[0].mxu0 %v5720
      %v5859 = vpop.f32.mrb[0].mxu0
      %v5860 = vadd.f32 0.0, %v5859
      %v5861 = vpop.f32.mrb[0].mxu0
      %v5862 = vadd.f32 0.0, %v5861
      %5863 = vdwg.mxu0
      %v5868 = vrot.slane %v5789, 6
      %v5869 = vrot.slane %v5791, 6
      %v5870 = vrot.slane %v5860, 6
      %v5871 = vrot.slane %v5862, 6
      %v5876 = vadd.f32 %v5114, %v5868
      %v5877 = vadd.f32 %v5116, %v5869
      %v5878 = vadd.f32 %v5278, %v5870
      %v5879 = vadd.f32 %v5280, %v5871
      %v5880 = vxor.u32 %v5876, 2147483648
      %v5881 = vmul.f32 %v5880, 1.442695
      %v5882 = vpow.pop %v5881
      %v5883 = vadd.f32 %v5882, 1.0
      %v5884 = vrcp.pop %v5883
      %v5885 = vmul.f32 1.0, %v5884
      %v5886 = vxor.u32 %v5877, 2147483648
      %v5887 = vmul.f32 %v5886, 1.442695
      %v5888 = vpow.pop %v5887
      %v5889 = vadd.f32 %v5888, 1.0
      %v5890 = vrcp.pop %v5889
      %v5891 = vmul.f32 1.0, %v5890
      %v5892 = vtanh.pop %v5878
      %v5893 = vxor.u32 %v5879, 2147483648
      %v5894 = vmul.f32 %v5893, 1.442695
      %v5895 = vpow.pop %v5894
      %v5896 = vadd.f32 %v5895, 1.0
      %v5897 = vrcp.pop %v5896
      %v5898 = vmul.f32 1.0, %v5897
      %v5900 = vrot.slane %v5710, 7
      %v5902 = vmul.f32 %v5891, %v5900
      %v5903 = vmul.f32 %v5885, %v5892
      %v5904 = vadd.f32 %v5902, %v5903
      %v5905 = vtanh.pop %v5904
      %v5906 = vmul.f32 %v5898, %v5905
      %vm5907 = vcmp.eq.s32.totalorder %v5285, 2
      %v5908 = vlaneseq
      %v5909 = vshrl.u32 %v5908, 7
      %v5910 = vsub.s32 2, %v5909
      %v5911 = vrot.slane %v5906, %v5910
      %v5912 = vsel %vm5907, %v5911, %v5718
      %v5914 = vrot.slane %v5906, 2
      %5916 = vmatprep.subr.mxu0 %v5289
      %5917 = vmatpush1.msra.mxu0 %v5288
      %5918 = vmatprep.subr.mxu0 %v5293
      %5919 = vmatpush1.msra.mxu0 %v5292
      %5920 = vmatprep.subr.mxu0 %v5297
      %5921 = vmatpush1.msra.mxu0 %v5296
      %5922 = vmatprep.subr.mxu0 %v5301
      %5923 = vmatpush1.msra.mxu0 %v5300
      %5924 = vmatprep.subr.mxu0 %v5305
      %5925 = vmatpush1.msra.mxu0 %v5304
      %5926 = vmatprep.subr.mxu0 %v5309
      %5927 = vmatpush1.msra.mxu0 %v5308
      %5928 = vmatprep.subr.mxu0 %v5313
      %5929 = vmatpush1.msra.mxu0 %v5312
      %5930 = vmatprep.subr.mxu0 %v5317
      %5931 = vmatpush1.msra.mxu0 %v5316
      %5932 = vmatprep.subr.mxu0 %v5321
      %5933 = vmatpush1.msra.mxu0 %v5320
      %5934 = vmatprep.subr.mxu0 %v5325
      %5935 = vmatpush1.msra.mxu0 %v5324
      %5936 = vmatprep.subr.mxu0 %v5329
      %5937 = vmatpush1.msra.mxu0 %v5328
      %5938 = vmatprep.subr.mxu0 %v5333
      %5939 = vmatpush1.msra.mxu0 %v5332
      %5940 = vmatprep.subr.mxu0 %v5337
      %5941 = vmatpush1.msra.mxu0 %v5336
      %5942 = vmatprep.subr.mxu0 %v5341
      %5943 = vmatpush1.msra.mxu0 %v5340
      %5944 = vmatprep.subr.mxu0 %v5345
      %5945 = vmatpush1.msra.mxu0 %v5344
      %5946 = vmatprep.subr.mxu0 %v5349
      %5947 = vmatpush1.msra.mxu0 %v5348
      %5948 = vmatprep.subr.mxu0 0.0
      %5949 = vmatpush1.msra.mxu0 0.0
      %5950 = vmatprep.subr.mxu0 0.0
      %5951 = vmatpush1.msra.mxu0 0.0
      %5952 = vmatprep.subr.mxu0 0.0
      %5953 = vmatpush1.msra.mxu0 0.0
      %5954 = vmatprep.subr.mxu0 0.0
      %5955 = vmatpush1.msra.mxu0 0.0
      %5956 = vmatprep.subr.mxu0 0.0
      %5957 = vmatpush1.msra.mxu0 0.0
      %5958 = vmatprep.subr.mxu0 0.0
      %5959 = vmatpush1.msra.mxu0 0.0
      %5960 = vmatprep.subr.mxu0 0.0
      %5961 = vmatpush1.msra.mxu0 0.0
      %5962 = vmatprep.subr.mxu0 0.0
      %5963 = vmatpush1.msra.mxu0 0.0
      %5964 = vmatprep.subr.mxu0 0.0
      %5965 = vmatpush1.msra.mxu0 0.0
      %5966 = vmatprep.subr.mxu0 0.0
      %5967 = vmatpush1.msra.mxu0 0.0
      %5968 = vmatprep.subr.mxu0 0.0
      %5969 = vmatpush1.msra.mxu0 0.0
      %5970 = vmatprep.subr.mxu0 0.0
      %5971 = vmatpush1.msra.mxu0 0.0
      %5972 = vmatprep.subr.mxu0 0.0
      %5973 = vmatpush1.msra.mxu0 0.0
      %5974 = vmatprep.subr.mxu0 0.0
      %5975 = vmatpush1.msra.mxu0 0.0
      %5976 = vmatprep.subr.mxu0 0.0
      %5977 = vmatpush1.msra.mxu0 0.0
      %5978 = vmatprep.subr.mxu0 0.0
      %5979 = vmatpush1.msra.mxu0 0.0
      %5980 = vmatprep.mubr.f32.mxu0 0.0
      %5981 = vmatmul.mubr.f32.gmra.mrb[0].mxu0 %v5914
      %v5982 = vpop.f32.mrb[0].mxu0
      %v5983 = vadd.f32 0.0, %v5982
      %v5984 = vpop.f32.mrb[0].mxu0
      %v5985 = vadd.f32 0.0, %v5984
      %5986 = vdwg.mxu0
      %5987 = vmatprep.subr.mxu0 %v5291
      %5988 = vmatpush1.msra.mxu0 %v5290
      %5989 = vmatprep.subr.mxu0 %v5295
      %5990 = vmatpush1.msra.mxu0 %v5294
      %5991 = vmatprep.subr.mxu0 %v5299
      %5992 = vmatpush1.msra.mxu0 %v5298
      %5993 = vmatprep.subr.mxu0 %v5303
      %5994 = vmatpush1.msra.mxu0 %v5302
      %5995 = vmatprep.subr.mxu0 %v5307
      %5996 = vmatpush1.msra.mxu0 %v5306
      %5997 = vmatprep.subr.mxu0 %v5311
      %5998 = vmatpush1.msra.mxu0 %v5310
      %5999 = vmatprep.subr.mxu0 %v5315
      %6000 = vmatpush1.msra.mxu0 %v5314
      %6001 = vmatprep.subr.mxu0 %v5319
      %6002 = vmatpush1.msra.mxu0 %v5318
      %6003 = vmatprep.subr.mxu0 %v5323
      %6004 = vmatpush1.msra.mxu0 %v5322
      %6005 = vmatprep.subr.mxu0 %v5327
      %6006 = vmatpush1.msra.mxu0 %v5326
      %6007 = vmatprep.subr.mxu0 %v5331
      %6008 = vmatpush1.msra.mxu0 %v5330
      %6009 = vmatprep.subr.mxu0 %v5335
      %6010 = vmatpush1.msra.mxu0 %v5334
      %6011 = vmatprep.subr.mxu0 %v5339
      %6012 = vmatpush1.msra.mxu0 %v5338
      %6013 = vmatprep.subr.mxu0 %v5343
      %6014 = vmatpush1.msra.mxu0 %v5342
      %6015 = vmatprep.subr.mxu0 %v5347
      %6016 = vmatpush1.msra.mxu0 %v5346
      %6017 = vmatprep.subr.mxu0 %v5351
      %6018 = vmatpush1.msra.mxu0 %v5350
      %6019 = vmatprep.subr.mxu0 0.0
      %6020 = vmatpush1.msra.mxu0 0.0
      %6021 = vmatprep.subr.mxu0 0.0
      %6022 = vmatpush1.msra.mxu0 0.0
      %6023 = vmatprep.subr.mxu0 0.0
      %6024 = vmatpush1.msra.mxu0 0.0
      %6025 = vmatprep.subr.mxu0 0.0
      %6026 = vmatpush1.msra.mxu0 0.0
      %6027 = vmatprep.subr.mxu0 0.0
      %6028 = vmatpush1.msra.mxu0 0.0
      %6029 = vmatprep.subr.mxu0 0.0
      %6030 = vmatpush1.msra.mxu0 0.0
      %6031 = vmatprep.subr.mxu0 0.0
      %6032 = vmatpush1.msra.mxu0 0.0
      %6033 = vmatprep.subr.mxu0 0.0
      %6034 = vmatpush1.msra.mxu0 0.0
      %6035 = vmatprep.subr.mxu0 0.0
      %6036 = vmatpush1.msra.mxu0 0.0
      %6037 = vmatprep.subr.mxu0 0.0
      %6038 = vmatpush1.msra.mxu0 0.0
      %6039 = vmatprep.subr.mxu0 0.0
      %6040 = vmatpush1.msra.mxu0 0.0
      %6041 = vmatprep.subr.mxu0 0.0
      %6042 = vmatpush1.msra.mxu0 0.0
      %6043 = vmatprep.subr.mxu0 0.0
      %6044 = vmatpush1.msra.mxu0 0.0
      %6045 = vmatprep.subr.mxu0 0.0
      %6046 = vmatpush1.msra.mxu0 0.0
      %6047 = vmatprep.subr.mxu0 0.0
      %6048 = vmatpush1.msra.mxu0 0.0
      %6049 = vmatprep.subr.mxu0 0.0
      %6050 = vmatpush1.msra.mxu0 0.0
      %6051 = vmatprep.mubr.f32.mxu0 0.0
      %6052 = vmatmul.mubr.f32.gmra.mrb[0].mxu0 %v5914
      %v6053 = vpop.f32.mrb[0].mxu0
      %v6054 = vadd.f32 0.0, %v6053
      %v6055 = vpop.f32.mrb[0].mxu0
      %v6056 = vadd.f32 0.0, %v6055
      %6057 = vdwg.mxu0
      %v6062 = vrot.slane %v5983, 5
      %v6063 = vrot.slane %v5985, 5
      %v6064 = vrot.slane %v6054, 5
      %v6065 = vrot.slane %v6056, 5
      %v6070 = vadd.f32 %v5114, %v6062
      %v6071 = vadd.f32 %v5116, %v6063
      %v6072 = vadd.f32 %v5278, %v6064
      %v6073 = vadd.f32 %v5280, %v6065
      %v6074 = vxor.u32 %v6070, 2147483648
      %v6075 = vmul.f32 %v6074, 1.442695
      %v6076 = vpow.pop %v6075
      %v6077 = vadd.f32 %v6076, 1.0
      %v6078 = vrcp.pop %v6077
      %v6079 = vmul.f32 1.0, %v6078
      %v6080 = vxor.u32 %v6071, 2147483648
      %v6081 = vmul.f32 %v6080, 1.442695
      %v6082 = vpow.pop %v6081
      %v6083 = vadd.f32 %v6082, 1.0
      %v6084 = vrcp.pop %v6083
      %v6085 = vmul.f32 1.0, %v6084
      %v6086 = vtanh.pop %v6072
      %v6087 = vxor.u32 %v6073, 2147483648
      %v6088 = vmul.f32 %v6087, 1.442695
      %v6089 = vpow.pop %v6088
      %v6090 = vadd.f32 %v6089, 1.0
      %v6091 = vrcp.pop %v6090
      %v6092 = vmul.f32 1.0, %v6091
      %v6094 = vrot.slane %v5904, 7
      %v6096 = vmul.f32 %v6085, %v6094
      %v6097 = vmul.f32 %v6079, %v6086
      %v6098 = vadd.f32 %v6096, %v6097
      %v6099 = vtanh.pop %v6098
      %v6100 = vmul.f32 %v6092, %v6099
      %vm6101 = vcmp.eq.s32.totalorder %v5285, 3
      %v6102 = vlaneseq
      %v6103 = vshrl.u32 %v6102, 7
      %v6104 = vsub.s32 3, %v6103
      %v6105 = vrot.slane %v6100, %v6104
      %v6106 = vsel %vm6101, %v6105, %v5912
      %v6108 = vrot.slane %v6100, 3
      %6110 = vmatprep.subr.mxu0 %v5289
      %6111 = vmatpush1.msra.mxu0 %v5288
      %6112 = vmatprep.subr.mxu0 %v5293
      %6113 = vmatpush1.msra.mxu0 %v5292
      %6114 = vmatprep.subr.mxu0 %v5297
      %6115 = vmatpush1.msra.mxu0 %v5296
      %6116 = vmatprep.subr.mxu0 %v5301
      %6117 = vmatpush1.msra.mxu0 %v5300
      %6118 = vmatprep.subr.mxu0 %v5305
      %6119 = vmatpush1.msra.mxu0 %v5304
      %6120 = vmatprep.subr.mxu0 %v5309
      %6121 = vmatpush1.msra.mxu0 %v5308
      %6122 = vmatprep.subr.mxu0 %v5313
      %6123 = vmatpush1.msra.mxu0 %v5312
      %6124 = vmatprep.subr.mxu0 %v5317
      %6125 = vmatpush1.msra.mxu0 %v5316
      %6126 = vmatprep.subr.mxu0 %v5321
      %6127 = vmatpush1.msra.mxu0 %v5320
      %6128 = vmatprep.subr.mxu0 %v5325
      %6129 = vmatpush1.msra.mxu0 %v5324
      %6130 = vmatprep.subr.mxu0 %v5329
      %6131 = vmatpush1.msra.mxu0 %v5328
      %6132 = vmatprep.subr.mxu0 %v5333
      %6133 = vmatpush1.msra.mxu0 %v5332
      %6134 = vmatprep.subr.mxu0 %v5337
      %6135 = vmatpush1.msra.mxu0 %v5336
      %6136 = vmatprep.subr.mxu0 %v5341
      %6137 = vmatpush1.msra.mxu0 %v5340
      %6138 = vmatprep.subr.mxu0 %v5345
      %6139 = vmatpush1.msra.mxu0 %v5344
      %6140 = vmatprep.subr.mxu0 %v5349
      %6141 = vmatpush1.msra.mxu0 %v5348
      %6142 = vmatprep.subr.mxu0 0.0
      %6143 = vmatpush1.msra.mxu0 0.0
      %6144 = vmatprep.subr.mxu0 0.0
      %6145 = vmatpush1.msra.mxu0 0.0
      %6146 = vmatprep.subr.mxu0 0.0
      %6147 = vmatpush1.msra.mxu0 0.0
      %6148 = vmatprep.subr.mxu0 0.0
      %6149 = vmatpush1.msra.mxu0 0.0
      %6150 = vmatprep.subr.mxu0 0.0
      %6151 = vmatpush1.msra.mxu0 0.0
      %6152 = vmatprep.subr.mxu0 0.0
      %6153 = vmatpush1.msra.mxu0 0.0
      %6154 = vmatprep.subr.mxu0 0.0
      %6155 = vmatpush1.msra.mxu0 0.0
      %6156 = vmatprep.subr.mxu0 0.0
      %6157 = vmatpush1.msra.mxu0 0.0
      %6158 = vmatprep.subr.mxu0 0.0
      %6159 = vmatpush1.msra.mxu0 0.0
      %6160 = vmatprep.subr.mxu0 0.0
      %6161 = vmatpush1.msra.mxu0 0.0
      %6162 = vmatprep.subr.mxu0 0.0
      %6163 = vmatpush1.msra.mxu0 0.0
      %6164 = vmatprep.subr.mxu0 0.0
      %6165 = vmatpush1.msra.mxu0 0.0
      %6166 = vmatprep.subr.mxu0 0.0
      %6167 = vmatpush1.msra.mxu0 0.0
      %6168 = vmatprep.subr.mxu0 0.0
      %6169 = vmatpush1.msra.mxu0 0.0
      %6170 = vmatprep.subr.mxu0 0.0
      %6171 = vmatpush1.msra.mxu0 0.0
      %6172 = vmatprep.subr.mxu0 0.0
      %6173 = vmatpush1.msra.mxu0 0.0
      %6174 = vmatprep.mubr.f32.mxu0 0.0
      %6175 = vmatmul.mubr.f32.gmra.mrb[0].mxu0 %v6108
      %v6176 = vpop.f32.mrb[0].mxu0
      %v6177 = vadd.f32 0.0, %v6176
      %v6178 = vpop.f32.mrb[0].mxu0
      %v6179 = vadd.f32 0.0, %v6178
      %6180 = vdwg.mxu0
      %6181 = vmatprep.subr.mxu0 %v5291
      %6182 = vmatpush1.msra.mxu0 %v5290
      %6183 = vmatprep.subr.mxu0 %v5295
      %6184 = vmatpush1.msra.mxu0 %v5294
      %6185 = vmatprep.subr.mxu0 %v5299
      %6186 = vmatpush1.msra.mxu0 %v5298
      %6187 = vmatprep.subr.mxu0 %v5303
      %6188 = vmatpush1.msra.mxu0 %v5302
      %6189 = vmatprep.subr.mxu0 %v5307
      %6190 = vmatpush1.msra.mxu0 %v5306
      %6191 = vmatprep.subr.mxu0 %v5311
      %6192 = vmatpush1.msra.mxu0 %v5310
      %6193 = vmatprep.subr.mxu0 %v5315
      %6194 = vmatpush1.msra.mxu0 %v5314
      %6195 = vmatprep.subr.mxu0 %v5319
      %6196 = vmatpush1.msra.mxu0 %v5318
      %6197 = vmatprep.subr.mxu0 %v5323
      %6198 = vmatpush1.msra.mxu0 %v5322
      %6199 = vmatprep.subr.mxu0 %v5327
      %6200 = vmatpush1.msra.mxu0 %v5326
      %6201 = vmatprep.subr.mxu0 %v5331
      %6202 = vmatpush1.msra.mxu0 %v5330
      %6203 = vmatprep.subr.mxu0 %v5335
      %6204 = vmatpush1.msra.mxu0 %v5334
      %6205 = vmatprep.subr.mxu0 %v5339
      %6206 = vmatpush1.msra.mxu0 %v5338
      %6207 = vmatprep.subr.mxu0 %v5343
      %6208 = vmatpush1.msra.mxu0 %v5342
      %6209 = vmatprep.subr.mxu0 %v5347
      %6210 = vmatpush1.msra.mxu0 %v5346
      %6211 = vmatprep.subr.mxu0 %v5351
      %6212 = vmatpush1.msra.mxu0 %v5350
      %6213 = vmatprep.subr.mxu0 0.0
      %6214 = vmatpush1.msra.mxu0 0.0
      %6215 = vmatprep.subr.mxu0 0.0
      %6216 = vmatpush1.msra.mxu0 0.0
      %6217 = vmatprep.subr.mxu0 0.0
      %6218 = vmatpush1.msra.mxu0 0.0
      %6219 = vmatprep.subr.mxu0 0.0
      %6220 = vmatpush1.msra.mxu0 0.0
      %6221 = vmatprep.subr.mxu0 0.0
      %6222 = vmatpush1.msra.mxu0 0.0
      %6223 = vmatprep.subr.mxu0 0.0
      %6224 = vmatpush1.msra.mxu0 0.0
      %6225 = vmatprep.subr.mxu0 0.0
      %6226 = vmatpush1.msra.mxu0 0.0
      %6227 = vmatprep.subr.mxu0 0.0
      %6228 = vmatpush1.msra.mxu0 0.0
      %6229 = vmatprep.subr.mxu0 0.0
      %6230 = vmatpush1.msra.mxu0 0.0
      %6231 = vmatprep.subr.mxu0 0.0
      %6232 = vmatpush1.msra.mxu0 0.0
      %6233 = vmatprep.subr.mxu0 0.0
      %6234 = vmatpush1.msra.mxu0 0.0
      %6235 = vmatprep.subr.mxu0 0.0
      %6236 = vmatpush1.msra.mxu0 0.0
      %6237 = vmatprep.subr.mxu0 0.0
      %6238 = vmatpush1.msra.mxu0 0.0
      %6239 = vmatprep.subr.mxu0 0.0
      %6240 = vmatpush1.msra.mxu0 0.0
      %6241 = vmatprep.subr.mxu0 0.0
      %6242 = vmatpush1.msra.mxu0 0.0
      %6243 = vmatprep.subr.mxu0 0.0
      %6244 = vmatpush1.msra.mxu0 0.0
      %6245 = vmatprep.mubr.f32.mxu0 0.0
      %6246 = vmatmul.mubr.f32.gmra.mrb[0].mxu0 %v6108
      %v6247 = vpop.f32.mrb[0].mxu0
      %v6248 = vadd.f32 0.0, %v6247
      %v6249 = vpop.f32.mrb[0].mxu0
      %v6250 = vadd.f32 0.0, %v6249
      %6251 = vdwg.mxu0
      %v6256 = vrot.slane %v6177, 4
      %v6257 = vrot.slane %v6179, 4
      %v6258 = vrot.slane %v6248, 4
      %v6259 = vrot.slane %v6250, 4
      %v6264 = vadd.f32 %v5114, %v6256
      %v6265 = vadd.f32 %v5116, %v6257
      %v6266 = vadd.f32 %v5278, %v6258
      %v6267 = vadd.f32 %v5280, %v6259
      %v6268 = vxor.u32 %v6264, 2147483648
      %v6269 = vmul.f32 %v6268, 1.442695
      %v6270 = vpow.pop %v6269
      %v6271 = vadd.f32 %v6270, 1.0
      %v6272 = vrcp.pop %v6271
      %v6273 = vmul.f32 1.0, %v6272
      %v6274 = vxor.u32 %v6265, 2147483648
      %v6275 = vmul.f32 %v6274, 1.442695
      %v6276 = vpow.pop %v6275
      %v6277 = vadd.f32 %v6276, 1.0
      %v6278 = vrcp.pop %v6277
      %v6279 = vmul.f32 1.0, %v6278
      %v6280 = vtanh.pop %v6266
      %v6281 = vxor.u32 %v6267, 2147483648
      %v6282 = vmul.f32 %v6281, 1.442695
      %v6283 = vpow.pop %v6282
      %v6284 = vadd.f32 %v6283, 1.0
      %v6285 = vrcp.pop %v6284
      %v6286 = vmul.f32 1.0, %v6285
      %v6288 = vrot.slane %v6098, 7
      %v6290 = vmul.f32 %v6279, %v6288
      %v6291 = vmul.f32 %v6273, %v6280
      %v6292 = vadd.f32 %v6290, %v6291
      %v6293 = vtanh.pop %v6292
      %v6294 = vmul.f32 %v6286, %v6293
      %vm6295 = vcmp.eq.s32.totalorder %v5285, 4
      %v6296 = vlaneseq
      %v6297 = vshrl.u32 %v6296, 7
      %v6298 = vsub.s32 4, %v6297
      %v6299 = vrot.slane %v6294, %v6298
      %v6300 = vsel %vm6295, %v6299, %v6106
      %v6302 = vrot.slane %v6294, 4
      %6304 = vmatprep.subr.mxu0 %v5289
      %6305 = vmatpush1.msra.mxu0 %v5288
      %6306 = vmatprep.subr.mxu0 %v5293
      %6307 = vmatpush1.msra.mxu0 %v5292
      %6308 = vmatprep.subr.mxu0 %v5297
      %6309 = vmatpush1.msra.mxu0 %v5296
      %6310 = vmatprep.subr.mxu0 %v5301
      %6311 = vmatpush1.msra.mxu0 %v5300
      %6312 = vmatprep.subr.mxu0 %v5305
      %6313 = vmatpush1.msra.mxu0 %v5304
      %6314 = vmatprep.subr.mxu0 %v5309
      %6315 = vmatpush1.msra.mxu0 %v5308
      %6316 = vmatprep.subr.mxu0 %v5313
      %6317 = vmatpush1.msra.mxu0 %v5312
      %6318 = vmatprep.subr.mxu0 %v5317
      %6319 = vmatpush1.msra.mxu0 %v5316
      %6320 = vmatprep.subr.mxu0 %v5321
      %6321 = vmatpush1.msra.mxu0 %v5320
      %6322 = vmatprep.subr.mxu0 %v5325
      %6323 = vmatpush1.msra.mxu0 %v5324
      %6324 = vmatprep.subr.mxu0 %v5329
      %6325 = vmatpush1.msra.mxu0 %v5328
      %6326 = vmatprep.subr.mxu0 %v5333
      %6327 = vmatpush1.msra.mxu0 %v5332
      %6328 = vmatprep.subr.mxu0 %v5337
      %6329 = vmatpush1.msra.mxu0 %v5336
      %6330 = vmatprep.subr.mxu0 %v5341
      %6331 = vmatpush1.msra.mxu0 %v5340
      %6332 = vmatprep.subr.mxu0 %v5345
      %6333 = vmatpush1.msra.mxu0 %v5344
      %6334 = vmatprep.subr.mxu0 %v5349
      %6335 = vmatpush1.msra.mxu0 %v5348
      %6336 = vmatprep.subr.mxu0 0.0
      %6337 = vmatpush1.msra.mxu0 0.0
      %6338 = vmatprep.subr.mxu0 0.0
      %6339 = vmatpush1.msra.mxu0 0.0
      %6340 = vmatprep.subr.mxu0 0.0
      %6341 = vmatpush1.msra.mxu0 0.0
      %6342 = vmatprep.subr.mxu0 0.0
      %6343 = vmatpush1.msra.mxu0 0.0
      %6344 = vmatprep.subr.mxu0 0.0
      %6345 = vmatpush1.msra.mxu0 0.0
      %6346 = vmatprep.subr.mxu0 0.0
      %6347 = vmatpush1.msra.mxu0 0.0
      %6348 = vmatprep.subr.mxu0 0.0
      %6349 = vmatpush1.msra.mxu0 0.0
      %6350 = vmatprep.subr.mxu0 0.0
      %6351 = vmatpush1.msra.mxu0 0.0
      %6352 = vmatprep.subr.mxu0 0.0
      %6353 = vmatpush1.msra.mxu0 0.0
      %6354 = vmatprep.subr.mxu0 0.0
      %6355 = vmatpush1.msra.mxu0 0.0
      %6356 = vmatprep.subr.mxu0 0.0
      %6357 = vmatpush1.msra.mxu0 0.0
      %6358 = vmatprep.subr.mxu0 0.0
      %6359 = vmatpush1.msra.mxu0 0.0
      %6360 = vmatprep.subr.mxu0 0.0
      %6361 = vmatpush1.msra.mxu0 0.0
      %6362 = vmatprep.subr.mxu0 0.0
      %6363 = vmatpush1.msra.mxu0 0.0
      %6364 = vmatprep.subr.mxu0 0.0
      %6365 = vmatpush1.msra.mxu0 0.0
      %6366 = vmatprep.subr.mxu0 0.0
      %6367 = vmatpush1.msra.mxu0 0.0
      %6368 = vmatprep.mubr.f32.mxu0 0.0
      %6369 = vmatmul.mubr.f32.gmra.mrb[0].mxu0 %v6302
      %v6370 = vpop.f32.mrb[0].mxu0
      %v6371 = vadd.f32 0.0, %v6370
      %v6372 = vpop.f32.mrb[0].mxu0
      %v6373 = vadd.f32 0.0, %v6372
      %6374 = vdwg.mxu0
      %6375 = vmatprep.subr.mxu0 %v5291
      %6376 = vmatpush1.msra.mxu0 %v5290
      %6377 = vmatprep.subr.mxu0 %v5295
      %6378 = vmatpush1.msra.mxu0 %v5294
      %6379 = vmatprep.subr.mxu0 %v5299
      %6380 = vmatpush1.msra.mxu0 %v5298
      %6381 = vmatprep.subr.mxu0 %v5303
      %6382 = vmatpush1.msra.mxu0 %v5302
      %6383 = vmatprep.subr.mxu0 %v5307
      %6384 = vmatpush1.msra.mxu0 %v5306
      %6385 = vmatprep.subr.mxu0 %v5311
      %6386 = vmatpush1.msra.mxu0 %v5310
      %6387 = vmatprep.subr.mxu0 %v5315
      %6388 = vmatpush1.msra.mxu0 %v5314
      %6389 = vmatprep.subr.mxu0 %v5319
      %6390 = vmatpush1.msra.mxu0 %v5318
      %6391 = vmatprep.subr.mxu0 %v5323
      %6392 = vmatpush1.msra.mxu0 %v5322
      %6393 = vmatprep.subr.mxu0 %v5327
      %6394 = vmatpush1.msra.mxu0 %v5326
      %6395 = vmatprep.subr.mxu0 %v5331
      %6396 = vmatpush1.msra.mxu0 %v5330
      %6397 = vmatprep.subr.mxu0 %v5335
      %6398 = vmatpush1.msra.mxu0 %v5334
      %6399 = vmatprep.subr.mxu0 %v5339
      %6400 = vmatpush1.msra.mxu0 %v5338
      %6401 = vmatprep.subr.mxu0 %v5343
      %6402 = vmatpush1.msra.mxu0 %v5342
      %6403 = vmatprep.subr.mxu0 %v5347
      %6404 = vmatpush1.msra.mxu0 %v5346
      %6405 = vmatprep.subr.mxu0 %v5351
      %6406 = vmatpush1.msra.mxu0 %v5350
      %6407 = vmatprep.subr.mxu0 0.0
      %6408 = vmatpush1.msra.mxu0 0.0
      %6409 = vmatprep.subr.mxu0 0.0
      %6410 = vmatpush1.msra.mxu0 0.0
      %6411 = vmatprep.subr.mxu0 0.0
      %6412 = vmatpush1.msra.mxu0 0.0
      %6413 = vmatprep.subr.mxu0 0.0
      %6414 = vmatpush1.msra.mxu0 0.0
      %6415 = vmatprep.subr.mxu0 0.0
      %6416 = vmatpush1.msra.mxu0 0.0
      %6417 = vmatprep.subr.mxu0 0.0
      %6418 = vmatpush1.msra.mxu0 0.0
      %6419 = vmatprep.subr.mxu0 0.0
      %6420 = vmatpush1.msra.mxu0 0.0
      %6421 = vmatprep.subr.mxu0 0.0
      %6422 = vmatpush1.msra.mxu0 0.0
      %6423 = vmatprep.subr.mxu0 0.0
      %6424 = vmatpush1.msra.mxu0 0.0
      %6425 = vmatprep.subr.mxu0 0.0
      %6426 = vmatpush1.msra.mxu0 0.0
      %6427 = vmatprep.subr.mxu0 0.0
      %6428 = vmatpush1.msra.mxu0 0.0
      %6429 = vmatprep.subr.mxu0 0.0
      %6430 = vmatpush1.msra.mxu0 0.0
      %6431 = vmatprep.subr.mxu0 0.0
      %6432 = vmatpush1.msra.mxu0 0.0
      %6433 = vmatprep.subr.mxu0 0.0
      %6434 = vmatpush1.msra.mxu0 0.0
      %6435 = vmatprep.subr.mxu0 0.0
      %6436 = vmatpush1.msra.mxu0 0.0
      %6437 = vmatprep.subr.mxu0 0.0
      %6438 = vmatpush1.msra.mxu0 0.0
      %6439 = vmatprep.mubr.f32.mxu0 0.0
      %6440 = vmatmul.mubr.f32.gmra.mrb[0].mxu0 %v6302
      %v6441 = vpop.f32.mrb[0].mxu0
      %v6442 = vadd.f32 0.0, %v6441
      %v6443 = vpop.f32.mrb[0].mxu0
      %v6444 = vadd.f32 0.0, %v6443
      %6445 = vdwg.mxu0
      %v6450 = vrot.slane %v6371, 3
      %v6451 = vrot.slane %v6373, 3
      %v6452 = vrot.slane %v6442, 3
      %v6453 = vrot.slane %v6444, 3
      %v6458 = vadd.f32 %v5114, %v6450
      %v6459 = vadd.f32 %v5116, %v6451
      %v6460 = vadd.f32 %v5278, %v6452
      %v6461 = vadd.f32 %v5280, %v6453
      %v6462 = vxor.u32 %v6458, 2147483648
      %v6463 = vmul.f32 %v6462, 1.442695
      %v6464 = vpow.pop %v6463
      %v6465 = vadd.f32 %v6464, 1.0
      %v6466 = vrcp.pop %v6465
      %v6467 = vmul.f32 1.0, %v6466
      %v6468 = vxor.u32 %v6459, 2147483648
      %v6469 = vmul.f32 %v6468, 1.442695
      %v6470 = vpow.pop %v6469
      %v6471 = vadd.f32 %v6470, 1.0
      %v6472 = vrcp.pop %v6471
      %v6473 = vmul.f32 1.0, %v6472
      %v6474 = vtanh.pop %v6460
      %v6475 = vxor.u32 %v6461, 2147483648
      %v6476 = vmul.f32 %v6475, 1.442695
      %v6477 = vpow.pop %v6476
      %v6478 = vadd.f32 %v6477, 1.0
      %v6479 = vrcp.pop %v6478
      %v6480 = vmul.f32 1.0, %v6479
      %v6482 = vrot.slane %v6292, 7
      %v6484 = vmul.f32 %v6473, %v6482
      %v6485 = vmul.f32 %v6467, %v6474
      %v6486 = vadd.f32 %v6484, %v6485
      %v6487 = vtanh.pop %v6486
      %v6488 = vmul.f32 %v6480, %v6487
      %vm6489 = vcmp.eq.s32.totalorder %v5285, 5
      %v6490 = vlaneseq
      %v6491 = vshrl.u32 %v6490, 7
      %v6492 = vsub.s32 5, %v6491
      %v6493 = vrot.slane %v6488, %v6492
      %v6494 = vsel %vm6489, %v6493, %v6300
      %v6496 = vrot.slane %v6488, 5
      %6498 = vmatprep.subr.mxu0 %v5289
      %6499 = vmatpush1.msra.mxu0 %v5288
      %6500 = vmatprep.subr.mxu0 %v5293
      %6501 = vmatpush1.msra.mxu0 %v5292
      %6502 = vmatprep.subr.mxu0 %v5297
      %6503 = vmatpush1.msra.mxu0 %v5296
      %6504 = vmatprep.subr.mxu0 %v5301
      %6505 = vmatpush1.msra.mxu0 %v5300
      %6506 = vmatprep.subr.mxu0 %v5305
      %6507 = vmatpush1.msra.mxu0 %v5304
      %6508 = vmatprep.subr.mxu0 %v5309
      %6509 = vmatpush1.msra.mxu0 %v5308
      %6510 = vmatprep.subr.mxu0 %v5313
      %6511 = vmatpush1.msra.mxu0 %v5312
      %6512 = vmatprep.subr.mxu0 %v5317
      %6513 = vmatpush1.msra.mxu0 %v5316
      %6514 = vmatprep.subr.mxu0 %v5321
      %6515 = vmatpush1.msra.mxu0 %v5320
      %6516 = vmatprep.subr.mxu0 %v5325
      %6517 = vmatpush1.msra.mxu0 %v5324
      %6518 = vmatprep.subr.mxu0 %v5329
      %6519 = vmatpush1.msra.mxu0 %v5328
      %6520 = vmatprep.subr.mxu0 %v5333
      %6521 = vmatpush1.msra.mxu0 %v5332
      %6522 = vmatprep.subr.mxu0 %v5337
      %6523 = vmatpush1.msra.mxu0 %v5336
      %6524 = vmatprep.subr.mxu0 %v5341
      %6525 = vmatpush1.msra.mxu0 %v5340
      %6526 = vmatprep.subr.mxu0 %v5345
      %6527 = vmatpush1.msra.mxu0 %v5344
      %6528 = vmatprep.subr.mxu0 %v5349
      %6529 = vmatpush1.msra.mxu0 %v5348
      %6530 = vmatprep.subr.mxu0 0.0
      %6531 = vmatpush1.msra.mxu0 0.0
      %6532 = vmatprep.subr.mxu0 0.0
      %6533 = vmatpush1.msra.mxu0 0.0
      %6534 = vmatprep.subr.mxu0 0.0
      %6535 = vmatpush1.msra.mxu0 0.0
      %6536 = vmatprep.subr.mxu0 0.0
      %6537 = vmatpush1.msra.mxu0 0.0
      %6538 = vmatprep.subr.mxu0 0.0
      %6539 = vmatpush1.msra.mxu0 0.0
      %6540 = vmatprep.subr.mxu0 0.0
      %6541 = vmatpush1.msra.mxu0 0.0
      %6542 = vmatprep.subr.mxu0 0.0
      %6543 = vmatpush1.msra.mxu0 0.0
      %6544 = vmatprep.subr.mxu0 0.0
      %6545 = vmatpush1.msra.mxu0 0.0
      %6546 = vmatprep.subr.mxu0 0.0
      %6547 = vmatpush1.msra.mxu0 0.0
      %6548 = vmatprep.subr.mxu0 0.0
      %6549 = vmatpush1.msra.mxu0 0.0
      %6550 = vmatprep.subr.mxu0 0.0
      %6551 = vmatpush1.msra.mxu0 0.0
      %6552 = vmatprep.subr.mxu0 0.0
      %6553 = vmatpush1.msra.mxu0 0.0
      %6554 = vmatprep.subr.mxu0 0.0
      %6555 = vmatpush1.msra.mxu0 0.0
      %6556 = vmatprep.subr.mxu0 0.0
      %6557 = vmatpush1.msra.mxu0 0.0
      %6558 = vmatprep.subr.mxu0 0.0
      %6559 = vmatpush1.msra.mxu0 0.0
      %6560 = vmatprep.subr.mxu0 0.0
      %6561 = vmatpush1.msra.mxu0 0.0
      %6562 = vmatprep.mubr.f32.mxu0 0.0
      %6563 = vmatmul.mubr.f32.gmra.mrb[0].mxu0 %v6496
      %v6564 = vpop.f32.mrb[0].mxu0
      %v6565 = vadd.f32 0.0, %v6564
      %v6566 = vpop.f32.mrb[0].mxu0
      %v6567 = vadd.f32 0.0, %v6566
      %6568 = vdwg.mxu0
      %6569 = vmatprep.subr.mxu0 %v5291
      %6570 = vmatpush1.msra.mxu0 %v5290
      %6571 = vmatprep.subr.mxu0 %v5295
      %6572 = vmatpush1.msra.mxu0 %v5294
      %6573 = vmatprep.subr.mxu0 %v5299
      %6574 = vmatpush1.msra.mxu0 %v5298
      %6575 = vmatprep.subr.mxu0 %v5303
      %6576 = vmatpush1.msra.mxu0 %v5302
      %6577 = vmatprep.subr.mxu0 %v5307
      %6578 = vmatpush1.msra.mxu0 %v5306
      %6579 = vmatprep.subr.mxu0 %v5311
      %6580 = vmatpush1.msra.mxu0 %v5310
      %6581 = vmatprep.subr.mxu0 %v5315
      %6582 = vmatpush1.msra.mxu0 %v5314
      %6583 = vmatprep.subr.mxu0 %v5319
      %6584 = vmatpush1.msra.mxu0 %v5318
      %6585 = vmatprep.subr.mxu0 %v5323
      %6586 = vmatpush1.msra.mxu0 %v5322
      %6587 = vmatprep.subr.mxu0 %v5327
      %6588 = vmatpush1.msra.mxu0 %v5326
      %6589 = vmatprep.subr.mxu0 %v5331
      %6590 = vmatpush1.msra.mxu0 %v5330
      %6591 = vmatprep.subr.mxu0 %v5335
      %6592 = vmatpush1.msra.mxu0 %v5334
      %6593 = vmatprep.subr.mxu0 %v5339
      %6594 = vmatpush1.msra.mxu0 %v5338
      %6595 = vmatprep.subr.mxu0 %v5343
      %6596 = vmatpush1.msra.mxu0 %v5342
      %6597 = vmatprep.subr.mxu0 %v5347
      %6598 = vmatpush1.msra.mxu0 %v5346
      %6599 = vmatprep.subr.mxu0 %v5351
      %6600 = vmatpush1.msra.mxu0 %v5350
      %6601 = vmatprep.subr.mxu0 0.0
      %6602 = vmatpush1.msra.mxu0 0.0
      %6603 = vmatprep.subr.mxu0 0.0
      %6604 = vmatpush1.msra.mxu0 0.0
      %6605 = vmatprep.subr.mxu0 0.0
      %6606 = vmatpush1.msra.mxu0 0.0
      %6607 = vmatprep.subr.mxu0 0.0
      %6608 = vmatpush1.msra.mxu0 0.0
      %6609 = vmatprep.subr.mxu0 0.0
      %6610 = vmatpush1.msra.mxu0 0.0
      %6611 = vmatprep.subr.mxu0 0.0
      %6612 = vmatpush1.msra.mxu0 0.0
      %6613 = vmatprep.subr.mxu0 0.0
      %6614 = vmatpush1.msra.mxu0 0.0
      %6615 = vmatprep.subr.mxu0 0.0
      %6616 = vmatpush1.msra.mxu0 0.0
      %6617 = vmatprep.subr.mxu0 0.0
      %6618 = vmatpush1.msra.mxu0 0.0
      %6619 = vmatprep.subr.mxu0 0.0
      %6620 = vmatpush1.msra.mxu0 0.0
      %6621 = vmatprep.subr.mxu0 0.0
      %6622 = vmatpush1.msra.mxu0 0.0
      %6623 = vmatprep.subr.mxu0 0.0
      %6624 = vmatpush1.msra.mxu0 0.0
      %6625 = vmatprep.subr.mxu0 0.0
      %6626 = vmatpush1.msra.mxu0 0.0
      %6627 = vmatprep.subr.mxu0 0.0
      %6628 = vmatpush1.msra.mxu0 0.0
      %6629 = vmatprep.subr.mxu0 0.0
      %6630 = vmatpush1.msra.mxu0 0.0
      %6631 = vmatprep.subr.mxu0 0.0
      %6632 = vmatpush1.msra.mxu0 0.0
      %6633 = vmatprep.mubr.f32.mxu0 0.0
      %6634 = vmatmul.mubr.f32.gmra.mrb[0].mxu0 %v6496
      %v6635 = vpop.f32.mrb[0].mxu0
      %v6636 = vadd.f32 0.0, %v6635
      %v6637 = vpop.f32.mrb[0].mxu0
      %v6638 = vadd.f32 0.0, %v6637
      %6639 = vdwg.mxu0
      %v6644 = vrot.slane %v6565, 2
      %v6645 = vrot.slane %v6567, 2
      %v6646 = vrot.slane %v6636, 2
      %v6647 = vrot.slane %v6638, 2
      %v6652 = vadd.f32 %v5114, %v6644
      %v6653 = vadd.f32 %v5116, %v6645
      %v6654 = vadd.f32 %v5278, %v6646
      %v6655 = vadd.f32 %v5280, %v6647
      %v6656 = vxor.u32 %v6652, 2147483648
      %v6657 = vmul.f32 %v6656, 1.442695
      %v6658 = vpow.pop %v6657
      %v6659 = vadd.f32 %v6658, 1.0
      %v6660 = vrcp.pop %v6659
      %v6661 = vmul.f32 1.0, %v6660
      %v6662 = vxor.u32 %v6653, 2147483648
      %v6663 = vmul.f32 %v6662, 1.442695
      %v6664 = vpow.pop %v6663
      %v6665 = vadd.f32 %v6664, 1.0
      %v6666 = vrcp.pop %v6665
      %v6667 = vmul.f32 1.0, %v6666
      %v6668 = vtanh.pop %v6654
      %v6669 = vxor.u32 %v6655, 2147483648
      %v6670 = vmul.f32 %v6669, 1.442695
      %v6671 = vpow.pop %v6670
      %v6672 = vadd.f32 %v6671, 1.0
      %v6673 = vrcp.pop %v6672
      %v6674 = vmul.f32 1.0, %v6673
      %v6676 = vrot.slane %v6486, 7
      %v6678 = vmul.f32 %v6667, %v6676
      %v6679 = vmul.f32 %v6661, %v6668
      %v6680 = vadd.f32 %v6678, %v6679
      %v6681 = vtanh.pop %v6680
      %v6682 = vmul.f32 %v6674, %v6681
      %vm6683 = vcmp.eq.s32.totalorder %v5285, 6
      %v6684 = vlaneseq
      %v6685 = vshrl.u32 %v6684, 7
      %v6686 = vsub.s32 6, %v6685
      %v6687 = vrot.slane %v6682, %v6686
      %v6688 = vsel %vm6683, %v6687, %v6494
      %v6690 = vrot.slane %v6682, 6
      %6692 = vmatprep.subr.mxu0 %v5289
      %6693 = vmatpush1.msra.mxu0 %v5288
      %6694 = vmatprep.subr.mxu0 %v5293
      %6695 = vmatpush1.msra.mxu0 %v5292
      %6696 = vmatprep.subr.mxu0 %v5297
      %6697 = vmatpush1.msra.mxu0 %v5296
      %6698 = vmatprep.subr.mxu0 %v5301
      %6699 = vmatpush1.msra.mxu0 %v5300
      %6700 = vmatprep.subr.mxu0 %v5305
      %6701 = vmatpush1.msra.mxu0 %v5304
      %6702 = vmatprep.subr.mxu0 %v5309
      %6703 = vmatpush1.msra.mxu0 %v5308
      %6704 = vmatprep.subr.mxu0 %v5313
      %6705 = vmatpush1.msra.mxu0 %v5312
      %6706 = vmatprep.subr.mxu0 %v5317
      %6707 = vmatpush1.msra.mxu0 %v5316
      %6708 = vmatprep.subr.mxu0 %v5321
      %6709 = vmatpush1.msra.mxu0 %v5320
      %6710 = vmatprep.subr.mxu0 %v5325
      %6711 = vmatpush1.msra.mxu0 %v5324
      %6712 = vmatprep.subr.mxu0 %v5329
      %6713 = vmatpush1.msra.mxu0 %v5328
      %6714 = vmatprep.subr.mxu0 %v5333
      %6715 = vmatpush1.msra.mxu0 %v5332
      %6716 = vmatprep.subr.mxu0 %v5337
      %6717 = vmatpush1.msra.mxu0 %v5336
      %6718 = vmatprep.subr.mxu0 %v5341
      %6719 = vmatpush1.msra.mxu0 %v5340
      %6720 = vmatprep.subr.mxu0 %v5345
      %6721 = vmatpush1.msra.mxu0 %v5344
      %6722 = vmatprep.subr.mxu0 %v5349
      %6723 = vmatpush1.msra.mxu0 %v5348
      %6724 = vmatprep.subr.mxu0 0.0
      %6725 = vmatpush1.msra.mxu0 0.0
      %6726 = vmatprep.subr.mxu0 0.0
      %6727 = vmatpush1.msra.mxu0 0.0
      %6728 = vmatprep.subr.mxu0 0.0
      %6729 = vmatpush1.msra.mxu0 0.0
      %6730 = vmatprep.subr.mxu0 0.0
      %6731 = vmatpush1.msra.mxu0 0.0
      %6732 = vmatprep.subr.mxu0 0.0
      %6733 = vmatpush1.msra.mxu0 0.0
      %6734 = vmatprep.subr.mxu0 0.0
      %6735 = vmatpush1.msra.mxu0 0.0
      %6736 = vmatprep.subr.mxu0 0.0
      %6737 = vmatpush1.msra.mxu0 0.0
      %6738 = vmatprep.subr.mxu0 0.0
      %6739 = vmatpush1.msra.mxu0 0.0
      %6740 = vmatprep.subr.mxu0 0.0
      %6741 = vmatpush1.msra.mxu0 0.0
      %6742 = vmatprep.subr.mxu0 0.0
      %6743 = vmatpush1.msra.mxu0 0.0
      %6744 = vmatprep.subr.mxu0 0.0
      %6745 = vmatpush1.msra.mxu0 0.0
      %6746 = vmatprep.subr.mxu0 0.0
      %6747 = vmatpush1.msra.mxu0 0.0
      %6748 = vmatprep.subr.mxu0 0.0
      %6749 = vmatpush1.msra.mxu0 0.0
      %6750 = vmatprep.subr.mxu0 0.0
      %6751 = vmatpush1.msra.mxu0 0.0
      %6752 = vmatprep.subr.mxu0 0.0
      %6753 = vmatpush1.msra.mxu0 0.0
      %6754 = vmatprep.subr.mxu0 0.0
      %6755 = vmatpush1.msra.mxu0 0.0
      %6756 = vmatprep.mubr.f32.mxu0 0.0
      %6757 = vmatmul.mubr.f32.gmra.mrb[0].mxu0 %v6690
      %v6758 = vpop.f32.mrb[0].mxu0
      %v6759 = vadd.f32 0.0, %v6758
      %v6760 = vpop.f32.mrb[0].mxu0
      %v6761 = vadd.f32 0.0, %v6760
      %6762 = vdwg.mxu0
      %6763 = vmatprep.subr.mxu0 %v5291
      %6764 = vmatpush1.msra.mxu0 %v5290
      %6765 = vmatprep.subr.mxu0 %v5295
      %6766 = vmatpush1.msra.mxu0 %v5294
      %6767 = vmatprep.subr.mxu0 %v5299
      %6768 = vmatpush1.msra.mxu0 %v5298
      %6769 = vmatprep.subr.mxu0 %v5303
      %6770 = vmatpush1.msra.mxu0 %v5302
      %6771 = vmatprep.subr.mxu0 %v5307
      %6772 = vmatpush1.msra.mxu0 %v5306
      %6773 = vmatprep.subr.mxu0 %v5311
      %6774 = vmatpush1.msra.mxu0 %v5310
      %6775 = vmatprep.subr.mxu0 %v5315
      %6776 = vmatpush1.msra.mxu0 %v5314
      %6777 = vmatprep.subr.mxu0 %v5319
      %6778 = vmatpush1.msra.mxu0 %v5318
      %6779 = vmatprep.subr.mxu0 %v5323
      %6780 = vmatpush1.msra.mxu0 %v5322
      %6781 = vmatprep.subr.mxu0 %v5327
      %6782 = vmatpush1.msra.mxu0 %v5326
      %6783 = vmatprep.subr.mxu0 %v5331
      %6784 = vmatpush1.msra.mxu0 %v5330
      %6785 = vmatprep.subr.mxu0 %v5335
      %6786 = vmatpush1.msra.mxu0 %v5334
      %6787 = vmatprep.subr.mxu0 %v5339
      %6788 = vmatpush1.msra.mxu0 %v5338
      %6789 = vmatprep.subr.mxu0 %v5343
      %6790 = vmatpush1.msra.mxu0 %v5342
      %6791 = vmatprep.subr.mxu0 %v5347
      %6792 = vmatpush1.msra.mxu0 %v5346
      %6793 = vmatprep.subr.mxu0 %v5351
      %6794 = vmatpush1.msra.mxu0 %v5350
      %6795 = vmatprep.subr.mxu0 0.0
      %6796 = vmatpush1.msra.mxu0 0.0
      %6797 = vmatprep.subr.mxu0 0.0
      %6798 = vmatpush1.msra.mxu0 0.0
      %6799 = vmatprep.subr.mxu0 0.0
      %6800 = vmatpush1.msra.mxu0 0.0
      %6801 = vmatprep.subr.mxu0 0.0
      %6802 = vmatpush1.msra.mxu0 0.0
      %6803 = vmatprep.subr.mxu0 0.0
      %6804 = vmatpush1.msra.mxu0 0.0
      %6805 = vmatprep.subr.mxu0 0.0
      %6806 = vmatpush1.msra.mxu0 0.0
      %6807 = vmatprep.subr.mxu0 0.0
      %6808 = vmatpush1.msra.mxu0 0.0
      %6809 = vmatprep.subr.mxu0 0.0
      %6810 = vmatpush1.msra.mxu0 0.0
      %6811 = vmatprep.subr.mxu0 0.0
      %6812 = vmatpush1.msra.mxu0 0.0
      %6813 = vmatprep.subr.mxu0 0.0
      %6814 = vmatpush1.msra.mxu0 0.0
      %6815 = vmatprep.subr.mxu0 0.0
      %6816 = vmatpush1.msra.mxu0 0.0
      %6817 = vmatprep.subr.mxu0 0.0
      %6818 = vmatpush1.msra.mxu0 0.0
      %6819 = vmatprep.subr.mxu0 0.0
      %6820 = vmatpush1.msra.mxu0 0.0
      %6821 = vmatprep.subr.mxu0 0.0
      %6822 = vmatpush1.msra.mxu0 0.0
      %6823 = vmatprep.subr.mxu0 0.0
      %6824 = vmatpush1.msra.mxu0 0.0
      %6825 = vmatprep.subr.mxu0 0.0
      %6826 = vmatpush1.msra.mxu0 0.0
      %6827 = vmatprep.mubr.f32.mxu0 0.0
      %6828 = vmatmul.mubr.f32.gmra.mrb[0].mxu0 %v6690
      %v6829 = vpop.f32.mrb[0].mxu0
      %v6830 = vadd.f32 0.0, %v6829
      %v6831 = vpop.f32.mrb[0].mxu0
      %v6832 = vadd.f32 0.0, %v6831
      %6833 = vdwg.mxu0
      %v6838 = vrot.slane %v6759, 1
      %v6839 = vrot.slane %v6761, 1
      %v6840 = vrot.slane %v6830, 1
      %v6841 = vrot.slane %v6832, 1
      %v6846 = vadd.f32 %v5114, %v6838
      %v6847 = vadd.f32 %v5116, %v6839
      %v6848 = vadd.f32 %v5278, %v6840
      %v6849 = vadd.f32 %v5280, %v6841
      %v6850 = vxor.u32 %v6846, 2147483648
      %v6851 = vmul.f32 %v6850, 1.442695
      %v6852 = vpow.pop %v6851
      %v6853 = vadd.f32 %v6852, 1.0
      %v6854 = vrcp.pop %v6853
      %v6855 = vmul.f32 1.0, %v6854
      %v6856 = vxor.u32 %v6847, 2147483648
      %v6857 = vmul.f32 %v6856, 1.442695
      %v6858 = vpow.pop %v6857
      %v6859 = vadd.f32 %v6858, 1.0
      %v6860 = vrcp.pop %v6859
      %v6861 = vmul.f32 1.0, %v6860
      %v6862 = vtanh.pop %v6848
      %v6863 = vxor.u32 %v6849, 2147483648
      %v6864 = vmul.f32 %v6863, 1.442695
      %v6865 = vpow.pop %v6864
      %v6866 = vadd.f32 %v6865, 1.0
      %v6867 = vrcp.pop %v6866
      %v6868 = vmul.f32 1.0, %v6867
      %v6870 = vrot.slane %v6680, 7
      %v6872 = vmul.f32 %v6861, %v6870
      %v6873 = vmul.f32 %v6855, %v6862
      %v6874 = vadd.f32 %v6872, %v6873
      %v6875 = vtanh.pop %v6874
      %v6876 = vmul.f32 %v6868, %v6875
      %vm6877 = vcmp.eq.s32.totalorder %v5285, 7
      %v6878 = vlaneseq
      %v6879 = vshrl.u32 %v6878, 7
      %v6880 = vsub.s32 7, %v6879
      %v6881 = vrot.slane %v6876, %v6880
      %v6882 = vsel %vm6877, %v6881, %v6688
      %v6883 = vpack.c.bf16 %v6882, %v6882
      %v6884 = vld [vmem:[%s12] sm:$0xf]
      %v6885 = vld [vmem:[%s12 + $0x4] sm:$0xf]
      %v6886 = vld [vmem:[%s12 + $0x8] sm:$0xf]
      %v6887 = vld [vmem:[%s12 + $0xc] sm:$0xf]
      %v6888 = vld [vmem:[%s12 + $0x10] sm:$0xf]
      %v6889 = vld [vmem:[%s12 + $0x14] sm:$0xf]
      %v6890 = vld [vmem:[%s12 + $0x18] sm:$0xf]
      %v6891 = vld [vmem:[%s12 + $0x1c] sm:$0xf]
      %v6892 = vld [vmem:[%s12 + $0x20] sm:$0xf]
      %v6893 = vld [vmem:[%s12 + $0x24] sm:$0xf]
      %v6894 = vld [vmem:[%s12 + $0x28] sm:$0xf]
      %v6895 = vld [vmem:[%s12 + $0x2c] sm:$0xf]
      %v6896 = vld [vmem:[%s12 + $0x30] sm:$0xf]
      %v6897 = vld [vmem:[%s12 + $0x34] sm:$0xf]
      %v6898 = vld [vmem:[%s12 + $0x38] sm:$0xf]
      %v6899 = vld [vmem:[%s12 + $0x3c] sm:$0xf]
      %v6900 = vld [vmem:[%s13] sm:$0x1]
      %v6902 = vlaneseq
      %v6903 = vshrl.u32 %v6902, 7
      %v6904 = vsub.s32 0, %v6903
      %v6905 = vrot.slane %v6900, %v6904
      %v6923 = vunpack.c.l.b16 %v6884
      %v6924 = vunpack.c.l.b16 %v6885
      %v6925 = vunpack.c.l.b16 %v6886
      %v6926 = vunpack.c.l.b16 %v6887
      %v6927 = vunpack.c.l.b16 %v6888
      %v6928 = vunpack.c.l.b16 %v6889
      %v6929 = vunpack.c.l.b16 %v6890
      %v6930 = vunpack.c.l.b16 %v6891
      %v6931 = vunpack.c.l.b16 %v6892
      %v6932 = vunpack.c.l.b16 %v6893
      %v6933 = vunpack.c.l.b16 %v6894
      %v6934 = vunpack.c.l.b16 %v6895
      %v6935 = vunpack.c.l.b16 %v6896
      %v6936 = vunpack.c.l.b16 %v6897
      %v6937 = vunpack.c.l.b16 %v6898
      %v6938 = vunpack.c.l.b16 %v6899
      %v6939 = vpack.c.b16 %v6924, %v6923
      %v6940 = vpack.c.b16 %v6926, %v6925
      %v6941 = vpack.c.b16 %v6928, %v6927
      %v6942 = vpack.c.b16 %v6930, %v6929
      %v6943 = vpack.c.b16 %v6932, %v6931
      %v6944 = vpack.c.b16 %v6934, %v6933
      %v6945 = vpack.c.b16 %v6936, %v6935
      %v6946 = vpack.c.b16 %v6938, %v6937
      %6955 = vmatprep.subr.bf16.mxu0 0
      %6956 = vmatpush1.bf16.msra.mxu0 %v6939
      %6957 = vmatprep.subr.bf16.mxu0 0
      %6958 = vmatpush1.bf16.msra.mxu0 %v6940
      %6959 = vmatprep.subr.bf16.mxu0 0
      %6960 = vmatpush1.bf16.msra.mxu0 %v6941
      %6961 = vmatprep.subr.bf16.mxu0 0
      %6962 = vmatpush1.bf16.msra.mxu0 %v6942
      %6963 = vmatprep.subr.bf16.mxu0 0
      %6964 = vmatpush1.bf16.msra.mxu0 %v6943
      %6965 = vmatprep.subr.bf16.mxu0 0
      %6966 = vmatpush1.bf16.msra.mxu0 %v6944
      %6967 = vmatprep.subr.bf16.mxu0 0
      %6968 = vmatpush1.bf16.msra.mxu0 %v6945
      %6969 = vmatprep.subr.bf16.mxu0 0
      %6970 = vmatpush1.bf16.msra.mxu0 %v6946
      %6971 = vmatprep.subr.bf16.mxu0 0
      %6972 = vmatpush1.bf16.msra.mxu0 0
      %6973 = vmatprep.subr.bf16.mxu0 0
      %6974 = vmatpush1.bf16.msra.mxu0 0
      %6975 = vmatprep.subr.bf16.mxu0 0
      %6976 = vmatpush1.bf16.msra.mxu0 0
      %6977 = vmatprep.subr.bf16.mxu0 0
      %6978 = vmatpush1.bf16.msra.mxu0 0
      %6979 = vmatprep.subr.bf16.mxu0 0
      %6980 = vmatpush1.bf16.msra.mxu0 0
      %6981 = vmatprep.subr.bf16.mxu0 0
      %6982 = vmatpush1.bf16.msra.mxu0 0
      %6983 = vmatprep.subr.bf16.mxu0 0
      %6984 = vmatpush1.bf16.msra.mxu0 0
      %6985 = vmatprep.subr.bf16.mxu0 0
      %6986 = vmatpush1.bf16.msra.mxu0 0
      %6987 = vmatprep.mubr.bf16.mxu0 0
      %6988 = vmatmul.mubr.bf16.gmra.mrb[0].mxu0 %v6883
      %v6989 = vpop.f32.mrb[0].mxu0
      %v6990 = vadd.f32 %v6905, %v6989
      %v6991 = vpop.f32.mrb[0].mxu0
      %v6992 = vpop.f32.mrb[0].mxu0
      %v6993 = vpop.f32.mrb[0].mxu0
      %6994 = vdwg.mxu0
      %v6995 = vmax.f32 %v6990, 0.0
      %v6996 = vpack.c.bf16 %v6995, %v6995
      %v6997 = vld [vmem:[%s14] sm:$0xf]
      %v6998 = vld [vmem:[%s14 + $0x4] sm:$0xf]
      %v6999 = vld [vmem:[%s14 + $0x8] sm:$0xf]
      %v7000 = vld [vmem:[%s14 + $0xc] sm:$0xf]
      %v7001 = vld [vmem:[%s14 + $0x10] sm:$0xf]
      %v7002 = vld [vmem:[%s14 + $0x14] sm:$0xf]
      %v7003 = vld [vmem:[%s14 + $0x18] sm:$0xf]
      %v7004 = vld [vmem:[%s14 + $0x1c] sm:$0xf]
      %v7005 = vld [vmem:[%s14 + $0x20] sm:$0xf]
      %v7006 = vld [vmem:[%s14 + $0x24] sm:$0xf]
      %v7007 = vld [vmem:[%s14 + $0x28] sm:$0xf]
      %v7008 = vld [vmem:[%s14 + $0x2c] sm:$0xf]
      %v7009 = vld [vmem:[%s14 + $0x30] sm:$0xf]
      %v7010 = vld [vmem:[%s14 + $0x34] sm:$0xf]
      %v7011 = vld [vmem:[%s14 + $0x38] sm:$0xf]
      %v7012 = vld [vmem:[%s14 + $0x3c] sm:$0xf]
      %v7013 = vld [vmem:[%s15] sm:$0x1]
      %v7015 = vlaneseq
      %v7016 = vshrl.u32 %v7015, 7
      %v7017 = vsub.s32 0, %v7016
      %v7018 = vrot.slane %v7013, %v7017
      %v7036 = vunpack.c.l.b16 %v6997
      %v7037 = vunpack.c.l.b16 %v6998
      %v7038 = vunpack.c.l.b16 %v6999
      %v7039 = vunpack.c.l.b16 %v7000
      %v7040 = vunpack.c.l.b16 %v7001
      %v7041 = vunpack.c.l.b16 %v7002
      %v7042 = vunpack.c.l.b16 %v7003
      %v7043 = vunpack.c.l.b16 %v7004
      %v7044 = vunpack.c.l.b16 %v7005
      %v7045 = vunpack.c.l.b16 %v7006
      %v7046 = vunpack.c.l.b16 %v7007
      %v7047 = vunpack.c.l.b16 %v7008
      %v7048 = vunpack.c.l.b16 %v7009
      %v7049 = vunpack.c.l.b16 %v7010
      %v7050 = vunpack.c.l.b16 %v7011
      %v7051 = vunpack.c.l.b16 %v7012
      %v7052 = vpack.c.b16 %v7037, %v7036
      %v7053 = vpack.c.b16 %v7039, %v7038
      %v7054 = vpack.c.b16 %v7041, %v7040
      %v7055 = vpack.c.b16 %v7043, %v7042
      %v7056 = vpack.c.b16 %v7045, %v7044
      %v7057 = vpack.c.b16 %v7047, %v7046
      %v7058 = vpack.c.b16 %v7049, %v7048
      %v7059 = vpack.c.b16 %v7051, %v7050
      %7068 = vmatprep.subr.bf16.mxu0 0
      %7069 = vmatpush1.bf16.msra.mxu0 %v7052
      %7070 = vmatprep.subr.bf16.mxu0 0
      %7071 = vmatpush1.bf16.msra.mxu0 %v7053
      %7072 = vmatprep.subr.bf16.mxu0 0
      %7073 = vmatpush1.bf16.msra.mxu0 %v7054
      %7074 = vmatprep.subr.bf16.mxu0 0
      %7075 = vmatpush1.bf16.msra.mxu0 %v7055
      %7076 = vmatprep.subr.bf16.mxu0 0
      %7077 = vmatpush1.bf16.msra.mxu0 %v7056
      %7078 = vmatprep.subr.bf16.mxu0 0
      %7079 = vmatpush1.bf16.msra.mxu0 %v7057
      %7080 = vmatprep.subr.bf16.mxu0 0
      %7081 = vmatpush1.bf16.msra.mxu0 %v7058
      %7082 = vmatprep.subr.bf16.mxu0 0
      %7083 = vmatpush1.bf16.msra.mxu0 %v7059
      %7084 = vmatprep.subr.bf16.mxu0 0
      %7085 = vmatpush1.bf16.msra.mxu0 0
      %7086 = vmatprep.subr.bf16.mxu0 0
      %7087 = vmatpush1.bf16.msra.mxu0 0
      %7088 = vmatprep.subr.bf16.mxu0 0
      %7089 = vmatpush1.bf16.msra.mxu0 0
      %7090 = vmatprep.subr.bf16.mxu0 0
      %7091 = vmatpush1.bf16.msra.mxu0 0
      %7092 = vmatprep.subr.bf16.mxu0 0
      %7093 = vmatpush1.bf16.msra.mxu0 0
      %7094 = vmatprep.subr.bf16.mxu0 0
      %7095 = vmatpush1.bf16.msra.mxu0 0
      %7096 = vmatprep.subr.bf16.mxu0 0
      %7097 = vmatpush1.bf16.msra.mxu0 0
      %7098 = vmatprep.subr.bf16.mxu0 0
      %7099 = vmatpush1.bf16.msra.mxu0 0
      %7100 = vmatprep.mubr.bf16.mxu0 0
      %7101 = vmatmul.mubr.bf16.gmra.mrb[0].mxu0 %v6996
      %v7102 = vpop.f32.mrb[0].mxu0
      %v7103 = vadd.f32 %v7018, %v7102
      %v7104 = vpop.f32.mrb[0].mxu0
      %v7105 = vpop.f32.mrb[0].mxu0
      %v7106 = vpop.f32.mrb[0].mxu0
      %7107 = vdwg.mxu0
      %v7108 = vlaneseq
      %v7109 = vand.u32 %v7108, 127
      %vm7110 = vcmp.lt.s32.totalorder %v7109, 7
      %v7111 = vsel %vm7110, %v7103, -1e+30
      %7112 = vmax.xlane.f32.xlu0 %v7111
      %v7113 = vpop.xlane.xlu0 %7112
      %v7114 = vsub.f32 %v7103, %v7113
      %v7115 = vmul.f32 %v7114, 1.442695
      %v7116 = vpow.pop %v7115
      %v7117 = vsel %vm7110, %v7116, 0.0
      %7118 = vadd.xlane.f32.xlu0 %v7117
      %v7119 = vpop.xlane.xlu0 %7118
      %v7120 = vrcp.pop %v7119
      %v7121 = vmul.f32 %v7117, %v7120
      %vm7122 = vcmp.eq.s32.totalorder %v7109, 7
      %v7123 = vsel %vm7122, %v7103, %v7121
      %7124 = vst [vmem:[%s549] sm:$0xff] %v7123
      %7125 = vst [vmem:[%s549 + $0x1] sm:$0x80] %v6876
      %7126 = vst [vmem:[%s549 + $0x2] sm:$0x80] %v6874
      %7127 = vst [vmem:[%s549 + $0xa] sm:$0x3f] 0.0
      %p7128 = scmp.lt.s32.totalorder %s27, 3
      %s7129 = scalar_select %p7128, %s27, 3
      %s7130 = smul.addr %s7129, 2
      %s7131 = smul.addr %s7130, 8
      %s7132 = scalar_lea.vmem %s16, %s7131
      // Predicated region
      $region85: #{ac_model_forward_batched.1} parent=83 // pred_check
        %p7133 = pneg %p396
      $region86: #{ac_model_forward_batched.1} parent=83 // pred_check_branch
        %7135 = sbr.rel (%p7133) target = $region88
      $region87: #{ac_model_forward_batched.1} parent=83 // pred_region
        _
      $region88: #{ac_model_forward_batched.1} parent=83 // pred_fallthru
        _
    $region84: #{ac_model_forward_batched.1} parent=5 // pred_fallthru
      _
    %p7136 = scmp.le.s32.totalorder 2, %s22
    // Predicated region
    $region89: #{ac_model_forward_batched.1} parent=5 // pred_check
      %p7137 = pneg %p7136
    $region90: #{ac_model_forward_batched.1} parent=5 // pred_check_branch
      %7139 = sbr.rel (%p7137) target = $region92
    $region91: #{ac_model_forward_batched.1} parent=5 // pred_region
      %s7140 = ssub.s32 %s22, 2
      // Predicated region
      $region93: #{ac_model_forward_batched.1} parent=91 // pred_check
        %p7141 = pneg %p402
      $region94: #{ac_model_forward_batched.1} parent=91 // pred_check_branch
        %7143 = sbr.rel (%p7141) target = $region96
      $region95: #{ac_model_forward_batched.1} parent=91 // pred_region
        %p7144 = scmp.lt.s32.totalorder %s28, 3
        %s7145 = scalar_select %p7144, %s28, 3
        %s7146 = smul.addr %s7145, 2
        %s7147 = smul.addr %s7146, 8
        %s7148 = scalar_lea.vmem %s16, %s7147
      $region96: #{ac_model_forward_batched.1} parent=91 // pred_fallthru
        _
    $region92: #{ac_model_forward_batched.1} parent=5 // pred_fallthru
      _
  $region6: #{ac_model_forward_batched.1} parent=0 // loop_footer
    %s26 = sadd.s32 1, %s22
  $region7: #{ac_model_forward_batched.1} parent=0 // loop_footer_branch
    %21 = sbr.rel target = $region3
  $region8: #{ac_model_forward_batched.1} parent=0 // loop_exit
    _

</llo_original>
